<compile_context>
chip_gen: v6e
topology: v6e:2x2x1
jax: 0.10.0
libtpu: 0.0.40
codegen_flags: <defaults>
</compile_context>

<pallas_src>
import functools

import numpy as np

import jax
import jax.numpy as jnp
from jax.experimental import pallas as pl
from jax.experimental.pallas import tpu as pltpu

K = 4  # kernel size of every conv layer


def _conv_pool_geom(hp, wp):
    """Geometry of conv(k=4, stride 1) on a pre-padded Hp x Wp input followed by a
    floor-mode 2x2/stride-2 max-pool, computed on the flattened spatial axis."""
    oh, ow = hp - K + 1, wp - K + 1
    ph, pw = oh // 2, ow // 2
    L = (2 * ph - 1) * wp + 2 * pw   # flat conv rows touched by the pooling windows
    lp = L - 1 - wp                  # rows of the shifted-max array
    return ph, pw, L, lp


# Pre-padded input sizes per stage: 28+2*2=32, 14+2*1=16, 6+2*1=8, 2+2*2=6.
_PH1, _PW1, _L1, _LP1 = _conv_pool_geom(32, 32)   # 14, 14, 892, 859
_PH2, _PW2, _L2, _LP2 = _conv_pool_geom(16, 16)   # 6,  6,  188, 171
_PH3, _PW3, _L3, _LP3 = _conv_pool_geom(8, 8)     # 2,  2,  28,  19
_PH4, _PW4, _L4, _LP4 = _conv_pool_geom(6, 6)     # 1,  1,  8,   1


def _pool_select_pad(wp, ph, pw, lp, next_pad, next_hp, next_wp):
    """0/1 matrix PS: (PS @ m) maps the shifted-max array m (rows = flat conv
    positions, width Wp) to the next stage's zero-padded flattened input."""
    out = np.zeros((next_hp * next_wp, lp), np.float32)
    for i in range(ph):
        for j in range(pw):
            out[(i + next_pad) * next_wp + (j + next_pad), 2 * i * wp + 2 * j] = 1.0
    return out


_PS1 = _pool_select_pad(32, _PH1, _PW1, _LP1, next_pad=1, next_hp=16, next_wp=16)
_PS2 = _pool_select_pad(16, _PH2, _PW2, _LP2, next_pad=1, next_hp=8, next_wp=8)
_PS3 = _pool_select_pad(8, _PH3, _PW3, _LP3, next_pad=2, next_hp=6, next_wp=6)


# ----------------------------------------------------------------------------
# Fused kernel: NB images per grid step, whole network per image, batched fc
# ----------------------------------------------------------------------------
def _seq_net_2_kernel(
    nb,                                       # Python int (bound via partial)
    p1_ref,                                   # [nb, 892, 16] bf16 conv1 patches
    w1_ref, b1_ref, ps1_ref,
    w2_ref, b2_ref, ps2_ref,
    w3_ref, b3_ref, ps3_ref,
    w4_ref, b4_ref,
    fw1_ref, fb1_ref, fw2_ref, fb2_ref, fw3_ref, fb3_ref, fw4_ref, fb4_ref,
    out_ref,                                  # [nb, 10] f32
    y1_s, x2_s, p2_s, y2_s, x3_s, p3_s, y3_s, x4_s, p4_s, y4_s, feat_s,
):
    f32, bf16 = jnp.float32, jnp.bfloat16

    def pool(y_s, wp, lp):
        """max over flat rows {i, i+1, i+wp, i+wp+1} == 2x2 stride-2 max-pool
        (only even spatial positions of the result are ever selected by PS)."""
        a = y_s[pl.ds(0, lp), :]
        b = y_s[pl.ds(1, lp), :]
        c = y_s[pl.ds(wp, lp), :]
        d = y_s[pl.ds(wp + 1, lp), :]
        return jnp.maximum(jnp.maximum(a, b), jnp.maximum(c, d))

    def conv_relu(x_s, patch_s, w_ref, b_ref, wp, L, cin):
        """Conv(4x4) + bias + ReLU as ONE im2col matmul: 16 lane-offset stores
        build the [L, 16*cin] bf16 patch matrix, then a single MXU dot."""
        for di in range(K):
            for dj in range(K):
                patch_s[:, pl.ds((di * K + dj) * cin, cin)] = (
                    x_s[pl.ds(di * wp + dj, L), :].astype(bf16))
        y = jnp.dot(patch_s[...], w_ref[...], preferred_element_type=f32)
        return jnp.maximum(y + b_ref[...], 0.0)

    @pl.loop(0, nb)
    def _(n):
        # layer1: conv(1->10, k4, pad2) + ReLU + pool (patches precomputed, Cin=1)
        y1 = jnp.dot(p1_ref[n], w1_ref[...], preferred_element_type=f32)   # [892,10]
        y1_s[...] = jnp.maximum(y1 + b1_ref[...], 0.0)
        x2_s[...] = jnp.dot(ps1_ref[...], pool(y1_s, 32, _LP1).astype(bf16),
                            preferred_element_type=f32)                    # [256,10]

        # layer2: conv(10->20, k4, pad1) + ReLU + pool
        y2_s[...] = conv_relu(x2_s, p2_s, w2_ref, b2_ref, 16, _L2, 10)     # [188,20]
        x3_s[...] = jnp.dot(ps2_ref[...], pool(y2_s, 16, _LP2).astype(bf16),
                            preferred_element_type=f32)                    # [64,20]

        # layer3: conv(20->40, k4, pad1) + ReLU + pool
        y3_s[...] = conv_relu(x3_s, p3_s, w3_ref, b3_ref, 8, _L3, 20)      # [28,40]
        x4_s[...] = jnp.dot(ps3_ref[...], pool(y3_s, 8, _LP3).astype(bf16),
                            preferred_element_type=f32)                    # [36,40]

        # layer4: conv(40->200, k4, pad2) + ReLU + pool -> one [1,200] feature row
        y4_s[...] = conv_relu(x4_s, p4_s, w4_ref, b4_ref, 6, _L4, 40)      # [8,200]
        feat_s[pl.ds(n, 1), :] = pool(y4_s, 6, _LP4)                       # [1,200]

    # fc1..fc4 batched across the nb images of this step (reference forward()
    # applies no activation between them). bf16 operands, f32 accumulate.
    h = jnp.dot(feat_s[...].astype(bf16), fw1_ref[...],
                preferred_element_type=f32) + fb1_ref[...]
    h = jnp.dot(h.astype(bf16), fw2_ref[...], preferred_element_type=f32) + fb2_ref[...]
    h = jnp.dot(h.astype(bf16), fw3_ref[...], preferred_element_type=f32) + fb3_ref[...]
    h = jnp.dot(h.astype(bf16), fw4_ref[...], preferred_element_type=f32) + fb4_ref[...]
    out_ref[...] = h.astype(out_ref.dtype)


# ----------------------------------------------------------------------------
# Parameters (PyTorch-native layouts) and conversion to kernel layouts
# ----------------------------------------------------------------------------
def init_params(key):
    """Deterministic params in PyTorch layouts: conv w [Cout,Cin,kh,kw], conv b
    [Cout], linear w [out,in], linear b [out] (PyTorch-style uniform bounds)."""
    def conv(k, cin, cout):
        kw_, kb_ = jax.random.split(k)
        bound = 1.0 / np.sqrt(cin * K * K)
        w = jax.random.uniform(kw_, (cout, cin, K, K), jnp.float32, -bound, bound)
        b = jax.random.uniform(kb_, (cout,), jnp.float32, -bound, bound)
        return w, b

    def linear(k, fin, fout):
        kw_, kb_ = jax.random.split(k)
        bound = 1.0 / np.sqrt(fin)
        w = jax.random.uniform(kw_, (fout, fin), jnp.float32, -bound, bound)
        b = jax.random.uniform(kb_, (fout,), jnp.float32, -bound, bound)
        return w, b

    ks = jax.random.split(key, 8)
    return {
        "conv1": conv(ks[0], 1, 10), "conv2": conv(ks[1], 10, 20),
        "conv3": conv(ks[2], 20, 40), "conv4": conv(ks[3], 40, 200),
        "fc1": linear(ks[4], 200, 120), "fc2": linear(ks[5], 120, 60),
        "fc3": linear(ks[6], 60, 30), "fc4": linear(ks[7], 30, 10),
    }


def prepare_params(params):
    """PyTorch layouts -> kernel layouts (call ONCE, outside jit):
    conv w [Cout,Cin,kh,kw] -> [(kh*K+kw)*Cin + ci, Cout] bf16; conv b -> [1,Cout] f32;
    fc w -> [in,out] bf16; fc b -> [1,out] f32; PS select matrices -> bf16."""
    out = {}
    for name in ("conv1", "conv2", "conv3", "conv4"):
        w, b = params[name]
        cout, cin = w.shape[0], w.shape[1]
        wmat = jnp.transpose(w, (2, 3, 1, 0)).reshape(K * K * cin, cout)
        out[name] = (wmat.astype(jnp.bfloat16),
                     b.reshape(1, cout).astype(jnp.float32))
    for name in ("fc1", "fc2", "fc3", "fc4"):
        w, b = params[name]
        out[name] = (jnp.transpose(w).astype(jnp.bfloat16),
                     b.reshape(1, -1).astype(jnp.float32))
    out["ps1"] = jnp.asarray(_PS1, jnp.bfloat16)
    out["ps2"] = jnp.asarray(_PS2, jnp.bfloat16)
    out["ps3"] = jnp.asarray(_PS3, jnp.bfloat16)
    return out


# ----------------------------------------------------------------------------
# Forward pass
# ----------------------------------------------------------------------------
@functools.partial(jax.jit, static_argnames=("nb",))
def seq_net_2_forward(kp, x_nchw, nb=8):
    """Forward of seq_net_2 with act_func = ReLU. x_nchw: [B, 1, 28, 28].
    kp = prepare_params(params), precomputed outside this jitted function.
    nb images are processed per grid step (batch is zero-padded to a multiple)."""
    B = x_nchw.shape[0]
    assert x_nchw.shape[1:] == (1, 28, 28), x_nchw.shape
    bp = ((B + nb - 1) // nb) * nb

    # conv1 patch gather on the XLA side (Cin == 1 -> ~28 KB/image in bf16);
    # keeps lane-width-1 data out of the kernel. Later stages build patches
    # in-kernel from VMEM-resident activations.
    x = x_nchw.reshape(B, 28, 28).astype(jnp.float32)
    if bp != B:
        x = jnp.concatenate([x, jnp.zeros((bp - B, 28, 28), jnp.float32)], axis=0)
    xpf = jnp.pad(x, ((0, 0), (2, 2), (2, 2))).reshape(bp, 32 * 32)
    p1 = jnp.stack(
        [xpf[:, di * 32 + dj: di * 32 + dj + _L1]
         for di in range(K) for dj in range(K)],
        axis=-1,
    ).astype(jnp.bfloat16)                                   # [bp, 892, 16]

    w1, b1 = kp["conv1"]; w2, b2 = kp["conv2"]
    w3, b3 = kp["conv3"]; w4, b4 = kp["conv4"]
    fw1, fb1 = kp["fc1"]; fw2, fb2 = kp["fc2"]
    fw3, fb3 = kp["fc3"]; fw4, fb4 = kp["fc4"]

    weights = (w1, b1, kp["ps1"], w2, b2, kp["ps2"], w3, b3, kp["ps3"], w4, b4,
               fw1, fb1, fw2, fb2, fw3, fb3, fw4, fb4)

    in_specs = [pl.BlockSpec((nb, _L1, K * K), lambda i: (i, 0, 0))]
    in_specs += [pl.BlockSpec(w.shape, lambda i: (0, 0)) for w in weights]

    out = pl.pallas_call(
        functools.partial(_seq_net_2_kernel, nb),
        out_shape=jax.ShapeDtypeStruct((bp, 10), jnp.float32),
        grid=(bp // nb,),
        in_specs=in_specs,
        out_specs=pl.BlockSpec((nb, 10), lambda i: (i, 0)),
        scratch_shapes=[
            pltpu.VMEM((_L1, 10), jnp.float32),             # y1 (conv1+relu, flat)
            pltpu.VMEM((16 * 16, 10), jnp.float32),         # x2 (pooled + padded)
            pltpu.VMEM((_L2, K * K * 10), jnp.bfloat16),    # p2 im2col patches
            pltpu.VMEM((_L2, 20), jnp.float32),             # y2
            pltpu.VMEM((8 * 8, 20), jnp.float32),           # x3
            pltpu.VMEM((_L3, K * K * 20), jnp.bfloat16),    # p3 im2col patches
            pltpu.VMEM((_L3, 40), jnp.float32),             # y3
            pltpu.VMEM((6 * 6, 40), jnp.float32),           # x4
            pltpu.VMEM((_L4, K * K * 40), jnp.bfloat16),    # p4 im2col patches
            pltpu.VMEM((_L4, 200), jnp.float32),            # y4
            pltpu.VMEM((nb, 200), jnp.float32),             # per-step feature rows
        ],
        compiler_params=pltpu.CompilerParams(
            dimension_semantics=("parallel",),
        ),
    )(p1, *weights)
    return out[:B]


# ----------------------------------------------------------------------------
# Pure-JAX reference (for a loose numerical cross-check)
# ----------------------------------------------------------------------------
def _reference_forward(params, x_nchw):
    x = x_nchw.astype(jnp.float32)

    def conv_relu_pool(x, w, b, pad):
        y = jax.lax.conv_general_dilated(
            x, w, window_strides=(1, 1), padding=[(pad, pad), (pad, pad)],
            dimension_numbers=("NCHW", "OIHW", "NCHW"))
        y = jnp.maximum(y + b[None, :, None, None], 0.0)
        n, c, h, wd = y.shape
        ph, pw = h // 2, wd // 2
        y = y[:, :, :2 * ph, :2 * pw].reshape(n, c, ph, 2, pw, 2)
        return y.max(axis=(3, 5))

    x = conv_relu_pool(x, *params["conv1"], 2)
    x = conv_relu_pool(x, *params["conv2"], 1)
    x = conv_relu_pool(x, *params["conv3"], 1)
    x = conv_relu_pool(x, *params["conv4"], 2)
    x = x.reshape(x.shape[0], -1)
    for name in ("fc1", "fc2", "fc3", "fc4"):
        w, b = params[name]
        x = x @ w.T + b
    return x


if __name__ == "__main__":
    key = jax.random.PRNGKey(0)
    k_param, k_x = jax.random.split(key)
    params = init_params(k_param)
    kp = prepare_params(params)   # hoisted out of the jitted forward (run once)

    # MNIST-shaped input (fc1 in_features=200 forces 1x28x28). B=16 -> grid of
    # two sub-batches of 8 images (keeps both v7x TensorCores busy).
    x = jax.random.normal(k_x, (16, 1, 28, 28), dtype=jnp.float32)

    out = seq_net_2_forward(kp, x)
    out = jax.block_until_ready(out)
    assert out.shape == (16, 10), out.shape

    # Loose tolerance: the Pallas kernel uses bf16 conv/fc operands with f32
    # accumulation; the reference is pure f32.
    ref = _reference_forward(params, x)
    np.testing.assert_allclose(np.asarray(out), np.asarray(ref),
                               rtol=0.05, atol=2e-2)

    print("KERNEL_OK")
</pallas_src>

<mosaic_0001>
module attributes {stable_mosaic.version = 11 : i64} {
  func.func @_seq_net_2_kernel(%arg0: i32, %arg1: memref<8x892x16xbf16, #tpu.memory_space<vmem>>, %arg2: memref<16x10xbf16, #tpu.memory_space<vmem>>, %arg3: memref<1x10xf32, #tpu.memory_space<vmem>>, %arg4: memref<256x859xbf16, #tpu.memory_space<vmem>>, %arg5: memref<160x20xbf16, #tpu.memory_space<vmem>>, %arg6: memref<1x20xf32, #tpu.memory_space<vmem>>, %arg7: memref<64x171xbf16, #tpu.memory_space<vmem>>, %arg8: memref<320x40xbf16, #tpu.memory_space<vmem>>, %arg9: memref<1x40xf32, #tpu.memory_space<vmem>>, %arg10: memref<36x19xbf16, #tpu.memory_space<vmem>>, %arg11: memref<640x200xbf16, #tpu.memory_space<vmem>>, %arg12: memref<1x200xf32, #tpu.memory_space<vmem>>, %arg13: memref<200x120xbf16, #tpu.memory_space<vmem>>, %arg14: memref<1x120xf32, #tpu.memory_space<vmem>>, %arg15: memref<120x60xbf16, #tpu.memory_space<vmem>>, %arg16: memref<1x60xf32, #tpu.memory_space<vmem>>, %arg17: memref<60x30xbf16, #tpu.memory_space<vmem>>, %arg18: memref<1x30xf32, #tpu.memory_space<vmem>>, %arg19: memref<30x10xbf16, #tpu.memory_space<vmem>>, %arg20: memref<1x10xf32, #tpu.memory_space<vmem>>, %arg21: memref<8x10xf32, #tpu.memory_space<vmem>>, %arg22: memref<892x10xf32, #tpu.memory_space<vmem>>, %arg23: memref<256x10xf32, #tpu.memory_space<vmem>>, %arg24: memref<188x160xbf16, #tpu.memory_space<vmem>>, %arg25: memref<188x20xf32, #tpu.memory_space<vmem>>, %arg26: memref<64x20xf32, #tpu.memory_space<vmem>>, %arg27: memref<28x320xbf16, #tpu.memory_space<vmem>>, %arg28: memref<28x40xf32, #tpu.memory_space<vmem>>, %arg29: memref<36x40xf32, #tpu.memory_space<vmem>>, %arg30: memref<8x640xbf16, #tpu.memory_space<vmem>>, %arg31: memref<8x200xf32, #tpu.memory_space<vmem>>, %arg32: memref<8x200xf32, #tpu.memory_space<vmem>>) attributes {dimension_semantics = [#tpu.dimension_semantics<parallel>], iteration_bounds = array<i64: 2>, scalar_prefetch = 0 : i64, scratch_operands = 11 : i64, tpu.core_type = #tpu.core_type<tc>, window_params = [{transform_indices = @transform_0, window_bounds = array<i64: 8, 892, 16>}, {pipeline_mode = #tpu.pipeline_mode<synchronous>, transform_indices = @transform_1, window_bounds = array<i64: 16, 10>}, {pipeline_mode = #tpu.pipeline_mode<synchronous>, transform_indices = @transform_2, window_bounds = array<i64: 1, 10>}, {pipeline_mode = #tpu.pipeline_mode<synchronous>, transform_indices = @transform_3, window_bounds = array<i64: 256, 859>}, {pipeline_mode = #tpu.pipeline_mode<synchronous>, transform_indices = @transform_4, window_bounds = array<i64: 160, 20>}, {pipeline_mode = #tpu.pipeline_mode<synchronous>, transform_indices = @transform_5, window_bounds = array<i64: 1, 20>}, {pipeline_mode = #tpu.pipeline_mode<synchronous>, transform_indices = @transform_6, window_bounds = array<i64: 64, 171>}, {pipeline_mode = #tpu.pipeline_mode<synchronous>, transform_indices = @transform_7, window_bounds = array<i64: 320, 40>}, {pipeline_mode = #tpu.pipeline_mode<synchronous>, transform_indices = @transform_8, window_bounds = array<i64: 1, 40>}, {pipeline_mode = #tpu.pipeline_mode<synchronous>, transform_indices = @transform_9, window_bounds = array<i64: 36, 19>}, {pipeline_mode = #tpu.pipeline_mode<synchronous>, transform_indices = @transform_10, window_bounds = array<i64: 640, 200>}, {pipeline_mode = #tpu.pipeline_mode<synchronous>, transform_indices = @transform_11, window_bounds = array<i64: 1, 200>}, {pipeline_mode = #tpu.pipeline_mode<synchronous>, transform_indices = @transform_12, window_bounds = array<i64: 200, 120>}, {pipeline_mode = #tpu.pipeline_mode<synchronous>, transform_indices = @transform_13, window_bounds = array<i64: 1, 120>}, {pipeline_mode = #tpu.pipeline_mode<synchronous>, transform_indices = @transform_14, window_bounds = array<i64: 120, 60>}, {pipeline_mode = #tpu.pipeline_mode<synchronous>, transform_indices = @transform_15, window_bounds = array<i64: 1, 60>}, {pipeline_mode = #tpu.pipeline_mode<synchronous>, transform_indices = @transform_16, window_bounds = array<i64: 60, 30>}, {pipeline_mode = #tpu.pipeline_mode<synchronous>, transform_indices = @transform_17, window_bounds = array<i64: 1, 30>}, {pipeline_mode = #tpu.pipeline_mode<synchronous>, transform_indices = @transform_18, window_bounds = array<i64: 30, 10>}, {pipeline_mode = #tpu.pipeline_mode<synchronous>, transform_indices = @transform_19, window_bounds = array<i64: 1, 10>}, {transform_indices = @transform_20, window_bounds = array<i64: 8, 10>}]} {
    %c0_i32 = arith.constant 0 : i32
    %c8_i32 = arith.constant 8 : i32
    %0 = arith.addi %c0_i32, %c8_i32 : i32
    %c1_i32 = arith.constant 1 : i32
    scf.for %arg33 = %c0_i32 to %0 step %c1_i32  : i32 {
      %c1_i32_23 = arith.constant 1 : i32
      %27 = arith.muli %arg33, %c1_i32_23 : i32
      %c0_i32_24 = arith.constant 0 : i32
      %28 = arith.addi %c0_i32_24, %27 : i32
      %29 = arith.index_cast %28 : i32 to index
      %c0_25 = arith.constant 0 : index
      %c0_26 = arith.constant 0 : index
      %30 = vector.load %arg1[%29, %c0_25, %c0_26] : memref<8x892x16xbf16, #tpu.memory_space<vmem>>, vector<1x892x16xbf16>
      %31 = vector.shape_cast %30 : vector<1x892x16xbf16> to vector<892x16xbf16>
      %c0_27 = arith.constant 0 : index
      %c0_28 = arith.constant 0 : index
      %32 = vector.load %arg2[%c0_27, %c0_28] : memref<16x10xbf16, #tpu.memory_space<vmem>>, vector<16x10xbf16>
      %cst_29 = arith.constant dense<0.000000e+00> : vector<892x10xf32>
      %33 = tpu.matmul %31, %32, %cst_29 {dimension_numbers = #tpu.dot_dimension_numbers<[1], [0], [0], [1], [0, 0, 1, 1], [], []>} : vector<892x16xbf16>, vector<16x10xbf16>, vector<892x10xf32> -> vector<892x10xf32>
      %c0_30 = arith.constant 0 : index
      %c0_31 = arith.constant 0 : index
      %34 = vector.load %arg3[%c0_30, %c0_31] : memref<1x10xf32, #tpu.memory_space<vmem>>, vector<1x10xf32>
      %35 = vector.broadcast %34 : vector<1x10xf32> to vector<892x10xf32>
      %36 = arith.addf %33, %35 : vector<892x10xf32>
      %cst_32 = arith.constant 0.000000e+00 : f32
      %37 = vector.broadcast %cst_32 : f32 to vector<892x10xf32>
      %38 = arith.maximumf %36, %37 : vector<892x10xf32>
      %c0_33 = arith.constant 0 : index
      %c0_34 = arith.constant 0 : index
      %39 = vector.load %arg22[%c0_33, %c0_34] : memref<892x10xf32, #tpu.memory_space<vmem>>, vector<892x10xf32>
      tpu.vector_store %arg22[%c0_33, %c0_34], %38 {strides = array<i32>} : memref<892x10xf32, #tpu.memory_space<vmem>>, vector<892x10xf32>,
      %c0_35 = arith.constant 0 : index
      %c0_36 = arith.constant 0 : index
      %40 = vector.load %arg4[%c0_35, %c0_36] : memref<256x859xbf16, #tpu.memory_space<vmem>>, vector<256x859xbf16>
      %c0_37 = arith.constant 0 : index
      %c0_38 = arith.constant 0 : index
      %41 = vector.load %arg22[%c0_37, %c0_38] : memref<892x10xf32, #tpu.memory_space<vmem>>, vector<859x10xf32>
      %c1 = arith.constant 1 : index
      %c0_39 = arith.constant 0 : index
      %42 = vector.load %arg22[%c1, %c0_39] : memref<892x10xf32, #tpu.memory_space<vmem>>, vector<859x10xf32>
      %c32 = arith.constant 32 : index
      %c0_40 = arith.constant 0 : index
      %43 = vector.load %arg22[%c32, %c0_40] : memref<892x10xf32, #tpu.memory_space<vmem>>, vector<859x10xf32>
      %c33 = arith.constant 33 : index
      %c0_41 = arith.constant 0 : index
      %44 = vector.load %arg22[%c33, %c0_41] : memref<892x10xf32, #tpu.memory_space<vmem>>, vector<859x10xf32>
      %45 = arith.maximumf %41, %42 : vector<859x10xf32>
      %46 = arith.maximumf %43, %44 : vector<859x10xf32>
      %47 = arith.maximumf %45, %46 : vector<859x10xf32>
      %48 = arith.truncf %47 : vector<859x10xf32> to vector<859x10xbf16>
      %cst_42 = arith.constant dense<0.000000e+00> : vector<256x10xf32>
      %49 = tpu.matmul %40, %48, %cst_42 {dimension_numbers = #tpu.dot_dimension_numbers<[1], [0], [0], [1], [0, 0, 1, 1], [], []>} : vector<256x859xbf16>, vector<859x10xbf16>, vector<256x10xf32> -> vector<256x10xf32>
      %c0_43 = arith.constant 0 : index
      %c0_44 = arith.constant 0 : index
      %50 = vector.load %arg23[%c0_43, %c0_44] : memref<256x10xf32, #tpu.memory_space<vmem>>, vector<256x10xf32>
      tpu.vector_store %arg23[%c0_43, %c0_44], %49 {strides = array<i32>} : memref<256x10xf32, #tpu.memory_space<vmem>>, vector<256x10xf32>,
      %c0_45 = arith.constant 0 : index
      %c0_46 = arith.constant 0 : index
      %51 = vector.load %arg23[%c0_45, %c0_46] : memref<256x10xf32, #tpu.memory_space<vmem>>, vector<188x10xf32>
      %52 = arith.truncf %51 : vector<188x10xf32> to vector<188x10xbf16>
      %c0_47 = arith.constant 0 : index
      %c0_48 = arith.constant 0 : index
      %53 = vector.load %arg24[%c0_47, %c0_48] : memref<188x160xbf16, #tpu.memory_space<vmem>>, vector<188x10xbf16>
      tpu.vector_store %arg24[%c0_47, %c0_48], %52 {strides = array<i32>} : memref<188x160xbf16, #tpu.memory_space<vmem>>, vector<188x10xbf16>,
      %c1_49 = arith.constant 1 : index
      %c0_50 = arith.constant 0 : index
      %54 = vector.load %arg23[%c1_49, %c0_50] : memref<256x10xf32, #tpu.memory_space<vmem>>, vector<188x10xf32>
      %55 = arith.truncf %54 : vector<188x10xf32> to vector<188x10xbf16>
      %c0_51 = arith.constant 0 : index
      %c10 = arith.constant 10 : index
      %56 = vector.load %arg24[%c0_51, %c10] : memref<188x160xbf16, #tpu.memory_space<vmem>>, vector<188x10xbf16>
      tpu.vector_store %arg24[%c0_51, %c10], %55 {strides = array<i32>} : memref<188x160xbf16, #tpu.memory_space<vmem>>, vector<188x10xbf16>,
      %c2 = arith.constant 2 : index
      %c0_52 = arith.constant 0 : index
      %57 = vector.load %arg23[%c2, %c0_52] : memref<256x10xf32, #tpu.memory_space<vmem>>, vector<188x10xf32>
      %58 = arith.truncf %57 : vector<188x10xf32> to vector<188x10xbf16>
      %c0_53 = arith.constant 0 : index
      %c20 = arith.constant 20 : index
      %59 = vector.load %arg24[%c0_53, %c20] : memref<188x160xbf16, #tpu.memory_space<vmem>>, vector<188x10xbf16>
      tpu.vector_store %arg24[%c0_53, %c20], %58 {strides = array<i32>} : memref<188x160xbf16, #tpu.memory_space<vmem>>, vector<188x10xbf16>,
      %c3 = arith.constant 3 : index
      %c0_54 = arith.constant 0 : index
      %60 = vector.load %arg23[%c3, %c0_54] : memref<256x10xf32, #tpu.memory_space<vmem>>, vector<188x10xf32>
      %61 = arith.truncf %60 : vector<188x10xf32> to vector<188x10xbf16>
      %c0_55 = arith.constant 0 : index
      %c30 = arith.constant 30 : index
      %62 = vector.load %arg24[%c0_55, %c30] : memref<188x160xbf16, #tpu.memory_space<vmem>>, vector<188x10xbf16>
      tpu.vector_store %arg24[%c0_55, %c30], %61 {strides = array<i32>} : memref<188x160xbf16, #tpu.memory_space<vmem>>, vector<188x10xbf16>,
      %c16 = arith.constant 16 : index
      %c0_56 = arith.constant 0 : index
      %63 = vector.load %arg23[%c16, %c0_56] : memref<256x10xf32, #tpu.memory_space<vmem>>, vector<188x10xf32>
      %64 = arith.truncf %63 : vector<188x10xf32> to vector<188x10xbf16>
      %c0_57 = arith.constant 0 : index
      %c40 = arith.constant 40 : index
      %65 = vector.load %arg24[%c0_57, %c40] : memref<188x160xbf16, #tpu.memory_space<vmem>>, vector<188x10xbf16>
      tpu.vector_store %arg24[%c0_57, %c40], %64 {strides = array<i32>} : memref<188x160xbf16, #tpu.memory_space<vmem>>, vector<188x10xbf16>,
      %c17 = arith.constant 17 : index
      %c0_58 = arith.constant 0 : index
      %66 = vector.load %arg23[%c17, %c0_58] : memref<256x10xf32, #tpu.memory_space<vmem>>, vector<188x10xf32>
      %67 = arith.truncf %66 : vector<188x10xf32> to vector<188x10xbf16>
      %c0_59 = arith.constant 0 : index
      %c50 = arith.constant 50 : index
      %68 = vector.load %arg24[%c0_59, %c50] : memref<188x160xbf16, #tpu.memory_space<vmem>>, vector<188x10xbf16>
      tpu.vector_store %arg24[%c0_59, %c50], %67 {strides = array<i32>} : memref<188x160xbf16, #tpu.memory_space<vmem>>, vector<188x10xbf16>,
      %c18 = arith.constant 18 : index
      %c0_60 = arith.constant 0 : index
      %69 = vector.load %arg23[%c18, %c0_60] : memref<256x10xf32, #tpu.memory_space<vmem>>, vector<188x10xf32>
      %70 = arith.truncf %69 : vector<188x10xf32> to vector<188x10xbf16>
      %c0_61 = arith.constant 0 : index
      %c60 = arith.constant 60 : index
      %71 = vector.load %arg24[%c0_61, %c60] : memref<188x160xbf16, #tpu.memory_space<vmem>>, vector<188x10xbf16>
      tpu.vector_store %arg24[%c0_61, %c60], %70 {strides = array<i32>} : memref<188x160xbf16, #tpu.memory_space<vmem>>, vector<188x10xbf16>,
      %c19 = arith.constant 19 : index
      %c0_62 = arith.constant 0 : index
      %72 = vector.load %arg23[%c19, %c0_62] : memref<256x10xf32, #tpu.memory_space<vmem>>, vector<188x10xf32>
      %73 = arith.truncf %72 : vector<188x10xf32> to vector<188x10xbf16>
      %c0_63 = arith.constant 0 : index
      %c70 = arith.constant 70 : index
      %74 = vector.load %arg24[%c0_63, %c70] : memref<188x160xbf16, #tpu.memory_space<vmem>>, vector<188x10xbf16>
      tpu.vector_store %arg24[%c0_63, %c70], %73 {strides = array<i32>} : memref<188x160xbf16, #tpu.memory_space<vmem>>, vector<188x10xbf16>,
      %c32_64 = arith.constant 32 : index
      %c0_65 = arith.constant 0 : index
      %75 = vector.load %arg23[%c32_64, %c0_65] : memref<256x10xf32, #tpu.memory_space<vmem>>, vector<188x10xf32>
      %76 = arith.truncf %75 : vector<188x10xf32> to vector<188x10xbf16>
      %c0_66 = arith.constant 0 : index
      %c80 = arith.constant 80 : index
      %77 = vector.load %arg24[%c0_66, %c80] : memref<188x160xbf16, #tpu.memory_space<vmem>>, vector<188x10xbf16>
      tpu.vector_store %arg24[%c0_66, %c80], %76 {strides = array<i32>} : memref<188x160xbf16, #tpu.memory_space<vmem>>, vector<188x10xbf16>,
      %c33_67 = arith.constant 33 : index
      %c0_68 = arith.constant 0 : index
      %78 = vector.load %arg23[%c33_67, %c0_68] : memref<256x10xf32, #tpu.memory_space<vmem>>, vector<188x10xf32>
      %79 = arith.truncf %78 : vector<188x10xf32> to vector<188x10xbf16>
      %c0_69 = arith.constant 0 : index
      %c90 = arith.constant 90 : index
      %80 = vector.load %arg24[%c0_69, %c90] : memref<188x160xbf16, #tpu.memory_space<vmem>>, vector<188x10xbf16>
      tpu.vector_store %arg24[%c0_69, %c90], %79 {strides = array<i32>} : memref<188x160xbf16, #tpu.memory_space<vmem>>, vector<188x10xbf16>,
      %c34 = arith.constant 34 : index
      %c0_70 = arith.constant 0 : index
      %81 = vector.load %arg23[%c34, %c0_70] : memref<256x10xf32, #tpu.memory_space<vmem>>, vector<188x10xf32>
      %82 = arith.truncf %81 : vector<188x10xf32> to vector<188x10xbf16>
      %c0_71 = arith.constant 0 : index
      %c100 = arith.constant 100 : index
      %83 = vector.load %arg24[%c0_71, %c100] : memref<188x160xbf16, #tpu.memory_space<vmem>>, vector<188x10xbf16>
      tpu.vector_store %arg24[%c0_71, %c100], %82 {strides = array<i32>} : memref<188x160xbf16, #tpu.memory_space<vmem>>, vector<188x10xbf16>,
      %c35 = arith.constant 35 : index
      %c0_72 = arith.constant 0 : index
      %84 = vector.load %arg23[%c35, %c0_72] : memref<256x10xf32, #tpu.memory_space<vmem>>, vector<188x10xf32>
      %85 = arith.truncf %84 : vector<188x10xf32> to vector<188x10xbf16>
      %c0_73 = arith.constant 0 : index
      %c110 = arith.constant 110 : index
      %86 = vector.load %arg24[%c0_73, %c110] : memref<188x160xbf16, #tpu.memory_space<vmem>>, vector<188x10xbf16>
      tpu.vector_store %arg24[%c0_73, %c110], %85 {strides = array<i32>} : memref<188x160xbf16, #tpu.memory_space<vmem>>, vector<188x10xbf16>,
      %c48 = arith.constant 48 : index
      %c0_74 = arith.constant 0 : index
      %87 = vector.load %arg23[%c48, %c0_74] : memref<256x10xf32, #tpu.memory_space<vmem>>, vector<188x10xf32>
      %88 = arith.truncf %87 : vector<188x10xf32> to vector<188x10xbf16>
      %c0_75 = arith.constant 0 : index
      %c120 = arith.constant 120 : index
      %89 = vector.load %arg24[%c0_75, %c120] : memref<188x160xbf16, #tpu.memory_space<vmem>>, vector<188x10xbf16>
      tpu.vector_store %arg24[%c0_75, %c120], %88 {strides = array<i32>} : memref<188x160xbf16, #tpu.memory_space<vmem>>, vector<188x10xbf16>,
      %c49 = arith.constant 49 : index
      %c0_76 = arith.constant 0 : index
      %90 = vector.load %arg23[%c49, %c0_76] : memref<256x10xf32, #tpu.memory_space<vmem>>, vector<188x10xf32>
      %91 = arith.truncf %90 : vector<188x10xf32> to vector<188x10xbf16>
      %c0_77 = arith.constant 0 : index
      %c130 = arith.constant 130 : index
      %92 = vector.load %arg24[%c0_77, %c130] : memref<188x160xbf16, #tpu.memory_space<vmem>>, vector<188x10xbf16>
      tpu.vector_store %arg24[%c0_77, %c130], %91 {strides = array<i32>} : memref<188x160xbf16, #tpu.memory_space<vmem>>, vector<188x10xbf16>,
      %c50_78 = arith.constant 50 : index
      %c0_79 = arith.constant 0 : index
      %93 = vector.load %arg23[%c50_78, %c0_79] : memref<256x10xf32, #tpu.memory_space<vmem>>, vector<188x10xf32>
      %94 = arith.truncf %93 : vector<188x10xf32> to vector<188x10xbf16>
      %c0_80 = arith.constant 0 : index
      %c140 = arith.constant 140 : index
      %95 = vector.load %arg24[%c0_80, %c140] : memref<188x160xbf16, #tpu.memory_space<vmem>>, vector<188x10xbf16>
      tpu.vector_store %arg24[%c0_80, %c140], %94 {strides = array<i32>} : memref<188x160xbf16, #tpu.memory_space<vmem>>, vector<188x10xbf16>,
      %c51 = arith.constant 51 : index
      %c0_81 = arith.constant 0 : index
      %96 = vector.load %arg23[%c51, %c0_81] : memref<256x10xf32, #tpu.memory_space<vmem>>, vector<188x10xf32>
      %97 = arith.truncf %96 : vector<188x10xf32> to vector<188x10xbf16>
      %c0_82 = arith.constant 0 : index
      %c150 = arith.constant 150 : index
      %98 = vector.load %arg24[%c0_82, %c150] : memref<188x160xbf16, #tpu.memory_space<vmem>>, vector<188x10xbf16>
      tpu.vector_store %arg24[%c0_82, %c150], %97 {strides = array<i32>} : memref<188x160xbf16, #tpu.memory_space<vmem>>, vector<188x10xbf16>,
      %c0_83 = arith.constant 0 : index
      %c0_84 = arith.constant 0 : index
      %99 = vector.load %arg24[%c0_83, %c0_84] : memref<188x160xbf16, #tpu.memory_space<vmem>>, vector<188x160xbf16>
      %c0_85 = arith.constant 0 : index
      %c0_86 = arith.constant 0 : index
      %100 = vector.load %arg5[%c0_85, %c0_86] : memref<160x20xbf16, #tpu.memory_space<vmem>>, vector<160x20xbf16>
      %cst_87 = arith.constant dense<0.000000e+00> : vector<188x20xf32>
      %101 = tpu.matmul %99, %100, %cst_87 {dimension_numbers = #tpu.dot_dimension_numbers<[1], [0], [0], [1], [0, 0, 1, 1], [], []>} : vector<188x160xbf16>, vector<160x20xbf16>, vector<188x20xf32> -> vector<188x20xf32>
      %c0_88 = arith.constant 0 : index
      %c0_89 = arith.constant 0 : index
      %102 = vector.load %arg6[%c0_88, %c0_89] : memref<1x20xf32, #tpu.memory_space<vmem>>, vector<1x20xf32>
      %103 = vector.broadcast %102 : vector<1x20xf32> to vector<188x20xf32>
      %104 = arith.addf %101, %103 : vector<188x20xf32>
      %cst_90 = arith.constant 0.000000e+00 : f32
      %105 = vector.broadcast %cst_90 : f32 to vector<188x20xf32>
      %106 = arith.maximumf %104, %105 : vector<188x20xf32>
      %c0_91 = arith.constant 0 : index
      %c0_92 = arith.constant 0 : index
      %107 = vector.load %arg25[%c0_91, %c0_92] : memref<188x20xf32, #tpu.memory_space<vmem>>, vector<188x20xf32>
      tpu.vector_store %arg25[%c0_91, %c0_92], %106 {strides = array<i32>} : memref<188x20xf32, #tpu.memory_space<vmem>>, vector<188x20xf32>,
      %c0_93 = arith.constant 0 : index
      %c0_94 = arith.constant 0 : index
      %108 = vector.load %arg7[%c0_93, %c0_94] : memref<64x171xbf16, #tpu.memory_space<vmem>>, vector<64x171xbf16>
      %c0_95 = arith.constant 0 : index
      %c0_96 = arith.constant 0 : index
      %109 = vector.load %arg25[%c0_95, %c0_96] : memref<188x20xf32, #tpu.memory_space<vmem>>, vector<171x20xf32>
      %c1_97 = arith.constant 1 : index
      %c0_98 = arith.constant 0 : index
      %110 = vector.load %arg25[%c1_97, %c0_98] : memref<188x20xf32, #tpu.memory_space<vmem>>, vector<171x20xf32>
      %c16_99 = arith.constant 16 : index
      %c0_100 = arith.constant 0 : index
      %111 = vector.load %arg25[%c16_99, %c0_100] : memref<188x20xf32, #tpu.memory_space<vmem>>, vector<171x20xf32>
      %c17_101 = arith.constant 17 : index
      %c0_102 = arith.constant 0 : index
      %112 = vector.load %arg25[%c17_101, %c0_102] : memref<188x20xf32, #tpu.memory_space<vmem>>, vector<171x20xf32>
      %113 = arith.maximumf %109, %110 : vector<171x20xf32>
      %114 = arith.maximumf %111, %112 : vector<171x20xf32>
      %115 = arith.maximumf %113, %114 : vector<171x20xf32>
      %116 = arith.truncf %115 : vector<171x20xf32> to vector<171x20xbf16>
      %cst_103 = arith.constant dense<0.000000e+00> : vector<64x20xf32>
      %117 = tpu.matmul %108, %116, %cst_103 {dimension_numbers = #tpu.dot_dimension_numbers<[1], [0], [0], [1], [0, 0, 1, 1], [], []>} : vector<64x171xbf16>, vector<171x20xbf16>, vector<64x20xf32> -> vector<64x20xf32>
      %c0_104 = arith.constant 0 : index
      %c0_105 = arith.constant 0 : index
      %118 = vector.load %arg26[%c0_104, %c0_105] : memref<64x20xf32, #tpu.memory_space<vmem>>, vector<64x20xf32>
      tpu.vector_store %arg26[%c0_104, %c0_105], %117 {strides = array<i32>} : memref<64x20xf32, #tpu.memory_space<vmem>>, vector<64x20xf32>,
      %c0_106 = arith.constant 0 : index
      %c0_107 = arith.constant 0 : index
      %119 = vector.load %arg26[%c0_106, %c0_107] : memref<64x20xf32, #tpu.memory_space<vmem>>, vector<28x20xf32>
      %120 = arith.truncf %119 : vector<28x20xf32> to vector<28x20xbf16>
      %c0_108 = arith.constant 0 : index
      %c0_109 = arith.constant 0 : index
      %121 = vector.load %arg27[%c0_108, %c0_109] : memref<28x320xbf16, #tpu.memory_space<vmem>>, vector<28x20xbf16>
      tpu.vector_store %arg27[%c0_108, %c0_109], %120 {strides = array<i32>} : memref<28x320xbf16, #tpu.memory_space<vmem>>, vector<28x20xbf16>,
      %c1_110 = arith.constant 1 : index
      %c0_111 = arith.constant 0 : index
      %122 = vector.load %arg26[%c1_110, %c0_111] : memref<64x20xf32, #tpu.memory_space<vmem>>, vector<28x20xf32>
      %123 = arith.truncf %122 : vector<28x20xf32> to vector<28x20xbf16>
      %c0_112 = arith.constant 0 : index
      %c20_113 = arith.constant 20 : index
      %124 = vector.load %arg27[%c0_112, %c20_113] : memref<28x320xbf16, #tpu.memory_space<vmem>>, vector<28x20xbf16>
      tpu.vector_store %arg27[%c0_112, %c20_113], %123 {strides = array<i32>} : memref<28x320xbf16, #tpu.memory_space<vmem>>, vector<28x20xbf16>,
      %c2_114 = arith.constant 2 : index
      %c0_115 = arith.constant 0 : index
      %125 = vector.load %arg26[%c2_114, %c0_115] : memref<64x20xf32, #tpu.memory_space<vmem>>, vector<28x20xf32>
      %126 = arith.truncf %125 : vector<28x20xf32> to vector<28x20xbf16>
      %c0_116 = arith.constant 0 : index
      %c40_117 = arith.constant 40 : index
      %127 = vector.load %arg27[%c0_116, %c40_117] : memref<28x320xbf16, #tpu.memory_space<vmem>>, vector<28x20xbf16>
      tpu.vector_store %arg27[%c0_116, %c40_117], %126 {strides = array<i32>} : memref<28x320xbf16, #tpu.memory_space<vmem>>, vector<28x20xbf16>,
      %c3_118 = arith.constant 3 : index
      %c0_119 = arith.constant 0 : index
      %128 = vector.load %arg26[%c3_118, %c0_119] : memref<64x20xf32, #tpu.memory_space<vmem>>, vector<28x20xf32>
      %129 = arith.truncf %128 : vector<28x20xf32> to vector<28x20xbf16>
      %c0_120 = arith.constant 0 : index
      %c60_121 = arith.constant 60 : index
      %130 = vector.load %arg27[%c0_120, %c60_121] : memref<28x320xbf16, #tpu.memory_space<vmem>>, vector<28x20xbf16>
      tpu.vector_store %arg27[%c0_120, %c60_121], %129 {strides = array<i32>} : memref<28x320xbf16, #tpu.memory_space<vmem>>, vector<28x20xbf16>,
      %c8 = arith.constant 8 : index
      %c0_122 = arith.constant 0 : index
      %131 = vector.load %arg26[%c8, %c0_122] : memref<64x20xf32, #tpu.memory_space<vmem>>, vector<28x20xf32>
      %132 = arith.truncf %131 : vector<28x20xf32> to vector<28x20xbf16>
      %c0_123 = arith.constant 0 : index
      %c80_124 = arith.constant 80 : index
      %133 = vector.load %arg27[%c0_123, %c80_124] : memref<28x320xbf16, #tpu.memory_space<vmem>>, vector<28x20xbf16>
      tpu.vector_store %arg27[%c0_123, %c80_124], %132 {strides = array<i32>} : memref<28x320xbf16, #tpu.memory_space<vmem>>, vector<28x20xbf16>,
      %c9 = arith.constant 9 : index
      %c0_125 = arith.constant 0 : index
      %134 = vector.load %arg26[%c9, %c0_125] : memref<64x20xf32, #tpu.memory_space<vmem>>, vector<28x20xf32>
      %135 = arith.truncf %134 : vector<28x20xf32> to vector<28x20xbf16>
      %c0_126 = arith.constant 0 : index
      %c100_127 = arith.constant 100 : index
      %136 = vector.load %arg27[%c0_126, %c100_127] : memref<28x320xbf16, #tpu.memory_space<vmem>>, vector<28x20xbf16>
      tpu.vector_store %arg27[%c0_126, %c100_127], %135 {strides = array<i32>} : memref<28x320xbf16, #tpu.memory_space<vmem>>, vector<28x20xbf16>,
      %c10_128 = arith.constant 10 : index
      %c0_129 = arith.constant 0 : index
      %137 = vector.load %arg26[%c10_128, %c0_129] : memref<64x20xf32, #tpu.memory_space<vmem>>, vector<28x20xf32>
      %138 = arith.truncf %137 : vector<28x20xf32> to vector<28x20xbf16>
      %c0_130 = arith.constant 0 : index
      %c120_131 = arith.constant 120 : index
      %139 = vector.load %arg27[%c0_130, %c120_131] : memref<28x320xbf16, #tpu.memory_space<vmem>>, vector<28x20xbf16>
      tpu.vector_store %arg27[%c0_130, %c120_131], %138 {strides = array<i32>} : memref<28x320xbf16, #tpu.memory_space<vmem>>, vector<28x20xbf16>,
      %c11 = arith.constant 11 : index
      %c0_132 = arith.constant 0 : index
      %140 = vector.load %arg26[%c11, %c0_132] : memref<64x20xf32, #tpu.memory_space<vmem>>, vector<28x20xf32>
      %141 = arith.truncf %140 : vector<28x20xf32> to vector<28x20xbf16>
      %c0_133 = arith.constant 0 : index
      %c140_134 = arith.constant 140 : index
      %142 = vector.load %arg27[%c0_133, %c140_134] : memref<28x320xbf16, #tpu.memory_space<vmem>>, vector<28x20xbf16>
      tpu.vector_store %arg27[%c0_133, %c140_134], %141 {strides = array<i32>} : memref<28x320xbf16, #tpu.memory_space<vmem>>, vector<28x20xbf16>,
      %c16_135 = arith.constant 16 : index
      %c0_136 = arith.constant 0 : index
      %143 = vector.load %arg26[%c16_135, %c0_136] : memref<64x20xf32, #tpu.memory_space<vmem>>, vector<28x20xf32>
      %144 = arith.truncf %143 : vector<28x20xf32> to vector<28x20xbf16>
      %c0_137 = arith.constant 0 : index
      %c160 = arith.constant 160 : index
      %145 = vector.load %arg27[%c0_137, %c160] : memref<28x320xbf16, #tpu.memory_space<vmem>>, vector<28x20xbf16>
      tpu.vector_store %arg27[%c0_137, %c160], %144 {strides = array<i32>} : memref<28x320xbf16, #tpu.memory_space<vmem>>, vector<28x20xbf16>,
      %c17_138 = arith.constant 17 : index
      %c0_139 = arith.constant 0 : index
      %146 = vector.load %arg26[%c17_138, %c0_139] : memref<64x20xf32, #tpu.memory_space<vmem>>, vector<28x20xf32>
      %147 = arith.truncf %146 : vector<28x20xf32> to vector<28x20xbf16>
      %c0_140 = arith.constant 0 : index
      %c180 = arith.constant 180 : index
      %148 = vector.load %arg27[%c0_140, %c180] : memref<28x320xbf16, #tpu.memory_space<vmem>>, vector<28x20xbf16>
      tpu.vector_store %arg27[%c0_140, %c180], %147 {strides = array<i32>} : memref<28x320xbf16, #tpu.memory_space<vmem>>, vector<28x20xbf16>,
      %c18_141 = arith.constant 18 : index
      %c0_142 = arith.constant 0 : index
      %149 = vector.load %arg26[%c18_141, %c0_142] : memref<64x20xf32, #tpu.memory_space<vmem>>, vector<28x20xf32>
      %150 = arith.truncf %149 : vector<28x20xf32> to vector<28x20xbf16>
      %c0_143 = arith.constant 0 : index
      %c200 = arith.constant 200 : index
      %151 = vector.load %arg27[%c0_143, %c200] : memref<28x320xbf16, #tpu.memory_space<vmem>>, vector<28x20xbf16>
      tpu.vector_store %arg27[%c0_143, %c200], %150 {strides = array<i32>} : memref<28x320xbf16, #tpu.memory_space<vmem>>, vector<28x20xbf16>,
      %c19_144 = arith.constant 19 : index
      %c0_145 = arith.constant 0 : index
      %152 = vector.load %arg26[%c19_144, %c0_145] : memref<64x20xf32, #tpu.memory_space<vmem>>, vector<28x20xf32>
      %153 = arith.truncf %152 : vector<28x20xf32> to vector<28x20xbf16>
      %c0_146 = arith.constant 0 : index
      %c220 = arith.constant 220 : index
      %154 = vector.load %arg27[%c0_146, %c220] : memref<28x320xbf16, #tpu.memory_space<vmem>>, vector<28x20xbf16>
      tpu.vector_store %arg27[%c0_146, %c220], %153 {strides = array<i32>} : memref<28x320xbf16, #tpu.memory_space<vmem>>, vector<28x20xbf16>,
      %c24 = arith.constant 24 : index
      %c0_147 = arith.constant 0 : index
      %155 = vector.load %arg26[%c24, %c0_147] : memref<64x20xf32, #tpu.memory_space<vmem>>, vector<28x20xf32>
      %156 = arith.truncf %155 : vector<28x20xf32> to vector<28x20xbf16>
      %c0_148 = arith.constant 0 : index
      %c240 = arith.constant 240 : index
      %157 = vector.load %arg27[%c0_148, %c240] : memref<28x320xbf16, #tpu.memory_space<vmem>>, vector<28x20xbf16>
      tpu.vector_store %arg27[%c0_148, %c240], %156 {strides = array<i32>} : memref<28x320xbf16, #tpu.memory_space<vmem>>, vector<28x20xbf16>,
      %c25 = arith.constant 25 : index
      %c0_149 = arith.constant 0 : index
      %158 = vector.load %arg26[%c25, %c0_149] : memref<64x20xf32, #tpu.memory_space<vmem>>, vector<28x20xf32>
      %159 = arith.truncf %158 : vector<28x20xf32> to vector<28x20xbf16>
      %c0_150 = arith.constant 0 : index
      %c260 = arith.constant 260 : index
      %160 = vector.load %arg27[%c0_150, %c260] : memref<28x320xbf16, #tpu.memory_space<vmem>>, vector<28x20xbf16>
      tpu.vector_store %arg27[%c0_150, %c260], %159 {strides = array<i32>} : memref<28x320xbf16, #tpu.memory_space<vmem>>, vector<28x20xbf16>,
      %c26 = arith.constant 26 : index
      %c0_151 = arith.constant 0 : index
      %161 = vector.load %arg26[%c26, %c0_151] : memref<64x20xf32, #tpu.memory_space<vmem>>, vector<28x20xf32>
      %162 = arith.truncf %161 : vector<28x20xf32> to vector<28x20xbf16>
      %c0_152 = arith.constant 0 : index
      %c280 = arith.constant 280 : index
      %163 = vector.load %arg27[%c0_152, %c280] : memref<28x320xbf16, #tpu.memory_space<vmem>>, vector<28x20xbf16>
      tpu.vector_store %arg27[%c0_152, %c280], %162 {strides = array<i32>} : memref<28x320xbf16, #tpu.memory_space<vmem>>, vector<28x20xbf16>,
      %c27 = arith.constant 27 : index
      %c0_153 = arith.constant 0 : index
      %164 = vector.load %arg26[%c27, %c0_153] : memref<64x20xf32, #tpu.memory_space<vmem>>, vector<28x20xf32>
      %165 = arith.truncf %164 : vector<28x20xf32> to vector<28x20xbf16>
      %c0_154 = arith.constant 0 : index
      %c300 = arith.constant 300 : index
      %166 = vector.load %arg27[%c0_154, %c300] : memref<28x320xbf16, #tpu.memory_space<vmem>>, vector<28x20xbf16>
      tpu.vector_store %arg27[%c0_154, %c300], %165 {strides = array<i32>} : memref<28x320xbf16, #tpu.memory_space<vmem>>, vector<28x20xbf16>,
      %c0_155 = arith.constant 0 : index
      %c0_156 = arith.constant 0 : index
      %167 = vector.load %arg27[%c0_155, %c0_156] : memref<28x320xbf16, #tpu.memory_space<vmem>>, vector<28x320xbf16>
      %c0_157 = arith.constant 0 : index
      %c0_158 = arith.constant 0 : index
      %168 = vector.load %arg8[%c0_157, %c0_158] : memref<320x40xbf16, #tpu.memory_space<vmem>>, vector<320x40xbf16>
      %cst_159 = arith.constant dense<0.000000e+00> : vector<28x40xf32>
      %169 = tpu.matmul %167, %168, %cst_159 {dimension_numbers = #tpu.dot_dimension_numbers<[1], [0], [0], [1], [0, 0, 1, 1], [], []>} : vector<28x320xbf16>, vector<320x40xbf16>, vector<28x40xf32> -> vector<28x40xf32>
      %c0_160 = arith.constant 0 : index
      %c0_161 = arith.constant 0 : index
      %170 = vector.load %arg9[%c0_160, %c0_161] : memref<1x40xf32, #tpu.memory_space<vmem>>, vector<1x40xf32>
      %171 = vector.broadcast %170 : vector<1x40xf32> to vector<28x40xf32>
      %172 = arith.addf %169, %171 : vector<28x40xf32>
      %cst_162 = arith.constant 0.000000e+00 : f32
      %173 = vector.broadcast %cst_162 : f32 to vector<28x40xf32>
      %174 = arith.maximumf %172, %173 : vector<28x40xf32>
      %c0_163 = arith.constant 0 : index
      %c0_164 = arith.constant 0 : index
      %175 = vector.load %arg28[%c0_163, %c0_164] : memref<28x40xf32, #tpu.memory_space<vmem>>, vector<28x40xf32>
      tpu.vector_store %arg28[%c0_163, %c0_164], %174 {strides = array<i32>} : memref<28x40xf32, #tpu.memory_space<vmem>>, vector<28x40xf32>,
      %c0_165 = arith.constant 0 : index
      %c0_166 = arith.constant 0 : index
      %176 = vector.load %arg10[%c0_165, %c0_166] : memref<36x19xbf16, #tpu.memory_space<vmem>>, vector<36x19xbf16>
      %c0_167 = arith.constant 0 : index
      %c0_168 = arith.constant 0 : index
      %177 = vector.load %arg28[%c0_167, %c0_168] : memref<28x40xf32, #tpu.memory_space<vmem>>, vector<19x40xf32>
      %c1_169 = arith.constant 1 : index
      %c0_170 = arith.constant 0 : index
      %178 = vector.load %arg28[%c1_169, %c0_170] : memref<28x40xf32, #tpu.memory_space<vmem>>, vector<19x40xf32>
      %c8_171 = arith.constant 8 : index
      %c0_172 = arith.constant 0 : index
      %179 = vector.load %arg28[%c8_171, %c0_172] : memref<28x40xf32, #tpu.memory_space<vmem>>, vector<19x40xf32>
      %c9_173 = arith.constant 9 : index
      %c0_174 = arith.constant 0 : index
      %180 = vector.load %arg28[%c9_173, %c0_174] : memref<28x40xf32, #tpu.memory_space<vmem>>, vector<19x40xf32>
      %181 = arith.maximumf %177, %178 : vector<19x40xf32>
      %182 = arith.maximumf %179, %180 : vector<19x40xf32>
      %183 = arith.maximumf %181, %182 : vector<19x40xf32>
      %184 = arith.truncf %183 : vector<19x40xf32> to vector<19x40xbf16>
      %cst_175 = arith.constant dense<0.000000e+00> : vector<36x40xf32>
      %185 = tpu.matmul %176, %184, %cst_175 {dimension_numbers = #tpu.dot_dimension_numbers<[1], [0], [0], [1], [0, 0, 1, 1], [], []>} : vector<36x19xbf16>, vector<19x40xbf16>, vector<36x40xf32> -> vector<36x40xf32>
      %c0_176 = arith.constant 0 : index
      %c0_177 = arith.constant 0 : index
      %186 = vector.load %arg29[%c0_176, %c0_177] : memref<36x40xf32, #tpu.memory_space<vmem>>, vector<36x40xf32>
      tpu.vector_store %arg29[%c0_176, %c0_177], %185 {strides = array<i32>} : memref<36x40xf32, #tpu.memory_space<vmem>>, vector<36x40xf32>,
      %c0_178 = arith.constant 0 : index
      %c0_179 = arith.constant 0 : index
      %187 = vector.load %arg29[%c0_178, %c0_179] : memref<36x40xf32, #tpu.memory_space<vmem>>, vector<8x40xf32>
      %188 = arith.truncf %187 : vector<8x40xf32> to vector<8x40xbf16>
      %c0_180 = arith.constant 0 : index
      %c0_181 = arith.constant 0 : index
      %189 = vector.load %arg30[%c0_180, %c0_181] : memref<8x640xbf16, #tpu.memory_space<vmem>>, vector<8x40xbf16>
      tpu.vector_store %arg30[%c0_180, %c0_181], %188 {strides = array<i32>} : memref<8x640xbf16, #tpu.memory_space<vmem>>, vector<8x40xbf16>,
      %c1_182 = arith.constant 1 : index
      %c0_183 = arith.constant 0 : index
      %190 = vector.load %arg29[%c1_182, %c0_183] : memref<36x40xf32, #tpu.memory_space<vmem>>, vector<8x40xf32>
      %191 = arith.truncf %190 : vector<8x40xf32> to vector<8x40xbf16>
      %c0_184 = arith.constant 0 : index
      %c40_185 = arith.constant 40 : index
      %192 = vector.load %arg30[%c0_184, %c40_185] : memref<8x640xbf16, #tpu.memory_space<vmem>>, vector<8x40xbf16>
      tpu.vector_store %arg30[%c0_184, %c40_185], %191 {strides = array<i32>} : memref<8x640xbf16, #tpu.memory_space<vmem>>, vector<8x40xbf16>,
      %c2_186 = arith.constant 2 : index
      %c0_187 = arith.constant 0 : index
      %193 = vector.load %arg29[%c2_186, %c0_187] : memref<36x40xf32, #tpu.memory_space<vmem>>, vector<8x40xf32>
      %194 = arith.truncf %193 : vector<8x40xf32> to vector<8x40xbf16>
      %c0_188 = arith.constant 0 : index
      %c80_189 = arith.constant 80 : index
      %195 = vector.load %arg30[%c0_188, %c80_189] : memref<8x640xbf16, #tpu.memory_space<vmem>>, vector<8x40xbf16>
      tpu.vector_store %arg30[%c0_188, %c80_189], %194 {strides = array<i32>} : memref<8x640xbf16, #tpu.memory_space<vmem>>, vector<8x40xbf16>,
      %c3_190 = arith.constant 3 : index
      %c0_191 = arith.constant 0 : index
      %196 = vector.load %arg29[%c3_190, %c0_191] : memref<36x40xf32, #tpu.memory_space<vmem>>, vector<8x40xf32>
      %197 = arith.truncf %196 : vector<8x40xf32> to vector<8x40xbf16>
      %c0_192 = arith.constant 0 : index
      %c120_193 = arith.constant 120 : index
      %198 = vector.load %arg30[%c0_192, %c120_193] : memref<8x640xbf16, #tpu.memory_space<vmem>>, vector<8x40xbf16>
      tpu.vector_store %arg30[%c0_192, %c120_193], %197 {strides = array<i32>} : memref<8x640xbf16, #tpu.memory_space<vmem>>, vector<8x40xbf16>,
      %c6 = arith.constant 6 : index
      %c0_194 = arith.constant 0 : index
      %199 = vector.load %arg29[%c6, %c0_194] : memref<36x40xf32, #tpu.memory_space<vmem>>, vector<8x40xf32>
      %200 = arith.truncf %199 : vector<8x40xf32> to vector<8x40xbf16>
      %c0_195 = arith.constant 0 : index
      %c160_196 = arith.constant 160 : index
      %201 = vector.load %arg30[%c0_195, %c160_196] : memref<8x640xbf16, #tpu.memory_space<vmem>>, vector<8x40xbf16>
      tpu.vector_store %arg30[%c0_195, %c160_196], %200 {strides = array<i32>} : memref<8x640xbf16, #tpu.memory_space<vmem>>, vector<8x40xbf16>,
      %c7 = arith.constant 7 : index
      %c0_197 = arith.constant 0 : index
      %202 = vector.load %arg29[%c7, %c0_197] : memref<36x40xf32, #tpu.memory_space<vmem>>, vector<8x40xf32>
      %203 = arith.truncf %202 : vector<8x40xf32> to vector<8x40xbf16>
      %c0_198 = arith.constant 0 : index
      %c200_199 = arith.constant 200 : index
      %204 = vector.load %arg30[%c0_198, %c200_199] : memref<8x640xbf16, #tpu.memory_space<vmem>>, vector<8x40xbf16>
      tpu.vector_store %arg30[%c0_198, %c200_199], %203 {strides = array<i32>} : memref<8x640xbf16, #tpu.memory_space<vmem>>, vector<8x40xbf16>,
      %c8_200 = arith.constant 8 : index
      %c0_201 = arith.constant 0 : index
      %205 = vector.load %arg29[%c8_200, %c0_201] : memref<36x40xf32, #tpu.memory_space<vmem>>, vector<8x40xf32>
      %206 = arith.truncf %205 : vector<8x40xf32> to vector<8x40xbf16>
      %c0_202 = arith.constant 0 : index
      %c240_203 = arith.constant 240 : index
      %207 = vector.load %arg30[%c0_202, %c240_203] : memref<8x640xbf16, #tpu.memory_space<vmem>>, vector<8x40xbf16>
      tpu.vector_store %arg30[%c0_202, %c240_203], %206 {strides = array<i32>} : memref<8x640xbf16, #tpu.memory_space<vmem>>, vector<8x40xbf16>,
      %c9_204 = arith.constant 9 : index
      %c0_205 = arith.constant 0 : index
      %208 = vector.load %arg29[%c9_204, %c0_205] : memref<36x40xf32, #tpu.memory_space<vmem>>, vector<8x40xf32>
      %209 = arith.truncf %208 : vector<8x40xf32> to vector<8x40xbf16>
      %c0_206 = arith.constant 0 : index
      %c280_207 = arith.constant 280 : index
      %210 = vector.load %arg30[%c0_206, %c280_207] : memref<8x640xbf16, #tpu.memory_space<vmem>>, vector<8x40xbf16>
      tpu.vector_store %arg30[%c0_206, %c280_207], %209 {strides = array<i32>} : memref<8x640xbf16, #tpu.memory_space<vmem>>, vector<8x40xbf16>,
      %c12 = arith.constant 12 : index
      %c0_208 = arith.constant 0 : index
      %211 = vector.load %arg29[%c12, %c0_208] : memref<36x40xf32, #tpu.memory_space<vmem>>, vector<8x40xf32>
      %212 = arith.truncf %211 : vector<8x40xf32> to vector<8x40xbf16>
      %c0_209 = arith.constant 0 : index
      %c320 = arith.constant 320 : index
      %213 = vector.load %arg30[%c0_209, %c320] : memref<8x640xbf16, #tpu.memory_space<vmem>>, vector<8x40xbf16>
      tpu.vector_store %arg30[%c0_209, %c320], %212 {strides = array<i32>} : memref<8x640xbf16, #tpu.memory_space<vmem>>, vector<8x40xbf16>,
      %c13 = arith.constant 13 : index
      %c0_210 = arith.constant 0 : index
      %214 = vector.load %arg29[%c13, %c0_210] : memref<36x40xf32, #tpu.memory_space<vmem>>, vector<8x40xf32>
      %215 = arith.truncf %214 : vector<8x40xf32> to vector<8x40xbf16>
      %c0_211 = arith.constant 0 : index
      %c360 = arith.constant 360 : index
      %216 = vector.load %arg30[%c0_211, %c360] : memref<8x640xbf16, #tpu.memory_space<vmem>>, vector<8x40xbf16>
      tpu.vector_store %arg30[%c0_211, %c360], %215 {strides = array<i32>} : memref<8x640xbf16, #tpu.memory_space<vmem>>, vector<8x40xbf16>,
      %c14 = arith.constant 14 : index
      %c0_212 = arith.constant 0 : index
      %217 = vector.load %arg29[%c14, %c0_212] : memref<36x40xf32, #tpu.memory_space<vmem>>, vector<8x40xf32>
      %218 = arith.truncf %217 : vector<8x40xf32> to vector<8x40xbf16>
      %c0_213 = arith.constant 0 : index
      %c400 = arith.constant 400 : index
      %219 = vector.load %arg30[%c0_213, %c400] : memref<8x640xbf16, #tpu.memory_space<vmem>>, vector<8x40xbf16>
      tpu.vector_store %arg30[%c0_213, %c400], %218 {strides = array<i32>} : memref<8x640xbf16, #tpu.memory_space<vmem>>, vector<8x40xbf16>,
      %c15 = arith.constant 15 : index
      %c0_214 = arith.constant 0 : index
      %220 = vector.load %arg29[%c15, %c0_214] : memref<36x40xf32, #tpu.memory_space<vmem>>, vector<8x40xf32>
      %221 = arith.truncf %220 : vector<8x40xf32> to vector<8x40xbf16>
      %c0_215 = arith.constant 0 : index
      %c440 = arith.constant 440 : index
      %222 = vector.load %arg30[%c0_215, %c440] : memref<8x640xbf16, #tpu.memory_space<vmem>>, vector<8x40xbf16>
      tpu.vector_store %arg30[%c0_215, %c440], %221 {strides = array<i32>} : memref<8x640xbf16, #tpu.memory_space<vmem>>, vector<8x40xbf16>,
      %c18_216 = arith.constant 18 : index
      %c0_217 = arith.constant 0 : index
      %223 = vector.load %arg29[%c18_216, %c0_217] : memref<36x40xf32, #tpu.memory_space<vmem>>, vector<8x40xf32>
      %224 = arith.truncf %223 : vector<8x40xf32> to vector<8x40xbf16>
      %c0_218 = arith.constant 0 : index
      %c480 = arith.constant 480 : index
      %225 = vector.load %arg30[%c0_218, %c480] : memref<8x640xbf16, #tpu.memory_space<vmem>>, vector<8x40xbf16>
      tpu.vector_store %arg30[%c0_218, %c480], %224 {strides = array<i32>} : memref<8x640xbf16, #tpu.memory_space<vmem>>, vector<8x40xbf16>,
      %c19_219 = arith.constant 19 : index
      %c0_220 = arith.constant 0 : index
      %226 = vector.load %arg29[%c19_219, %c0_220] : memref<36x40xf32, #tpu.memory_space<vmem>>, vector<8x40xf32>
      %227 = arith.truncf %226 : vector<8x40xf32> to vector<8x40xbf16>
      %c0_221 = arith.constant 0 : index
      %c520 = arith.constant 520 : index
      %228 = vector.load %arg30[%c0_221, %c520] : memref<8x640xbf16, #tpu.memory_space<vmem>>, vector<8x40xbf16>
      tpu.vector_store %arg30[%c0_221, %c520], %227 {strides = array<i32>} : memref<8x640xbf16, #tpu.memory_space<vmem>>, vector<8x40xbf16>,
      %c20_222 = arith.constant 20 : index
      %c0_223 = arith.constant 0 : index
      %229 = vector.load %arg29[%c20_222, %c0_223] : memref<36x40xf32, #tpu.memory_space<vmem>>, vector<8x40xf32>
      %230 = arith.truncf %229 : vector<8x40xf32> to vector<8x40xbf16>
      %c0_224 = arith.constant 0 : index
      %c560 = arith.constant 560 : index
      %231 = vector.load %arg30[%c0_224, %c560] : memref<8x640xbf16, #tpu.memory_space<vmem>>, vector<8x40xbf16>
      tpu.vector_store %arg30[%c0_224, %c560], %230 {strides = array<i32>} : memref<8x640xbf16, #tpu.memory_space<vmem>>, vector<8x40xbf16>,
      %c21 = arith.constant 21 : index
      %c0_225 = arith.constant 0 : index
      %232 = vector.load %arg29[%c21, %c0_225] : memref<36x40xf32, #tpu.memory_space<vmem>>, vector<8x40xf32>
      %233 = arith.truncf %232 : vector<8x40xf32> to vector<8x40xbf16>
      %c0_226 = arith.constant 0 : index
      %c600 = arith.constant 600 : index
      %234 = vector.load %arg30[%c0_226, %c600] : memref<8x640xbf16, #tpu.memory_space<vmem>>, vector<8x40xbf16>
      tpu.vector_store %arg30[%c0_226, %c600], %233 {strides = array<i32>} : memref<8x640xbf16, #tpu.memory_space<vmem>>, vector<8x40xbf16>,
      %c0_227 = arith.constant 0 : index
      %c0_228 = arith.constant 0 : index
      %235 = vector.load %arg30[%c0_227, %c0_228] : memref<8x640xbf16, #tpu.memory_space<vmem>>, vector<8x640xbf16>
      %c0_229 = arith.constant 0 : index
      %c0_230 = arith.constant 0 : index
      %236 = vector.load %arg11[%c0_229, %c0_230] : memref<640x200xbf16, #tpu.memory_space<vmem>>, vector<640x200xbf16>
      %cst_231 = arith.constant dense<0.000000e+00> : vector<8x200xf32>
      %237 = tpu.matmul %235, %236, %cst_231 {dimension_numbers = #tpu.dot_dimension_numbers<[1], [0], [0], [1], [0, 0, 1, 1], [], []>} : vector<8x640xbf16>, vector<640x200xbf16>, vector<8x200xf32> -> vector<8x200xf32>
      %c0_232 = arith.constant 0 : index
      %c0_233 = arith.constant 0 : index
      %238 = vector.load %arg12[%c0_232, %c0_233] : memref<1x200xf32, #tpu.memory_space<vmem>>, vector<1x200xf32>
      %239 = vector.broadcast %238 : vector<1x200xf32> to vector<8x200xf32>
      %240 = arith.addf %237, %239 : vector<8x200xf32>
      %cst_234 = arith.constant 0.000000e+00 : f32
      %241 = vector.broadcast %cst_234 : f32 to vector<8x200xf32>
      %242 = arith.maximumf %240, %241 : vector<8x200xf32>
      %c0_235 = arith.constant 0 : index
      %c0_236 = arith.constant 0 : index
      %243 = vector.load %arg31[%c0_235, %c0_236] : memref<8x200xf32, #tpu.memory_space<vmem>>, vector<8x200xf32>
      tpu.vector_store %arg31[%c0_235, %c0_236], %242 {strides = array<i32>} : memref<8x200xf32, #tpu.memory_space<vmem>>, vector<8x200xf32>,
      %c0_237 = arith.constant 0 : index
      %c0_238 = arith.constant 0 : index
      %244 = vector.load %arg31[%c0_237, %c0_238] : memref<8x200xf32, #tpu.memory_space<vmem>>, vector<1x200xf32>
      %c1_239 = arith.constant 1 : index
      %c0_240 = arith.constant 0 : index
      %245 = vector.load %arg31[%c1_239, %c0_240] : memref<8x200xf32, #tpu.memory_space<vmem>>, vector<1x200xf32>
      %c6_241 = arith.constant 6 : index
      %c0_242 = arith.constant 0 : index
      %246 = vector.load %arg31[%c6_241, %c0_242] : memref<8x200xf32, #tpu.memory_space<vmem>>, vector<1x200xf32>
      %c7_243 = arith.constant 7 : index
      %c0_244 = arith.constant 0 : index
      %247 = vector.load %arg31[%c7_243, %c0_244] : memref<8x200xf32, #tpu.memory_space<vmem>>, vector<1x200xf32>
      %248 = arith.maximumf %244, %245 : vector<1x200xf32>
      %249 = arith.maximumf %246, %247 : vector<1x200xf32>
      %250 = arith.maximumf %248, %249 : vector<1x200xf32>
      %251 = arith.index_cast %28 : i32 to index
      %c0_245 = arith.constant 0 : index
      %252 = vector.load %arg32[%251, %c0_245] : memref<8x200xf32, #tpu.memory_space<vmem>>, vector<1x200xf32>
      tpu.vector_store %arg32[%251, %c0_245], %250 {strides = array<i32>} : memref<8x200xf32, #tpu.memory_space<vmem>>, vector<1x200xf32>,
    }
    %c8_i32_0 = arith.constant 8 : i32
    %c0 = arith.constant 0 : index
    %c0_1 = arith.constant 0 : index
    %1 = vector.load %arg32[%c0, %c0_1] : memref<8x200xf32, #tpu.memory_space<vmem>>, vector<8x200xf32>
    %2 = arith.truncf %1 : vector<8x200xf32> to vector<8x200xbf16>
    %c0_2 = arith.constant 0 : index
    %c0_3 = arith.constant 0 : index
    %3 = vector.load %arg13[%c0_2, %c0_3] : memref<200x120xbf16, #tpu.memory_space<vmem>>, vector<200x120xbf16>
    %cst = arith.constant dense<0.000000e+00> : vector<8x120xf32>
    %4 = tpu.matmul %2, %3, %cst {dimension_numbers = #tpu.dot_dimension_numbers<[1], [0], [0], [1], [0, 0, 1, 1], [], []>} : vector<8x200xbf16>, vector<200x120xbf16>, vector<8x120xf32> -> vector<8x120xf32>
    %c0_4 = arith.constant 0 : index
    %c0_5 = arith.constant 0 : index
    %5 = vector.load %arg14[%c0_4, %c0_5] : memref<1x120xf32, #tpu.memory_space<vmem>>, vector<1x120xf32>
    %6 = vector.broadcast %5 : vector<1x120xf32> to vector<8x120xf32>
    %7 = arith.addf %4, %6 : vector<8x120xf32>
    %8 = arith.truncf %7 : vector<8x120xf32> to vector<8x120xbf16>
    %c0_6 = arith.constant 0 : index
    %c0_7 = arith.constant 0 : index
    %9 = vector.load %arg15[%c0_6, %c0_7] : memref<120x60xbf16, #tpu.memory_space<vmem>>, vector<120x60xbf16>
    %cst_8 = arith.constant dense<0.000000e+00> : vector<8x60xf32>
    %10 = tpu.matmul %8, %9, %cst_8 {dimension_numbers = #tpu.dot_dimension_numbers<[1], [0], [0], [1], [0, 0, 1, 1], [], []>} : vector<8x120xbf16>, vector<120x60xbf16>, vector<8x60xf32> -> vector<8x60xf32>
    %c0_9 = arith.constant 0 : index
    %c0_10 = arith.constant 0 : index
    %11 = vector.load %arg16[%c0_9, %c0_10] : memref<1x60xf32, #tpu.memory_space<vmem>>, vector<1x60xf32>
    %12 = vector.broadcast %11 : vector<1x60xf32> to vector<8x60xf32>
    %13 = arith.addf %10, %12 : vector<8x60xf32>
    %14 = arith.truncf %13 : vector<8x60xf32> to vector<8x60xbf16>
    %c0_11 = arith.constant 0 : index
    %c0_12 = arith.constant 0 : index
    %15 = vector.load %arg17[%c0_11, %c0_12] : memref<60x30xbf16, #tpu.memory_space<vmem>>, vector<60x30xbf16>
    %cst_13 = arith.constant dense<0.000000e+00> : vector<8x30xf32>
    %16 = tpu.matmul %14, %15, %cst_13 {dimension_numbers = #tpu.dot_dimension_numbers<[1], [0], [0], [1], [0, 0, 1, 1], [], []>} : vector<8x60xbf16>, vector<60x30xbf16>, vector<8x30xf32> -> vector<8x30xf32>
    %c0_14 = arith.constant 0 : index
    %c0_15 = arith.constant 0 : index
    %17 = vector.load %arg18[%c0_14, %c0_15] : memref<1x30xf32, #tpu.memory_space<vmem>>, vector<1x30xf32>
    %18 = vector.broadcast %17 : vector<1x30xf32> to vector<8x30xf32>
    %19 = arith.addf %16, %18 : vector<8x30xf32>
    %20 = arith.truncf %19 : vector<8x30xf32> to vector<8x30xbf16>
    %c0_16 = arith.constant 0 : index
    %c0_17 = arith.constant 0 : index
    %21 = vector.load %arg19[%c0_16, %c0_17] : memref<30x10xbf16, #tpu.memory_space<vmem>>, vector<30x10xbf16>
    %cst_18 = arith.constant dense<0.000000e+00> : vector<8x10xf32>
    %22 = tpu.matmul %20, %21, %cst_18 {dimension_numbers = #tpu.dot_dimension_numbers<[1], [0], [0], [1], [0, 0, 1, 1], [], []>} : vector<8x30xbf16>, vector<30x10xbf16>, vector<8x10xf32> -> vector<8x10xf32>
    %c0_19 = arith.constant 0 : index
    %c0_20 = arith.constant 0 : index
    %23 = vector.load %arg20[%c0_19, %c0_20] : memref<1x10xf32, #tpu.memory_space<vmem>>, vector<1x10xf32>
    %24 = vector.broadcast %23 : vector<1x10xf32> to vector<8x10xf32>
    %25 = arith.addf %22, %24 : vector<8x10xf32>
    %c0_21 = arith.constant 0 : index
    %c0_22 = arith.constant 0 : index
    %26 = vector.load %arg21[%c0_21, %c0_22] : memref<8x10xf32, #tpu.memory_space<vmem>>, vector<8x10xf32>
    tpu.vector_store %arg21[%c0_21, %c0_22], %25 {strides = array<i32>} : memref<8x10xf32, #tpu.memory_space<vmem>>, vector<8x10xf32>,
    return
  }
  func.func @transform_0(%arg0: i32) -> (i32, i32, i32) {
    %c0_i32 = arith.constant 0 : i32
    %c0_i32_0 = arith.constant 0 : i32
    %c0_i32_1 = arith.constant 0 : i32
    return %arg0, %c0_i32, %c0_i32_0 : i32, i32, i32
  }
  func.func @transform_1(%arg0: i32) -> (i32, i32) {
    %c0_i32 = arith.constant 0 : i32
    %c0_i32_0 = arith.constant 0 : i32
    %c0_i32_1 = arith.constant 0 : i32
    return %c0_i32, %c0_i32_0 : i32, i32
  }
  func.func @transform_2(%arg0: i32) -> (i32, i32) {
    %c0_i32 = arith.constant 0 : i32
    %c0_i32_0 = arith.constant 0 : i32
    %c0_i32_1 = arith.constant 0 : i32
    return %c0_i32, %c0_i32_0 : i32, i32
  }
  func.func @transform_3(%arg0: i32) -> (i32, i32) {
    %c0_i32 = arith.constant 0 : i32
    %c0_i32_0 = arith.constant 0 : i32
    %c0_i32_1 = arith.constant 0 : i32
    return %c0_i32, %c0_i32_0 : i32, i32
  }
  func.func @transform_4(%arg0: i32) -> (i32, i32) {
    %c0_i32 = arith.constant 0 : i32
    %c0_i32_0 = arith.constant 0 : i32
    %c0_i32_1 = arith.constant 0 : i32
    return %c0_i32, %c0_i32_0 : i32, i32
  }
  func.func @transform_5(%arg0: i32) -> (i32, i32) {
    %c0_i32 = arith.constant 0 : i32
    %c0_i32_0 = arith.constant 0 : i32
    %c0_i32_1 = arith.constant 0 : i32
    return %c0_i32, %c0_i32_0 : i32, i32
  }
  func.func @transform_6(%arg0: i32) -> (i32, i32) {
    %c0_i32 = arith.constant 0 : i32
    %c0_i32_0 = arith.constant 0 : i32
    %c0_i32_1 = arith.constant 0 : i32
    return %c0_i32, %c0_i32_0 : i32, i32
  }
  func.func @transform_7(%arg0: i32) -> (i32, i32) {
    %c0_i32 = arith.constant 0 : i32
    %c0_i32_0 = arith.constant 0 : i32
    %c0_i32_1 = arith.constant 0 : i32
    return %c0_i32, %c0_i32_0 : i32, i32
  }
  func.func @transform_8(%arg0: i32) -> (i32, i32) {
    %c0_i32 = arith.constant 0 : i32
    %c0_i32_0 = arith.constant 0 : i32
    %c0_i32_1 = arith.constant 0 : i32
    return %c0_i32, %c0_i32_0 : i32, i32
  }
  func.func @transform_9(%arg0: i32) -> (i32, i32) {
    %c0_i32 = arith.constant 0 : i32
    %c0_i32_0 = arith.constant 0 : i32
    %c0_i32_1 = arith.constant 0 : i32
    return %c0_i32, %c0_i32_0 : i32, i32
  }
  func.func @transform_10(%arg0: i32) -> (i32, i32) {
    %c0_i32 = arith.constant 0 : i32
    %c0_i32_0 = arith.constant 0 : i32
    %c0_i32_1 = arith.constant 0 : i32
    return %c0_i32, %c0_i32_0 : i32, i32
  }
  func.func @transform_11(%arg0: i32) -> (i32, i32) {
    %c0_i32 = arith.constant 0 : i32
    %c0_i32_0 = arith.constant 0 : i32
    %c0_i32_1 = arith.constant 0 : i32
    return %c0_i32, %c0_i32_0 : i32, i32
  }
  func.func @transform_12(%arg0: i32) -> (i32, i32) {
    %c0_i32 = arith.constant 0 : i32
    %c0_i32_0 = arith.constant 0 : i32
    %c0_i32_1 = arith.constant 0 : i32
    return %c0_i32, %c0_i32_0 : i32, i32
  }
  func.func @transform_13(%arg0: i32) -> (i32, i32) {
    %c0_i32 = arith.constant 0 : i32
    %c0_i32_0 = arith.constant 0 : i32
    %c0_i32_1 = arith.constant 0 : i32
    return %c0_i32, %c0_i32_0 : i32, i32
  }
  func.func @transform_14(%arg0: i32) -> (i32, i32) {
    %c0_i32 = arith.constant 0 : i32
    %c0_i32_0 = arith.constant 0 : i32
    %c0_i32_1 = arith.constant 0 : i32
    return %c0_i32, %c0_i32_0 : i32, i32
  }
  func.func @transform_15(%arg0: i32) -> (i32, i32) {
    %c0_i32 = arith.constant 0 : i32
    %c0_i32_0 = arith.constant 0 : i32
    %c0_i32_1 = arith.constant 0 : i32
    return %c0_i32, %c0_i32_0 : i32, i32
  }
  func.func @transform_16(%arg0: i32) -> (i32, i32) {
    %c0_i32 = arith.constant 0 : i32
    %c0_i32_0 = arith.constant 0 : i32
    %c0_i32_1 = arith.constant 0 : i32
    return %c0_i32, %c0_i32_0 : i32, i32
  }
  func.func @transform_17(%arg0: i32) -> (i32, i32) {
    %c0_i32 = arith.constant 0 : i32
    %c0_i32_0 = arith.constant 0 : i32
    %c0_i32_1 = arith.constant 0 : i32
    return %c0_i32, %c0_i32_0 : i32, i32
  }
  func.func @transform_18(%arg0: i32) -> (i32, i32) {
    %c0_i32 = arith.constant 0 : i32
    %c0_i32_0 = arith.constant 0 : i32
    %c0_i32_1 = arith.constant 0 : i32
    return %c0_i32, %c0_i32_0 : i32, i32
  }
  func.func @transform_19(%arg0: i32) -> (i32, i32) {
    %c0_i32 = arith.constant 0 : i32
    %c0_i32_0 = arith.constant 0 : i32
    %c0_i32_1 = arith.constant 0 : i32
    return %c0_i32, %c0_i32_0 : i32, i32
  }
  func.func @transform_20(%arg0: i32) -> (i32, i32) {
    %c0_i32 = arith.constant 0 : i32
    %c0_i32_0 = arith.constant 0 : i32
    return %arg0, %c0_i32 : i32, i32
  }
}

</mosaic_0001>

<llo_original>
// kernel: seq_net_2_forward.1
$region0: #{seq_net_2_forward.1}
  #allocation0 [shape = 'u32[]', space=smem, size = 0x4, offset = 0x4, fixed_abs, tag = 'smem constant byte address 0x4 - core index']
  #allocation1 [shape = 'u32[144,128]{1,0:T(1,128)}', space=vmem, size = 0x12000, scoped, tag = 'internal scratch']
  #allocation2 [shape = 'f32[892,10]{1,0:T(8,128)}', space=vmem, size = 0x70000, scoped, tag = 'scratch operand']
  #allocation3 [shape = 'f32[256,10]{1,0:T(8,128)}', space=vmem, size = 0x20000, scoped, tag = 'scratch operand']
  #allocation4 [shape = 'bf16[188,160]{1,0:T(8,128)(2,1)}', space=vmem, size = 0x18000, scoped, tag = 'scratch operand']
  #allocation5 [shape = 'f32[188,20]{1,0:T(8,128)}', space=vmem, size = 0x18000, scoped, tag = 'scratch operand']
  #allocation6 [shape = 'f32[64,20]{1,0:T(8,128)}', space=vmem, size = 0x8000, scoped, tag = 'scratch operand']
  #allocation7 [shape = 'bf16[28,320]{1,0:T(8,128)(2,1)}', space=vmem, size = 0x6000, scoped, tag = 'scratch operand']
  #allocation8 [shape = 'f32[28,40]{1,0:T(8,128)}', space=vmem, size = 0x4000, scoped, tag = 'scratch operand']
  #allocation9 [shape = 'f32[36,40]{1,0:T(8,128)}', space=vmem, size = 0x5000, scoped, tag = 'scratch operand']
  #allocation10 [shape = 'bf16[8,640]{1,0:T(8,128)(2,1)}', space=vmem, size = 0x2800, scoped, tag = 'scratch operand']
  #allocation11 [shape = 'f32[8,200]{1,0:T(8,128)}', space=vmem, size = 0x2000, scoped, tag = 'scratch operand']
  #allocation12 [shape = 'f32[8,200]{1,0:T(8,128)}', space=vmem, size = 0x2000, scoped, tag = 'scratch operand']
  %s0 = inlined_call_operand.vmem [shape: bf16[16,892,16], index: 0, kind: input, shape index: {}]
  %s1 = inlined_call_operand.vmem [shape: bf16[16,10], index: 1, kind: input, shape index: {}]
  %s2 = inlined_call_operand.vmem [shape: f32[1,10], index: 2, kind: input, shape index: {}]
  %s3 = inlined_call_operand.vmem [shape: bf16[256,859], index: 3, kind: input, shape index: {}]
  %s4 = inlined_call_operand.vmem [shape: bf16[160,20], index: 4, kind: input, shape index: {}]
  %s5 = inlined_call_operand.vmem [shape: f32[1,20], index: 5, kind: input, shape index: {}]
  %s6 = inlined_call_operand.vmem [shape: bf16[64,171], index: 6, kind: input, shape index: {}]
  %s7 = inlined_call_operand.vmem [shape: bf16[320,40], index: 7, kind: input, shape index: {}]
  %s8 = inlined_call_operand.vmem [shape: f32[1,40], index: 8, kind: input, shape index: {}]
  %s9 = inlined_call_operand.vmem [shape: bf16[36,19], index: 9, kind: input, shape index: {}]
  %s10 = inlined_call_operand.vmem [shape: bf16[640,200], index: 10, kind: input, shape index: {}]
  %s11 = inlined_call_operand.vmem [shape: f32[1,200], index: 11, kind: input, shape index: {}]
  %s12 = inlined_call_operand.vmem [shape: bf16[200,120], index: 12, kind: input, shape index: {}]
  %s13 = inlined_call_operand.vmem [shape: f32[1,120], index: 13, kind: input, shape index: {}]
  %s14 = inlined_call_operand.vmem [shape: bf16[120,60], index: 14, kind: input, shape index: {}]
  %s15 = inlined_call_operand.vmem [shape: f32[1,60], index: 15, kind: input, shape index: {}]
  %s16 = inlined_call_operand.vmem [shape: bf16[60,30], index: 16, kind: input, shape index: {}]
  %s17 = inlined_call_operand.vmem [shape: f32[1,30], index: 17, kind: input, shape index: {}]
  %s18 = inlined_call_operand.vmem [shape: bf16[30,10], index: 18, kind: input, shape index: {}]
  %s19 = inlined_call_operand.vmem [shape: f32[1,10], index: 19, kind: input, shape index: {}]
  %s20 = inlined_call_operand.hbm [shape: f32[16,10], index: 20, kind: output, shape index: {}]
  %s21 = sld [smem:[#allocation0]]
  $region120: #{seq_net_2_forward.1} parent=0
    _
  %s23 = ssub.s32 1, %s21
  %s24 = scalar_select 0, %s23, %s21
  $region1: #{seq_net_2_forward.1} parent=0
    #allocation13 [shape = 'u8[8192]{0}', space=vmem, size = 0x2000, scoped, tag = 'output window, operand 0']
    #allocation14 [shape = 's32[2]{0}', space=sflag, size = 0x8, scoped, tag = 'scoped memory for seq_net_2_forward.1']
    %25 = vsyncpa [#allocation14], 0
    %s26 = scalar_lea.sflag [#allocation14], 1
    %27 = vsyncpa %s26, 0
    loop: start=0, step=1, limit=4
    $region2: #{seq_net_2_forward.1} parent=1 // loop_pre_header
      _
    $region3: #{seq_net_2_forward.1} parent=1 // loop_header
      %s29 = sphi 0, %s33
      %p30 = scmp.ge.s32.totalorder %s29, 4
      %s39 = sphi 0, %s41
      %s42 = sphi 0, %s39
      %s43 = sphi 0, %s42
      %s59 = sphi 0, %s43
      %s63 = sphi 0, %s63
      %s65 = sphi 0, %s63
      %s66 = sphi 0, %s65
      %s80 = sphi 0, %s66
      %s84 = sphi 0, %s84
      %s86 = sphi 0, %s84
      %s87 = sphi 0, %s86
      %s101 = sphi 0, %s87
      %s105 = sphi 0, %s105
      %s107 = sphi 0, %s105
      %s108 = sphi 0, %s107
      %s122 = sphi 0, %s108
      %s126 = sphi 0, %s126
      %s128 = sphi 0, %s126
      %s129 = sphi 0, %s128
      %s143 = sphi 0, %s129
      %s147 = sphi 0, %s147
      %s149 = sphi 0, %s147
      %s150 = sphi 0, %s149
      %s164 = sphi 0, %s150
      %s168 = sphi 0, %s168
      %s170 = sphi 0, %s168
      %s171 = sphi 0, %s170
      %s185 = sphi 0, %s171
      %s189 = sphi 0, %s189
      %s191 = sphi 0, %s189
      %s192 = sphi 0, %s191
      %s206 = sphi 0, %s192
      %s210 = sphi 0, %s210
      %s212 = sphi 0, %s210
      %s213 = sphi 0, %s212
      %s227 = sphi 0, %s213
      %s231 = sphi 0, %s231
      %s233 = sphi 0, %s231
      %s234 = sphi 0, %s233
      %s248 = sphi 0, %s234
      %s252 = sphi 0, %s252
      %s254 = sphi 0, %s252
      %s255 = sphi 0, %s254
      %s269 = sphi 0, %s255
      %s273 = sphi 0, %s273
      %s275 = sphi 0, %s273
      %s276 = sphi 0, %s275
      %s290 = sphi 0, %s276
      %s294 = sphi 0, %s294
      %s296 = sphi 0, %s294
      %s297 = sphi 0, %s296
      %s311 = sphi 0, %s297
      %s315 = sphi 0, %s315
      %s317 = sphi 0, %s315
      %s318 = sphi 0, %s317
      %s332 = sphi 0, %s318
      %s336 = sphi 0, %s336
      %s338 = sphi 0, %s336
      %s339 = sphi 0, %s338
      %s353 = sphi 0, %s339
      %s357 = sphi 0, %s357
      %s359 = sphi 0, %s357
      %s360 = sphi 0, %s359
      %s374 = sphi 0, %s360
      %s378 = sphi 0, %s378
      %s380 = sphi 0, %s378
      %s381 = sphi 0, %s380
      %s395 = sphi 0, %s381
      %s399 = sphi 0, %s399
      %s401 = sphi 0, %s399
      %s402 = sphi 0, %s401
      %s416 = sphi 0, %s402
      %s420 = sphi 0, %s420
      %s422 = sphi 0, %s420
      %s423 = sphi 0, %s422
      %s437 = sphi 0, %s423
      %s441 = sphi 0, %s441
      %s443 = sphi 0, %s441
      %s444 = sphi 0, %s443
      %s458 = sphi 0, %s444
      %s464 = sphi 0, %s466
      %s467 = sphi 0, %s464
      %s468 = sphi 0, %s467
      %s484 = sphi 0, %s468
    $region4: #{seq_net_2_forward.1} parent=1 // loop_header_branch
      %32 = sbr.rel (%p30) target = $region8
    $region5: #{seq_net_2_forward.1} parent=1 // loop_body
      %s34 = ssub.s32 %s29, 1
      %s35 = ssub.s32 %s29, 2
      %s36 = sadd.s32 %s29, 1
      %s37 = ssub.s32 %s29, %s36
      %p38 = scmp.eq.s32.totalorder %s37, 0
      %s40 = sadd.s32 %s39, 1
      %s41 = scalar_select %p38, %s39, %s40
      %p44 = pneg %p38
      %p45 = scmp.eq.s32.totalorder %s29, 1
      %p46 = por %p44, %p45
      %p47 = scmp.ne.s32.totalorder %s39, %s42
      %p48 = scmp.eq.s32.totalorder %s29, 0
      %p49 = por %p47, %p48
      %p50 = scmp.ne.s32.totalorder %s39, %s42
      %p51 = scmp.eq.s32.totalorder %s34, 1
      %p52 = por %p50, %p51
      %p53 = scmp.ne.s32.totalorder %s42, %s43
      %p54 = scmp.eq.s32.totalorder %s34, 0
      %p55 = por %p53, %p54
      %p56 = scmp.ne.s32.totalorder %s42, %s43
      %p57 = scmp.eq.s32.totalorder %s35, 1
      %p58 = por %p56, %p57
      %p60 = scmp.ne.s32.totalorder %s43, %s59
      %p61 = scmp.eq.s32.totalorder %s35, 0
      %p62 = por %p60, %p61
      %s64 = sadd.s32 %s63, 1
      %p67 = scmp.eq.s32.totalorder %s29, 1
      %p68 = scmp.ne.s32.totalorder %s63, %s65
      %p69 = scmp.eq.s32.totalorder %s29, 0
      %p70 = por %p68, %p69
      %p71 = scmp.ne.s32.totalorder %s63, %s65
      %p72 = scmp.eq.s32.totalorder %s34, 1
      %p73 = por %p71, %p72
      %p74 = scmp.ne.s32.totalorder %s65, %s66
      %p75 = scmp.eq.s32.totalorder %s34, 0
      %p76 = por %p74, %p75
      %p77 = scmp.ne.s32.totalorder %s65, %s66
      %p78 = scmp.eq.s32.totalorder %s35, 1
      %p79 = por %p77, %p78
      %p81 = scmp.ne.s32.totalorder %s66, %s80
      %p82 = scmp.eq.s32.totalorder %s35, 0
      %p83 = por %p81, %p82
      %s85 = sadd.s32 %s84, 1
      %p88 = scmp.eq.s32.totalorder %s29, 1
      %p89 = scmp.ne.s32.totalorder %s84, %s86
      %p90 = scmp.eq.s32.totalorder %s29, 0
      %p91 = por %p89, %p90
      %p92 = scmp.ne.s32.totalorder %s84, %s86
      %p93 = scmp.eq.s32.totalorder %s34, 1
      %p94 = por %p92, %p93
      %p95 = scmp.ne.s32.totalorder %s86, %s87
      %p96 = scmp.eq.s32.totalorder %s34, 0
      %p97 = por %p95, %p96
      %p98 = scmp.ne.s32.totalorder %s86, %s87
      %p99 = scmp.eq.s32.totalorder %s35, 1
      %p100 = por %p98, %p99
      %p102 = scmp.ne.s32.totalorder %s87, %s101
      %p103 = scmp.eq.s32.totalorder %s35, 0
      %p104 = por %p102, %p103
      %s106 = sadd.s32 %s105, 1
      %p109 = scmp.eq.s32.totalorder %s29, 1
      %p110 = scmp.ne.s32.totalorder %s105, %s107
      %p111 = scmp.eq.s32.totalorder %s29, 0
      %p112 = por %p110, %p111
      %p113 = scmp.ne.s32.totalorder %s105, %s107
      %p114 = scmp.eq.s32.totalorder %s34, 1
      %p115 = por %p113, %p114
      %p116 = scmp.ne.s32.totalorder %s107, %s108
      %p117 = scmp.eq.s32.totalorder %s34, 0
      %p118 = por %p116, %p117
      %p119 = scmp.ne.s32.totalorder %s107, %s108
      %p120 = scmp.eq.s32.totalorder %s35, 1
      %p121 = por %p119, %p120
      %p123 = scmp.ne.s32.totalorder %s108, %s122
      %p124 = scmp.eq.s32.totalorder %s35, 0
      %p125 = por %p123, %p124
      %s127 = sadd.s32 %s126, 1
      %p130 = scmp.eq.s32.totalorder %s29, 1
      %p131 = scmp.ne.s32.totalorder %s126, %s128
      %p132 = scmp.eq.s32.totalorder %s29, 0
      %p133 = por %p131, %p132
      %p134 = scmp.ne.s32.totalorder %s126, %s128
      %p135 = scmp.eq.s32.totalorder %s34, 1
      %p136 = por %p134, %p135
      %p137 = scmp.ne.s32.totalorder %s128, %s129
      %p138 = scmp.eq.s32.totalorder %s34, 0
      %p139 = por %p137, %p138
      %p140 = scmp.ne.s32.totalorder %s128, %s129
      %p141 = scmp.eq.s32.totalorder %s35, 1
      %p142 = por %p140, %p141
      %p144 = scmp.ne.s32.totalorder %s129, %s143
      %p145 = scmp.eq.s32.totalorder %s35, 0
      %p146 = por %p144, %p145
      %s148 = sadd.s32 %s147, 1
      %p151 = scmp.eq.s32.totalorder %s29, 1
      %p152 = scmp.ne.s32.totalorder %s147, %s149
      %p153 = scmp.eq.s32.totalorder %s29, 0
      %p154 = por %p152, %p153
      %p155 = scmp.ne.s32.totalorder %s147, %s149
      %p156 = scmp.eq.s32.totalorder %s34, 1
      %p157 = por %p155, %p156
      %p158 = scmp.ne.s32.totalorder %s149, %s150
      %p159 = scmp.eq.s32.totalorder %s34, 0
      %p160 = por %p158, %p159
      %p161 = scmp.ne.s32.totalorder %s149, %s150
      %p162 = scmp.eq.s32.totalorder %s35, 1
      %p163 = por %p161, %p162
      %p165 = scmp.ne.s32.totalorder %s150, %s164
      %p166 = scmp.eq.s32.totalorder %s35, 0
      %p167 = por %p165, %p166
      %s169 = sadd.s32 %s168, 1
      %p172 = scmp.eq.s32.totalorder %s29, 1
      %p173 = scmp.ne.s32.totalorder %s168, %s170
      %p174 = scmp.eq.s32.totalorder %s29, 0
      %p175 = por %p173, %p174
      %p176 = scmp.ne.s32.totalorder %s168, %s170
      %p177 = scmp.eq.s32.totalorder %s34, 1
      %p178 = por %p176, %p177
      %p179 = scmp.ne.s32.totalorder %s170, %s171
      %p180 = scmp.eq.s32.totalorder %s34, 0
      %p181 = por %p179, %p180
      %p182 = scmp.ne.s32.totalorder %s170, %s171
      %p183 = scmp.eq.s32.totalorder %s35, 1
      %p184 = por %p182, %p183
      %p186 = scmp.ne.s32.totalorder %s171, %s185
      %p187 = scmp.eq.s32.totalorder %s35, 0
      %p188 = por %p186, %p187
      %s190 = sadd.s32 %s189, 1
      %p193 = scmp.eq.s32.totalorder %s29, 1
      %p194 = scmp.ne.s32.totalorder %s189, %s191
      %p195 = scmp.eq.s32.totalorder %s29, 0
      %p196 = por %p194, %p195
      %p197 = scmp.ne.s32.totalorder %s189, %s191
      %p198 = scmp.eq.s32.totalorder %s34, 1
      %p199 = por %p197, %p198
      %p200 = scmp.ne.s32.totalorder %s191, %s192
      %p201 = scmp.eq.s32.totalorder %s34, 0
      %p202 = por %p200, %p201
      %p203 = scmp.ne.s32.totalorder %s191, %s192
      %p204 = scmp.eq.s32.totalorder %s35, 1
      %p205 = por %p203, %p204
      %p207 = scmp.ne.s32.totalorder %s192, %s206
      %p208 = scmp.eq.s32.totalorder %s35, 0
      %p209 = por %p207, %p208
      %s211 = sadd.s32 %s210, 1
      %p214 = scmp.eq.s32.totalorder %s29, 1
      %p215 = scmp.ne.s32.totalorder %s210, %s212
      %p216 = scmp.eq.s32.totalorder %s29, 0
      %p217 = por %p215, %p216
      %p218 = scmp.ne.s32.totalorder %s210, %s212
      %p219 = scmp.eq.s32.totalorder %s34, 1
      %p220 = por %p218, %p219
      %p221 = scmp.ne.s32.totalorder %s212, %s213
      %p222 = scmp.eq.s32.totalorder %s34, 0
      %p223 = por %p221, %p222
      %p224 = scmp.ne.s32.totalorder %s212, %s213
      %p225 = scmp.eq.s32.totalorder %s35, 1
      %p226 = por %p224, %p225
      %p228 = scmp.ne.s32.totalorder %s213, %s227
      %p229 = scmp.eq.s32.totalorder %s35, 0
      %p230 = por %p228, %p229
      %s232 = sadd.s32 %s231, 1
      %p235 = scmp.eq.s32.totalorder %s29, 1
      %p236 = scmp.ne.s32.totalorder %s231, %s233
      %p237 = scmp.eq.s32.totalorder %s29, 0
      %p238 = por %p236, %p237
      %p239 = scmp.ne.s32.totalorder %s231, %s233
      %p240 = scmp.eq.s32.totalorder %s34, 1
      %p241 = por %p239, %p240
      %p242 = scmp.ne.s32.totalorder %s233, %s234
      %p243 = scmp.eq.s32.totalorder %s34, 0
      %p244 = por %p242, %p243
      %p245 = scmp.ne.s32.totalorder %s233, %s234
      %p246 = scmp.eq.s32.totalorder %s35, 1
      %p247 = por %p245, %p246
      %p249 = scmp.ne.s32.totalorder %s234, %s248
      %p250 = scmp.eq.s32.totalorder %s35, 0
      %p251 = por %p249, %p250
      %s253 = sadd.s32 %s252, 1
      %p256 = scmp.eq.s32.totalorder %s29, 1
      %p257 = scmp.ne.s32.totalorder %s252, %s254
      %p258 = scmp.eq.s32.totalorder %s29, 0
      %p259 = por %p257, %p258
      %p260 = scmp.ne.s32.totalorder %s252, %s254
      %p261 = scmp.eq.s32.totalorder %s34, 1
      %p262 = por %p260, %p261
      %p263 = scmp.ne.s32.totalorder %s254, %s255
      %p264 = scmp.eq.s32.totalorder %s34, 0
      %p265 = por %p263, %p264
      %p266 = scmp.ne.s32.totalorder %s254, %s255
      %p267 = scmp.eq.s32.totalorder %s35, 1
      %p268 = por %p266, %p267
      %p270 = scmp.ne.s32.totalorder %s255, %s269
      %p271 = scmp.eq.s32.totalorder %s35, 0
      %p272 = por %p270, %p271
      %s274 = sadd.s32 %s273, 1
      %p277 = scmp.eq.s32.totalorder %s29, 1
      %p278 = scmp.ne.s32.totalorder %s273, %s275
      %p279 = scmp.eq.s32.totalorder %s29, 0
      %p280 = por %p278, %p279
      %p281 = scmp.ne.s32.totalorder %s273, %s275
      %p282 = scmp.eq.s32.totalorder %s34, 1
      %p283 = por %p281, %p282
      %p284 = scmp.ne.s32.totalorder %s275, %s276
      %p285 = scmp.eq.s32.totalorder %s34, 0
      %p286 = por %p284, %p285
      %p287 = scmp.ne.s32.totalorder %s275, %s276
      %p288 = scmp.eq.s32.totalorder %s35, 1
      %p289 = por %p287, %p288
      %p291 = scmp.ne.s32.totalorder %s276, %s290
      %p292 = scmp.eq.s32.totalorder %s35, 0
      %p293 = por %p291, %p292
      %s295 = sadd.s32 %s294, 1
      %p298 = scmp.eq.s32.totalorder %s29, 1
      %p299 = scmp.ne.s32.totalorder %s294, %s296
      %p300 = scmp.eq.s32.totalorder %s29, 0
      %p301 = por %p299, %p300
      %p302 = scmp.ne.s32.totalorder %s294, %s296
      %p303 = scmp.eq.s32.totalorder %s34, 1
      %p304 = por %p302, %p303
      %p305 = scmp.ne.s32.totalorder %s296, %s297
      %p306 = scmp.eq.s32.totalorder %s34, 0
      %p307 = por %p305, %p306
      %p308 = scmp.ne.s32.totalorder %s296, %s297
      %p309 = scmp.eq.s32.totalorder %s35, 1
      %p310 = por %p308, %p309
      %p312 = scmp.ne.s32.totalorder %s297, %s311
      %p313 = scmp.eq.s32.totalorder %s35, 0
      %p314 = por %p312, %p313
      %s316 = sadd.s32 %s315, 1
      %p319 = scmp.eq.s32.totalorder %s29, 1
      %p320 = scmp.ne.s32.totalorder %s315, %s317
      %p321 = scmp.eq.s32.totalorder %s29, 0
      %p322 = por %p320, %p321
      %p323 = scmp.ne.s32.totalorder %s315, %s317
      %p324 = scmp.eq.s32.totalorder %s34, 1
      %p325 = por %p323, %p324
      %p326 = scmp.ne.s32.totalorder %s317, %s318
      %p327 = scmp.eq.s32.totalorder %s34, 0
      %p328 = por %p326, %p327
      %p329 = scmp.ne.s32.totalorder %s317, %s318
      %p330 = scmp.eq.s32.totalorder %s35, 1
      %p331 = por %p329, %p330
      %p333 = scmp.ne.s32.totalorder %s318, %s332
      %p334 = scmp.eq.s32.totalorder %s35, 0
      %p335 = por %p333, %p334
      %s337 = sadd.s32 %s336, 1
      %p340 = scmp.eq.s32.totalorder %s29, 1
      %p341 = scmp.ne.s32.totalorder %s336, %s338
      %p342 = scmp.eq.s32.totalorder %s29, 0
      %p343 = por %p341, %p342
      %p344 = scmp.ne.s32.totalorder %s336, %s338
      %p345 = scmp.eq.s32.totalorder %s34, 1
      %p346 = por %p344, %p345
      %p347 = scmp.ne.s32.totalorder %s338, %s339
      %p348 = scmp.eq.s32.totalorder %s34, 0
      %p349 = por %p347, %p348
      %p350 = scmp.ne.s32.totalorder %s338, %s339
      %p351 = scmp.eq.s32.totalorder %s35, 1
      %p352 = por %p350, %p351
      %p354 = scmp.ne.s32.totalorder %s339, %s353
      %p355 = scmp.eq.s32.totalorder %s35, 0
      %p356 = por %p354, %p355
      %s358 = sadd.s32 %s357, 1
      %p361 = scmp.eq.s32.totalorder %s29, 1
      %p362 = scmp.ne.s32.totalorder %s357, %s359
      %p363 = scmp.eq.s32.totalorder %s29, 0
      %p364 = por %p362, %p363
      %p365 = scmp.ne.s32.totalorder %s357, %s359
      %p366 = scmp.eq.s32.totalorder %s34, 1
      %p367 = por %p365, %p366
      %p368 = scmp.ne.s32.totalorder %s359, %s360
      %p369 = scmp.eq.s32.totalorder %s34, 0
      %p370 = por %p368, %p369
      %p371 = scmp.ne.s32.totalorder %s359, %s360
      %p372 = scmp.eq.s32.totalorder %s35, 1
      %p373 = por %p371, %p372
      %p375 = scmp.ne.s32.totalorder %s360, %s374
      %p376 = scmp.eq.s32.totalorder %s35, 0
      %p377 = por %p375, %p376
      %s379 = sadd.s32 %s378, 1
      %p382 = scmp.eq.s32.totalorder %s29, 1
      %p383 = scmp.ne.s32.totalorder %s378, %s380
      %p384 = scmp.eq.s32.totalorder %s29, 0
      %p385 = por %p383, %p384
      %p386 = scmp.ne.s32.totalorder %s378, %s380
      %p387 = scmp.eq.s32.totalorder %s34, 1
      %p388 = por %p386, %p387
      %p389 = scmp.ne.s32.totalorder %s380, %s381
      %p390 = scmp.eq.s32.totalorder %s34, 0
      %p391 = por %p389, %p390
      %p392 = scmp.ne.s32.totalorder %s380, %s381
      %p393 = scmp.eq.s32.totalorder %s35, 1
      %p394 = por %p392, %p393
      %p396 = scmp.ne.s32.totalorder %s381, %s395
      %p397 = scmp.eq.s32.totalorder %s35, 0
      %p398 = por %p396, %p397
      %s400 = sadd.s32 %s399, 1
      %p403 = scmp.eq.s32.totalorder %s29, 1
      %p404 = scmp.ne.s32.totalorder %s399, %s401
      %p405 = scmp.eq.s32.totalorder %s29, 0
      %p406 = por %p404, %p405
      %p407 = scmp.ne.s32.totalorder %s399, %s401
      %p408 = scmp.eq.s32.totalorder %s34, 1
      %p409 = por %p407, %p408
      %p410 = scmp.ne.s32.totalorder %s401, %s402
      %p411 = scmp.eq.s32.totalorder %s34, 0
      %p412 = por %p410, %p411
      %p413 = scmp.ne.s32.totalorder %s401, %s402
      %p414 = scmp.eq.s32.totalorder %s35, 1
      %p415 = por %p413, %p414
      %p417 = scmp.ne.s32.totalorder %s402, %s416
      %p418 = scmp.eq.s32.totalorder %s35, 0
      %p419 = por %p417, %p418
      %s421 = sadd.s32 %s420, 1
      %p424 = scmp.eq.s32.totalorder %s29, 1
      %p425 = scmp.ne.s32.totalorder %s420, %s422
      %p426 = scmp.eq.s32.totalorder %s29, 0
      %p427 = por %p425, %p426
      %p428 = scmp.ne.s32.totalorder %s420, %s422
      %p429 = scmp.eq.s32.totalorder %s34, 1
      %p430 = por %p428, %p429
      %p431 = scmp.ne.s32.totalorder %s422, %s423
      %p432 = scmp.eq.s32.totalorder %s34, 0
      %p433 = por %p431, %p432
      %p434 = scmp.ne.s32.totalorder %s422, %s423
      %p435 = scmp.eq.s32.totalorder %s35, 1
      %p436 = por %p434, %p435
      %p438 = scmp.ne.s32.totalorder %s423, %s437
      %p439 = scmp.eq.s32.totalorder %s35, 0
      %p440 = por %p438, %p439
      %s442 = sadd.s32 %s441, 1
      %p445 = scmp.eq.s32.totalorder %s29, 1
      %p446 = scmp.ne.s32.totalorder %s441, %s443
      %p447 = scmp.eq.s32.totalorder %s29, 0
      %p448 = por %p446, %p447
      %p449 = scmp.ne.s32.totalorder %s441, %s443
      %p450 = scmp.eq.s32.totalorder %s34, 1
      %p451 = por %p449, %p450
      %p452 = scmp.ne.s32.totalorder %s443, %s444
      %p453 = scmp.eq.s32.totalorder %s34, 0
      %p454 = por %p452, %p453
      %p455 = scmp.ne.s32.totalorder %s443, %s444
      %p456 = scmp.eq.s32.totalorder %s35, 1
      %p457 = por %p455, %p456
      %p459 = scmp.ne.s32.totalorder %s444, %s458
      %p460 = scmp.eq.s32.totalorder %s35, 0
      %p461 = por %p459, %p460
      %s462 = ssub.s32 %s29, %s36
      %p463 = scmp.eq.s32.totalorder %s462, 0
      %s465 = sadd.s32 %s464, 1
      %s466 = scalar_select %p463, %s464, %s465
      %p469 = pneg %p463
      %p470 = scmp.eq.s32.totalorder %s29, 1
      %p471 = por %p469, %p470
      %p472 = scmp.ne.s32.totalorder %s464, %s467
      %p473 = scmp.eq.s32.totalorder %s29, 0
      %p474 = por %p472, %p473
      %p475 = scmp.ne.s32.totalorder %s464, %s467
      %p476 = scmp.eq.s32.totalorder %s34, 1
      %p477 = por %p475, %p476
      %p478 = scmp.ne.s32.totalorder %s467, %s468
      %p479 = scmp.eq.s32.totalorder %s34, 0
      %p480 = por %p478, %p479
      %p481 = scmp.ne.s32.totalorder %s467, %s468
      %p482 = scmp.eq.s32.totalorder %s35, 1
      %p483 = por %p481, %p482
      %p485 = scmp.ne.s32.totalorder %s468, %s484
      %p486 = scmp.eq.s32.totalorder %s35, 0
      %p487 = por %p485, %p486
      %p488 = scmp.le.s32.totalorder 1, %s29
      %p489 = scmp.lt.s32.totalorder %s29, 3
      %p490 = pnand %p488, %p489
      %p491 = pneg %p490
      // Predicated region
      $region9: #{seq_net_2_forward.1} parent=5 // pred_check
        _
      $region10: #{seq_net_2_forward.1} parent=5 // pred_check_branch
        %493 = sbr.rel (%p490) target = $region12
      $region11: #{seq_net_2_forward.1} parent=5 // pred_region
        %s494 = ssub.s32 %s29, 1
        // Predicated region
        $region13: #{seq_net_2_forward.1} parent=11 // pred_check
          %p495 = pneg %p76
        $region14: #{seq_net_2_forward.1} parent=11 // pred_check_branch
          %497 = sbr.rel (%p495) target = $region16
        $region15: #{seq_net_2_forward.1} parent=11 // pred_region
          _
        $region16: #{seq_net_2_forward.1} parent=11 // pred_fallthru
          _
        // Predicated region
        $region17: #{seq_net_2_forward.1} parent=11 // pred_check
          %p498 = pneg %p97
        $region18: #{seq_net_2_forward.1} parent=11 // pred_check_branch
          %500 = sbr.rel (%p498) target = $region20
        $region19: #{seq_net_2_forward.1} parent=11 // pred_region
          _
        $region20: #{seq_net_2_forward.1} parent=11 // pred_fallthru
          _
        // Predicated region
        $region21: #{seq_net_2_forward.1} parent=11 // pred_check
          %p501 = pneg %p118
        $region22: #{seq_net_2_forward.1} parent=11 // pred_check_branch
          %503 = sbr.rel (%p501) target = $region24
        $region23: #{seq_net_2_forward.1} parent=11 // pred_region
          _
        $region24: #{seq_net_2_forward.1} parent=11 // pred_fallthru
          _
        // Predicated region
        $region25: #{seq_net_2_forward.1} parent=11 // pred_check
          %p504 = pneg %p139
        $region26: #{seq_net_2_forward.1} parent=11 // pred_check_branch
          %506 = sbr.rel (%p504) target = $region28
        $region27: #{seq_net_2_forward.1} parent=11 // pred_region
          _
        $region28: #{seq_net_2_forward.1} parent=11 // pred_fallthru
          _
        // Predicated region
        $region29: #{seq_net_2_forward.1} parent=11 // pred_check
          %p507 = pneg %p160
        $region30: #{seq_net_2_forward.1} parent=11 // pred_check_branch
          %509 = sbr.rel (%p507) target = $region32
        $region31: #{seq_net_2_forward.1} parent=11 // pred_region
          _
        $region32: #{seq_net_2_forward.1} parent=11 // pred_fallthru
          _
        // Predicated region
        $region33: #{seq_net_2_forward.1} parent=11 // pred_check
          %p510 = pneg %p181
        $region34: #{seq_net_2_forward.1} parent=11 // pred_check_branch
          %512 = sbr.rel (%p510) target = $region36
        $region35: #{seq_net_2_forward.1} parent=11 // pred_region
          _
        $region36: #{seq_net_2_forward.1} parent=11 // pred_fallthru
          _
        // Predicated region
        $region37: #{seq_net_2_forward.1} parent=11 // pred_check
          %p513 = pneg %p202
        $region38: #{seq_net_2_forward.1} parent=11 // pred_check_branch
          %515 = sbr.rel (%p513) target = $region40
        $region39: #{seq_net_2_forward.1} parent=11 // pred_region
          _
        $region40: #{seq_net_2_forward.1} parent=11 // pred_fallthru
          _
        // Predicated region
        $region41: #{seq_net_2_forward.1} parent=11 // pred_check
          %p516 = pneg %p223
        $region42: #{seq_net_2_forward.1} parent=11 // pred_check_branch
          %518 = sbr.rel (%p516) target = $region44
        $region43: #{seq_net_2_forward.1} parent=11 // pred_region
          _
        $region44: #{seq_net_2_forward.1} parent=11 // pred_fallthru
          _
        // Predicated region
        $region45: #{seq_net_2_forward.1} parent=11 // pred_check
          %p519 = pneg %p244
        $region46: #{seq_net_2_forward.1} parent=11 // pred_check_branch
          %521 = sbr.rel (%p519) target = $region48
        $region47: #{seq_net_2_forward.1} parent=11 // pred_region
          _
        $region48: #{seq_net_2_forward.1} parent=11 // pred_fallthru
          _
        // Predicated region
        $region49: #{seq_net_2_forward.1} parent=11 // pred_check
          %p522 = pneg %p265
        $region50: #{seq_net_2_forward.1} parent=11 // pred_check_branch
          %524 = sbr.rel (%p522) target = $region52
        $region51: #{seq_net_2_forward.1} parent=11 // pred_region
          _
        $region52: #{seq_net_2_forward.1} parent=11 // pred_fallthru
          _
        // Predicated region
        $region53: #{seq_net_2_forward.1} parent=11 // pred_check
          %p525 = pneg %p286
        $region54: #{seq_net_2_forward.1} parent=11 // pred_check_branch
          %527 = sbr.rel (%p525) target = $region56
        $region55: #{seq_net_2_forward.1} parent=11 // pred_region
          _
        $region56: #{seq_net_2_forward.1} parent=11 // pred_fallthru
          _
        // Predicated region
        $region57: #{seq_net_2_forward.1} parent=11 // pred_check
          %p528 = pneg %p307
        $region58: #{seq_net_2_forward.1} parent=11 // pred_check_branch
          %530 = sbr.rel (%p528) target = $region60
        $region59: #{seq_net_2_forward.1} parent=11 // pred_region
          _
        $region60: #{seq_net_2_forward.1} parent=11 // pred_fallthru
          _
        // Predicated region
        $region61: #{seq_net_2_forward.1} parent=11 // pred_check
          %p531 = pneg %p328
        $region62: #{seq_net_2_forward.1} parent=11 // pred_check_branch
          %533 = sbr.rel (%p531) target = $region64
        $region63: #{seq_net_2_forward.1} parent=11 // pred_region
          _
        $region64: #{seq_net_2_forward.1} parent=11 // pred_fallthru
          _
        // Predicated region
        $region65: #{seq_net_2_forward.1} parent=11 // pred_check
          %p534 = pneg %p349
        $region66: #{seq_net_2_forward.1} parent=11 // pred_check_branch
          %536 = sbr.rel (%p534) target = $region68
        $region67: #{seq_net_2_forward.1} parent=11 // pred_region
          _
        $region68: #{seq_net_2_forward.1} parent=11 // pred_fallthru
          _
        // Predicated region
        $region69: #{seq_net_2_forward.1} parent=11 // pred_check
          %p537 = pneg %p370
        $region70: #{seq_net_2_forward.1} parent=11 // pred_check_branch
          %539 = sbr.rel (%p537) target = $region72
        $region71: #{seq_net_2_forward.1} parent=11 // pred_region
          _
        $region72: #{seq_net_2_forward.1} parent=11 // pred_fallthru
          _
        // Predicated region
        $region73: #{seq_net_2_forward.1} parent=11 // pred_check
          %p540 = pneg %p391
        $region74: #{seq_net_2_forward.1} parent=11 // pred_check_branch
          %542 = sbr.rel (%p540) target = $region76
        $region75: #{seq_net_2_forward.1} parent=11 // pred_region
          _
        $region76: #{seq_net_2_forward.1} parent=11 // pred_fallthru
          _
        // Predicated region
        $region77: #{seq_net_2_forward.1} parent=11 // pred_check
          %p543 = pneg %p412
        $region78: #{seq_net_2_forward.1} parent=11 // pred_check_branch
          %545 = sbr.rel (%p543) target = $region80
        $region79: #{seq_net_2_forward.1} parent=11 // pred_region
          _
        $region80: #{seq_net_2_forward.1} parent=11 // pred_fallthru
          _
        // Predicated region
        $region81: #{seq_net_2_forward.1} parent=11 // pred_check
          %p546 = pneg %p433
        $region82: #{seq_net_2_forward.1} parent=11 // pred_check_branch
          %548 = sbr.rel (%p546) target = $region84
        $region83: #{seq_net_2_forward.1} parent=11 // pred_region
          _
        $region84: #{seq_net_2_forward.1} parent=11 // pred_fallthru
          _
        // Predicated region
        $region85: #{seq_net_2_forward.1} parent=11 // pred_check
          %p549 = pneg %p454
        $region86: #{seq_net_2_forward.1} parent=11 // pred_check_branch
          %551 = sbr.rel (%p549) target = $region88
        $region87: #{seq_net_2_forward.1} parent=11 // pred_region
          _
        $region88: #{seq_net_2_forward.1} parent=11 // pred_fallthru
          _
      $region12: #{seq_net_2_forward.1} parent=5 // pred_fallthru
        _
      %p552 = scmp.lt.s32.totalorder %s29, 2
      // Predicated region
      $region89: #{seq_net_2_forward.1} parent=5 // pred_check
        %p553 = pneg %p552
      $region90: #{seq_net_2_forward.1} parent=5 // pred_check_branch
        %555 = sbr.rel (%p553) target = $region92
      $region91: #{seq_net_2_forward.1} parent=5 // pred_region
        // Predicated region
        $region93: #{seq_net_2_forward.1} parent=91 // pred_check
          %p556 = pneg %p49
        $region94: #{seq_net_2_forward.1} parent=91 // pred_check_branch
          %558 = sbr.rel (%p556) target = $region96
        $region95: #{seq_net_2_forward.1} parent=91 // pred_region
          %s559 = smul.u32 8, %s29
          %p560 = scmp.lt.s32.totalorder %s559, 15
          %s561 = scalar_select %p560, %s559, 15
          %s562 = smul.addr %s561, 112
          %s563 = smul.addr %s562, 4
          %s564 = scalar_lea.vmem %s0, %s563
          %s565 = smul.u32 8, %s29
        $region96: #{seq_net_2_forward.1} parent=91 // pred_fallthru
          _
      $region92: #{seq_net_2_forward.1} parent=5 // pred_fallthru
        _
      %p566 = scmp.le.s32.totalorder 1, %s29
      %p567 = scmp.lt.s32.totalorder %s29, 3
      %p568 = pnand %p566, %p567
      %p569 = pneg %p568
      // Predicated region
      $region97: #{seq_net_2_forward.1} parent=5 // pred_check
        _
      $region98: #{seq_net_2_forward.1} parent=5 // pred_check_branch
        %571 = sbr.rel (%p568) target = $region100
      $region99: #{seq_net_2_forward.1} parent=5 // pred_region
        %s572 = ssub.s32 %s29, 1
        %s573 = smul.u32 8, %s34
        %p574 = scmp.lt.s32.totalorder %s573, 15
        %s575 = scalar_select %p574, %s573, 15
        %s576 = smul.addr %s575, 112
        %s577 = smul.addr %s576, 4
        %s578 = scalar_lea.vmem %s0, %s577
        %p579 = pneg %p55
        %p580 = pneg %p52
        %p581 = pneg %p76
        %p582 = pneg %p73
        %p583 = pneg %p97
        %p584 = pneg %p94
        %p585 = pneg %p118
        %p586 = pneg %p115
        %p587 = pneg %p139
        %p588 = pneg %p136
        %p589 = pneg %p160
        %p590 = pneg %p157
        %p591 = pneg %p181
        %p592 = pneg %p178
        %p593 = pneg %p202
        %p594 = pneg %p199
        %p595 = pneg %p223
        %p596 = pneg %p220
        %p597 = pneg %p244
        %p598 = pneg %p241
        %p599 = pneg %p265
        %p600 = pneg %p262
        %p601 = pneg %p286
        %p602 = pneg %p283
        %p603 = pneg %p307
        %p604 = pneg %p304
        %p605 = pneg %p328
        %p606 = pneg %p325
        %p607 = pneg %p349
        %p608 = pneg %p346
        %p609 = pneg %p370
        %p610 = pneg %p367
        %p611 = pneg %p391
        %p612 = pneg %p388
        %p613 = pneg %p412
        %p614 = pneg %p409
        %p615 = pneg %p433
        %p616 = pneg %p430
        %p617 = pneg %p454
        %p618 = pneg %p451
        %p619 = pneg %p480
        %p620 = pneg %p477
        %s621 = sand.u32 %s467, 1
        %s622 = scalar_lea.sflag [#allocation14], %s621
        %s623 = sand.u32 %s467, 1
        %s624 = smul.addr %s623, 8
        %s625 = scalar_lea.vmem [#allocation13], %s624
        %s626 = smul.u32 8, %s34
        %p627 = scmp.lt.s32.totalorder %s626, 15
        %s628 = scalar_select %p627, %s626, 15
        %s629 = smul.addr %s628, 112
        %s630 = smul.addr %s629, 4
        %s631 = scalar_lea.vmem %s0, %s630
        %s632 = smul.u32 8, %s34
        loop: start=0, step=1, limit=8
        $region101: #{seq_net_2_forward.1} parent=99 // loop_pre_header
          _
        $region102: #{seq_net_2_forward.1} parent=99 // loop_header
          %s635 = sphi 0, %s639
          %p636 = scmp.ge.s32.totalorder %s635, 8
        $region103: #{seq_net_2_forward.1} parent=99 // loop_header_branch
          %638 = sbr.rel (%p636) target = $region107
        $region104: #{seq_net_2_forward.1} parent=99 // loop_body
          %s640 = smul.u32 %s635, 112
          %s641 = smul.addr %s640, 4
          %s642 = scalar_lea.vmem %s631, %s641
          %v643 = vld [vmem:[%s642] sm:$0xf]
          %v644 = vld [vmem:[%s642 + $0x4] sm:$0xf]
          %v645 = vld [vmem:[%s642 + $0x8] sm:$0xf]
          %v646 = vld [vmem:[%s642 + $0xc] sm:$0xf]
          %v647 = vld [vmem:[%s642 + $0x10] sm:$0xf]
          %v648 = vld [vmem:[%s642 + $0x14] sm:$0xf]
          %v649 = vld [vmem:[%s642 + $0x18] sm:$0xf]
          %v650 = vld [vmem:[%s642 + $0x1c] sm:$0xf]
          %v651 = vld [vmem:[%s642 + $0x20] sm:$0xf]
          %v652 = vld [vmem:[%s642 + $0x24] sm:$0xf]
          %v653 = vld [vmem:[%s642 + $0x28] sm:$0xf]
          %v654 = vld [vmem:[%s642 + $0x2c] sm:$0xf]
          %v655 = vld [vmem:[%s642 + $0x30] sm:$0xf]
          %v656 = vld [vmem:[%s642 + $0x34] sm:$0xf]
          %v657 = vld [vmem:[%s642 + $0x38] sm:$0xf]
          %v658 = vld [vmem:[%s642 + $0x3c] sm:$0xf]
          %v659 = vld [vmem:[%s642 + $0x40] sm:$0xf]
          %v660 = vld [vmem:[%s642 + $0x44] sm:$0xf]
          %v661 = vld [vmem:[%s642 + $0x48] sm:$0xf]
          %v662 = vld [vmem:[%s642 + $0x4c] sm:$0xf]
          %v663 = vld [vmem:[%s642 + $0x50] sm:$0xf]
          %v664 = vld [vmem:[%s642 + $0x54] sm:$0xf]
          %v665 = vld [vmem:[%s642 + $0x58] sm:$0xf]
          %v666 = vld [vmem:[%s642 + $0x5c] sm:$0xf]
          %v667 = vld [vmem:[%s642 + $0x60] sm:$0xf]
          %v668 = vld [vmem:[%s642 + $0x64] sm:$0xf]
          %v669 = vld [vmem:[%s642 + $0x68] sm:$0xf]
          %v670 = vld [vmem:[%s642 + $0x6c] sm:$0xf]
          %v671 = vld [vmem:[%s642 + $0x70] sm:$0xf]
          %v672 = vld [vmem:[%s642 + $0x74] sm:$0xf]
          %v673 = vld [vmem:[%s642 + $0x78] sm:$0xf]
          %v674 = vld [vmem:[%s642 + $0x7c] sm:$0xf]
          %v675 = vld [vmem:[%s642 + $0x80] sm:$0xf]
          %v676 = vld [vmem:[%s642 + $0x84] sm:$0xf]
          %v677 = vld [vmem:[%s642 + $0x88] sm:$0xf]
          %v678 = vld [vmem:[%s642 + $0x8c] sm:$0xf]
          %v679 = vld [vmem:[%s642 + $0x90] sm:$0xf]
          %v680 = vld [vmem:[%s642 + $0x94] sm:$0xf]
          %v681 = vld [vmem:[%s642 + $0x98] sm:$0xf]
          %v682 = vld [vmem:[%s642 + $0x9c] sm:$0xf]
          %v683 = vld [vmem:[%s642 + $0xa0] sm:$0xf]
          %v684 = vld [vmem:[%s642 + $0xa4] sm:$0xf]
          %v685 = vld [vmem:[%s642 + $0xa8] sm:$0xf]
          %v686 = vld [vmem:[%s642 + $0xac] sm:$0xf]
          %v687 = vld [vmem:[%s642 + $0xb0] sm:$0xf]
          %v688 = vld [vmem:[%s642 + $0xb4] sm:$0xf]
          %v689 = vld [vmem:[%s642 + $0xb8] sm:$0xf]
          %v690 = vld [vmem:[%s642 + $0xbc] sm:$0xf]
          %v691 = vld [vmem:[%s642 + $0xc0] sm:$0xf]
          %v692 = vld [vmem:[%s642 + $0xc4] sm:$0xf]
          %v693 = vld [vmem:[%s642 + $0xc8] sm:$0xf]
          %v694 = vld [vmem:[%s642 + $0xcc] sm:$0xf]
          %v695 = vld [vmem:[%s642 + $0xd0] sm:$0xf]
          %v696 = vld [vmem:[%s642 + $0xd4] sm:$0xf]
          %v697 = vld [vmem:[%s642 + $0xd8] sm:$0xf]
          %v698 = vld [vmem:[%s642 + $0xdc] sm:$0xf]
          %v699 = vld [vmem:[%s642 + $0xe0] sm:$0xf]
          %v700 = vld [vmem:[%s642 + $0xe4] sm:$0xf]
          %v701 = vld [vmem:[%s642 + $0xe8] sm:$0xf]
          %v702 = vld [vmem:[%s642 + $0xec] sm:$0xf]
          %v703 = vld [vmem:[%s642 + $0xf0] sm:$0xf]
          %v704 = vld [vmem:[%s642 + $0xf4] sm:$0xf]
          %v705 = vld [vmem:[%s642 + $0xf8] sm:$0xf]
          %v706 = vld [vmem:[%s642 + $0xfc] sm:$0xf]
          %v707 = vld [vmem:[%s642 + $0x100] sm:$0xf]
          %v708 = vld [vmem:[%s642 + $0x104] sm:$0xf]
          %v709 = vld [vmem:[%s642 + $0x108] sm:$0xf]
          %v710 = vld [vmem:[%s642 + $0x10c] sm:$0xf]
          %v711 = vld [vmem:[%s642 + $0x110] sm:$0xf]
          %v712 = vld [vmem:[%s642 + $0x114] sm:$0xf]
          %v713 = vld [vmem:[%s642 + $0x118] sm:$0xf]
          %v714 = vld [vmem:[%s642 + $0x11c] sm:$0xf]
          %v715 = vld [vmem:[%s642 + $0x120] sm:$0xf]
          %v716 = vld [vmem:[%s642 + $0x124] sm:$0xf]
          %v717 = vld [vmem:[%s642 + $0x128] sm:$0xf]
          %v718 = vld [vmem:[%s642 + $0x12c] sm:$0xf]
          %v719 = vld [vmem:[%s642 + $0x130] sm:$0xf]
          %v720 = vld [vmem:[%s642 + $0x134] sm:$0xf]
          %v721 = vld [vmem:[%s642 + $0x138] sm:$0xf]
          %v722 = vld [vmem:[%s642 + $0x13c] sm:$0xf]
          %v723 = vld [vmem:[%s642 + $0x140] sm:$0xf]
          %v724 = vld [vmem:[%s642 + $0x144] sm:$0xf]
          %v725 = vld [vmem:[%s642 + $0x148] sm:$0xf]
          %v726 = vld [vmem:[%s642 + $0x14c] sm:$0xf]
          %v727 = vld [vmem:[%s642 + $0x150] sm:$0xf]
          %v728 = vld [vmem:[%s642 + $0x154] sm:$0xf]
          %v729 = vld [vmem:[%s642 + $0x158] sm:$0xf]
          %v730 = vld [vmem:[%s642 + $0x15c] sm:$0xf]
          %v731 = vld [vmem:[%s642 + $0x160] sm:$0xf]
          %v732 = vld [vmem:[%s642 + $0x164] sm:$0xf]
          %v733 = vld [vmem:[%s642 + $0x168] sm:$0xf]
          %v734 = vld [vmem:[%s642 + $0x16c] sm:$0xf]
          %v735 = vld [vmem:[%s642 + $0x170] sm:$0xf]
          %v736 = vld [vmem:[%s642 + $0x174] sm:$0xf]
          %v737 = vld [vmem:[%s642 + $0x178] sm:$0xf]
          %v738 = vld [vmem:[%s642 + $0x17c] sm:$0xf]
          %v739 = vld [vmem:[%s642 + $0x180] sm:$0xf]
          %v740 = vld [vmem:[%s642 + $0x184] sm:$0xf]
          %v741 = vld [vmem:[%s642 + $0x188] sm:$0xf]
          %v742 = vld [vmem:[%s642 + $0x18c] sm:$0xf]
          %v743 = vld [vmem:[%s642 + $0x190] sm:$0xf]
          %v744 = vld [vmem:[%s642 + $0x194] sm:$0xf]
          %v745 = vld [vmem:[%s642 + $0x198] sm:$0xf]
          %v746 = vld [vmem:[%s642 + $0x19c] sm:$0xf]
          %v747 = vld [vmem:[%s642 + $0x1a0] sm:$0xf]
          %v748 = vld [vmem:[%s642 + $0x1a4] sm:$0xf]
          %v749 = vld [vmem:[%s642 + $0x1a8] sm:$0xf]
          %v750 = vld [vmem:[%s642 + $0x1ac] sm:$0xf]
          %v751 = vld [vmem:[%s642 + $0x1b0] sm:$0xf]
          %v752 = vld [vmem:[%s642 + $0x1b4] sm:$0xf]
          %v753 = vld [vmem:[%s642 + $0x1b8] sm:$0xf]
          %v754 = vld [vmem:[%s642 + $0x1bc] sm:$0x3]
          %v755 = vld [vmem:[%s1] sm:$0xf]
          %v756 = vld [vmem:[%s1 + $0x4] sm:$0xf]
          %v757 = vld [vmem:[%s2] sm:$0x1]
          %v759 = vlaneseq
          %v760 = vshrl.u32 %v759, 7
          %v761 = vsub.s32 0, %v760
          %v762 = vrot.slane %v757, %v761
          %v876 = vunpack.c.l.b16 %v643
          %v877 = vunpack.c.l.b16 %v644
          %v878 = vunpack.c.l.b16 %v645
          %v879 = vunpack.c.l.b16 %v646
          %v880 = vunpack.c.l.b16 %v647
          %v881 = vunpack.c.l.b16 %v648
          %v882 = vunpack.c.l.b16 %v649
          %v883 = vunpack.c.l.b16 %v650
          %v884 = vunpack.c.l.b16 %v651
          %v885 = vunpack.c.l.b16 %v652
          %v886 = vunpack.c.l.b16 %v653
          %v887 = vunpack.c.l.b16 %v654
          %v888 = vunpack.c.l.b16 %v655
          %v889 = vunpack.c.l.b16 %v656
          %v890 = vunpack.c.l.b16 %v657
          %v891 = vunpack.c.l.b16 %v658
          %v892 = vunpack.c.l.b16 %v659
          %v893 = vunpack.c.l.b16 %v660
          %v894 = vunpack.c.l.b16 %v661
          %v895 = vunpack.c.l.b16 %v662
          %v896 = vunpack.c.l.b16 %v663
          %v897 = vunpack.c.l.b16 %v664
          %v898 = vunpack.c.l.b16 %v665
          %v899 = vunpack.c.l.b16 %v666
          %v900 = vunpack.c.l.b16 %v667
          %v901 = vunpack.c.l.b16 %v668
          %v902 = vunpack.c.l.b16 %v669
          %v903 = vunpack.c.l.b16 %v670
          %v904 = vunpack.c.l.b16 %v671
          %v905 = vunpack.c.l.b16 %v672
          %v906 = vunpack.c.l.b16 %v673
          %v907 = vunpack.c.l.b16 %v674
          %v908 = vunpack.c.l.b16 %v675
          %v909 = vunpack.c.l.b16 %v676
          %v910 = vunpack.c.l.b16 %v677
          %v911 = vunpack.c.l.b16 %v678
          %v912 = vunpack.c.l.b16 %v679
          %v913 = vunpack.c.l.b16 %v680
          %v914 = vunpack.c.l.b16 %v681
          %v915 = vunpack.c.l.b16 %v682
          %v916 = vunpack.c.l.b16 %v683
          %v917 = vunpack.c.l.b16 %v684
          %v918 = vunpack.c.l.b16 %v685
          %v919 = vunpack.c.l.b16 %v686
          %v920 = vunpack.c.l.b16 %v687
          %v921 = vunpack.c.l.b16 %v688
          %v922 = vunpack.c.l.b16 %v689
          %v923 = vunpack.c.l.b16 %v690
          %v924 = vunpack.c.l.b16 %v691
          %v925 = vunpack.c.l.b16 %v692
          %v926 = vunpack.c.l.b16 %v693
          %v927 = vunpack.c.l.b16 %v694
          %v928 = vunpack.c.l.b16 %v695
          %v929 = vunpack.c.l.b16 %v696
          %v930 = vunpack.c.l.b16 %v697
          %v931 = vunpack.c.l.b16 %v698
          %v932 = vunpack.c.l.b16 %v699
          %v933 = vunpack.c.l.b16 %v700
          %v934 = vunpack.c.l.b16 %v701
          %v935 = vunpack.c.l.b16 %v702
          %v936 = vunpack.c.l.b16 %v703
          %v937 = vunpack.c.l.b16 %v704
          %v938 = vunpack.c.l.b16 %v705
          %v939 = vunpack.c.l.b16 %v706
          %v940 = vunpack.c.l.b16 %v707
          %v941 = vunpack.c.l.b16 %v708
          %v942 = vunpack.c.l.b16 %v709
          %v943 = vunpack.c.l.b16 %v710
          %v944 = vunpack.c.l.b16 %v711
          %v945 = vunpack.c.l.b16 %v712
          %v946 = vunpack.c.l.b16 %v713
          %v947 = vunpack.c.l.b16 %v714
          %v948 = vunpack.c.l.b16 %v715
          %v949 = vunpack.c.l.b16 %v716
          %v950 = vunpack.c.l.b16 %v717
          %v951 = vunpack.c.l.b16 %v718
          %v952 = vunpack.c.l.b16 %v719
          %v953 = vunpack.c.l.b16 %v720
          %v954 = vunpack.c.l.b16 %v721
          %v955 = vunpack.c.l.b16 %v722
          %v956 = vunpack.c.l.b16 %v723
          %v957 = vunpack.c.l.b16 %v724
          %v958 = vunpack.c.l.b16 %v725
          %v959 = vunpack.c.l.b16 %v726
          %v960 = vunpack.c.l.b16 %v727
          %v961 = vunpack.c.l.b16 %v728
          %v962 = vunpack.c.l.b16 %v729
          %v963 = vunpack.c.l.b16 %v730
          %v964 = vunpack.c.l.b16 %v731
          %v965 = vunpack.c.l.b16 %v732
          %v966 = vunpack.c.l.b16 %v733
          %v967 = vunpack.c.l.b16 %v734
          %v968 = vunpack.c.l.b16 %v735
          %v969 = vunpack.c.l.b16 %v736
          %v970 = vunpack.c.l.b16 %v737
          %v971 = vunpack.c.l.b16 %v738
          %v972 = vunpack.c.l.b16 %v739
          %v973 = vunpack.c.l.b16 %v740
          %v974 = vunpack.c.l.b16 %v741
          %v975 = vunpack.c.l.b16 %v742
          %v976 = vunpack.c.l.b16 %v743
          %v977 = vunpack.c.l.b16 %v744
          %v978 = vunpack.c.l.b16 %v745
          %v979 = vunpack.c.l.b16 %v746
          %v980 = vunpack.c.l.b16 %v747
          %v981 = vunpack.c.l.b16 %v748
          %v982 = vunpack.c.l.b16 %v749
          %v983 = vunpack.c.l.b16 %v750
          %v984 = vunpack.c.l.b16 %v751
          %v985 = vunpack.c.l.b16 %v752
          %v986 = vunpack.c.l.b16 %v753
          %v987 = vunpack.c.l.b16 %v754
          %v988 = vpack.c.b16 %v877, %v876
          %v989 = vpack.c.b16 %v879, %v878
          %v990 = vpack.c.b16 %v881, %v880
          %v991 = vpack.c.b16 %v883, %v882
          %v992 = vpack.c.b16 %v885, %v884
          %v993 = vpack.c.b16 %v887, %v886
          %v994 = vpack.c.b16 %v889, %v888
          %v995 = vpack.c.b16 %v891, %v890
          %v996 = vpack.c.b16 %v893, %v892
          %v997 = vpack.c.b16 %v895, %v894
          %v998 = vpack.c.b16 %v897, %v896
          %v999 = vpack.c.b16 %v899, %v898
          %v1000 = vpack.c.b16 %v901, %v900
          %v1001 = vpack.c.b16 %v903, %v902
          %v1002 = vpack.c.b16 %v905, %v904
          %v1003 = vpack.c.b16 %v907, %v906
          %v1004 = vpack.c.b16 %v909, %v908
          %v1005 = vpack.c.b16 %v911, %v910
          %v1006 = vpack.c.b16 %v913, %v912
          %v1007 = vpack.c.b16 %v915, %v914
          %v1008 = vpack.c.b16 %v917, %v916
          %v1009 = vpack.c.b16 %v919, %v918
          %v1010 = vpack.c.b16 %v921, %v920
          %v1011 = vpack.c.b16 %v923, %v922
          %v1012 = vpack.c.b16 %v925, %v924
          %v1013 = vpack.c.b16 %v927, %v926
          %v1014 = vpack.c.b16 %v929, %v928
          %v1015 = vpack.c.b16 %v931, %v930
          %v1016 = vpack.c.b16 %v933, %v932
          %v1017 = vpack.c.b16 %v935, %v934
          %v1018 = vpack.c.b16 %v937, %v936
          %v1019 = vpack.c.b16 %v939, %v938
          %v1020 = vpack.c.b16 %v941, %v940
          %v1021 = vpack.c.b16 %v943, %v942
          %v1022 = vpack.c.b16 %v945, %v944
          %v1023 = vpack.c.b16 %v947, %v946
          %v1024 = vpack.c.b16 %v949, %v948
          %v1025 = vpack.c.b16 %v951, %v950
          %v1026 = vpack.c.b16 %v953, %v952
          %v1027 = vpack.c.b16 %v955, %v954
          %v1028 = vpack.c.b16 %v957, %v956
          %v1029 = vpack.c.b16 %v959, %v958
          %v1030 = vpack.c.b16 %v961, %v960
          %v1031 = vpack.c.b16 %v963, %v962
          %v1032 = vpack.c.b16 %v965, %v964
          %v1033 = vpack.c.b16 %v967, %v966
          %v1034 = vpack.c.b16 %v969, %v968
          %v1035 = vpack.c.b16 %v971, %v970
          %v1036 = vpack.c.b16 %v973, %v972
          %v1037 = vpack.c.b16 %v975, %v974
          %v1038 = vpack.c.b16 %v977, %v976
          %v1039 = vpack.c.b16 %v979, %v978
          %v1040 = vpack.c.b16 %v981, %v980
          %v1041 = vpack.c.b16 %v983, %v982
          %v1042 = vpack.c.b16 %v985, %v984
          %v1043 = vpack.c.b16 %v987, %v986
          %v1046 = vunpack.c.l.b16 %v755
          %v1047 = vunpack.c.l.b16 %v756
          %v1048 = vpack.c.b16 %v1047, %v1046
          %vm1050 = vcmask 130048
          %v1052 = vsel %vm1050, %v988, 0
          %v1055 = vsel %vm1050, %v989, 0
          %v1058 = vsel %vm1050, %v990, 0
          %v1061 = vsel %vm1050, %v991, 0
          %v1064 = vsel %vm1050, %v992, 0
          %v1067 = vsel %vm1050, %v993, 0
          %v1070 = vsel %vm1050, %v994, 0
          %v1073 = vsel %vm1050, %v995, 0
          %v1076 = vsel %vm1050, %v996, 0
          %v1079 = vsel %vm1050, %v997, 0
          %v1082 = vsel %vm1050, %v998, 0
          %v1085 = vsel %vm1050, %v999, 0
          %v1088 = vsel %vm1050, %v1000, 0
          %v1091 = vsel %vm1050, %v1001, 0
          %v1094 = vsel %vm1050, %v1002, 0
          %v1097 = vsel %vm1050, %v1003, 0
          %v1100 = vsel %vm1050, %v1004, 0
          %v1103 = vsel %vm1050, %v1005, 0
          %v1106 = vsel %vm1050, %v1006, 0
          %v1109 = vsel %vm1050, %v1007, 0
          %v1112 = vsel %vm1050, %v1008, 0
          %v1115 = vsel %vm1050, %v1009, 0
          %v1118 = vsel %vm1050, %v1010, 0
          %v1121 = vsel %vm1050, %v1011, 0
          %v1124 = vsel %vm1050, %v1012, 0
          %v1127 = vsel %vm1050, %v1013, 0
          %v1130 = vsel %vm1050, %v1014, 0
          %v1133 = vsel %vm1050, %v1015, 0
          %v1136 = vsel %vm1050, %v1016, 0
          %v1139 = vsel %vm1050, %v1017, 0
          %v1142 = vsel %vm1050, %v1018, 0
          %v1145 = vsel %vm1050, %v1019, 0
          %v1148 = vsel %vm1050, %v1020, 0
          %v1151 = vsel %vm1050, %v1021, 0
          %v1154 = vsel %vm1050, %v1022, 0
          %v1157 = vsel %vm1050, %v1023, 0
          %v1160 = vsel %vm1050, %v1024, 0
          %v1163 = vsel %vm1050, %v1025, 0
          %v1166 = vsel %vm1050, %v1026, 0
          %v1169 = vsel %vm1050, %v1027, 0
          %v1172 = vsel %vm1050, %v1028, 0
          %v1175 = vsel %vm1050, %v1029, 0
          %v1178 = vsel %vm1050, %v1030, 0
          %v1181 = vsel %vm1050, %v1031, 0
          %v1184 = vsel %vm1050, %v1032, 0
          %v1187 = vsel %vm1050, %v1033, 0
          %v1190 = vsel %vm1050, %v1034, 0
          %v1193 = vsel %vm1050, %v1035, 0
          %v1196 = vsel %vm1050, %v1036, 0
          %v1199 = vsel %vm1050, %v1037, 0
          %v1202 = vsel %vm1050, %v1038, 0
          %v1205 = vsel %vm1050, %v1039, 0
          %v1208 = vsel %vm1050, %v1040, 0
          %v1211 = vsel %vm1050, %v1041, 0
          %v1214 = vsel %vm1050, %v1042, 0
          %v1217 = vsel %vm1050, %v1043, 0
          %1219 = vmatprep.subr.bf16.mxu0 0
          %1220 = vmatpush1.bf16.msra.mxu0 0
          %1221 = vmatprep.subr.bf16.mxu0 0
          %1222 = vmatpush1.bf16.msra.mxu0 0
          %1223 = vmatprep.subr.bf16.mxu0 0
          %1224 = vmatpush1.bf16.msra.mxu0 0
          %1225 = vmatprep.subr.bf16.mxu0 0
          %1226 = vmatpush1.bf16.msra.mxu0 0
          %1227 = vmatprep.subr.bf16.mxu0 0
          %1228 = vmatpush1.bf16.msra.mxu0 0
          %1229 = vmatprep.subr.bf16.mxu0 0
          %1230 = vmatpush1.bf16.msra.mxu0 0
          %1231 = vmatprep.subr.bf16.mxu0 0
          %1232 = vmatpush1.bf16.msra.mxu0 0
          %1233 = vmatprep.subr.bf16.mxu0 0
          %1234 = vmatpush1.bf16.msra.mxu0 %v1048
          %1235 = vmatprep.subr.bf16.mxu0 0
          %1236 = vmatpush2.bf16.msra.mxu0 0
          %1237 = vmatprep.subr.bf16.mxu0 0
          %1238 = vmatpush2.bf16.msra.mxu0 0
          %1239 = vmatprep.subr.bf16.mxu0 0
          %1240 = vmatpush2.bf16.msra.mxu0 0
          %1241 = vmatprep.subr.bf16.mxu0 0
          %1242 = vmatpush2.bf16.msra.mxu0 0
          %1243 = vmatprep.subr.bf16.mxu0 0
          %1244 = vmatpush2.bf16.msra.mxu0 0
          %1245 = vmatprep.subr.bf16.mxu0 0
          %1246 = vmatpush2.bf16.msra.mxu0 0
          %1247 = vmatprep.subr.bf16.mxu0 0
          %1248 = vmatpush2.bf16.msra.mxu0 0
          %1249 = vmatprep.subr.bf16.mxu0 0
          %1250 = vmatpush2.bf16.msra.mxu0 0
          %1251 = vmatprep.mubr.bf16.mxu0 0
          %1252 = vmatmul.mubr.bf16.gmra.mxu0 %v1052
          %v1253 = vpop.f32.mrf.mxu0
          %v1254 = vadd.f32 %v762, %v1253
          %v1255 = vpop.f32.mrf.mxu0
          %v1256 = vpop.f32.mrf.mxu0
          %v1257 = vadd.f32 %v762, %v1256
          %v1258 = vpop.f32.mrf.mxu0
          %1259 = vmatprep.mubr.bf16.mxu0 0
          %1260 = vmatmul.mubr.bf16.gmra.mxu0 %v1055
          %v1261 = vpop.f32.mrf.mxu0
          %v1262 = vadd.f32 %v762, %v1261
          %v1263 = vpop.f32.mrf.mxu0
          %v1264 = vpop.f32.mrf.mxu0
          %v1265 = vadd.f32 %v762, %v1264
          %v1266 = vpop.f32.mrf.mxu0
          %1267 = vmatprep.mubr.bf16.mxu0 0
          %1268 = vmatmul.mubr.bf16.gmra.mxu0 %v1058
          %v1269 = vpop.f32.mrf.mxu0
          %v1270 = vadd.f32 %v762, %v1269
          %v1271 = vpop.f32.mrf.mxu0
          %v1272 = vpop.f32.mrf.mxu0
          %v1273 = vadd.f32 %v762, %v1272
          %v1274 = vpop.f32.mrf.mxu0
          %1275 = vmatprep.mubr.bf16.mxu0 0
          %1276 = vmatmul.mubr.bf16.gmra.mxu0 %v1061
          %v1277 = vpop.f32.mrf.mxu0
          %v1278 = vadd.f32 %v762, %v1277
          %v1279 = vpop.f32.mrf.mxu0
          %v1280 = vpop.f32.mrf.mxu0
          %v1281 = vadd.f32 %v762, %v1280
          %v1282 = vpop.f32.mrf.mxu0
          %1283 = vmatprep.mubr.bf16.mxu0 0
          %1284 = vmatmul.mubr.bf16.gmra.mxu0 %v1064
          %v1285 = vpop.f32.mrf.mxu0
          %v1286 = vadd.f32 %v762, %v1285
          %v1287 = vpop.f32.mrf.mxu0
          %v1288 = vpop.f32.mrf.mxu0
          %v1289 = vadd.f32 %v762, %v1288
          %v1290 = vpop.f32.mrf.mxu0
          %1291 = vmatprep.mubr.bf16.mxu0 0
          %1292 = vmatmul.mubr.bf16.gmra.mxu0 %v1067
          %v1293 = vpop.f32.mrf.mxu0
          %v1294 = vadd.f32 %v762, %v1293
          %v1295 = vpop.f32.mrf.mxu0
          %v1296 = vpop.f32.mrf.mxu0
          %v1297 = vadd.f32 %v762, %v1296
          %v1298 = vpop.f32.mrf.mxu0
          %1299 = vmatprep.mubr.bf16.mxu0 0
          %1300 = vmatmul.mubr.bf16.gmra.mxu0 %v1070
          %v1301 = vpop.f32.mrf.mxu0
          %v1302 = vadd.f32 %v762, %v1301
          %v1303 = vpop.f32.mrf.mxu0
          %v1304 = vpop.f32.mrf.mxu0
          %v1305 = vadd.f32 %v762, %v1304
          %v1306 = vpop.f32.mrf.mxu0
          %1307 = vmatprep.mubr.bf16.mxu0 0
          %1308 = vmatmul.mubr.bf16.gmra.mxu0 %v1073
          %v1309 = vpop.f32.mrf.mxu0
          %v1310 = vadd.f32 %v762, %v1309
          %v1311 = vpop.f32.mrf.mxu0
          %v1312 = vpop.f32.mrf.mxu0
          %v1313 = vadd.f32 %v762, %v1312
          %v1314 = vpop.f32.mrf.mxu0
          %1315 = vmatprep.mubr.bf16.mxu0 0
          %1316 = vmatmul.mubr.bf16.gmra.mxu0 %v1076
          %v1317 = vpop.f32.mrf.mxu0
          %v1318 = vadd.f32 %v762, %v1317
          %v1319 = vpop.f32.mrf.mxu0
          %v1320 = vpop.f32.mrf.mxu0
          %v1321 = vadd.f32 %v762, %v1320
          %v1322 = vpop.f32.mrf.mxu0
          %1323 = vmatprep.mubr.bf16.mxu0 0
          %1324 = vmatmul.mubr.bf16.gmra.mxu0 %v1079
          %v1325 = vpop.f32.mrf.mxu0
          %v1326 = vadd.f32 %v762, %v1325
          %v1327 = vpop.f32.mrf.mxu0
          %v1328 = vpop.f32.mrf.mxu0
          %v1329 = vadd.f32 %v762, %v1328
          %v1330 = vpop.f32.mrf.mxu0
          %1331 = vmatprep.mubr.bf16.mxu0 0
          %1332 = vmatmul.mubr.bf16.gmra.mxu0 %v1082
          %v1333 = vpop.f32.mrf.mxu0
          %v1334 = vadd.f32 %v762, %v1333
          %v1335 = vpop.f32.mrf.mxu0
          %v1336 = vpop.f32.mrf.mxu0
          %v1337 = vadd.f32 %v762, %v1336
          %v1338 = vpop.f32.mrf.mxu0
          %1339 = vmatprep.mubr.bf16.mxu0 0
          %1340 = vmatmul.mubr.bf16.gmra.mxu0 %v1085
          %v1341 = vpop.f32.mrf.mxu0
          %v1342 = vadd.f32 %v762, %v1341
          %v1343 = vpop.f32.mrf.mxu0
          %v1344 = vpop.f32.mrf.mxu0
          %v1345 = vadd.f32 %v762, %v1344
          %v1346 = vpop.f32.mrf.mxu0
          %1347 = vmatprep.mubr.bf16.mxu0 0
          %1348 = vmatmul.mubr.bf16.gmra.mxu0 %v1088
          %v1349 = vpop.f32.mrf.mxu0
          %v1350 = vadd.f32 %v762, %v1349
          %v1351 = vpop.f32.mrf.mxu0
          %v1352 = vpop.f32.mrf.mxu0
          %v1353 = vadd.f32 %v762, %v1352
          %v1354 = vpop.f32.mrf.mxu0
          %1355 = vmatprep.mubr.bf16.mxu0 0
          %1356 = vmatmul.mubr.bf16.gmra.mxu0 %v1091
          %v1357 = vpop.f32.mrf.mxu0
          %v1358 = vadd.f32 %v762, %v1357
          %v1359 = vpop.f32.mrf.mxu0
          %v1360 = vpop.f32.mrf.mxu0
          %v1361 = vadd.f32 %v762, %v1360
          %v1362 = vpop.f32.mrf.mxu0
          %1363 = vmatprep.mubr.bf16.mxu0 0
          %1364 = vmatmul.mubr.bf16.gmra.mxu0 %v1094
          %v1365 = vpop.f32.mrf.mxu0
          %v1366 = vadd.f32 %v762, %v1365
          %v1367 = vpop.f32.mrf.mxu0
          %v1368 = vpop.f32.mrf.mxu0
          %v1369 = vadd.f32 %v762, %v1368
          %v1370 = vpop.f32.mrf.mxu0
          %1371 = vmatprep.mubr.bf16.mxu0 0
          %1372 = vmatmul.mubr.bf16.gmra.mxu0 %v1097
          %v1373 = vpop.f32.mrf.mxu0
          %v1374 = vadd.f32 %v762, %v1373
          %v1375 = vpop.f32.mrf.mxu0
          %v1376 = vpop.f32.mrf.mxu0
          %v1377 = vadd.f32 %v762, %v1376
          %v1378 = vpop.f32.mrf.mxu0
          %1379 = vmatprep.mubr.bf16.mxu0 0
          %1380 = vmatmul.mubr.bf16.gmra.mxu0 %v1100
          %v1381 = vpop.f32.mrf.mxu0
          %v1382 = vadd.f32 %v762, %v1381
          %v1383 = vpop.f32.mrf.mxu0
          %v1384 = vpop.f32.mrf.mxu0
          %v1385 = vadd.f32 %v762, %v1384
          %v1386 = vpop.f32.mrf.mxu0
          %1387 = vmatprep.mubr.bf16.mxu0 0
          %1388 = vmatmul.mubr.bf16.gmra.mxu0 %v1103
          %v1389 = vpop.f32.mrf.mxu0
          %v1390 = vadd.f32 %v762, %v1389
          %v1391 = vpop.f32.mrf.mxu0
          %v1392 = vpop.f32.mrf.mxu0
          %v1393 = vadd.f32 %v762, %v1392
          %v1394 = vpop.f32.mrf.mxu0
          %1395 = vmatprep.mubr.bf16.mxu0 0
          %1396 = vmatmul.mubr.bf16.gmra.mxu0 %v1106
          %v1397 = vpop.f32.mrf.mxu0
          %v1398 = vadd.f32 %v762, %v1397
          %v1399 = vpop.f32.mrf.mxu0
          %v1400 = vpop.f32.mrf.mxu0
          %v1401 = vadd.f32 %v762, %v1400
          %v1402 = vpop.f32.mrf.mxu0
          %1403 = vmatprep.mubr.bf16.mxu0 0
          %1404 = vmatmul.mubr.bf16.gmra.mxu0 %v1109
          %v1405 = vpop.f32.mrf.mxu0
          %v1406 = vadd.f32 %v762, %v1405
          %v1407 = vpop.f32.mrf.mxu0
          %v1408 = vpop.f32.mrf.mxu0
          %v1409 = vadd.f32 %v762, %v1408
          %v1410 = vpop.f32.mrf.mxu0
          %1411 = vmatprep.mubr.bf16.mxu0 0
          %1412 = vmatmul.mubr.bf16.gmra.mxu0 %v1112
          %v1413 = vpop.f32.mrf.mxu0
          %v1414 = vadd.f32 %v762, %v1413
          %v1415 = vpop.f32.mrf.mxu0
          %v1416 = vpop.f32.mrf.mxu0
          %v1417 = vadd.f32 %v762, %v1416
          %v1418 = vpop.f32.mrf.mxu0
          %1419 = vmatprep.mubr.bf16.mxu0 0
          %1420 = vmatmul.mubr.bf16.gmra.mxu0 %v1115
          %v1421 = vpop.f32.mrf.mxu0
          %v1422 = vadd.f32 %v762, %v1421
          %v1423 = vpop.f32.mrf.mxu0
          %v1424 = vpop.f32.mrf.mxu0
          %v1425 = vadd.f32 %v762, %v1424
          %v1426 = vpop.f32.mrf.mxu0
          %1427 = vmatprep.mubr.bf16.mxu0 0
          %1428 = vmatmul.mubr.bf16.gmra.mxu0 %v1118
          %v1429 = vpop.f32.mrf.mxu0
          %v1430 = vadd.f32 %v762, %v1429
          %v1431 = vpop.f32.mrf.mxu0
          %v1432 = vpop.f32.mrf.mxu0
          %v1433 = vadd.f32 %v762, %v1432
          %v1434 = vpop.f32.mrf.mxu0
          %1435 = vmatprep.mubr.bf16.mxu0 0
          %1436 = vmatmul.mubr.bf16.gmra.mxu0 %v1121
          %v1437 = vpop.f32.mrf.mxu0
          %v1438 = vadd.f32 %v762, %v1437
          %v1439 = vpop.f32.mrf.mxu0
          %v1440 = vpop.f32.mrf.mxu0
          %v1441 = vadd.f32 %v762, %v1440
          %v1442 = vpop.f32.mrf.mxu0
          %1443 = vmatprep.mubr.bf16.mxu0 0
          %1444 = vmatmul.mubr.bf16.gmra.mxu0 %v1124
          %v1445 = vpop.f32.mrf.mxu0
          %v1446 = vadd.f32 %v762, %v1445
          %v1447 = vpop.f32.mrf.mxu0
          %v1448 = vpop.f32.mrf.mxu0
          %v1449 = vadd.f32 %v762, %v1448
          %v1450 = vpop.f32.mrf.mxu0
          %1451 = vmatprep.mubr.bf16.mxu0 0
          %1452 = vmatmul.mubr.bf16.gmra.mxu0 %v1127
          %v1453 = vpop.f32.mrf.mxu0
          %v1454 = vadd.f32 %v762, %v1453
          %v1455 = vpop.f32.mrf.mxu0
          %v1456 = vpop.f32.mrf.mxu0
          %v1457 = vadd.f32 %v762, %v1456
          %v1458 = vpop.f32.mrf.mxu0
          %1459 = vmatprep.mubr.bf16.mxu0 0
          %1460 = vmatmul.mubr.bf16.gmra.mxu0 %v1130
          %v1461 = vpop.f32.mrf.mxu0
          %v1462 = vadd.f32 %v762, %v1461
          %v1463 = vpop.f32.mrf.mxu0
          %v1464 = vpop.f32.mrf.mxu0
          %v1465 = vadd.f32 %v762, %v1464
          %v1466 = vpop.f32.mrf.mxu0
          %1467 = vmatprep.mubr.bf16.mxu0 0
          %1468 = vmatmul.mubr.bf16.gmra.mxu0 %v1133
          %v1469 = vpop.f32.mrf.mxu0
          %v1470 = vadd.f32 %v762, %v1469
          %v1471 = vpop.f32.mrf.mxu0
          %v1472 = vpop.f32.mrf.mxu0
          %v1473 = vadd.f32 %v762, %v1472
          %v1474 = vpop.f32.mrf.mxu0
          %1475 = vmatprep.mubr.bf16.mxu0 0
          %1476 = vmatmul.mubr.bf16.gmra.mxu0 %v1136
          %v1477 = vpop.f32.mrf.mxu0
          %v1478 = vadd.f32 %v762, %v1477
          %v1479 = vpop.f32.mrf.mxu0
          %v1480 = vpop.f32.mrf.mxu0
          %v1481 = vadd.f32 %v762, %v1480
          %v1482 = vpop.f32.mrf.mxu0
          %1483 = vmatprep.mubr.bf16.mxu0 0
          %1484 = vmatmul.mubr.bf16.gmra.mxu0 %v1139
          %v1485 = vpop.f32.mrf.mxu0
          %v1486 = vadd.f32 %v762, %v1485
          %v1487 = vpop.f32.mrf.mxu0
          %v1488 = vpop.f32.mrf.mxu0
          %v1489 = vadd.f32 %v762, %v1488
          %v1490 = vpop.f32.mrf.mxu0
          %1491 = vmatprep.mubr.bf16.mxu0 0
          %1492 = vmatmul.mubr.bf16.gmra.mxu0 %v1142
          %v1493 = vpop.f32.mrf.mxu0
          %v1494 = vadd.f32 %v762, %v1493
          %v1495 = vpop.f32.mrf.mxu0
          %v1496 = vpop.f32.mrf.mxu0
          %v1497 = vadd.f32 %v762, %v1496
          %v1498 = vpop.f32.mrf.mxu0
          %1499 = vmatprep.mubr.bf16.mxu0 0
          %1500 = vmatmul.mubr.bf16.gmra.mxu0 %v1145
          %v1501 = vpop.f32.mrf.mxu0
          %v1502 = vadd.f32 %v762, %v1501
          %v1503 = vpop.f32.mrf.mxu0
          %v1504 = vpop.f32.mrf.mxu0
          %v1505 = vadd.f32 %v762, %v1504
          %v1506 = vpop.f32.mrf.mxu0
          %1507 = vmatprep.mubr.bf16.mxu0 0
          %1508 = vmatmul.mubr.bf16.gmra.mxu0 %v1148
          %v1509 = vpop.f32.mrf.mxu0
          %v1510 = vadd.f32 %v762, %v1509
          %v1511 = vpop.f32.mrf.mxu0
          %v1512 = vpop.f32.mrf.mxu0
          %v1513 = vadd.f32 %v762, %v1512
          %v1514 = vpop.f32.mrf.mxu0
          %1515 = vmatprep.mubr.bf16.mxu0 0
          %1516 = vmatmul.mubr.bf16.gmra.mxu0 %v1151
          %v1517 = vpop.f32.mrf.mxu0
          %v1518 = vadd.f32 %v762, %v1517
          %v1519 = vpop.f32.mrf.mxu0
          %v1520 = vpop.f32.mrf.mxu0
          %v1521 = vadd.f32 %v762, %v1520
          %v1522 = vpop.f32.mrf.mxu0
          %1523 = vmatprep.mubr.bf16.mxu0 0
          %1524 = vmatmul.mubr.bf16.gmra.mxu0 %v1154
          %v1525 = vpop.f32.mrf.mxu0
          %v1526 = vadd.f32 %v762, %v1525
          %v1527 = vpop.f32.mrf.mxu0
          %v1528 = vpop.f32.mrf.mxu0
          %v1529 = vadd.f32 %v762, %v1528
          %v1530 = vpop.f32.mrf.mxu0
          %1531 = vmatprep.mubr.bf16.mxu0 0
          %1532 = vmatmul.mubr.bf16.gmra.mxu0 %v1157
          %v1533 = vpop.f32.mrf.mxu0
          %v1534 = vadd.f32 %v762, %v1533
          %v1535 = vpop.f32.mrf.mxu0
          %v1536 = vpop.f32.mrf.mxu0
          %v1537 = vadd.f32 %v762, %v1536
          %v1538 = vpop.f32.mrf.mxu0
          %1539 = vmatprep.mubr.bf16.mxu0 0
          %1540 = vmatmul.mubr.bf16.gmra.mxu0 %v1160
          %v1541 = vpop.f32.mrf.mxu0
          %v1542 = vadd.f32 %v762, %v1541
          %v1543 = vpop.f32.mrf.mxu0
          %v1544 = vpop.f32.mrf.mxu0
          %v1545 = vadd.f32 %v762, %v1544
          %v1546 = vpop.f32.mrf.mxu0
          %1547 = vmatprep.mubr.bf16.mxu0 0
          %1548 = vmatmul.mubr.bf16.gmra.mxu0 %v1163
          %v1549 = vpop.f32.mrf.mxu0
          %v1550 = vadd.f32 %v762, %v1549
          %v1551 = vpop.f32.mrf.mxu0
          %v1552 = vpop.f32.mrf.mxu0
          %v1553 = vadd.f32 %v762, %v1552
          %v1554 = vpop.f32.mrf.mxu0
          %1555 = vmatprep.mubr.bf16.mxu0 0
          %1556 = vmatmul.mubr.bf16.gmra.mxu0 %v1166
          %v1557 = vpop.f32.mrf.mxu0
          %v1558 = vadd.f32 %v762, %v1557
          %v1559 = vpop.f32.mrf.mxu0
          %v1560 = vpop.f32.mrf.mxu0
          %v1561 = vadd.f32 %v762, %v1560
          %v1562 = vpop.f32.mrf.mxu0
          %1563 = vmatprep.mubr.bf16.mxu0 0
          %1564 = vmatmul.mubr.bf16.gmra.mxu0 %v1169
          %v1565 = vpop.f32.mrf.mxu0
          %v1566 = vadd.f32 %v762, %v1565
          %v1567 = vpop.f32.mrf.mxu0
          %v1568 = vpop.f32.mrf.mxu0
          %v1569 = vadd.f32 %v762, %v1568
          %v1570 = vpop.f32.mrf.mxu0
          %1571 = vmatprep.mubr.bf16.mxu0 0
          %1572 = vmatmul.mubr.bf16.gmra.mxu0 %v1172
          %v1573 = vpop.f32.mrf.mxu0
          %v1574 = vadd.f32 %v762, %v1573
          %v1575 = vpop.f32.mrf.mxu0
          %v1576 = vpop.f32.mrf.mxu0
          %v1577 = vadd.f32 %v762, %v1576
          %v1578 = vpop.f32.mrf.mxu0
          %1579 = vmatprep.mubr.bf16.mxu0 0
          %1580 = vmatmul.mubr.bf16.gmra.mxu0 %v1175
          %v1581 = vpop.f32.mrf.mxu0
          %v1582 = vadd.f32 %v762, %v1581
          %v1583 = vpop.f32.mrf.mxu0
          %v1584 = vpop.f32.mrf.mxu0
          %v1585 = vadd.f32 %v762, %v1584
          %v1586 = vpop.f32.mrf.mxu0
          %1587 = vmatprep.mubr.bf16.mxu0 0
          %1588 = vmatmul.mubr.bf16.gmra.mxu0 %v1178
          %v1589 = vpop.f32.mrf.mxu0
          %v1590 = vadd.f32 %v762, %v1589
          %v1591 = vpop.f32.mrf.mxu0
          %v1592 = vpop.f32.mrf.mxu0
          %v1593 = vadd.f32 %v762, %v1592
          %v1594 = vpop.f32.mrf.mxu0
          %1595 = vmatprep.mubr.bf16.mxu0 0
          %1596 = vmatmul.mubr.bf16.gmra.mxu0 %v1181
          %v1597 = vpop.f32.mrf.mxu0
          %v1598 = vadd.f32 %v762, %v1597
          %v1599 = vpop.f32.mrf.mxu0
          %v1600 = vpop.f32.mrf.mxu0
          %v1601 = vadd.f32 %v762, %v1600
          %v1602 = vpop.f32.mrf.mxu0
          %1603 = vmatprep.mubr.bf16.mxu0 0
          %1604 = vmatmul.mubr.bf16.gmra.mxu0 %v1184
          %v1605 = vpop.f32.mrf.mxu0
          %v1606 = vadd.f32 %v762, %v1605
          %v1607 = vpop.f32.mrf.mxu0
          %v1608 = vpop.f32.mrf.mxu0
          %v1609 = vadd.f32 %v762, %v1608
          %v1610 = vpop.f32.mrf.mxu0
          %1611 = vmatprep.mubr.bf16.mxu0 0
          %1612 = vmatmul.mubr.bf16.gmra.mxu0 %v1187
          %v1613 = vpop.f32.mrf.mxu0
          %v1614 = vadd.f32 %v762, %v1613
          %v1615 = vpop.f32.mrf.mxu0
          %v1616 = vpop.f32.mrf.mxu0
          %v1617 = vadd.f32 %v762, %v1616
          %v1618 = vpop.f32.mrf.mxu0
          %1619 = vmatprep.mubr.bf16.mxu0 0
          %1620 = vmatmul.mubr.bf16.gmra.mxu0 %v1190
          %v1621 = vpop.f32.mrf.mxu0
          %v1622 = vadd.f32 %v762, %v1621
          %v1623 = vpop.f32.mrf.mxu0
          %v1624 = vpop.f32.mrf.mxu0
          %v1625 = vadd.f32 %v762, %v1624
          %v1626 = vpop.f32.mrf.mxu0
          %1627 = vmatprep.mubr.bf16.mxu0 0
          %1628 = vmatmul.mubr.bf16.gmra.mxu0 %v1193
          %v1629 = vpop.f32.mrf.mxu0
          %v1630 = vadd.f32 %v762, %v1629
          %v1631 = vpop.f32.mrf.mxu0
          %v1632 = vpop.f32.mrf.mxu0
          %v1633 = vadd.f32 %v762, %v1632
          %v1634 = vpop.f32.mrf.mxu0
          %1635 = vmatprep.mubr.bf16.mxu0 0
          %1636 = vmatmul.mubr.bf16.gmra.mxu0 %v1196
          %v1637 = vpop.f32.mrf.mxu0
          %v1638 = vadd.f32 %v762, %v1637
          %v1639 = vpop.f32.mrf.mxu0
          %v1640 = vpop.f32.mrf.mxu0
          %v1641 = vadd.f32 %v762, %v1640
          %v1642 = vpop.f32.mrf.mxu0
          %1643 = vmatprep.mubr.bf16.mxu0 0
          %1644 = vmatmul.mubr.bf16.gmra.mxu0 %v1199
          %v1645 = vpop.f32.mrf.mxu0
          %v1646 = vadd.f32 %v762, %v1645
          %v1647 = vpop.f32.mrf.mxu0
          %v1648 = vpop.f32.mrf.mxu0
          %v1649 = vadd.f32 %v762, %v1648
          %v1650 = vpop.f32.mrf.mxu0
          %1651 = vmatprep.mubr.bf16.mxu0 0
          %1652 = vmatmul.mubr.bf16.gmra.mxu0 %v1202
          %v1653 = vpop.f32.mrf.mxu0
          %v1654 = vadd.f32 %v762, %v1653
          %v1655 = vpop.f32.mrf.mxu0
          %v1656 = vpop.f32.mrf.mxu0
          %v1657 = vadd.f32 %v762, %v1656
          %v1658 = vpop.f32.mrf.mxu0
          %1659 = vmatprep.mubr.bf16.mxu0 0
          %1660 = vmatmul.mubr.bf16.gmra.mxu0 %v1205
          %v1661 = vpop.f32.mrf.mxu0
          %v1662 = vadd.f32 %v762, %v1661
          %v1663 = vpop.f32.mrf.mxu0
          %v1664 = vpop.f32.mrf.mxu0
          %v1665 = vadd.f32 %v762, %v1664
          %v1666 = vpop.f32.mrf.mxu0
          %1667 = vmatprep.mubr.bf16.mxu0 0
          %1668 = vmatmul.mubr.bf16.gmra.mxu0 %v1208
          %v1669 = vpop.f32.mrf.mxu0
          %v1670 = vadd.f32 %v762, %v1669
          %v1671 = vpop.f32.mrf.mxu0
          %v1672 = vpop.f32.mrf.mxu0
          %v1673 = vadd.f32 %v762, %v1672
          %v1674 = vpop.f32.mrf.mxu0
          %1675 = vmatprep.mubr.bf16.mxu0 0
          %1676 = vmatmul.mubr.bf16.gmra.mxu0 %v1211
          %v1677 = vpop.f32.mrf.mxu0
          %v1678 = vadd.f32 %v762, %v1677
          %v1679 = vpop.f32.mrf.mxu0
          %v1680 = vpop.f32.mrf.mxu0
          %v1681 = vadd.f32 %v762, %v1680
          %v1682 = vpop.f32.mrf.mxu0
          %1683 = vmatprep.mubr.bf16.mxu0 0
          %1684 = vmatmul.mubr.bf16.gmra.mxu0 %v1214
          %v1685 = vpop.f32.mrf.mxu0
          %v1686 = vadd.f32 %v762, %v1685
          %v1687 = vpop.f32.mrf.mxu0
          %v1688 = vpop.f32.mrf.mxu0
          %v1689 = vadd.f32 %v762, %v1688
          %v1690 = vpop.f32.mrf.mxu0
          %1691 = vmatprep.mubr.bf16.mxu0 0
          %1692 = vmatmul.mubr.bf16.gmra.mxu0 %v1217
          %v1693 = vpop.f32.mrf.mxu0
          %v1694 = vadd.f32 %v762, %v1693
          %v1695 = vpop.f32.mrf.mxu0
          %v1696 = vpop.f32.mrf.mxu0
          %v1697 = vadd.f32 %v762, %v1696
          %v1698 = vpop.f32.mrf.mxu0
          %1699 = vdwg.mxu0
          %v1700 = vmax.f32 %v1254, 0.0
          %v1701 = vmax.f32 %v1257, 0.0
          %v1702 = vmax.f32 %v1262, 0.0
          %v1703 = vmax.f32 %v1265, 0.0
          %v1704 = vmax.f32 %v1270, 0.0
          %v1705 = vmax.f32 %v1273, 0.0
          %v1706 = vmax.f32 %v1278, 0.0
          %v1707 = vmax.f32 %v1281, 0.0
          %v1708 = vmax.f32 %v1286, 0.0
          %v1709 = vmax.f32 %v1289, 0.0
          %v1710 = vmax.f32 %v1294, 0.0
          %v1711 = vmax.f32 %v1297, 0.0
          %v1712 = vmax.f32 %v1302, 0.0
          %v1713 = vmax.f32 %v1305, 0.0
          %v1714 = vmax.f32 %v1310, 0.0
          %v1715 = vmax.f32 %v1313, 0.0
          %v1716 = vmax.f32 %v1318, 0.0
          %v1717 = vmax.f32 %v1321, 0.0
          %v1718 = vmax.f32 %v1326, 0.0
          %v1719 = vmax.f32 %v1329, 0.0
          %v1720 = vmax.f32 %v1334, 0.0
          %v1721 = vmax.f32 %v1337, 0.0
          %v1722 = vmax.f32 %v1342, 0.0
          %v1723 = vmax.f32 %v1345, 0.0
          %v1724 = vmax.f32 %v1350, 0.0
          %v1725 = vmax.f32 %v1353, 0.0
          %v1726 = vmax.f32 %v1358, 0.0
          %v1727 = vmax.f32 %v1361, 0.0
          %v1728 = vmax.f32 %v1366, 0.0
          %v1729 = vmax.f32 %v1369, 0.0
          %v1730 = vmax.f32 %v1374, 0.0
          %v1731 = vmax.f32 %v1377, 0.0
          %v1732 = vmax.f32 %v1382, 0.0
          %v1733 = vmax.f32 %v1385, 0.0
          %v1734 = vmax.f32 %v1390, 0.0
          %v1735 = vmax.f32 %v1393, 0.0
          %v1736 = vmax.f32 %v1398, 0.0
          %v1737 = vmax.f32 %v1401, 0.0
          %v1738 = vmax.f32 %v1406, 0.0
          %v1739 = vmax.f32 %v1409, 0.0
          %v1740 = vmax.f32 %v1414, 0.0
          %v1741 = vmax.f32 %v1417, 0.0
          %v1742 = vmax.f32 %v1422, 0.0
          %v1743 = vmax.f32 %v1425, 0.0
          %v1744 = vmax.f32 %v1430, 0.0
          %v1745 = vmax.f32 %v1433, 0.0
          %v1746 = vmax.f32 %v1438, 0.0
          %v1747 = vmax.f32 %v1441, 0.0
          %v1748 = vmax.f32 %v1446, 0.0
          %v1749 = vmax.f32 %v1449, 0.0
          %v1750 = vmax.f32 %v1454, 0.0
          %v1751 = vmax.f32 %v1457, 0.0
          %v1752 = vmax.f32 %v1462, 0.0
          %v1753 = vmax.f32 %v1465, 0.0
          %v1754 = vmax.f32 %v1470, 0.0
          %v1755 = vmax.f32 %v1473, 0.0
          %v1756 = vmax.f32 %v1478, 0.0
          %v1757 = vmax.f32 %v1481, 0.0
          %v1758 = vmax.f32 %v1486, 0.0
          %v1759 = vmax.f32 %v1489, 0.0
          %v1760 = vmax.f32 %v1494, 0.0
          %v1761 = vmax.f32 %v1497, 0.0
          %v1762 = vmax.f32 %v1502, 0.0
          %v1763 = vmax.f32 %v1505, 0.0
          %v1764 = vmax.f32 %v1510, 0.0
          %v1765 = vmax.f32 %v1513, 0.0
          %v1766 = vmax.f32 %v1518, 0.0
          %v1767 = vmax.f32 %v1521, 0.0
          %v1768 = vmax.f32 %v1526, 0.0
          %v1769 = vmax.f32 %v1529, 0.0
          %v1770 = vmax.f32 %v1534, 0.0
          %v1771 = vmax.f32 %v1537, 0.0
          %v1772 = vmax.f32 %v1542, 0.0
          %v1773 = vmax.f32 %v1545, 0.0
          %v1774 = vmax.f32 %v1550, 0.0
          %v1775 = vmax.f32 %v1553, 0.0
          %v1776 = vmax.f32 %v1558, 0.0
          %v1777 = vmax.f32 %v1561, 0.0
          %v1778 = vmax.f32 %v1566, 0.0
          %v1779 = vmax.f32 %v1569, 0.0
          %v1780 = vmax.f32 %v1574, 0.0
          %v1781 = vmax.f32 %v1577, 0.0
          %v1782 = vmax.f32 %v1582, 0.0
          %v1783 = vmax.f32 %v1585, 0.0
          %v1784 = vmax.f32 %v1590, 0.0
          %v1785 = vmax.f32 %v1593, 0.0
          %v1786 = vmax.f32 %v1598, 0.0
          %v1787 = vmax.f32 %v1601, 0.0
          %v1788 = vmax.f32 %v1606, 0.0
          %v1789 = vmax.f32 %v1609, 0.0
          %v1790 = vmax.f32 %v1614, 0.0
          %v1791 = vmax.f32 %v1617, 0.0
          %v1792 = vmax.f32 %v1622, 0.0
          %v1793 = vmax.f32 %v1625, 0.0
          %v1794 = vmax.f32 %v1630, 0.0
          %v1795 = vmax.f32 %v1633, 0.0
          %v1796 = vmax.f32 %v1638, 0.0
          %v1797 = vmax.f32 %v1641, 0.0
          %v1798 = vmax.f32 %v1646, 0.0
          %v1799 = vmax.f32 %v1649, 0.0
          %v1800 = vmax.f32 %v1654, 0.0
          %v1801 = vmax.f32 %v1657, 0.0
          %v1802 = vmax.f32 %v1662, 0.0
          %v1803 = vmax.f32 %v1665, 0.0
          %v1804 = vmax.f32 %v1670, 0.0
          %v1805 = vmax.f32 %v1673, 0.0
          %v1806 = vmax.f32 %v1678, 0.0
          %v1807 = vmax.f32 %v1681, 0.0
          %v1808 = vmax.f32 %v1686, 0.0
          %v1809 = vmax.f32 %v1689, 0.0
          %v1810 = vmax.f32 %v1694, 0.0
          %v1811 = vmax.f32 %v1697, 0.0
          %vm1812 = vcmask 80896
          %1813 = vst.msk [vmem:[#allocation2] sm:$0xff] %vm1812, %v1700
          %1814 = vst.msk [vmem:[#allocation2 + $0x8] sm:$0xff] %vm1812, %v1701
          %1815 = vst.msk [vmem:[#allocation2 + $0x10] sm:$0xff] %vm1812, %v1702
          %1816 = vst.msk [vmem:[#allocation2 + $0x18] sm:$0xff] %vm1812, %v1703
          %1817 = vst.msk [vmem:[#allocation2 + $0x20] sm:$0xff] %vm1812, %v1704
          %1818 = vst.msk [vmem:[#allocation2 + $0x28] sm:$0xff] %vm1812, %v1705
          %1819 = vst.msk [vmem:[#allocation2 + $0x30] sm:$0xff] %vm1812, %v1706
          %1820 = vst.msk [vmem:[#allocation2 + $0x38] sm:$0xff] %vm1812, %v1707
          %1821 = vst.msk [vmem:[#allocation2 + $0x40] sm:$0xff] %vm1812, %v1708
          %1822 = vst.msk [vmem:[#allocation2 + $0x48] sm:$0xff] %vm1812, %v1709
          %1823 = vst.msk [vmem:[#allocation2 + $0x50] sm:$0xff] %vm1812, %v1710
          %1824 = vst.msk [vmem:[#allocation2 + $0x58] sm:$0xff] %vm1812, %v1711
          %1825 = vst.msk [vmem:[#allocation2 + $0x60] sm:$0xff] %vm1812, %v1712
          %1826 = vst.msk [vmem:[#allocation2 + $0x68] sm:$0xff] %vm1812, %v1713
          %1827 = vst.msk [vmem:[#allocation2 + $0x70] sm:$0xff] %vm1812, %v1714
          %1828 = vst.msk [vmem:[#allocation2 + $0x78] sm:$0xff] %vm1812, %v1715
          %1829 = vst.msk [vmem:[#allocation2 + $0x80] sm:$0xff] %vm1812, %v1716
          %1830 = vst.msk [vmem:[#allocation2 + $0x88] sm:$0xff] %vm1812, %v1717
          %1831 = vst.msk [vmem:[#allocation2 + $0x90] sm:$0xff] %vm1812, %v1718
          %1832 = vst.msk [vmem:[#allocation2 + $0x98] sm:$0xff] %vm1812, %v1719
          %1833 = vst.msk [vmem:[#allocation2 + $0xa0] sm:$0xff] %vm1812, %v1720
          %1834 = vst.msk [vmem:[#allocation2 + $0xa8] sm:$0xff] %vm1812, %v1721
          %1835 = vst.msk [vmem:[#allocation2 + $0xb0] sm:$0xff] %vm1812, %v1722
          %1836 = vst.msk [vmem:[#allocation2 + $0xb8] sm:$0xff] %vm1812, %v1723
          %1837 = vst.msk [vmem:[#allocation2 + $0xc0] sm:$0xff] %vm1812, %v1724
          %1838 = vst.msk [vmem:[#allocation2 + $0xc8] sm:$0xff] %vm1812, %v1725
          %1839 = vst.msk [vmem:[#allocation2 + $0xd0] sm:$0xff] %vm1812, %v1726
          %1840 = vst.msk [vmem:[#allocation2 + $0xd8] sm:$0xff] %vm1812, %v1727
          %1841 = vst.msk [vmem:[#allocation2 + $0xe0] sm:$0xff] %vm1812, %v1728
          %1842 = vst.msk [vmem:[#allocation2 + $0xe8] sm:$0xff] %vm1812, %v1729
          %1843 = vst.msk [vmem:[#allocation2 + $0xf0] sm:$0xff] %vm1812, %v1730
          %1844 = vst.msk [vmem:[#allocation2 + $0xf8] sm:$0xff] %vm1812, %v1731
          %1845 = vst.msk [vmem:[#allocation2 + $0x100] sm:$0xff] %vm1812, %v1732
          %1846 = vst.msk [vmem:[#allocation2 + $0x108] sm:$0xff] %vm1812, %v1733
          %1847 = vst.msk [vmem:[#allocation2 + $0x110] sm:$0xff] %vm1812, %v1734
          %1848 = vst.msk [vmem:[#allocation2 + $0x118] sm:$0xff] %vm1812, %v1735
          %1849 = vst.msk [vmem:[#allocation2 + $0x120] sm:$0xff] %vm1812, %v1736
          %1850 = vst.msk [vmem:[#allocation2 + $0x128] sm:$0xff] %vm1812, %v1737
          %1851 = vst.msk [vmem:[#allocation2 + $0x130] sm:$0xff] %vm1812, %v1738
          %1852 = vst.msk [vmem:[#allocation2 + $0x138] sm:$0xff] %vm1812, %v1739
          %1853 = vst.msk [vmem:[#allocation2 + $0x140] sm:$0xff] %vm1812, %v1740
          %1854 = vst.msk [vmem:[#allocation2 + $0x148] sm:$0xff] %vm1812, %v1741
          %1855 = vst.msk [vmem:[#allocation2 + $0x150] sm:$0xff] %vm1812, %v1742
          %1856 = vst.msk [vmem:[#allocation2 + $0x158] sm:$0xff] %vm1812, %v1743
          %1857 = vst.msk [vmem:[#allocation2 + $0x160] sm:$0xff] %vm1812, %v1744
          %1858 = vst.msk [vmem:[#allocation2 + $0x168] sm:$0xff] %vm1812, %v1745
          %1859 = vst.msk [vmem:[#allocation2 + $0x170] sm:$0xff] %vm1812, %v1746
          %1860 = vst.msk [vmem:[#allocation2 + $0x178] sm:$0xff] %vm1812, %v1747
          %1861 = vst.msk [vmem:[#allocation2 + $0x180] sm:$0xff] %vm1812, %v1748
          %1862 = vst.msk [vmem:[#allocation2 + $0x188] sm:$0xff] %vm1812, %v1749
          %1863 = vst.msk [vmem:[#allocation2 + $0x190] sm:$0xff] %vm1812, %v1750
          %1864 = vst.msk [vmem:[#allocation2 + $0x198] sm:$0xff] %vm1812, %v1751
          %1865 = vst.msk [vmem:[#allocation2 + $0x1a0] sm:$0xff] %vm1812, %v1752
          %1866 = vst.msk [vmem:[#allocation2 + $0x1a8] sm:$0xff] %vm1812, %v1753
          %1867 = vst.msk [vmem:[#allocation2 + $0x1b0] sm:$0xff] %vm1812, %v1754
          %1868 = vst.msk [vmem:[#allocation2 + $0x1b8] sm:$0xff] %vm1812, %v1755
          %1869 = vst.msk [vmem:[#allocation2 + $0x1c0] sm:$0xff] %vm1812, %v1756
          %1870 = vst.msk [vmem:[#allocation2 + $0x1c8] sm:$0xff] %vm1812, %v1757
          %1871 = vst.msk [vmem:[#allocation2 + $0x1d0] sm:$0xff] %vm1812, %v1758
          %1872 = vst.msk [vmem:[#allocation2 + $0x1d8] sm:$0xff] %vm1812, %v1759
          %1873 = vst.msk [vmem:[#allocation2 + $0x1e0] sm:$0xff] %vm1812, %v1760
          %1874 = vst.msk [vmem:[#allocation2 + $0x1e8] sm:$0xff] %vm1812, %v1761
          %1875 = vst.msk [vmem:[#allocation2 + $0x1f0] sm:$0xff] %vm1812, %v1762
          %1876 = vst.msk [vmem:[#allocation2 + $0x1f8] sm:$0xff] %vm1812, %v1763
          %1877 = vst.msk [vmem:[#allocation2 + $0x200] sm:$0xff] %vm1812, %v1764
          %1878 = vst.msk [vmem:[#allocation2 + $0x208] sm:$0xff] %vm1812, %v1765
          %1879 = vst.msk [vmem:[#allocation2 + $0x210] sm:$0xff] %vm1812, %v1766
          %1880 = vst.msk [vmem:[#allocation2 + $0x218] sm:$0xff] %vm1812, %v1767
          %1881 = vst.msk [vmem:[#allocation2 + $0x220] sm:$0xff] %vm1812, %v1768
          %1882 = vst.msk [vmem:[#allocation2 + $0x228] sm:$0xff] %vm1812, %v1769
          %1883 = vst.msk [vmem:[#allocation2 + $0x230] sm:$0xff] %vm1812, %v1770
          %1884 = vst.msk [vmem:[#allocation2 + $0x238] sm:$0xff] %vm1812, %v1771
          %1885 = vst.msk [vmem:[#allocation2 + $0x240] sm:$0xff] %vm1812, %v1772
          %1886 = vst.msk [vmem:[#allocation2 + $0x248] sm:$0xff] %vm1812, %v1773
          %1887 = vst.msk [vmem:[#allocation2 + $0x250] sm:$0xff] %vm1812, %v1774
          %1888 = vst.msk [vmem:[#allocation2 + $0x258] sm:$0xff] %vm1812, %v1775
          %1889 = vst.msk [vmem:[#allocation2 + $0x260] sm:$0xff] %vm1812, %v1776
          %1890 = vst.msk [vmem:[#allocation2 + $0x268] sm:$0xff] %vm1812, %v1777
          %1891 = vst.msk [vmem:[#allocation2 + $0x270] sm:$0xff] %vm1812, %v1778
          %1892 = vst.msk [vmem:[#allocation2 + $0x278] sm:$0xff] %vm1812, %v1779
          %1893 = vst.msk [vmem:[#allocation2 + $0x280] sm:$0xff] %vm1812, %v1780
          %1894 = vst.msk [vmem:[#allocation2 + $0x288] sm:$0xff] %vm1812, %v1781
          %1895 = vst.msk [vmem:[#allocation2 + $0x290] sm:$0xff] %vm1812, %v1782
          %1896 = vst.msk [vmem:[#allocation2 + $0x298] sm:$0xff] %vm1812, %v1783
          %1897 = vst.msk [vmem:[#allocation2 + $0x2a0] sm:$0xff] %vm1812, %v1784
          %1898 = vst.msk [vmem:[#allocation2 + $0x2a8] sm:$0xff] %vm1812, %v1785
          %1899 = vst.msk [vmem:[#allocation2 + $0x2b0] sm:$0xff] %vm1812, %v1786
          %1900 = vst.msk [vmem:[#allocation2 + $0x2b8] sm:$0xff] %vm1812, %v1787
          %1901 = vst.msk [vmem:[#allocation2 + $0x2c0] sm:$0xff] %vm1812, %v1788
          %1902 = vst.msk [vmem:[#allocation2 + $0x2c8] sm:$0xff] %vm1812, %v1789
          %1903 = vst.msk [vmem:[#allocation2 + $0x2d0] sm:$0xff] %vm1812, %v1790
          %1904 = vst.msk [vmem:[#allocation2 + $0x2d8] sm:$0xff] %vm1812, %v1791
          %1905 = vst.msk [vmem:[#allocation2 + $0x2e0] sm:$0xff] %vm1812, %v1792
          %1906 = vst.msk [vmem:[#allocation2 + $0x2e8] sm:$0xff] %vm1812, %v1793
          %1907 = vst.msk [vmem:[#allocation2 + $0x2f0] sm:$0xff] %vm1812, %v1794
          %1908 = vst.msk [vmem:[#allocation2 + $0x2f8] sm:$0xff] %vm1812, %v1795
          %1909 = vst.msk [vmem:[#allocation2 + $0x300] sm:$0xff] %vm1812, %v1796
          %1910 = vst.msk [vmem:[#allocation2 + $0x308] sm:$0xff] %vm1812, %v1797
          %1911 = vst.msk [vmem:[#allocation2 + $0x310] sm:$0xff] %vm1812, %v1798
          %1912 = vst.msk [vmem:[#allocation2 + $0x318] sm:$0xff] %vm1812, %v1799
          %1913 = vst.msk [vmem:[#allocation2 + $0x320] sm:$0xff] %vm1812, %v1800
          %1914 = vst.msk [vmem:[#allocation2 + $0x328] sm:$0xff] %vm1812, %v1801
          %1915 = vst.msk [vmem:[#allocation2 + $0x330] sm:$0xff] %vm1812, %v1802
          %1916 = vst.msk [vmem:[#allocation2 + $0x338] sm:$0xff] %vm1812, %v1803
          %1917 = vst.msk [vmem:[#allocation2 + $0x340] sm:$0xff] %vm1812, %v1804
          %1918 = vst.msk [vmem:[#allocation2 + $0x348] sm:$0xff] %vm1812, %v1805
          %1919 = vst.msk [vmem:[#allocation2 + $0x350] sm:$0xff] %vm1812, %v1806
          %1920 = vst.msk [vmem:[#allocation2 + $0x358] sm:$0xff] %vm1812, %v1807
          %1921 = vst.msk [vmem:[#allocation2 + $0x360] sm:$0xff] %vm1812, %v1808
          %1922 = vst.msk [vmem:[#allocation2 + $0x368] sm:$0xff] %vm1812, %v1809
          %1923 = vst.msk [vmem:[#allocation2 + $0x370] sm:$0xff] %vm1812, %v1810
          %vm1924 = vcmask 76800
          %1925 = vst.msk [vmem:[#allocation2 + $0x378] sm:$0xf] %vm1924, %v1811
          %v1926 = vld [vmem:[%s3] sm:$0xff]
          %v1927 = vld [vmem:[%s3 + $0x8] sm:$0xff]
          %v1928 = vld [vmem:[%s3 + $0x10] sm:$0xff]
          %v1929 = vld [vmem:[%s3 + $0x18] sm:$0xf]
          %v1930 = vld [vmem:[%s3 + $0x1c] sm:$0xff]
          %v1931 = vld [vmem:[%s3 + $0x24] sm:$0xff]
          %v1932 = vld [vmem:[%s3 + $0x2c] sm:$0xff]
          %v1933 = vld [vmem:[%s3 + $0x34] sm:$0xf]
          %v1934 = vld [vmem:[%s3 + $0x38] sm:$0xff]
          %v1935 = vld [vmem:[%s3 + $0x40] sm:$0xff]
          %v1936 = vld [vmem:[%s3 + $0x48] sm:$0xff]
          %v1937 = vld [vmem:[%s3 + $0x50] sm:$0xf]
          %v1938 = vld [vmem:[%s3 + $0x54] sm:$0xff]
          %v1939 = vld [vmem:[%s3 + $0x5c] sm:$0xff]
          %v1940 = vld [vmem:[%s3 + $0x64] sm:$0xff]
          %v1941 = vld [vmem:[%s3 + $0x6c] sm:$0xf]
          %v1942 = vld [vmem:[%s3 + $0x70] sm:$0xff]
          %v1943 = vld [vmem:[%s3 + $0x78] sm:$0xff]
          %v1944 = vld [vmem:[%s3 + $0x80] sm:$0xff]
          %v1945 = vld [vmem:[%s3 + $0x88] sm:$0xf]
          %v1946 = vld [vmem:[%s3 + $0x8c] sm:$0xff]
          %v1947 = vld [vmem:[%s3 + $0x94] sm:$0xff]
          %v1948 = vld [vmem:[%s3 + $0x9c] sm:$0xff]
          %v1949 = vld [vmem:[%s3 + $0xa4] sm:$0xf]
          %v1950 = vld [vmem:[%s3 + $0xa8] sm:$0xff]
          %v1951 = vld [vmem:[%s3 + $0xb0] sm:$0xff]
          %v1952 = vld [vmem:[%s3 + $0xb8] sm:$0xff]
          %v1953 = vld [vmem:[%s3 + $0xc0] sm:$0xf]
          %v1954 = vld [vmem:[%s3 + $0xc4] sm:$0xff]
          %v1955 = vld [vmem:[%s3 + $0xcc] sm:$0xff]
          %v1956 = vld [vmem:[%s3 + $0xd4] sm:$0xff]
          %v1957 = vld [vmem:[%s3 + $0xdc] sm:$0xf]
          %v1958 = vld [vmem:[%s3 + $0xe0] sm:$0xff]
          %v1959 = vld [vmem:[%s3 + $0xe8] sm:$0xff]
          %v1960 = vld [vmem:[%s3 + $0xf0] sm:$0xff]
          %v1961 = vld [vmem:[%s3 + $0xf8] sm:$0xf]
          %v1962 = vld [vmem:[%s3 + $0xfc] sm:$0xff]
          %v1963 = vld [vmem:[%s3 + $0x104] sm:$0xff]
          %v1964 = vld [vmem:[%s3 + $0x10c] sm:$0xff]
          %v1965 = vld [vmem:[%s3 + $0x114] sm:$0xf]
          %v1966 = vld [vmem:[%s3 + $0x118] sm:$0xff]
          %v1967 = vld [vmem:[%s3 + $0x120] sm:$0xff]
          %v1968 = vld [vmem:[%s3 + $0x128] sm:$0xff]
          %v1969 = vld [vmem:[%s3 + $0x130] sm:$0xf]
          %v1970 = vld [vmem:[%s3 + $0x134] sm:$0xff]
          %v1971 = vld [vmem:[%s3 + $0x13c] sm:$0xff]
          %v1972 = vld [vmem:[%s3 + $0x144] sm:$0xff]
          %v1973 = vld [vmem:[%s3 + $0x14c] sm:$0xf]
          %v1974 = vld [vmem:[%s3 + $0x150] sm:$0xff]
          %v1975 = vld [vmem:[%s3 + $0x158] sm:$0xff]
          %v1976 = vld [vmem:[%s3 + $0x160] sm:$0xff]
          %v1977 = vld [vmem:[%s3 + $0x168] sm:$0xf]
          %v1978 = vld [vmem:[%s3 + $0x16c] sm:$0xff]
          %v1979 = vld [vmem:[%s3 + $0x174] sm:$0xff]
          %v1980 = vld [vmem:[%s3 + $0x17c] sm:$0xff]
          %v1981 = vld [vmem:[%s3 + $0x184] sm:$0xf]
          %v1982 = vld [vmem:[%s3 + $0x188] sm:$0xff]
          %v1983 = vld [vmem:[%s3 + $0x190] sm:$0xff]
          %v1984 = vld [vmem:[%s3 + $0x198] sm:$0xff]
          %v1985 = vld [vmem:[%s3 + $0x1a0] sm:$0xf]
          %v1986 = vld [vmem:[%s3 + $0x1a4] sm:$0xff]
          %v1987 = vld [vmem:[%s3 + $0x1ac] sm:$0xff]
          %v1988 = vld [vmem:[%s3 + $0x1b4] sm:$0xff]
          %v1989 = vld [vmem:[%s3 + $0x1bc] sm:$0xf]
          %v1990 = vld [vmem:[%s3 + $0x1c0] sm:$0xff]
          %v1991 = vld [vmem:[%s3 + $0x1c8] sm:$0xff]
          %v1992 = vld [vmem:[%s3 + $0x1d0] sm:$0xff]
          %v1993 = vld [vmem:[%s3 + $0x1d8] sm:$0xf]
          %v1994 = vld [vmem:[%s3 + $0x1dc] sm:$0xff]
          %v1995 = vld [vmem:[%s3 + $0x1e4] sm:$0xff]
          %v1996 = vld [vmem:[%s3 + $0x1ec] sm:$0xff]
          %v1997 = vld [vmem:[%s3 + $0x1f4] sm:$0xf]
          %v1998 = vld [vmem:[%s3 + $0x1f8] sm:$0xff]
          %v1999 = vld [vmem:[%s3 + $0x200] sm:$0xff]
          %v2000 = vld [vmem:[%s3 + $0x208] sm:$0xff]
          %v2001 = vld [vmem:[%s3 + $0x210] sm:$0xf]
          %v2002 = vld [vmem:[%s3 + $0x214] sm:$0xff]
          %v2003 = vld [vmem:[%s3 + $0x21c] sm:$0xff]
          %v2004 = vld [vmem:[%s3 + $0x224] sm:$0xff]
          %v2005 = vld [vmem:[%s3 + $0x22c] sm:$0xf]
          %v2006 = vld [vmem:[%s3 + $0x230] sm:$0xff]
          %v2007 = vld [vmem:[%s3 + $0x238] sm:$0xff]
          %v2008 = vld [vmem:[%s3 + $0x240] sm:$0xff]
          %v2009 = vld [vmem:[%s3 + $0x248] sm:$0xf]
          %v2010 = vld [vmem:[%s3 + $0x24c] sm:$0xff]
          %v2011 = vld [vmem:[%s3 + $0x254] sm:$0xff]
          %v2012 = vld [vmem:[%s3 + $0x25c] sm:$0xff]
          %v2013 = vld [vmem:[%s3 + $0x264] sm:$0xf]
          %v2014 = vld [vmem:[%s3 + $0x268] sm:$0xff]
          %v2015 = vld [vmem:[%s3 + $0x270] sm:$0xff]
          %v2016 = vld [vmem:[%s3 + $0x278] sm:$0xff]
          %v2017 = vld [vmem:[%s3 + $0x280] sm:$0xf]
          %v2018 = vld [vmem:[%s3 + $0x284] sm:$0xff]
          %v2019 = vld [vmem:[%s3 + $0x28c] sm:$0xff]
          %v2020 = vld [vmem:[%s3 + $0x294] sm:$0xff]
          %v2021 = vld [vmem:[%s3 + $0x29c] sm:$0xf]
          %v2022 = vld [vmem:[%s3 + $0x2a0] sm:$0xff]
          %v2023 = vld [vmem:[%s3 + $0x2a8] sm:$0xff]
          %v2024 = vld [vmem:[%s3 + $0x2b0] sm:$0xff]
          %v2025 = vld [vmem:[%s3 + $0x2b8] sm:$0xf]
          %v2026 = vld [vmem:[%s3 + $0x2bc] sm:$0xff]
          %v2027 = vld [vmem:[%s3 + $0x2c4] sm:$0xff]
          %v2028 = vld [vmem:[%s3 + $0x2cc] sm:$0xff]
          %v2029 = vld [vmem:[%s3 + $0x2d4] sm:$0xf]
          %v2030 = vld [vmem:[%s3 + $0x2d8] sm:$0xff]
          %v2031 = vld [vmem:[%s3 + $0x2e0] sm:$0xff]
          %v2032 = vld [vmem:[%s3 + $0x2e8] sm:$0xff]
          %v2033 = vld [vmem:[%s3 + $0x2f0] sm:$0xf]
          %v2034 = vld [vmem:[%s3 + $0x2f4] sm:$0xff]
          %v2035 = vld [vmem:[%s3 + $0x2fc] sm:$0xff]
          %v2036 = vld [vmem:[%s3 + $0x304] sm:$0xff]
          %v2037 = vld [vmem:[%s3 + $0x30c] sm:$0xf]
          %v2038 = vld [vmem:[%s3 + $0x310] sm:$0xff]
          %v2039 = vld [vmem:[%s3 + $0x318] sm:$0xff]
          %v2040 = vld [vmem:[%s3 + $0x320] sm:$0xff]
          %v2041 = vld [vmem:[%s3 + $0x328] sm:$0xf]
          %v2042 = vld [vmem:[%s3 + $0x32c] sm:$0xff]
          %v2043 = vld [vmem:[%s3 + $0x334] sm:$0xff]
          %v2044 = vld [vmem:[%s3 + $0x33c] sm:$0xff]
          %v2045 = vld [vmem:[%s3 + $0x344] sm:$0xf]
          %v2046 = vld [vmem:[%s3 + $0x348] sm:$0xff]
          %v2047 = vld [vmem:[%s3 + $0x350] sm:$0xff]
          %v2048 = vld [vmem:[%s3 + $0x358] sm:$0xff]
          %v2049 = vld [vmem:[%s3 + $0x360] sm:$0xf]
          %v2050 = vld [vmem:[%s3 + $0x364] sm:$0xff]
          %v2051 = vld [vmem:[%s3 + $0x36c] sm:$0xff]
          %v2052 = vld [vmem:[%s3 + $0x374] sm:$0xff]
          %v2053 = vld [vmem:[%s3 + $0x37c] sm:$0xf]
          %v2054 = vld [vmem:[#allocation2] sm:$0xff]
          %v2055 = vld [vmem:[#allocation2 + $0x8] sm:$0xff]
          %v2056 = vld [vmem:[#allocation2 + $0x10] sm:$0xff]
          %v2057 = vld [vmem:[#allocation2 + $0x18] sm:$0xff]
          %v2058 = vld [vmem:[#allocation2 + $0x20] sm:$0xff]
          %v2059 = vld [vmem:[#allocation2 + $0x28] sm:$0xff]
          %v2060 = vld [vmem:[#allocation2 + $0x30] sm:$0xff]
          %v2061 = vld [vmem:[#allocation2 + $0x38] sm:$0xff]
          %v2062 = vld [vmem:[#allocation2 + $0x40] sm:$0xff]
          %v2063 = vld [vmem:[#allocation2 + $0x48] sm:$0xff]
          %v2064 = vld [vmem:[#allocation2 + $0x50] sm:$0xff]
          %v2065 = vld [vmem:[#allocation2 + $0x58] sm:$0xff]
          %v2066 = vld [vmem:[#allocation2 + $0x60] sm:$0xff]
          %v2067 = vld [vmem:[#allocation2 + $0x68] sm:$0xff]
          %v2068 = vld [vmem:[#allocation2 + $0x70] sm:$0xff]
          %v2069 = vld [vmem:[#allocation2 + $0x78] sm:$0xff]
          %v2070 = vld [vmem:[#allocation2 + $0x80] sm:$0xff]
          %v2071 = vld [vmem:[#allocation2 + $0x88] sm:$0xff]
          %v2072 = vld [vmem:[#allocation2 + $0x90] sm:$0xff]
          %v2073 = vld [vmem:[#allocation2 + $0x98] sm:$0xff]
          %v2074 = vld [vmem:[#allocation2 + $0xa0] sm:$0xff]
          %v2075 = vld [vmem:[#allocation2 + $0xa8] sm:$0xff]
          %v2076 = vld [vmem:[#allocation2 + $0xb0] sm:$0xff]
          %v2077 = vld [vmem:[#allocation2 + $0xb8] sm:$0xff]
          %v2078 = vld [vmem:[#allocation2 + $0xc0] sm:$0xff]
          %v2079 = vld [vmem:[#allocation2 + $0xc8] sm:$0xff]
          %v2080 = vld [vmem:[#allocation2 + $0xd0] sm:$0xff]
          %v2081 = vld [vmem:[#allocation2 + $0xd8] sm:$0xff]
          %v2082 = vld [vmem:[#allocation2 + $0xe0] sm:$0xff]
          %v2083 = vld [vmem:[#allocation2 + $0xe8] sm:$0xff]
          %v2084 = vld [vmem:[#allocation2 + $0xf0] sm:$0xff]
          %v2085 = vld [vmem:[#allocation2 + $0xf8] sm:$0xff]
          %v2086 = vld [vmem:[#allocation2 + $0x100] sm:$0xff]
          %v2087 = vld [vmem:[#allocation2 + $0x108] sm:$0xff]
          %v2088 = vld [vmem:[#allocation2 + $0x110] sm:$0xff]
          %v2089 = vld [vmem:[#allocation2 + $0x118] sm:$0xff]
          %v2090 = vld [vmem:[#allocation2 + $0x120] sm:$0xff]
          %v2091 = vld [vmem:[#allocation2 + $0x128] sm:$0xff]
          %v2092 = vld [vmem:[#allocation2 + $0x130] sm:$0xff]
          %v2093 = vld [vmem:[#allocation2 + $0x138] sm:$0xff]
          %v2094 = vld [vmem:[#allocation2 + $0x140] sm:$0xff]
          %v2095 = vld [vmem:[#allocation2 + $0x148] sm:$0xff]
          %v2096 = vld [vmem:[#allocation2 + $0x150] sm:$0xff]
          %v2097 = vld [vmem:[#allocation2 + $0x158] sm:$0xff]
          %v2098 = vld [vmem:[#allocation2 + $0x160] sm:$0xff]
          %v2099 = vld [vmem:[#allocation2 + $0x168] sm:$0xff]
          %v2100 = vld [vmem:[#allocation2 + $0x170] sm:$0xff]
          %v2101 = vld [vmem:[#allocation2 + $0x178] sm:$0xff]
          %v2102 = vld [vmem:[#allocation2 + $0x180] sm:$0xff]
          %v2103 = vld [vmem:[#allocation2 + $0x188] sm:$0xff]
          %v2104 = vld [vmem:[#allocation2 + $0x190] sm:$0xff]
          %v2105 = vld [vmem:[#allocation2 + $0x198] sm:$0xff]
          %v2106 = vld [vmem:[#allocation2 + $0x1a0] sm:$0xff]
          %v2107 = vld [vmem:[#allocation2 + $0x1a8] sm:$0xff]
          %v2108 = vld [vmem:[#allocation2 + $0x1b0] sm:$0xff]
          %v2109 = vld [vmem:[#allocation2 + $0x1b8] sm:$0xff]
          %v2110 = vld [vmem:[#allocation2 + $0x1c0] sm:$0xff]
          %v2111 = vld [vmem:[#allocation2 + $0x1c8] sm:$0xff]
          %v2112 = vld [vmem:[#allocation2 + $0x1d0] sm:$0xff]
          %v2113 = vld [vmem:[#allocation2 + $0x1d8] sm:$0xff]
          %v2114 = vld [vmem:[#allocation2 + $0x1e0] sm:$0xff]
          %v2115 = vld [vmem:[#allocation2 + $0x1e8] sm:$0xff]
          %v2116 = vld [vmem:[#allocation2 + $0x1f0] sm:$0xff]
          %v2117 = vld [vmem:[#allocation2 + $0x1f8] sm:$0xff]
          %v2118 = vld [vmem:[#allocation2 + $0x200] sm:$0xff]
          %v2119 = vld [vmem:[#allocation2 + $0x208] sm:$0xff]
          %v2120 = vld [vmem:[#allocation2 + $0x210] sm:$0xff]
          %v2121 = vld [vmem:[#allocation2 + $0x218] sm:$0xff]
          %v2122 = vld [vmem:[#allocation2 + $0x220] sm:$0xff]
          %v2123 = vld [vmem:[#allocation2 + $0x228] sm:$0xff]
          %v2124 = vld [vmem:[#allocation2 + $0x230] sm:$0xff]
          %v2125 = vld [vmem:[#allocation2 + $0x238] sm:$0xff]
          %v2126 = vld [vmem:[#allocation2 + $0x240] sm:$0xff]
          %v2127 = vld [vmem:[#allocation2 + $0x248] sm:$0xff]
          %v2128 = vld [vmem:[#allocation2 + $0x250] sm:$0xff]
          %v2129 = vld [vmem:[#allocation2 + $0x258] sm:$0xff]
          %v2130 = vld [vmem:[#allocation2 + $0x260] sm:$0xff]
          %v2131 = vld [vmem:[#allocation2 + $0x268] sm:$0xff]
          %v2132 = vld [vmem:[#allocation2 + $0x270] sm:$0xff]
          %v2133 = vld [vmem:[#allocation2 + $0x278] sm:$0xff]
          %v2134 = vld [vmem:[#allocation2 + $0x280] sm:$0xff]
          %v2135 = vld [vmem:[#allocation2 + $0x288] sm:$0xff]
          %v2136 = vld [vmem:[#allocation2 + $0x290] sm:$0xff]
          %v2137 = vld [vmem:[#allocation2 + $0x298] sm:$0xff]
          %v2138 = vld [vmem:[#allocation2 + $0x2a0] sm:$0xff]
          %v2139 = vld [vmem:[#allocation2 + $0x2a8] sm:$0xff]
          %v2140 = vld [vmem:[#allocation2 + $0x2b0] sm:$0xff]
          %v2141 = vld [vmem:[#allocation2 + $0x2b8] sm:$0xff]
          %v2142 = vld [vmem:[#allocation2 + $0x2c0] sm:$0xff]
          %v2143 = vld [vmem:[#allocation2 + $0x2c8] sm:$0xff]
          %v2144 = vld [vmem:[#allocation2 + $0x2d0] sm:$0xff]
          %v2145 = vld [vmem:[#allocation2 + $0x2d8] sm:$0xff]
          %v2146 = vld [vmem:[#allocation2 + $0x2e0] sm:$0xff]
          %v2147 = vld [vmem:[#allocation2 + $0x2e8] sm:$0xff]
          %v2148 = vld [vmem:[#allocation2 + $0x2f0] sm:$0xff]
          %v2149 = vld [vmem:[#allocation2 + $0x2f8] sm:$0xff]
          %v2150 = vld [vmem:[#allocation2 + $0x300] sm:$0xff]
          %v2151 = vld [vmem:[#allocation2 + $0x308] sm:$0xff]
          %v2152 = vld [vmem:[#allocation2 + $0x310] sm:$0xff]
          %v2153 = vld [vmem:[#allocation2 + $0x318] sm:$0xff]
          %v2154 = vld [vmem:[#allocation2 + $0x320] sm:$0xff]
          %v2155 = vld [vmem:[#allocation2 + $0x328] sm:$0xff]
          %v2156 = vld [vmem:[#allocation2 + $0x330] sm:$0xff]
          %v2157 = vld [vmem:[#allocation2 + $0x338] sm:$0xff]
          %v2158 = vld [vmem:[#allocation2 + $0x340] sm:$0xff]
          %v2159 = vld [vmem:[#allocation2 + $0x348] sm:$0xff]
          %v2160 = vld [vmem:[#allocation2 + $0x350] sm:$0xff]
          %v2161 = vld [vmem:[#allocation2 + $0x358] sm:$0x7]
          %v2162 = vld [vmem:[#allocation2 + $0x1] sm:$0xff]
          %v2163 = vld [vmem:[#allocation2 + $0x9] sm:$0xff]
          %v2164 = vld [vmem:[#allocation2 + $0x11] sm:$0xff]
          %v2165 = vld [vmem:[#allocation2 + $0x19] sm:$0xff]
          %v2166 = vld [vmem:[#allocation2 + $0x21] sm:$0xff]
          %v2167 = vld [vmem:[#allocation2 + $0x29] sm:$0xff]
          %v2168 = vld [vmem:[#allocation2 + $0x31] sm:$0xff]
          %v2169 = vld [vmem:[#allocation2 + $0x39] sm:$0xff]
          %v2170 = vld [vmem:[#allocation2 + $0x41] sm:$0xff]
          %v2171 = vld [vmem:[#allocation2 + $0x49] sm:$0xff]
          %v2172 = vld [vmem:[#allocation2 + $0x51] sm:$0xff]
          %v2173 = vld [vmem:[#allocation2 + $0x59] sm:$0xff]
          %v2174 = vld [vmem:[#allocation2 + $0x61] sm:$0xff]
          %v2175 = vld [vmem:[#allocation2 + $0x69] sm:$0xff]
          %v2176 = vld [vmem:[#allocation2 + $0x71] sm:$0xff]
          %v2177 = vld [vmem:[#allocation2 + $0x79] sm:$0xff]
          %v2178 = vld [vmem:[#allocation2 + $0x81] sm:$0xff]
          %v2179 = vld [vmem:[#allocation2 + $0x89] sm:$0xff]
          %v2180 = vld [vmem:[#allocation2 + $0x91] sm:$0xff]
          %v2181 = vld [vmem:[#allocation2 + $0x99] sm:$0xff]
          %v2182 = vld [vmem:[#allocation2 + $0xa1] sm:$0xff]
          %v2183 = vld [vmem:[#allocation2 + $0xa9] sm:$0xff]
          %v2184 = vld [vmem:[#allocation2 + $0xb1] sm:$0xff]
          %v2185 = vld [vmem:[#allocation2 + $0xb9] sm:$0xff]
          %v2186 = vld [vmem:[#allocation2 + $0xc1] sm:$0xff]
          %v2187 = vld [vmem:[#allocation2 + $0xc9] sm:$0xff]
          %v2188 = vld [vmem:[#allocation2 + $0xd1] sm:$0xff]
          %v2189 = vld [vmem:[#allocation2 + $0xd9] sm:$0xff]
          %v2190 = vld [vmem:[#allocation2 + $0xe1] sm:$0xff]
          %v2191 = vld [vmem:[#allocation2 + $0xe9] sm:$0xff]
          %v2192 = vld [vmem:[#allocation2 + $0xf1] sm:$0xff]
          %v2193 = vld [vmem:[#allocation2 + $0xf9] sm:$0xff]
          %v2194 = vld [vmem:[#allocation2 + $0x101] sm:$0xff]
          %v2195 = vld [vmem:[#allocation2 + $0x109] sm:$0xff]
          %v2196 = vld [vmem:[#allocation2 + $0x111] sm:$0xff]
          %v2197 = vld [vmem:[#allocation2 + $0x119] sm:$0xff]
          %v2198 = vld [vmem:[#allocation2 + $0x121] sm:$0xff]
          %v2199 = vld [vmem:[#allocation2 + $0x129] sm:$0xff]
          %v2200 = vld [vmem:[#allocation2 + $0x131] sm:$0xff]
          %v2201 = vld [vmem:[#allocation2 + $0x139] sm:$0xff]
          %v2202 = vld [vmem:[#allocation2 + $0x141] sm:$0xff]
          %v2203 = vld [vmem:[#allocation2 + $0x149] sm:$0xff]
          %v2204 = vld [vmem:[#allocation2 + $0x151] sm:$0xff]
          %v2205 = vld [vmem:[#allocation2 + $0x159] sm:$0xff]
          %v2206 = vld [vmem:[#allocation2 + $0x161] sm:$0xff]
          %v2207 = vld [vmem:[#allocation2 + $0x169] sm:$0xff]
          %v2208 = vld [vmem:[#allocation2 + $0x171] sm:$0xff]
          %v2209 = vld [vmem:[#allocation2 + $0x179] sm:$0xff]
          %v2210 = vld [vmem:[#allocation2 + $0x181] sm:$0xff]
          %v2211 = vld [vmem:[#allocation2 + $0x189] sm:$0xff]
          %v2212 = vld [vmem:[#allocation2 + $0x191] sm:$0xff]
          %v2213 = vld [vmem:[#allocation2 + $0x199] sm:$0xff]
          %v2214 = vld [vmem:[#allocation2 + $0x1a1] sm:$0xff]
          %v2215 = vld [vmem:[#allocation2 + $0x1a9] sm:$0xff]
          %v2216 = vld [vmem:[#allocation2 + $0x1b1] sm:$0xff]
          %v2217 = vld [vmem:[#allocation2 + $0x1b9] sm:$0xff]
          %v2218 = vld [vmem:[#allocation2 + $0x1c1] sm:$0xff]
          %v2219 = vld [vmem:[#allocation2 + $0x1c9] sm:$0xff]
          %v2220 = vld [vmem:[#allocation2 + $0x1d1] sm:$0xff]
          %v2221 = vld [vmem:[#allocation2 + $0x1d9] sm:$0xff]
          %v2222 = vld [vmem:[#allocation2 + $0x1e1] sm:$0xff]
          %v2223 = vld [vmem:[#allocation2 + $0x1e9] sm:$0xff]
          %v2224 = vld [vmem:[#allocation2 + $0x1f1] sm:$0xff]
          %v2225 = vld [vmem:[#allocation2 + $0x1f9] sm:$0xff]
          %v2226 = vld [vmem:[#allocation2 + $0x201] sm:$0xff]
          %v2227 = vld [vmem:[#allocation2 + $0x209] sm:$0xff]
          %v2228 = vld [vmem:[#allocation2 + $0x211] sm:$0xff]
          %v2229 = vld [vmem:[#allocation2 + $0x219] sm:$0xff]
          %v2230 = vld [vmem:[#allocation2 + $0x221] sm:$0xff]
          %v2231 = vld [vmem:[#allocation2 + $0x229] sm:$0xff]
          %v2232 = vld [vmem:[#allocation2 + $0x231] sm:$0xff]
          %v2233 = vld [vmem:[#allocation2 + $0x239] sm:$0xff]
          %v2234 = vld [vmem:[#allocation2 + $0x241] sm:$0xff]
          %v2235 = vld [vmem:[#allocation2 + $0x249] sm:$0xff]
          %v2236 = vld [vmem:[#allocation2 + $0x251] sm:$0xff]
          %v2237 = vld [vmem:[#allocation2 + $0x259] sm:$0xff]
          %v2238 = vld [vmem:[#allocation2 + $0x261] sm:$0xff]
          %v2239 = vld [vmem:[#allocation2 + $0x269] sm:$0xff]
          %v2240 = vld [vmem:[#allocation2 + $0x271] sm:$0xff]
          %v2241 = vld [vmem:[#allocation2 + $0x279] sm:$0xff]
          %v2242 = vld [vmem:[#allocation2 + $0x281] sm:$0xff]
          %v2243 = vld [vmem:[#allocation2 + $0x289] sm:$0xff]
          %v2244 = vld [vmem:[#allocation2 + $0x291] sm:$0xff]
          %v2245 = vld [vmem:[#allocation2 + $0x299] sm:$0xff]
          %v2246 = vld [vmem:[#allocation2 + $0x2a1] sm:$0xff]
          %v2247 = vld [vmem:[#allocation2 + $0x2a9] sm:$0xff]
          %v2248 = vld [vmem:[#allocation2 + $0x2b1] sm:$0xff]
          %v2249 = vld [vmem:[#allocation2 + $0x2b9] sm:$0xff]
          %v2250 = vld [vmem:[#allocation2 + $0x2c1] sm:$0xff]
          %v2251 = vld [vmem:[#allocation2 + $0x2c9] sm:$0xff]
          %v2252 = vld [vmem:[#allocation2 + $0x2d1] sm:$0xff]
          %v2253 = vld [vmem:[#allocation2 + $0x2d9] sm:$0xff]
          %v2254 = vld [vmem:[#allocation2 + $0x2e1] sm:$0xff]
          %v2255 = vld [vmem:[#allocation2 + $0x2e9] sm:$0xff]
          %v2256 = vld [vmem:[#allocation2 + $0x2f1] sm:$0xff]
          %v2257 = vld [vmem:[#allocation2 + $0x2f9] sm:$0xff]
          %v2258 = vld [vmem:[#allocation2 + $0x301] sm:$0xff]
          %v2259 = vld [vmem:[#allocation2 + $0x309] sm:$0xff]
          %v2260 = vld [vmem:[#allocation2 + $0x311] sm:$0xff]
          %v2261 = vld [vmem:[#allocation2 + $0x319] sm:$0xff]
          %v2262 = vld [vmem:[#allocation2 + $0x321] sm:$0xff]
          %v2263 = vld [vmem:[#allocation2 + $0x329] sm:$0xff]
          %v2264 = vld [vmem:[#allocation2 + $0x331] sm:$0xff]
          %v2265 = vld [vmem:[#allocation2 + $0x339] sm:$0xff]
          %v2266 = vld [vmem:[#allocation2 + $0x341] sm:$0xff]
          %v2267 = vld [vmem:[#allocation2 + $0x349] sm:$0xff]
          %v2268 = vld [vmem:[#allocation2 + $0x351] sm:$0xff]
          %v2269 = vld [vmem:[#allocation2 + $0x359] sm:$0x7]
          %v2270 = vld [vmem:[#allocation2 + $0x358] sm:$0xff]
          %v2271 = vld [vmem:[#allocation2 + $0x360] sm:$0xff]
          %v2272 = vld [vmem:[#allocation2 + $0x368] sm:$0xff]
          %v2273 = vld [vmem:[#allocation2 + $0x370] sm:$0xff]
          %v2274 = vld [vmem:[#allocation2 + $0x378] sm:$0x7]
          %v2275 = vld [vmem:[#allocation2 + $0x359] sm:$0xff]
          %v2276 = vld [vmem:[#allocation2 + $0x361] sm:$0xff]
          %v2277 = vld [vmem:[#allocation2 + $0x369] sm:$0xff]
          %v2278 = vld [vmem:[#allocation2 + $0x371] sm:$0xff]
          %v2279 = vld [vmem:[#allocation2 + $0x379] sm:$0x7]
          %v2280 = vmax.f32 %v2054, %v2162
          %v2281 = vmax.f32 %v2055, %v2163
          %v2282 = vmax.f32 %v2056, %v2164
          %v2283 = vmax.f32 %v2057, %v2165
          %v2284 = vmax.f32 %v2058, %v2166
          %v2285 = vmax.f32 %v2059, %v2167
          %v2286 = vmax.f32 %v2060, %v2168
          %v2287 = vmax.f32 %v2061, %v2169
          %v2288 = vmax.f32 %v2062, %v2170
          %v2289 = vmax.f32 %v2063, %v2171
          %v2290 = vmax.f32 %v2064, %v2172
          %v2291 = vmax.f32 %v2065, %v2173
          %v2292 = vmax.f32 %v2066, %v2174
          %v2293 = vmax.f32 %v2067, %v2175
          %v2294 = vmax.f32 %v2068, %v2176
          %v2295 = vmax.f32 %v2069, %v2177
          %v2296 = vmax.f32 %v2070, %v2178
          %v2297 = vmax.f32 %v2071, %v2179
          %v2298 = vmax.f32 %v2072, %v2180
          %v2299 = vmax.f32 %v2073, %v2181
          %v2300 = vmax.f32 %v2074, %v2182
          %v2301 = vmax.f32 %v2075, %v2183
          %v2302 = vmax.f32 %v2076, %v2184
          %v2303 = vmax.f32 %v2077, %v2185
          %v2304 = vmax.f32 %v2078, %v2186
          %v2305 = vmax.f32 %v2079, %v2187
          %v2306 = vmax.f32 %v2080, %v2188
          %v2307 = vmax.f32 %v2081, %v2189
          %v2308 = vmax.f32 %v2082, %v2190
          %v2309 = vmax.f32 %v2083, %v2191
          %v2310 = vmax.f32 %v2084, %v2192
          %v2311 = vmax.f32 %v2085, %v2193
          %v2312 = vmax.f32 %v2086, %v2194
          %v2313 = vmax.f32 %v2087, %v2195
          %v2314 = vmax.f32 %v2088, %v2196
          %v2315 = vmax.f32 %v2089, %v2197
          %v2316 = vmax.f32 %v2090, %v2198
          %v2317 = vmax.f32 %v2091, %v2199
          %v2318 = vmax.f32 %v2092, %v2200
          %v2319 = vmax.f32 %v2093, %v2201
          %v2320 = vmax.f32 %v2094, %v2202
          %v2321 = vmax.f32 %v2095, %v2203
          %v2322 = vmax.f32 %v2096, %v2204
          %v2323 = vmax.f32 %v2097, %v2205
          %v2324 = vmax.f32 %v2098, %v2206
          %v2325 = vmax.f32 %v2099, %v2207
          %v2326 = vmax.f32 %v2100, %v2208
          %v2327 = vmax.f32 %v2101, %v2209
          %v2328 = vmax.f32 %v2102, %v2210
          %v2329 = vmax.f32 %v2103, %v2211
          %v2330 = vmax.f32 %v2104, %v2212
          %v2331 = vmax.f32 %v2105, %v2213
          %v2332 = vmax.f32 %v2106, %v2214
          %v2333 = vmax.f32 %v2107, %v2215
          %v2334 = vmax.f32 %v2108, %v2216
          %v2335 = vmax.f32 %v2109, %v2217
          %v2336 = vmax.f32 %v2110, %v2218
          %v2337 = vmax.f32 %v2111, %v2219
          %v2338 = vmax.f32 %v2112, %v2220
          %v2339 = vmax.f32 %v2113, %v2221
          %v2340 = vmax.f32 %v2114, %v2222
          %v2341 = vmax.f32 %v2115, %v2223
          %v2342 = vmax.f32 %v2116, %v2224
          %v2343 = vmax.f32 %v2117, %v2225
          %v2344 = vmax.f32 %v2118, %v2226
          %v2345 = vmax.f32 %v2119, %v2227
          %v2346 = vmax.f32 %v2120, %v2228
          %v2347 = vmax.f32 %v2121, %v2229
          %v2348 = vmax.f32 %v2122, %v2230
          %v2349 = vmax.f32 %v2123, %v2231
          %v2350 = vmax.f32 %v2124, %v2232
          %v2351 = vmax.f32 %v2125, %v2233
          %v2352 = vmax.f32 %v2126, %v2234
          %v2353 = vmax.f32 %v2127, %v2235
          %v2354 = vmax.f32 %v2128, %v2236
          %v2355 = vmax.f32 %v2129, %v2237
          %v2356 = vmax.f32 %v2130, %v2238
          %v2357 = vmax.f32 %v2131, %v2239
          %v2358 = vmax.f32 %v2132, %v2240
          %v2359 = vmax.f32 %v2133, %v2241
          %v2360 = vmax.f32 %v2134, %v2242
          %v2361 = vmax.f32 %v2135, %v2243
          %v2362 = vmax.f32 %v2136, %v2244
          %v2363 = vmax.f32 %v2137, %v2245
          %v2364 = vmax.f32 %v2138, %v2246
          %v2365 = vmax.f32 %v2139, %v2247
          %v2366 = vmax.f32 %v2140, %v2248
          %v2367 = vmax.f32 %v2141, %v2249
          %v2368 = vmax.f32 %v2142, %v2250
          %v2369 = vmax.f32 %v2143, %v2251
          %v2370 = vmax.f32 %v2144, %v2252
          %v2371 = vmax.f32 %v2145, %v2253
          %v2372 = vmax.f32 %v2146, %v2254
          %v2373 = vmax.f32 %v2147, %v2255
          %v2374 = vmax.f32 %v2148, %v2256
          %v2375 = vmax.f32 %v2149, %v2257
          %v2376 = vmax.f32 %v2150, %v2258
          %v2377 = vmax.f32 %v2151, %v2259
          %v2378 = vmax.f32 %v2152, %v2260
          %v2379 = vmax.f32 %v2153, %v2261
          %v2380 = vmax.f32 %v2154, %v2262
          %v2381 = vmax.f32 %v2155, %v2263
          %v2382 = vmax.f32 %v2156, %v2264
          %v2383 = vmax.f32 %v2157, %v2265
          %v2384 = vmax.f32 %v2158, %v2266
          %v2385 = vmax.f32 %v2159, %v2267
          %v2386 = vmax.f32 %v2160, %v2268
          %v2387 = vmax.f32 %v2161, %v2269
          %v2388 = vmax.f32 %v2270, %v2275
          %v2389 = vmax.f32 %v2271, %v2276
          %v2390 = vmax.f32 %v2272, %v2277
          %v2391 = vmax.f32 %v2273, %v2278
          %v2392 = vmax.f32 %v2274, %v2279
          %v2393 = vmax.f32 %v2280, %v2284
          %v2394 = vmax.f32 %v2281, %v2285
          %v2395 = vmax.f32 %v2282, %v2286
          %v2396 = vmax.f32 %v2283, %v2287
          %v2397 = vmax.f32 %v2284, %v2288
          %v2398 = vmax.f32 %v2285, %v2289
          %v2399 = vmax.f32 %v2286, %v2290
          %v2400 = vmax.f32 %v2287, %v2291
          %v2401 = vmax.f32 %v2288, %v2292
          %v2402 = vmax.f32 %v2289, %v2293
          %v2403 = vmax.f32 %v2290, %v2294
          %v2404 = vmax.f32 %v2291, %v2295
          %v2405 = vmax.f32 %v2292, %v2296
          %v2406 = vmax.f32 %v2293, %v2297
          %v2407 = vmax.f32 %v2294, %v2298
          %v2408 = vmax.f32 %v2295, %v2299
          %v2409 = vmax.f32 %v2296, %v2300
          %v2410 = vmax.f32 %v2297, %v2301
          %v2411 = vmax.f32 %v2298, %v2302
          %v2412 = vmax.f32 %v2299, %v2303
          %v2413 = vmax.f32 %v2300, %v2304
          %v2414 = vmax.f32 %v2301, %v2305
          %v2415 = vmax.f32 %v2302, %v2306
          %v2416 = vmax.f32 %v2303, %v2307
          %v2417 = vmax.f32 %v2304, %v2308
          %v2418 = vmax.f32 %v2305, %v2309
          %v2419 = vmax.f32 %v2306, %v2310
          %v2420 = vmax.f32 %v2307, %v2311
          %v2421 = vmax.f32 %v2308, %v2312
          %v2422 = vmax.f32 %v2309, %v2313
          %v2423 = vmax.f32 %v2310, %v2314
          %v2424 = vmax.f32 %v2311, %v2315
          %v2425 = vmax.f32 %v2312, %v2316
          %v2426 = vmax.f32 %v2313, %v2317
          %v2427 = vmax.f32 %v2314, %v2318
          %v2428 = vmax.f32 %v2315, %v2319
          %v2429 = vmax.f32 %v2316, %v2320
          %v2430 = vmax.f32 %v2317, %v2321
          %v2431 = vmax.f32 %v2318, %v2322
          %v2432 = vmax.f32 %v2319, %v2323
          %v2433 = vmax.f32 %v2320, %v2324
          %v2434 = vmax.f32 %v2321, %v2325
          %v2435 = vmax.f32 %v2322, %v2326
          %v2436 = vmax.f32 %v2323, %v2327
          %v2437 = vmax.f32 %v2324, %v2328
          %v2438 = vmax.f32 %v2325, %v2329
          %v2439 = vmax.f32 %v2326, %v2330
          %v2440 = vmax.f32 %v2327, %v2331
          %v2441 = vmax.f32 %v2328, %v2332
          %v2442 = vmax.f32 %v2329, %v2333
          %v2443 = vmax.f32 %v2330, %v2334
          %v2444 = vmax.f32 %v2331, %v2335
          %v2445 = vmax.f32 %v2332, %v2336
          %v2446 = vmax.f32 %v2333, %v2337
          %v2447 = vmax.f32 %v2334, %v2338
          %v2448 = vmax.f32 %v2335, %v2339
          %v2449 = vmax.f32 %v2336, %v2340
          %v2450 = vmax.f32 %v2337, %v2341
          %v2451 = vmax.f32 %v2338, %v2342
          %v2452 = vmax.f32 %v2339, %v2343
          %v2453 = vmax.f32 %v2340, %v2344
          %v2454 = vmax.f32 %v2341, %v2345
          %v2455 = vmax.f32 %v2342, %v2346
          %v2456 = vmax.f32 %v2343, %v2347
          %v2457 = vmax.f32 %v2344, %v2348
          %v2458 = vmax.f32 %v2345, %v2349
          %v2459 = vmax.f32 %v2346, %v2350
          %v2460 = vmax.f32 %v2347, %v2351
          %v2461 = vmax.f32 %v2348, %v2352
          %v2462 = vmax.f32 %v2349, %v2353
          %v2463 = vmax.f32 %v2350, %v2354
          %v2464 = vmax.f32 %v2351, %v2355
          %v2465 = vmax.f32 %v2352, %v2356
          %v2466 = vmax.f32 %v2353, %v2357
          %v2467 = vmax.f32 %v2354, %v2358
          %v2468 = vmax.f32 %v2355, %v2359
          %v2469 = vmax.f32 %v2356, %v2360
          %v2470 = vmax.f32 %v2357, %v2361
          %v2471 = vmax.f32 %v2358, %v2362
          %v2472 = vmax.f32 %v2359, %v2363
          %v2473 = vmax.f32 %v2360, %v2364
          %v2474 = vmax.f32 %v2361, %v2365
          %v2475 = vmax.f32 %v2362, %v2366
          %v2476 = vmax.f32 %v2363, %v2367
          %v2477 = vmax.f32 %v2364, %v2368
          %v2478 = vmax.f32 %v2365, %v2369
          %v2479 = vmax.f32 %v2366, %v2370
          %v2480 = vmax.f32 %v2367, %v2371
          %v2481 = vmax.f32 %v2368, %v2372
          %v2482 = vmax.f32 %v2369, %v2373
          %v2483 = vmax.f32 %v2370, %v2374
          %v2484 = vmax.f32 %v2371, %v2375
          %v2485 = vmax.f32 %v2372, %v2376
          %v2486 = vmax.f32 %v2373, %v2377
          %v2487 = vmax.f32 %v2374, %v2378
          %v2488 = vmax.f32 %v2375, %v2379
          %v2489 = vmax.f32 %v2376, %v2380
          %v2490 = vmax.f32 %v2377, %v2381
          %v2491 = vmax.f32 %v2378, %v2382
          %v2492 = vmax.f32 %v2379, %v2383
          %v2493 = vmax.f32 %v2380, %v2384
          %v2494 = vmax.f32 %v2381, %v2385
          %v2495 = vmax.f32 %v2382, %v2386
          %v2496 = vmax.f32 %v2383, %v2388
          %v2497 = vmax.f32 %v2384, %v2389
          %v2498 = vmax.f32 %v2385, %v2390
          %v2499 = vmax.f32 %v2386, %v2391
          %v2500 = vmax.f32 %v2387, %v2392
          %v2501 = vpack.c.bf16 %v2394, %v2393
          %v2502 = vpack.c.bf16 %v2396, %v2395
          %v2503 = vpack.c.bf16 %v2398, %v2397
          %v2504 = vpack.c.bf16 %v2400, %v2399
          %v2505 = vpack.c.bf16 %v2402, %v2401
          %v2506 = vpack.c.bf16 %v2404, %v2403
          %v2507 = vpack.c.bf16 %v2406, %v2405
          %v2508 = vpack.c.bf16 %v2408, %v2407
          %v2509 = vpack.c.bf16 %v2410, %v2409
          %v2510 = vpack.c.bf16 %v2412, %v2411
          %v2511 = vpack.c.bf16 %v2414, %v2413
          %v2512 = vpack.c.bf16 %v2416, %v2415
          %v2513 = vpack.c.bf16 %v2418, %v2417
          %v2514 = vpack.c.bf16 %v2420, %v2419
          %v2515 = vpack.c.bf16 %v2422, %v2421
          %v2516 = vpack.c.bf16 %v2424, %v2423
          %v2517 = vpack.c.bf16 %v2426, %v2425
          %v2518 = vpack.c.bf16 %v2428, %v2427
          %v2519 = vpack.c.bf16 %v2430, %v2429
          %v2520 = vpack.c.bf16 %v2432, %v2431
          %v2521 = vpack.c.bf16 %v2434, %v2433
          %v2522 = vpack.c.bf16 %v2436, %v2435
          %v2523 = vpack.c.bf16 %v2438, %v2437
          %v2524 = vpack.c.bf16 %v2440, %v2439
          %v2525 = vpack.c.bf16 %v2442, %v2441
          %v2526 = vpack.c.bf16 %v2444, %v2443
          %v2527 = vpack.c.bf16 %v2446, %v2445
          %v2528 = vpack.c.bf16 %v2448, %v2447
          %v2529 = vpack.c.bf16 %v2450, %v2449
          %v2530 = vpack.c.bf16 %v2452, %v2451
          %v2531 = vpack.c.bf16 %v2454, %v2453
          %v2532 = vpack.c.bf16 %v2456, %v2455
          %v2533 = vpack.c.bf16 %v2458, %v2457
          %v2534 = vpack.c.bf16 %v2460, %v2459
          %v2535 = vpack.c.bf16 %v2462, %v2461
          %v2536 = vpack.c.bf16 %v2464, %v2463
          %v2537 = vpack.c.bf16 %v2466, %v2465
          %v2538 = vpack.c.bf16 %v2468, %v2467
          %v2539 = vpack.c.bf16 %v2470, %v2469
          %v2540 = vpack.c.bf16 %v2472, %v2471
          %v2541 = vpack.c.bf16 %v2474, %v2473
          %v2542 = vpack.c.bf16 %v2476, %v2475
          %v2543 = vpack.c.bf16 %v2478, %v2477
          %v2544 = vpack.c.bf16 %v2480, %v2479
          %v2545 = vpack.c.bf16 %v2482, %v2481
          %v2546 = vpack.c.bf16 %v2484, %v2483
          %v2547 = vpack.c.bf16 %v2486, %v2485
          %v2548 = vpack.c.bf16 %v2488, %v2487
          %v2549 = vpack.c.bf16 %v2490, %v2489
          %v2550 = vpack.c.bf16 %v2492, %v2491
          %v2551 = vpack.c.bf16 %v2494, %v2493
          %v2552 = vpack.c.bf16 %v2496, %v2495
          %v2553 = vpack.c.bf16 %v2498, %v2497
          %v2554 = vpack.c.bf16 %v2500, %v2499
          %v2683 = vunpack.c.l.b16 %v1926
          %v2684 = vunpack.c.h.b16 %v1926
          %v2685 = vunpack.c.l.b16 %v1927
          %v2686 = vunpack.c.h.b16 %v1927
          %v2687 = vunpack.c.l.b16 %v1928
          %v2688 = vunpack.c.h.b16 %v1928
          %v2689 = vunpack.c.l.b16 %v1929
          %v2690 = vunpack.c.l.b16 %v1930
          %v2691 = vunpack.c.h.b16 %v1930
          %v2692 = vunpack.c.l.b16 %v1931
          %v2693 = vunpack.c.h.b16 %v1931
          %v2694 = vunpack.c.l.b16 %v1932
          %v2695 = vunpack.c.h.b16 %v1932
          %v2696 = vunpack.c.l.b16 %v1933
          %v2697 = vunpack.c.l.b16 %v1934
          %v2698 = vunpack.c.h.b16 %v1934
          %v2699 = vunpack.c.l.b16 %v1935
          %v2700 = vunpack.c.h.b16 %v1935
          %v2701 = vunpack.c.l.b16 %v1936
          %v2702 = vunpack.c.h.b16 %v1936
          %v2703 = vunpack.c.l.b16 %v1937
          %v2704 = vunpack.c.l.b16 %v1938
          %v2705 = vunpack.c.h.b16 %v1938
          %v2706 = vunpack.c.l.b16 %v1939
          %v2707 = vunpack.c.h.b16 %v1939
          %v2708 = vunpack.c.l.b16 %v1940
          %v2709 = vunpack.c.h.b16 %v1940
          %v2710 = vunpack.c.l.b16 %v1941
          %v2711 = vunpack.c.l.b16 %v1942
          %v2712 = vunpack.c.h.b16 %v1942
          %v2713 = vunpack.c.l.b16 %v1943
          %v2714 = vunpack.c.h.b16 %v1943
          %v2715 = vunpack.c.l.b16 %v1944
          %v2716 = vunpack.c.h.b16 %v1944
          %v2717 = vunpack.c.l.b16 %v1945
          %v2718 = vunpack.c.l.b16 %v1946
          %v2719 = vunpack.c.h.b16 %v1946
          %v2720 = vunpack.c.l.b16 %v1947
          %v2721 = vunpack.c.h.b16 %v1947
          %v2722 = vunpack.c.l.b16 %v1948
          %v2723 = vunpack.c.h.b16 %v1948
          %v2724 = vunpack.c.l.b16 %v1949
          %v2725 = vunpack.c.l.b16 %v1950
          %v2726 = vunpack.c.h.b16 %v1950
          %v2727 = vunpack.c.l.b16 %v1951
          %v2728 = vunpack.c.h.b16 %v1951
          %v2729 = vunpack.c.l.b16 %v1952
          %v2730 = vunpack.c.h.b16 %v1952
          %v2731 = vunpack.c.l.b16 %v1953
          %v2732 = vunpack.c.l.b16 %v1954
          %v2733 = vunpack.c.h.b16 %v1954
          %v2734 = vunpack.c.l.b16 %v1955
          %v2735 = vunpack.c.h.b16 %v1955
          %v2736 = vunpack.c.l.b16 %v1956
          %v2737 = vunpack.c.h.b16 %v1956
          %v2738 = vunpack.c.l.b16 %v1957
          %v2739 = vunpack.c.l.b16 %v1958
          %v2740 = vunpack.c.h.b16 %v1958
          %v2741 = vunpack.c.l.b16 %v1959
          %v2742 = vunpack.c.h.b16 %v1959
          %v2743 = vunpack.c.l.b16 %v1960
          %v2744 = vunpack.c.h.b16 %v1960
          %v2745 = vunpack.c.l.b16 %v1961
          %v2746 = vunpack.c.l.b16 %v1962
          %v2747 = vunpack.c.h.b16 %v1962
          %v2748 = vunpack.c.l.b16 %v1963
          %v2749 = vunpack.c.h.b16 %v1963
          %v2750 = vunpack.c.l.b16 %v1964
          %v2751 = vunpack.c.h.b16 %v1964
          %v2752 = vunpack.c.l.b16 %v1965
          %v2753 = vunpack.c.l.b16 %v1966
          %v2754 = vunpack.c.h.b16 %v1966
          %v2755 = vunpack.c.l.b16 %v1967
          %v2756 = vunpack.c.h.b16 %v1967
          %v2757 = vunpack.c.l.b16 %v1968
          %v2758 = vunpack.c.h.b16 %v1968
          %v2759 = vunpack.c.l.b16 %v1969
          %v2760 = vunpack.c.l.b16 %v1970
          %v2761 = vunpack.c.h.b16 %v1970
          %v2762 = vunpack.c.l.b16 %v1971
          %v2763 = vunpack.c.h.b16 %v1971
          %v2764 = vunpack.c.l.b16 %v1972
          %v2765 = vunpack.c.h.b16 %v1972
          %v2766 = vunpack.c.l.b16 %v1973
          %v2767 = vunpack.c.l.b16 %v1974
          %v2768 = vunpack.c.h.b16 %v1974
          %v2769 = vunpack.c.l.b16 %v1975
          %v2770 = vunpack.c.h.b16 %v1975
          %v2771 = vunpack.c.l.b16 %v1976
          %v2772 = vunpack.c.h.b16 %v1976
          %v2773 = vunpack.c.l.b16 %v1977
          %v2774 = vunpack.c.l.b16 %v1978
          %v2775 = vunpack.c.h.b16 %v1978
          %v2776 = vunpack.c.l.b16 %v1979
          %v2777 = vunpack.c.h.b16 %v1979
          %v2778 = vunpack.c.l.b16 %v1980
          %v2779 = vunpack.c.h.b16 %v1980
          %v2780 = vunpack.c.l.b16 %v1981
          %v2781 = vunpack.c.l.b16 %v1982
          %v2782 = vunpack.c.h.b16 %v1982
          %v2783 = vunpack.c.l.b16 %v1983
          %v2784 = vunpack.c.h.b16 %v1983
          %v2785 = vunpack.c.l.b16 %v1984
          %v2786 = vunpack.c.h.b16 %v1984
          %v2787 = vunpack.c.l.b16 %v1985
          %v2788 = vunpack.c.l.b16 %v1986
          %v2789 = vunpack.c.h.b16 %v1986
          %v2790 = vunpack.c.l.b16 %v1987
          %v2791 = vunpack.c.h.b16 %v1987
          %v2792 = vunpack.c.l.b16 %v1988
          %v2793 = vunpack.c.h.b16 %v1988
          %v2794 = vunpack.c.l.b16 %v1989
          %v2795 = vunpack.c.l.b16 %v1990
          %v2796 = vunpack.c.h.b16 %v1990
          %v2797 = vunpack.c.l.b16 %v1991
          %v2798 = vunpack.c.h.b16 %v1991
          %v2799 = vunpack.c.l.b16 %v1992
          %v2800 = vunpack.c.h.b16 %v1992
          %v2801 = vunpack.c.l.b16 %v1993
          %v2802 = vunpack.c.l.b16 %v1994
          %v2803 = vunpack.c.h.b16 %v1994
          %v2804 = vunpack.c.l.b16 %v1995
          %v2805 = vunpack.c.h.b16 %v1995
          %v2806 = vunpack.c.l.b16 %v1996
          %v2807 = vunpack.c.h.b16 %v1996
          %v2808 = vunpack.c.l.b16 %v1997
          %v2809 = vunpack.c.l.b16 %v1998
          %v2810 = vunpack.c.h.b16 %v1998
          %v2811 = vunpack.c.l.b16 %v1999
          %v2812 = vunpack.c.h.b16 %v1999
          %v2813 = vunpack.c.l.b16 %v2000
          %v2814 = vunpack.c.h.b16 %v2000
          %v2815 = vunpack.c.l.b16 %v2001
          %v2816 = vunpack.c.l.b16 %v2002
          %v2817 = vunpack.c.h.b16 %v2002
          %v2818 = vunpack.c.l.b16 %v2003
          %v2819 = vunpack.c.h.b16 %v2003
          %v2820 = vunpack.c.l.b16 %v2004
          %v2821 = vunpack.c.h.b16 %v2004
          %v2822 = vunpack.c.l.b16 %v2005
          %v2823 = vunpack.c.l.b16 %v2006
          %v2824 = vunpack.c.h.b16 %v2006
          %v2825 = vunpack.c.l.b16 %v2007
          %v2826 = vunpack.c.h.b16 %v2007
          %v2827 = vunpack.c.l.b16 %v2008
          %v2828 = vunpack.c.h.b16 %v2008
          %v2829 = vunpack.c.l.b16 %v2009
          %v2830 = vunpack.c.l.b16 %v2010
          %v2831 = vunpack.c.h.b16 %v2010
          %v2832 = vunpack.c.l.b16 %v2011
          %v2833 = vunpack.c.h.b16 %v2011
          %v2834 = vunpack.c.l.b16 %v2012
          %v2835 = vunpack.c.h.b16 %v2012
          %v2836 = vunpack.c.l.b16 %v2013
          %v2837 = vunpack.c.l.b16 %v2014
          %v2838 = vunpack.c.h.b16 %v2014
          %v2839 = vunpack.c.l.b16 %v2015
          %v2840 = vunpack.c.h.b16 %v2015
          %v2841 = vunpack.c.l.b16 %v2016
          %v2842 = vunpack.c.h.b16 %v2016
          %v2843 = vunpack.c.l.b16 %v2017
          %v2844 = vunpack.c.l.b16 %v2018
          %v2845 = vunpack.c.h.b16 %v2018
          %v2846 = vunpack.c.l.b16 %v2019
          %v2847 = vunpack.c.h.b16 %v2019
          %v2848 = vunpack.c.l.b16 %v2020
          %v2849 = vunpack.c.h.b16 %v2020
          %v2850 = vunpack.c.l.b16 %v2021
          %v2851 = vunpack.c.l.b16 %v2022
          %v2852 = vunpack.c.h.b16 %v2022
          %v2853 = vunpack.c.l.b16 %v2023
          %v2854 = vunpack.c.h.b16 %v2023
          %v2855 = vunpack.c.l.b16 %v2024
          %v2856 = vunpack.c.h.b16 %v2024
          %v2857 = vunpack.c.l.b16 %v2025
          %v2858 = vunpack.c.l.b16 %v2026
          %v2859 = vunpack.c.h.b16 %v2026
          %v2860 = vunpack.c.l.b16 %v2027
          %v2861 = vunpack.c.h.b16 %v2027
          %v2862 = vunpack.c.l.b16 %v2028
          %v2863 = vunpack.c.h.b16 %v2028
          %v2864 = vunpack.c.l.b16 %v2029
          %v2865 = vunpack.c.l.b16 %v2030
          %v2866 = vunpack.c.h.b16 %v2030
          %v2867 = vunpack.c.l.b16 %v2031
          %v2868 = vunpack.c.h.b16 %v2031
          %v2869 = vunpack.c.l.b16 %v2032
          %v2870 = vunpack.c.h.b16 %v2032
          %v2871 = vunpack.c.l.b16 %v2033
          %v2872 = vunpack.c.l.b16 %v2034
          %v2873 = vunpack.c.h.b16 %v2034
          %v2874 = vunpack.c.l.b16 %v2035
          %v2875 = vunpack.c.h.b16 %v2035
          %v2876 = vunpack.c.l.b16 %v2036
          %v2877 = vunpack.c.h.b16 %v2036
          %v2878 = vunpack.c.l.b16 %v2037
          %v2879 = vunpack.c.l.b16 %v2038
          %v2880 = vunpack.c.h.b16 %v2038
          %v2881 = vunpack.c.l.b16 %v2039
          %v2882 = vunpack.c.h.b16 %v2039
          %v2883 = vunpack.c.l.b16 %v2040
          %v2884 = vunpack.c.h.b16 %v2040
          %v2885 = vunpack.c.l.b16 %v2041
          %v2886 = vunpack.c.l.b16 %v2042
          %v2887 = vunpack.c.h.b16 %v2042
          %v2888 = vunpack.c.l.b16 %v2043
          %v2889 = vunpack.c.h.b16 %v2043
          %v2890 = vunpack.c.l.b16 %v2044
          %v2891 = vunpack.c.h.b16 %v2044
          %v2892 = vunpack.c.l.b16 %v2045
          %v2893 = vunpack.c.l.b16 %v2046
          %v2894 = vunpack.c.h.b16 %v2046
          %v2895 = vunpack.c.l.b16 %v2047
          %v2896 = vunpack.c.h.b16 %v2047
          %v2897 = vunpack.c.l.b16 %v2048
          %v2898 = vunpack.c.h.b16 %v2048
          %v2899 = vunpack.c.l.b16 %v2049
          %v2900 = vunpack.c.l.b16 %v2050
          %v2901 = vunpack.c.h.b16 %v2050
          %v2902 = vunpack.c.l.b16 %v2051
          %v2903 = vunpack.c.h.b16 %v2051
          %v2904 = vunpack.c.l.b16 %v2052
          %v2905 = vunpack.c.h.b16 %v2052
          %v2906 = vunpack.c.l.b16 %v2053
          %v2907 = vpack.c.b16 %v2690, %v2683
          %v2908 = vpack.c.b16 %v2691, %v2684
          %v2909 = vpack.c.b16 %v2692, %v2685
          %v2910 = vpack.c.b16 %v2693, %v2686
          %v2911 = vpack.c.b16 %v2694, %v2687
          %v2912 = vpack.c.b16 %v2695, %v2688
          %v2913 = vpack.c.b16 %v2696, %v2689
          %v2914 = vpack.c.b16 %v2704, %v2697
          %v2915 = vpack.c.b16 %v2705, %v2698
          %v2916 = vpack.c.b16 %v2706, %v2699
          %v2917 = vpack.c.b16 %v2707, %v2700
          %v2918 = vpack.c.b16 %v2708, %v2701
          %v2919 = vpack.c.b16 %v2709, %v2702
          %v2920 = vpack.c.b16 %v2710, %v2703
          %v2921 = vpack.c.b16 %v2718, %v2711
          %v2922 = vpack.c.b16 %v2719, %v2712
          %v2923 = vpack.c.b16 %v2720, %v2713
          %v2924 = vpack.c.b16 %v2721, %v2714
          %v2925 = vpack.c.b16 %v2722, %v2715
          %v2926 = vpack.c.b16 %v2723, %v2716
          %v2927 = vpack.c.b16 %v2724, %v2717
          %v2928 = vpack.c.b16 %v2732, %v2725
          %v2929 = vpack.c.b16 %v2733, %v2726
          %v2930 = vpack.c.b16 %v2734, %v2727
          %v2931 = vpack.c.b16 %v2735, %v2728
          %v2932 = vpack.c.b16 %v2736, %v2729
          %v2933 = vpack.c.b16 %v2737, %v2730
          %v2934 = vpack.c.b16 %v2738, %v2731
          %v2935 = vpack.c.b16 %v2746, %v2739
          %v2936 = vpack.c.b16 %v2747, %v2740
          %v2937 = vpack.c.b16 %v2748, %v2741
          %v2938 = vpack.c.b16 %v2749, %v2742
          %v2939 = vpack.c.b16 %v2750, %v2743
          %v2940 = vpack.c.b16 %v2751, %v2744
          %v2941 = vpack.c.b16 %v2752, %v2745
          %v2942 = vpack.c.b16 %v2760, %v2753
          %v2943 = vpack.c.b16 %v2761, %v2754
          %v2944 = vpack.c.b16 %v2762, %v2755
          %v2945 = vpack.c.b16 %v2763, %v2756
          %v2946 = vpack.c.b16 %v2764, %v2757
          %v2947 = vpack.c.b16 %v2765, %v2758
          %v2948 = vpack.c.b16 %v2766, %v2759
          %v2949 = vpack.c.b16 %v2774, %v2767
          %v2950 = vpack.c.b16 %v2775, %v2768
          %v2951 = vpack.c.b16 %v2776, %v2769
          %v2952 = vpack.c.b16 %v2777, %v2770
          %v2953 = vpack.c.b16 %v2778, %v2771
          %v2954 = vpack.c.b16 %v2779, %v2772
          %v2955 = vpack.c.b16 %v2780, %v2773
          %v2956 = vpack.c.b16 %v2788, %v2781
          %v2957 = vpack.c.b16 %v2789, %v2782
          %v2958 = vpack.c.b16 %v2790, %v2783
          %v2959 = vpack.c.b16 %v2791, %v2784
          %v2960 = vpack.c.b16 %v2792, %v2785
          %v2961 = vpack.c.b16 %v2793, %v2786
          %v2962 = vpack.c.b16 %v2794, %v2787
          %v2963 = vpack.c.b16 %v2802, %v2795
          %v2964 = vpack.c.b16 %v2803, %v2796
          %v2965 = vpack.c.b16 %v2804, %v2797
          %v2966 = vpack.c.b16 %v2805, %v2798
          %v2967 = vpack.c.b16 %v2806, %v2799
          %v2968 = vpack.c.b16 %v2807, %v2800
          %v2969 = vpack.c.b16 %v2808, %v2801
          %v2970 = vpack.c.b16 %v2816, %v2809
          %v2971 = vpack.c.b16 %v2817, %v2810
          %v2972 = vpack.c.b16 %v2818, %v2811
          %v2973 = vpack.c.b16 %v2819, %v2812
          %v2974 = vpack.c.b16 %v2820, %v2813
          %v2975 = vpack.c.b16 %v2821, %v2814
          %v2976 = vpack.c.b16 %v2822, %v2815
          %v2977 = vpack.c.b16 %v2830, %v2823
          %v2978 = vpack.c.b16 %v2831, %v2824
          %v2979 = vpack.c.b16 %v2832, %v2825
          %v2980 = vpack.c.b16 %v2833, %v2826
          %v2981 = vpack.c.b16 %v2834, %v2827
          %v2982 = vpack.c.b16 %v2835, %v2828
          %v2983 = vpack.c.b16 %v2836, %v2829
          %v2984 = vpack.c.b16 %v2844, %v2837
          %v2985 = vpack.c.b16 %v2845, %v2838
          %v2986 = vpack.c.b16 %v2846, %v2839
          %v2987 = vpack.c.b16 %v2847, %v2840
          %v2988 = vpack.c.b16 %v2848, %v2841
          %v2989 = vpack.c.b16 %v2849, %v2842
          %v2990 = vpack.c.b16 %v2850, %v2843
          %v2991 = vpack.c.b16 %v2858, %v2851
          %v2992 = vpack.c.b16 %v2859, %v2852
          %v2993 = vpack.c.b16 %v2860, %v2853
          %v2994 = vpack.c.b16 %v2861, %v2854
          %v2995 = vpack.c.b16 %v2862, %v2855
          %v2996 = vpack.c.b16 %v2863, %v2856
          %v2997 = vpack.c.b16 %v2864, %v2857
          %v2998 = vpack.c.b16 %v2872, %v2865
          %v2999 = vpack.c.b16 %v2873, %v2866
          %v3000 = vpack.c.b16 %v2874, %v2867
          %v3001 = vpack.c.b16 %v2875, %v2868
          %v3002 = vpack.c.b16 %v2876, %v2869
          %v3003 = vpack.c.b16 %v2877, %v2870
          %v3004 = vpack.c.b16 %v2878, %v2871
          %v3005 = vpack.c.b16 %v2886, %v2879
          %v3006 = vpack.c.b16 %v2887, %v2880
          %v3007 = vpack.c.b16 %v2888, %v2881
          %v3008 = vpack.c.b16 %v2889, %v2882
          %v3009 = vpack.c.b16 %v2890, %v2883
          %v3010 = vpack.c.b16 %v2891, %v2884
          %v3011 = vpack.c.b16 %v2892, %v2885
          %v3012 = vpack.c.b16 %v2900, %v2893
          %v3013 = vpack.c.b16 %v2901, %v2894
          %v3014 = vpack.c.b16 %v2902, %v2895
          %v3015 = vpack.c.b16 %v2903, %v2896
          %v3016 = vpack.c.b16 %v2904, %v2897
          %v3017 = vpack.c.b16 %v2905, %v2898
          %v3018 = vpack.c.b16 %v2906, %v2899
          %vm3115 = vcmask 744448
          %v3117 = vsel %vm3115, %v2913, 0
          %v3120 = vsel %vm3115, %v2920, 0
          %v3123 = vsel %vm3115, %v2927, 0
          %v3126 = vsel %vm3115, %v2934, 0
          %v3129 = vsel %vm3115, %v2941, 0
          %v3132 = vsel %vm3115, %v2948, 0
          %v3135 = vsel %vm3115, %v2955, 0
          %v3138 = vsel %vm3115, %v2962, 0
          %v3141 = vsel %vm3115, %v2969, 0
          %v3144 = vsel %vm3115, %v2976, 0
          %v3147 = vsel %vm3115, %v2983, 0
          %v3150 = vsel %vm3115, %v2990, 0
          %v3153 = vsel %vm3115, %v2997, 0
          %v3156 = vsel %vm3115, %v3004, 0
          %v3159 = vsel %vm3115, %v3011, 0
          %v3162 = vsel %vm3115, %v3018, 0
          %vm3164 = vcmask 1044480
          %vm3165 = vcmask 1045504
          %v3166 = vsel %vm3164, 4294967295, 65535
          %v3167 = vsel %vm3165, %v3166, 0
          %v3169 = vand.u32 %v2554, %v3167
          %3171 = vmatprep.subr.bf16.mxu0 0
          %3172 = vmatpush1.bf16.msra.mxu0 %v2508
          %3173 = vmatprep.subr.bf16.mxu0 0
          %3174 = vmatpush1.bf16.msra.mxu0 %v2507
          %3175 = vmatprep.subr.bf16.mxu0 0
          %3176 = vmatpush1.bf16.msra.mxu0 %v2506
          %3177 = vmatprep.subr.bf16.mxu0 0
          %3178 = vmatpush1.bf16.msra.mxu0 %v2505
          %3179 = vmatprep.subr.bf16.mxu0 0
          %3180 = vmatpush1.bf16.msra.mxu0 %v2504
          %3181 = vmatprep.subr.bf16.mxu0 0
          %3182 = vmatpush1.bf16.msra.mxu0 %v2503
          %3183 = vmatprep.subr.bf16.mxu0 0
          %3184 = vmatpush1.bf16.msra.mxu0 %v2502
          %3185 = vmatprep.subr.bf16.mxu0 0
          %3186 = vmatpush1.bf16.msra.mxu0 %v2501
          %3187 = vmatprep.subr.bf16.mxu0 0
          %3188 = vmatpush2.bf16.msra.mxu0 %v2516
          %3189 = vmatprep.subr.bf16.mxu0 0
          %3190 = vmatpush2.bf16.msra.mxu0 %v2515
          %3191 = vmatprep.subr.bf16.mxu0 0
          %3192 = vmatpush2.bf16.msra.mxu0 %v2514
          %3193 = vmatprep.subr.bf16.mxu0 0
          %3194 = vmatpush2.bf16.msra.mxu0 %v2513
          %3195 = vmatprep.subr.bf16.mxu0 0
          %3196 = vmatpush2.bf16.msra.mxu0 %v2512
          %3197 = vmatprep.subr.bf16.mxu0 0
          %3198 = vmatpush2.bf16.msra.mxu0 %v2511
          %3199 = vmatprep.subr.bf16.mxu0 0
          %3200 = vmatpush2.bf16.msra.mxu0 %v2510
          %3201 = vmatprep.subr.bf16.mxu0 0
          %3202 = vmatpush2.bf16.msra.mxu0 %v2509
          %3203 = vmatprep.mubr.bf16.mxu0 %v2908
          %3204 = vmatmul.mubr.bf16.gmra.mxu0 %v2907
          %v3205 = vpop.f32.mrf.mxu0
          %v3206 = vadd.f32 0.0, %v3205
          %v3207 = vpop.f32.mrf.mxu0
          %v3208 = vpop.f32.mrf.mxu0
          %v3209 = vadd.f32 0.0, %v3208
          %v3210 = vpop.f32.mrf.mxu0
          %3211 = vmatprep.mubr.bf16.mxu0 %v2915
          %3212 = vmatmul.mubr.bf16.gmra.mxu0 %v2914
          %v3213 = vpop.f32.mrf.mxu0
          %v3214 = vadd.f32 0.0, %v3213
          %v3215 = vpop.f32.mrf.mxu0
          %v3216 = vpop.f32.mrf.mxu0
          %v3217 = vadd.f32 0.0, %v3216
          %v3218 = vpop.f32.mrf.mxu0
          %3219 = vmatprep.mubr.bf16.mxu0 %v2922
          %3220 = vmatmul.mubr.bf16.gmra.mxu0 %v2921
          %v3221 = vpop.f32.mrf.mxu0
          %v3222 = vadd.f32 0.0, %v3221
          %v3223 = vpop.f32.mrf.mxu0
          %v3224 = vpop.f32.mrf.mxu0
          %v3225 = vadd.f32 0.0, %v3224
          %v3226 = vpop.f32.mrf.mxu0
          %3227 = vmatprep.mubr.bf16.mxu0 %v2929
          %3228 = vmatmul.mubr.bf16.gmra.mxu0 %v2928
          %v3229 = vpop.f32.mrf.mxu0
          %v3230 = vadd.f32 0.0, %v3229
          %v3231 = vpop.f32.mrf.mxu0
          %v3232 = vpop.f32.mrf.mxu0
          %v3233 = vadd.f32 0.0, %v3232
          %v3234 = vpop.f32.mrf.mxu0
          %3235 = vmatprep.mubr.bf16.mxu0 %v2936
          %3236 = vmatmul.mubr.bf16.gmra.mxu0 %v2935
          %v3237 = vpop.f32.mrf.mxu0
          %v3238 = vadd.f32 0.0, %v3237
          %v3239 = vpop.f32.mrf.mxu0
          %v3240 = vpop.f32.mrf.mxu0
          %v3241 = vadd.f32 0.0, %v3240
          %v3242 = vpop.f32.mrf.mxu0
          %3243 = vmatprep.mubr.bf16.mxu0 %v2943
          %3244 = vmatmul.mubr.bf16.gmra.mxu0 %v2942
          %v3245 = vpop.f32.mrf.mxu0
          %v3246 = vadd.f32 0.0, %v3245
          %v3247 = vpop.f32.mrf.mxu0
          %v3248 = vpop.f32.mrf.mxu0
          %v3249 = vadd.f32 0.0, %v3248
          %v3250 = vpop.f32.mrf.mxu0
          %3251 = vmatprep.mubr.bf16.mxu0 %v2950
          %3252 = vmatmul.mubr.bf16.gmra.mxu0 %v2949
          %v3253 = vpop.f32.mrf.mxu0
          %v3254 = vadd.f32 0.0, %v3253
          %v3255 = vpop.f32.mrf.mxu0
          %v3256 = vpop.f32.mrf.mxu0
          %v3257 = vadd.f32 0.0, %v3256
          %v3258 = vpop.f32.mrf.mxu0
          %3259 = vmatprep.mubr.bf16.mxu0 %v2957
          %3260 = vmatmul.mubr.bf16.gmra.mxu0 %v2956
          %v3261 = vpop.f32.mrf.mxu0
          %v3262 = vadd.f32 0.0, %v3261
          %v3263 = vpop.f32.mrf.mxu0
          %v3264 = vpop.f32.mrf.mxu0
          %v3265 = vadd.f32 0.0, %v3264
          %v3266 = vpop.f32.mrf.mxu0
          %3267 = vmatprep.mubr.bf16.mxu0 %v2964
          %3268 = vmatmul.mubr.bf16.gmra.mxu0 %v2963
          %v3269 = vpop.f32.mrf.mxu0
          %v3270 = vadd.f32 0.0, %v3269
          %v3271 = vpop.f32.mrf.mxu0
          %v3272 = vpop.f32.mrf.mxu0
          %v3273 = vadd.f32 0.0, %v3272
          %v3274 = vpop.f32.mrf.mxu0
          %3275 = vmatprep.mubr.bf16.mxu0 %v2971
          %3276 = vmatmul.mubr.bf16.gmra.mxu0 %v2970
          %v3277 = vpop.f32.mrf.mxu0
          %v3278 = vadd.f32 0.0, %v3277
          %v3279 = vpop.f32.mrf.mxu0
          %v3280 = vpop.f32.mrf.mxu0
          %v3281 = vadd.f32 0.0, %v3280
          %v3282 = vpop.f32.mrf.mxu0
          %3283 = vmatprep.mubr.bf16.mxu0 %v2978
          %3284 = vmatmul.mubr.bf16.gmra.mxu0 %v2977
          %v3285 = vpop.f32.mrf.mxu0
          %v3286 = vadd.f32 0.0, %v3285
          %v3287 = vpop.f32.mrf.mxu0
          %v3288 = vpop.f32.mrf.mxu0
          %v3289 = vadd.f32 0.0, %v3288
          %v3290 = vpop.f32.mrf.mxu0
          %3291 = vmatprep.mubr.bf16.mxu0 %v2985
          %3292 = vmatmul.mubr.bf16.gmra.mxu0 %v2984
          %v3293 = vpop.f32.mrf.mxu0
          %v3294 = vadd.f32 0.0, %v3293
          %v3295 = vpop.f32.mrf.mxu0
          %v3296 = vpop.f32.mrf.mxu0
          %v3297 = vadd.f32 0.0, %v3296
          %v3298 = vpop.f32.mrf.mxu0
          %3299 = vmatprep.mubr.bf16.mxu0 %v2992
          %3300 = vmatmul.mubr.bf16.gmra.mxu0 %v2991
          %v3301 = vpop.f32.mrf.mxu0
          %v3302 = vadd.f32 0.0, %v3301
          %v3303 = vpop.f32.mrf.mxu0
          %v3304 = vpop.f32.mrf.mxu0
          %v3305 = vadd.f32 0.0, %v3304
          %v3306 = vpop.f32.mrf.mxu0
          %3307 = vmatprep.mubr.bf16.mxu0 %v2999
          %3308 = vmatmul.mubr.bf16.gmra.mxu0 %v2998
          %v3309 = vpop.f32.mrf.mxu0
          %v3310 = vadd.f32 0.0, %v3309
          %v3311 = vpop.f32.mrf.mxu0
          %v3312 = vpop.f32.mrf.mxu0
          %v3313 = vadd.f32 0.0, %v3312
          %v3314 = vpop.f32.mrf.mxu0
          %3315 = vmatprep.mubr.bf16.mxu0 %v3006
          %3316 = vmatmul.mubr.bf16.gmra.mxu0 %v3005
          %v3317 = vpop.f32.mrf.mxu0
          %v3318 = vadd.f32 0.0, %v3317
          %v3319 = vpop.f32.mrf.mxu0
          %v3320 = vpop.f32.mrf.mxu0
          %v3321 = vadd.f32 0.0, %v3320
          %v3322 = vpop.f32.mrf.mxu0
          %3323 = vmatprep.mubr.bf16.mxu0 %v3013
          %3324 = vmatmul.mubr.bf16.gmra.mxu0 %v3012
          %v3325 = vpop.f32.mrf.mxu0
          %v3326 = vadd.f32 0.0, %v3325
          %v3327 = vpop.f32.mrf.mxu0
          %v3328 = vpop.f32.mrf.mxu0
          %v3329 = vadd.f32 0.0, %v3328
          %v3330 = vpop.f32.mrf.mxu0
          %3331 = vdwg.mxu0
          %3332 = vmatprep.subr.bf16.mxu0 0
          %3333 = vmatpush1.bf16.msra.mxu0 %v2524
          %3334 = vmatprep.subr.bf16.mxu0 0
          %3335 = vmatpush1.bf16.msra.mxu0 %v2523
          %3336 = vmatprep.subr.bf16.mxu0 0
          %3337 = vmatpush1.bf16.msra.mxu0 %v2522
          %3338 = vmatprep.subr.bf16.mxu0 0
          %3339 = vmatpush1.bf16.msra.mxu0 %v2521
          %3340 = vmatprep.subr.bf16.mxu0 0
          %3341 = vmatpush1.bf16.msra.mxu0 %v2520
          %3342 = vmatprep.subr.bf16.mxu0 0
          %3343 = vmatpush1.bf16.msra.mxu0 %v2519
          %3344 = vmatprep.subr.bf16.mxu0 0
          %3345 = vmatpush1.bf16.msra.mxu0 %v2518
          %3346 = vmatprep.subr.bf16.mxu0 0
          %3347 = vmatpush1.bf16.msra.mxu0 %v2517
          %3348 = vmatprep.subr.bf16.mxu0 0
          %3349 = vmatpush2.bf16.msra.mxu0 %v2532
          %3350 = vmatprep.subr.bf16.mxu0 0
          %3351 = vmatpush2.bf16.msra.mxu0 %v2531
          %3352 = vmatprep.subr.bf16.mxu0 0
          %3353 = vmatpush2.bf16.msra.mxu0 %v2530
          %3354 = vmatprep.subr.bf16.mxu0 0
          %3355 = vmatpush2.bf16.msra.mxu0 %v2529
          %3356 = vmatprep.subr.bf16.mxu0 0
          %3357 = vmatpush2.bf16.msra.mxu0 %v2528
          %3358 = vmatprep.subr.bf16.mxu0 0
          %3359 = vmatpush2.bf16.msra.mxu0 %v2527
          %3360 = vmatprep.subr.bf16.mxu0 0
          %3361 = vmatpush2.bf16.msra.mxu0 %v2526
          %3362 = vmatprep.subr.bf16.mxu0 0
          %3363 = vmatpush2.bf16.msra.mxu0 %v2525
          %3364 = vmatprep.mubr.bf16.mxu0 %v2910
          %3365 = vmatmul.mubr.bf16.gmra.mxu0 %v2909
          %v3366 = vpop.f32.mrf.mxu0
          %v3367 = vadd.f32 %v3206, %v3366
          %v3368 = vpop.f32.mrf.mxu0
          %v3369 = vpop.f32.mrf.mxu0
          %v3370 = vadd.f32 %v3209, %v3369
          %v3371 = vpop.f32.mrf.mxu0
          %3372 = vmatprep.mubr.bf16.mxu0 %v2917
          %3373 = vmatmul.mubr.bf16.gmra.mxu0 %v2916
          %v3374 = vpop.f32.mrf.mxu0
          %v3375 = vadd.f32 %v3214, %v3374
          %v3376 = vpop.f32.mrf.mxu0
          %v3377 = vpop.f32.mrf.mxu0
          %v3378 = vadd.f32 %v3217, %v3377
          %v3379 = vpop.f32.mrf.mxu0
          %3380 = vmatprep.mubr.bf16.mxu0 %v2924
          %3381 = vmatmul.mubr.bf16.gmra.mxu0 %v2923
          %v3382 = vpop.f32.mrf.mxu0
          %v3383 = vadd.f32 %v3222, %v3382
          %v3384 = vpop.f32.mrf.mxu0
          %v3385 = vpop.f32.mrf.mxu0
          %v3386 = vadd.f32 %v3225, %v3385
          %v3387 = vpop.f32.mrf.mxu0
          %3388 = vmatprep.mubr.bf16.mxu0 %v2931
          %3389 = vmatmul.mubr.bf16.gmra.mxu0 %v2930
          %v3390 = vpop.f32.mrf.mxu0
          %v3391 = vadd.f32 %v3230, %v3390
          %v3392 = vpop.f32.mrf.mxu0
          %v3393 = vpop.f32.mrf.mxu0
          %v3394 = vadd.f32 %v3233, %v3393
          %v3395 = vpop.f32.mrf.mxu0
          %3396 = vmatprep.mubr.bf16.mxu0 %v2938
          %3397 = vmatmul.mubr.bf16.gmra.mxu0 %v2937
          %v3398 = vpop.f32.mrf.mxu0
          %v3399 = vadd.f32 %v3238, %v3398
          %v3400 = vpop.f32.mrf.mxu0
          %v3401 = vpop.f32.mrf.mxu0
          %v3402 = vadd.f32 %v3241, %v3401
          %v3403 = vpop.f32.mrf.mxu0
          %3404 = vmatprep.mubr.bf16.mxu0 %v2945
          %3405 = vmatmul.mubr.bf16.gmra.mxu0 %v2944
          %v3406 = vpop.f32.mrf.mxu0
          %v3407 = vadd.f32 %v3246, %v3406
          %v3408 = vpop.f32.mrf.mxu0
          %v3409 = vpop.f32.mrf.mxu0
          %v3410 = vadd.f32 %v3249, %v3409
          %v3411 = vpop.f32.mrf.mxu0
          %3412 = vmatprep.mubr.bf16.mxu0 %v2952
          %3413 = vmatmul.mubr.bf16.gmra.mxu0 %v2951
          %v3414 = vpop.f32.mrf.mxu0
          %v3415 = vadd.f32 %v3254, %v3414
          %v3416 = vpop.f32.mrf.mxu0
          %v3417 = vpop.f32.mrf.mxu0
          %v3418 = vadd.f32 %v3257, %v3417
          %v3419 = vpop.f32.mrf.mxu0
          %3420 = vmatprep.mubr.bf16.mxu0 %v2959
          %3421 = vmatmul.mubr.bf16.gmra.mxu0 %v2958
          %v3422 = vpop.f32.mrf.mxu0
          %v3423 = vadd.f32 %v3262, %v3422
          %v3424 = vpop.f32.mrf.mxu0
          %v3425 = vpop.f32.mrf.mxu0
          %v3426 = vadd.f32 %v3265, %v3425
          %v3427 = vpop.f32.mrf.mxu0
          %3428 = vmatprep.mubr.bf16.mxu0 %v2966
          %3429 = vmatmul.mubr.bf16.gmra.mxu0 %v2965
          %v3430 = vpop.f32.mrf.mxu0
          %v3431 = vadd.f32 %v3270, %v3430
          %v3432 = vpop.f32.mrf.mxu0
          %v3433 = vpop.f32.mrf.mxu0
          %v3434 = vadd.f32 %v3273, %v3433
          %v3435 = vpop.f32.mrf.mxu0
          %3436 = vmatprep.mubr.bf16.mxu0 %v2973
          %3437 = vmatmul.mubr.bf16.gmra.mxu0 %v2972
          %v3438 = vpop.f32.mrf.mxu0
          %v3439 = vadd.f32 %v3278, %v3438
          %v3440 = vpop.f32.mrf.mxu0
          %v3441 = vpop.f32.mrf.mxu0
          %v3442 = vadd.f32 %v3281, %v3441
          %v3443 = vpop.f32.mrf.mxu0
          %3444 = vmatprep.mubr.bf16.mxu0 %v2980
          %3445 = vmatmul.mubr.bf16.gmra.mxu0 %v2979
          %v3446 = vpop.f32.mrf.mxu0
          %v3447 = vadd.f32 %v3286, %v3446
          %v3448 = vpop.f32.mrf.mxu0
          %v3449 = vpop.f32.mrf.mxu0
          %v3450 = vadd.f32 %v3289, %v3449
          %v3451 = vpop.f32.mrf.mxu0
          %3452 = vmatprep.mubr.bf16.mxu0 %v2987
          %3453 = vmatmul.mubr.bf16.gmra.mxu0 %v2986
          %v3454 = vpop.f32.mrf.mxu0
          %v3455 = vadd.f32 %v3294, %v3454
          %v3456 = vpop.f32.mrf.mxu0
          %v3457 = vpop.f32.mrf.mxu0
          %v3458 = vadd.f32 %v3297, %v3457
          %v3459 = vpop.f32.mrf.mxu0
          %3460 = vmatprep.mubr.bf16.mxu0 %v2994
          %3461 = vmatmul.mubr.bf16.gmra.mxu0 %v2993
          %v3462 = vpop.f32.mrf.mxu0
          %v3463 = vadd.f32 %v3302, %v3462
          %v3464 = vpop.f32.mrf.mxu0
          %v3465 = vpop.f32.mrf.mxu0
          %v3466 = vadd.f32 %v3305, %v3465
          %v3467 = vpop.f32.mrf.mxu0
          %3468 = vmatprep.mubr.bf16.mxu0 %v3001
          %3469 = vmatmul.mubr.bf16.gmra.mxu0 %v3000
          %v3470 = vpop.f32.mrf.mxu0
          %v3471 = vadd.f32 %v3310, %v3470
          %v3472 = vpop.f32.mrf.mxu0
          %v3473 = vpop.f32.mrf.mxu0
          %v3474 = vadd.f32 %v3313, %v3473
          %v3475 = vpop.f32.mrf.mxu0
          %3476 = vmatprep.mubr.bf16.mxu0 %v3008
          %3477 = vmatmul.mubr.bf16.gmra.mxu0 %v3007
          %v3478 = vpop.f32.mrf.mxu0
          %v3479 = vadd.f32 %v3318, %v3478
          %v3480 = vpop.f32.mrf.mxu0
          %v3481 = vpop.f32.mrf.mxu0
          %v3482 = vadd.f32 %v3321, %v3481
          %v3483 = vpop.f32.mrf.mxu0
          %3484 = vmatprep.mubr.bf16.mxu0 %v3015
          %3485 = vmatmul.mubr.bf16.gmra.mxu0 %v3014
          %v3486 = vpop.f32.mrf.mxu0
          %v3487 = vadd.f32 %v3326, %v3486
          %v3488 = vpop.f32.mrf.mxu0
          %v3489 = vpop.f32.mrf.mxu0
          %v3490 = vadd.f32 %v3329, %v3489
          %v3491 = vpop.f32.mrf.mxu0
          %3492 = vdwg.mxu0
          %3493 = vmatprep.subr.bf16.mxu0 0
          %3494 = vmatpush1.bf16.msra.mxu0 %v2540
          %3495 = vmatprep.subr.bf16.mxu0 0
          %3496 = vmatpush1.bf16.msra.mxu0 %v2539
          %3497 = vmatprep.subr.bf16.mxu0 0
          %3498 = vmatpush1.bf16.msra.mxu0 %v2538
          %3499 = vmatprep.subr.bf16.mxu0 0
          %3500 = vmatpush1.bf16.msra.mxu0 %v2537
          %3501 = vmatprep.subr.bf16.mxu0 0
          %3502 = vmatpush1.bf16.msra.mxu0 %v2536
          %3503 = vmatprep.subr.bf16.mxu0 0
          %3504 = vmatpush1.bf16.msra.mxu0 %v2535
          %3505 = vmatprep.subr.bf16.mxu0 0
          %3506 = vmatpush1.bf16.msra.mxu0 %v2534
          %3507 = vmatprep.subr.bf16.mxu0 0
          %3508 = vmatpush1.bf16.msra.mxu0 %v2533
          %3509 = vmatprep.subr.bf16.mxu0 0
          %3510 = vmatpush2.bf16.msra.mxu0 %v2548
          %3511 = vmatprep.subr.bf16.mxu0 0
          %3512 = vmatpush2.bf16.msra.mxu0 %v2547
          %3513 = vmatprep.subr.bf16.mxu0 0
          %3514 = vmatpush2.bf16.msra.mxu0 %v2546
          %3515 = vmatprep.subr.bf16.mxu0 0
          %3516 = vmatpush2.bf16.msra.mxu0 %v2545
          %3517 = vmatprep.subr.bf16.mxu0 0
          %3518 = vmatpush2.bf16.msra.mxu0 %v2544
          %3519 = vmatprep.subr.bf16.mxu0 0
          %3520 = vmatpush2.bf16.msra.mxu0 %v2543
          %3521 = vmatprep.subr.bf16.mxu0 0
          %3522 = vmatpush2.bf16.msra.mxu0 %v2542
          %3523 = vmatprep.subr.bf16.mxu0 0
          %3524 = vmatpush2.bf16.msra.mxu0 %v2541
          %3525 = vmatprep.mubr.bf16.mxu0 %v2912
          %3526 = vmatmul.mubr.bf16.gmra.mxu0 %v2911
          %v3527 = vpop.f32.mrf.mxu0
          %v3528 = vadd.f32 %v3367, %v3527
          %v3529 = vpop.f32.mrf.mxu0
          %v3530 = vpop.f32.mrf.mxu0
          %v3531 = vadd.f32 %v3370, %v3530
          %v3532 = vpop.f32.mrf.mxu0
          %3533 = vmatprep.mubr.bf16.mxu0 %v2919
          %3534 = vmatmul.mubr.bf16.gmra.mxu0 %v2918
          %v3535 = vpop.f32.mrf.mxu0
          %v3536 = vadd.f32 %v3375, %v3535
          %v3537 = vpop.f32.mrf.mxu0
          %v3538 = vpop.f32.mrf.mxu0
          %v3539 = vadd.f32 %v3378, %v3538
          %v3540 = vpop.f32.mrf.mxu0
          %3541 = vmatprep.mubr.bf16.mxu0 %v2926
          %3542 = vmatmul.mubr.bf16.gmra.mxu0 %v2925
          %v3543 = vpop.f32.mrf.mxu0
          %v3544 = vadd.f32 %v3383, %v3543
          %v3545 = vpop.f32.mrf.mxu0
          %v3546 = vpop.f32.mrf.mxu0
          %v3547 = vadd.f32 %v3386, %v3546
          %v3548 = vpop.f32.mrf.mxu0
          %3549 = vmatprep.mubr.bf16.mxu0 %v2933
          %3550 = vmatmul.mubr.bf16.gmra.mxu0 %v2932
          %v3551 = vpop.f32.mrf.mxu0
          %v3552 = vadd.f32 %v3391, %v3551
          %v3553 = vpop.f32.mrf.mxu0
          %v3554 = vpop.f32.mrf.mxu0
          %v3555 = vadd.f32 %v3394, %v3554
          %v3556 = vpop.f32.mrf.mxu0
          %3557 = vmatprep.mubr.bf16.mxu0 %v2940
          %3558 = vmatmul.mubr.bf16.gmra.mxu0 %v2939
          %v3559 = vpop.f32.mrf.mxu0
          %v3560 = vadd.f32 %v3399, %v3559
          %v3561 = vpop.f32.mrf.mxu0
          %v3562 = vpop.f32.mrf.mxu0
          %v3563 = vadd.f32 %v3402, %v3562
          %v3564 = vpop.f32.mrf.mxu0
          %3565 = vmatprep.mubr.bf16.mxu0 %v2947
          %3566 = vmatmul.mubr.bf16.gmra.mxu0 %v2946
          %v3567 = vpop.f32.mrf.mxu0
          %v3568 = vadd.f32 %v3407, %v3567
          %v3569 = vpop.f32.mrf.mxu0
          %v3570 = vpop.f32.mrf.mxu0
          %v3571 = vadd.f32 %v3410, %v3570
          %v3572 = vpop.f32.mrf.mxu0
          %3573 = vmatprep.mubr.bf16.mxu0 %v2954
          %3574 = vmatmul.mubr.bf16.gmra.mxu0 %v2953
          %v3575 = vpop.f32.mrf.mxu0
          %v3576 = vadd.f32 %v3415, %v3575
          %v3577 = vpop.f32.mrf.mxu0
          %v3578 = vpop.f32.mrf.mxu0
          %v3579 = vadd.f32 %v3418, %v3578
          %v3580 = vpop.f32.mrf.mxu0
          %3581 = vmatprep.mubr.bf16.mxu0 %v2961
          %3582 = vmatmul.mubr.bf16.gmra.mxu0 %v2960
          %v3583 = vpop.f32.mrf.mxu0
          %v3584 = vadd.f32 %v3423, %v3583
          %v3585 = vpop.f32.mrf.mxu0
          %v3586 = vpop.f32.mrf.mxu0
          %v3587 = vadd.f32 %v3426, %v3586
          %v3588 = vpop.f32.mrf.mxu0
          %3589 = vmatprep.mubr.bf16.mxu0 %v2968
          %3590 = vmatmul.mubr.bf16.gmra.mxu0 %v2967
          %v3591 = vpop.f32.mrf.mxu0
          %v3592 = vadd.f32 %v3431, %v3591
          %v3593 = vpop.f32.mrf.mxu0
          %v3594 = vpop.f32.mrf.mxu0
          %v3595 = vadd.f32 %v3434, %v3594
          %v3596 = vpop.f32.mrf.mxu0
          %3597 = vmatprep.mubr.bf16.mxu0 %v2975
          %3598 = vmatmul.mubr.bf16.gmra.mxu0 %v2974
          %v3599 = vpop.f32.mrf.mxu0
          %v3600 = vadd.f32 %v3439, %v3599
          %v3601 = vpop.f32.mrf.mxu0
          %v3602 = vpop.f32.mrf.mxu0
          %v3603 = vadd.f32 %v3442, %v3602
          %v3604 = vpop.f32.mrf.mxu0
          %3605 = vmatprep.mubr.bf16.mxu0 %v2982
          %3606 = vmatmul.mubr.bf16.gmra.mxu0 %v2981
          %v3607 = vpop.f32.mrf.mxu0
          %v3608 = vadd.f32 %v3447, %v3607
          %v3609 = vpop.f32.mrf.mxu0
          %v3610 = vpop.f32.mrf.mxu0
          %v3611 = vadd.f32 %v3450, %v3610
          %v3612 = vpop.f32.mrf.mxu0
          %3613 = vmatprep.mubr.bf16.mxu0 %v2989
          %3614 = vmatmul.mubr.bf16.gmra.mxu0 %v2988
          %v3615 = vpop.f32.mrf.mxu0
          %v3616 = vadd.f32 %v3455, %v3615
          %v3617 = vpop.f32.mrf.mxu0
          %v3618 = vpop.f32.mrf.mxu0
          %v3619 = vadd.f32 %v3458, %v3618
          %v3620 = vpop.f32.mrf.mxu0
          %3621 = vmatprep.mubr.bf16.mxu0 %v2996
          %3622 = vmatmul.mubr.bf16.gmra.mxu0 %v2995
          %v3623 = vpop.f32.mrf.mxu0
          %v3624 = vadd.f32 %v3463, %v3623
          %v3625 = vpop.f32.mrf.mxu0
          %v3626 = vpop.f32.mrf.mxu0
          %v3627 = vadd.f32 %v3466, %v3626
          %v3628 = vpop.f32.mrf.mxu0
          %3629 = vmatprep.mubr.bf16.mxu0 %v3003
          %3630 = vmatmul.mubr.bf16.gmra.mxu0 %v3002
          %v3631 = vpop.f32.mrf.mxu0
          %v3632 = vadd.f32 %v3471, %v3631
          %v3633 = vpop.f32.mrf.mxu0
          %v3634 = vpop.f32.mrf.mxu0
          %v3635 = vadd.f32 %v3474, %v3634
          %v3636 = vpop.f32.mrf.mxu0
          %3637 = vmatprep.mubr.bf16.mxu0 %v3010
          %3638 = vmatmul.mubr.bf16.gmra.mxu0 %v3009
          %v3639 = vpop.f32.mrf.mxu0
          %v3640 = vadd.f32 %v3479, %v3639
          %v3641 = vpop.f32.mrf.mxu0
          %v3642 = vpop.f32.mrf.mxu0
          %v3643 = vadd.f32 %v3482, %v3642
          %v3644 = vpop.f32.mrf.mxu0
          %3645 = vmatprep.mubr.bf16.mxu0 %v3017
          %3646 = vmatmul.mubr.bf16.gmra.mxu0 %v3016
          %v3647 = vpop.f32.mrf.mxu0
          %v3648 = vadd.f32 %v3487, %v3647
          %v3649 = vpop.f32.mrf.mxu0
          %v3650 = vpop.f32.mrf.mxu0
          %v3651 = vadd.f32 %v3490, %v3650
          %v3652 = vpop.f32.mrf.mxu0
          %3653 = vdwg.mxu0
          %3654 = vmatprep.subr.bf16.mxu0 0
          %3655 = vmatpush1.bf16.msra.mxu0 0
          %3656 = vmatprep.subr.bf16.mxu0 0
          %3657 = vmatpush1.bf16.msra.mxu0 0
          %3658 = vmatprep.subr.bf16.mxu0 0
          %3659 = vmatpush1.bf16.msra.mxu0 %v3169
          %3660 = vmatprep.subr.bf16.mxu0 0
          %3661 = vmatpush1.bf16.msra.mxu0 %v2553
          %3662 = vmatprep.subr.bf16.mxu0 0
          %3663 = vmatpush1.bf16.msra.mxu0 %v2552
          %3664 = vmatprep.subr.bf16.mxu0 0
          %3665 = vmatpush1.bf16.msra.mxu0 %v2551
          %3666 = vmatprep.subr.bf16.mxu0 0
          %3667 = vmatpush1.bf16.msra.mxu0 %v2550
          %3668 = vmatprep.subr.bf16.mxu0 0
          %3669 = vmatpush1.bf16.msra.mxu0 %v2549
          %3670 = vmatprep.subr.bf16.mxu0 0
          %3671 = vmatpush2.bf16.msra.mxu0 0
          %3672 = vmatprep.subr.bf16.mxu0 0
          %3673 = vmatpush2.bf16.msra.mxu0 0
          %3674 = vmatprep.subr.bf16.mxu0 0
          %3675 = vmatpush2.bf16.msra.mxu0 0
          %3676 = vmatprep.subr.bf16.mxu0 0
          %3677 = vmatpush2.bf16.msra.mxu0 0
          %3678 = vmatprep.subr.bf16.mxu0 0
          %3679 = vmatpush2.bf16.msra.mxu0 0
          %3680 = vmatprep.subr.bf16.mxu0 0
          %3681 = vmatpush2.bf16.msra.mxu0 0
          %3682 = vmatprep.subr.bf16.mxu0 0
          %3683 = vmatpush2.bf16.msra.mxu0 0
          %3684 = vmatprep.subr.bf16.mxu0 0
          %3685 = vmatpush2.bf16.msra.mxu0 0
          %3686 = vmatprep.mubr.bf16.mxu0 0
          %3687 = vmatmul.mubr.bf16.gmra.mxu0 %v3117
          %v3688 = vpop.f32.mrf.mxu0
          %v3689 = vadd.f32 %v3528, %v3688
          %v3690 = vpop.f32.mrf.mxu0
          %v3691 = vpop.f32.mrf.mxu0
          %v3692 = vadd.f32 %v3531, %v3691
          %v3693 = vpop.f32.mrf.mxu0
          %3694 = vmatprep.mubr.bf16.mxu0 0
          %3695 = vmatmul.mubr.bf16.gmra.mxu0 %v3120
          %v3696 = vpop.f32.mrf.mxu0
          %v3697 = vadd.f32 %v3536, %v3696
          %v3698 = vpop.f32.mrf.mxu0
          %v3699 = vpop.f32.mrf.mxu0
          %v3700 = vadd.f32 %v3539, %v3699
          %v3701 = vpop.f32.mrf.mxu0
          %3702 = vmatprep.mubr.bf16.mxu0 0
          %3703 = vmatmul.mubr.bf16.gmra.mxu0 %v3123
          %v3704 = vpop.f32.mrf.mxu0
          %v3705 = vadd.f32 %v3544, %v3704
          %v3706 = vpop.f32.mrf.mxu0
          %v3707 = vpop.f32.mrf.mxu0
          %v3708 = vadd.f32 %v3547, %v3707
          %v3709 = vpop.f32.mrf.mxu0
          %3710 = vmatprep.mubr.bf16.mxu0 0
          %3711 = vmatmul.mubr.bf16.gmra.mxu0 %v3126
          %v3712 = vpop.f32.mrf.mxu0
          %v3713 = vadd.f32 %v3552, %v3712
          %v3714 = vpop.f32.mrf.mxu0
          %v3715 = vpop.f32.mrf.mxu0
          %v3716 = vadd.f32 %v3555, %v3715
          %v3717 = vpop.f32.mrf.mxu0
          %3718 = vmatprep.mubr.bf16.mxu0 0
          %3719 = vmatmul.mubr.bf16.gmra.mxu0 %v3129
          %v3720 = vpop.f32.mrf.mxu0
          %v3721 = vadd.f32 %v3560, %v3720
          %v3722 = vpop.f32.mrf.mxu0
          %v3723 = vpop.f32.mrf.mxu0
          %v3724 = vadd.f32 %v3563, %v3723
          %v3725 = vpop.f32.mrf.mxu0
          %3726 = vmatprep.mubr.bf16.mxu0 0
          %3727 = vmatmul.mubr.bf16.gmra.mxu0 %v3132
          %v3728 = vpop.f32.mrf.mxu0
          %v3729 = vadd.f32 %v3568, %v3728
          %v3730 = vpop.f32.mrf.mxu0
          %v3731 = vpop.f32.mrf.mxu0
          %v3732 = vadd.f32 %v3571, %v3731
          %v3733 = vpop.f32.mrf.mxu0
          %3734 = vmatprep.mubr.bf16.mxu0 0
          %3735 = vmatmul.mubr.bf16.gmra.mxu0 %v3135
          %v3736 = vpop.f32.mrf.mxu0
          %v3737 = vadd.f32 %v3576, %v3736
          %v3738 = vpop.f32.mrf.mxu0
          %v3739 = vpop.f32.mrf.mxu0
          %v3740 = vadd.f32 %v3579, %v3739
          %v3741 = vpop.f32.mrf.mxu0
          %3742 = vmatprep.mubr.bf16.mxu0 0
          %3743 = vmatmul.mubr.bf16.gmra.mxu0 %v3138
          %v3744 = vpop.f32.mrf.mxu0
          %v3745 = vadd.f32 %v3584, %v3744
          %v3746 = vpop.f32.mrf.mxu0
          %v3747 = vpop.f32.mrf.mxu0
          %v3748 = vadd.f32 %v3587, %v3747
          %v3749 = vpop.f32.mrf.mxu0
          %3750 = vmatprep.mubr.bf16.mxu0 0
          %3751 = vmatmul.mubr.bf16.gmra.mxu0 %v3141
          %v3752 = vpop.f32.mrf.mxu0
          %v3753 = vadd.f32 %v3592, %v3752
          %v3754 = vpop.f32.mrf.mxu0
          %v3755 = vpop.f32.mrf.mxu0
          %v3756 = vadd.f32 %v3595, %v3755
          %v3757 = vpop.f32.mrf.mxu0
          %3758 = vmatprep.mubr.bf16.mxu0 0
          %3759 = vmatmul.mubr.bf16.gmra.mxu0 %v3144
          %v3760 = vpop.f32.mrf.mxu0
          %v3761 = vadd.f32 %v3600, %v3760
          %v3762 = vpop.f32.mrf.mxu0
          %v3763 = vpop.f32.mrf.mxu0
          %v3764 = vadd.f32 %v3603, %v3763
          %v3765 = vpop.f32.mrf.mxu0
          %3766 = vmatprep.mubr.bf16.mxu0 0
          %3767 = vmatmul.mubr.bf16.gmra.mxu0 %v3147
          %v3768 = vpop.f32.mrf.mxu0
          %v3769 = vadd.f32 %v3608, %v3768
          %v3770 = vpop.f32.mrf.mxu0
          %v3771 = vpop.f32.mrf.mxu0
          %v3772 = vadd.f32 %v3611, %v3771
          %v3773 = vpop.f32.mrf.mxu0
          %3774 = vmatprep.mubr.bf16.mxu0 0
          %3775 = vmatmul.mubr.bf16.gmra.mxu0 %v3150
          %v3776 = vpop.f32.mrf.mxu0
          %v3777 = vadd.f32 %v3616, %v3776
          %v3778 = vpop.f32.mrf.mxu0
          %v3779 = vpop.f32.mrf.mxu0
          %v3780 = vadd.f32 %v3619, %v3779
          %v3781 = vpop.f32.mrf.mxu0
          %3782 = vmatprep.mubr.bf16.mxu0 0
          %3783 = vmatmul.mubr.bf16.gmra.mxu0 %v3153
          %v3784 = vpop.f32.mrf.mxu0
          %v3785 = vadd.f32 %v3624, %v3784
          %v3786 = vpop.f32.mrf.mxu0
          %v3787 = vpop.f32.mrf.mxu0
          %v3788 = vadd.f32 %v3627, %v3787
          %v3789 = vpop.f32.mrf.mxu0
          %3790 = vmatprep.mubr.bf16.mxu0 0
          %3791 = vmatmul.mubr.bf16.gmra.mxu0 %v3156
          %v3792 = vpop.f32.mrf.mxu0
          %v3793 = vadd.f32 %v3632, %v3792
          %v3794 = vpop.f32.mrf.mxu0
          %v3795 = vpop.f32.mrf.mxu0
          %v3796 = vadd.f32 %v3635, %v3795
          %v3797 = vpop.f32.mrf.mxu0
          %3798 = vmatprep.mubr.bf16.mxu0 0
          %3799 = vmatmul.mubr.bf16.gmra.mxu0 %v3159
          %v3800 = vpop.f32.mrf.mxu0
          %v3801 = vadd.f32 %v3640, %v3800
          %v3802 = vpop.f32.mrf.mxu0
          %v3803 = vpop.f32.mrf.mxu0
          %v3804 = vadd.f32 %v3643, %v3803
          %v3805 = vpop.f32.mrf.mxu0
          %3806 = vmatprep.mubr.bf16.mxu0 0
          %3807 = vmatmul.mubr.bf16.gmra.mxu0 %v3162
          %v3808 = vpop.f32.mrf.mxu0
          %v3809 = vadd.f32 %v3648, %v3808
          %v3810 = vpop.f32.mrf.mxu0
          %v3811 = vpop.f32.mrf.mxu0
          %v3812 = vadd.f32 %v3651, %v3811
          %v3813 = vpop.f32.mrf.mxu0
          %3814 = vdwg.mxu0
          %3815 = vst.msk [vmem:[#allocation3] sm:$0xff] %vm1812, %v3689
          %3816 = vst.msk [vmem:[#allocation3 + $0x8] sm:$0xff] %vm1812, %v3692
          %3817 = vst.msk [vmem:[#allocation3 + $0x10] sm:$0xff] %vm1812, %v3697
          %3818 = vst.msk [vmem:[#allocation3 + $0x18] sm:$0xff] %vm1812, %v3700
          %3819 = vst.msk [vmem:[#allocation3 + $0x20] sm:$0xff] %vm1812, %v3705
          %3820 = vst.msk [vmem:[#allocation3 + $0x28] sm:$0xff] %vm1812, %v3708
          %3821 = vst.msk [vmem:[#allocation3 + $0x30] sm:$0xff] %vm1812, %v3713
          %3822 = vst.msk [vmem:[#allocation3 + $0x38] sm:$0xff] %vm1812, %v3716
          %3823 = vst.msk [vmem:[#allocation3 + $0x40] sm:$0xff] %vm1812, %v3721
          %3824 = vst.msk [vmem:[#allocation3 + $0x48] sm:$0xff] %vm1812, %v3724
          %3825 = vst.msk [vmem:[#allocation3 + $0x50] sm:$0xff] %vm1812, %v3729
          %3826 = vst.msk [vmem:[#allocation3 + $0x58] sm:$0xff] %vm1812, %v3732
          %3827 = vst.msk [vmem:[#allocation3 + $0x60] sm:$0xff] %vm1812, %v3737
          %3828 = vst.msk [vmem:[#allocation3 + $0x68] sm:$0xff] %vm1812, %v3740
          %3829 = vst.msk [vmem:[#allocation3 + $0x70] sm:$0xff] %vm1812, %v3745
          %3830 = vst.msk [vmem:[#allocation3 + $0x78] sm:$0xff] %vm1812, %v3748
          %3831 = vst.msk [vmem:[#allocation3 + $0x80] sm:$0xff] %vm1812, %v3753
          %3832 = vst.msk [vmem:[#allocation3 + $0x88] sm:$0xff] %vm1812, %v3756
          %3833 = vst.msk [vmem:[#allocation3 + $0x90] sm:$0xff] %vm1812, %v3761
          %3834 = vst.msk [vmem:[#allocation3 + $0x98] sm:$0xff] %vm1812, %v3764
          %3835 = vst.msk [vmem:[#allocation3 + $0xa0] sm:$0xff] %vm1812, %v3769
          %3836 = vst.msk [vmem:[#allocation3 + $0xa8] sm:$0xff] %vm1812, %v3772
          %3837 = vst.msk [vmem:[#allocation3 + $0xb0] sm:$0xff] %vm1812, %v3777
          %3838 = vst.msk [vmem:[#allocation3 + $0xb8] sm:$0xff] %vm1812, %v3780
          %3839 = vst.msk [vmem:[#allocation3 + $0xc0] sm:$0xff] %vm1812, %v3785
          %3840 = vst.msk [vmem:[#allocation3 + $0xc8] sm:$0xff] %vm1812, %v3788
          %3841 = vst.msk [vmem:[#allocation3 + $0xd0] sm:$0xff] %vm1812, %v3793
          %3842 = vst.msk [vmem:[#allocation3 + $0xd8] sm:$0xff] %vm1812, %v3796
          %3843 = vst.msk [vmem:[#allocation3 + $0xe0] sm:$0xff] %vm1812, %v3801
          %3844 = vst.msk [vmem:[#allocation3 + $0xe8] sm:$0xff] %vm1812, %v3804
          %3845 = vst.msk [vmem:[#allocation3 + $0xf0] sm:$0xff] %vm1812, %v3809
          %3846 = vst.msk [vmem:[#allocation3 + $0xf8] sm:$0xff] %vm1812, %v3812
          %v3847 = vld [vmem:[#allocation3] sm:$0xff]
          %v3848 = vld [vmem:[#allocation3 + $0x8] sm:$0xff]
          %v3849 = vld [vmem:[#allocation3 + $0x10] sm:$0xff]
          %v3850 = vld [vmem:[#allocation3 + $0x18] sm:$0xff]
          %v3851 = vld [vmem:[#allocation3 + $0x20] sm:$0xff]
          %v3852 = vld [vmem:[#allocation3 + $0x28] sm:$0xff]
          %v3853 = vld [vmem:[#allocation3 + $0x30] sm:$0xff]
          %v3854 = vld [vmem:[#allocation3 + $0x38] sm:$0xff]
          %v3855 = vld [vmem:[#allocation3 + $0x40] sm:$0xff]
          %v3856 = vld [vmem:[#allocation3 + $0x48] sm:$0xff]
          %v3857 = vld [vmem:[#allocation3 + $0x50] sm:$0xff]
          %v3858 = vld [vmem:[#allocation3 + $0x58] sm:$0xff]
          %v3859 = vld [vmem:[#allocation3 + $0x60] sm:$0xff]
          %v3860 = vld [vmem:[#allocation3 + $0x68] sm:$0xff]
          %v3861 = vld [vmem:[#allocation3 + $0x70] sm:$0xff]
          %v3862 = vld [vmem:[#allocation3 + $0x78] sm:$0xff]
          %v3863 = vld [vmem:[#allocation3 + $0x80] sm:$0xff]
          %v3864 = vld [vmem:[#allocation3 + $0x88] sm:$0xff]
          %v3865 = vld [vmem:[#allocation3 + $0x90] sm:$0xff]
          %v3866 = vld [vmem:[#allocation3 + $0x98] sm:$0xff]
          %v3867 = vld [vmem:[#allocation3 + $0xa0] sm:$0xff]
          %v3868 = vld [vmem:[#allocation3 + $0xa8] sm:$0xff]
          %v3869 = vld [vmem:[#allocation3 + $0xb0] sm:$0xff]
          %v3870 = vld [vmem:[#allocation3 + $0xb8] sm:$0xf]
          %v3871 = vpack.c.bf16 %v3848, %v3847
          %v3872 = vpack.c.bf16 %v3850, %v3849
          %v3873 = vpack.c.bf16 %v3852, %v3851
          %v3874 = vpack.c.bf16 %v3854, %v3853
          %v3875 = vpack.c.bf16 %v3856, %v3855
          %v3876 = vpack.c.bf16 %v3858, %v3857
          %v3877 = vpack.c.bf16 %v3860, %v3859
          %v3878 = vpack.c.bf16 %v3862, %v3861
          %v3879 = vpack.c.bf16 %v3864, %v3863
          %v3880 = vpack.c.bf16 %v3866, %v3865
          %v3881 = vpack.c.bf16 %v3868, %v3867
          %v3882 = vpack.c.bf16 %v3870, %v3869
          %v3895 = vunpack.c.l.b16 %v3871
          %v3896 = vunpack.c.h.b16 %v3871
          %v3897 = vunpack.c.l.b16 %v3872
          %v3898 = vunpack.c.h.b16 %v3872
          %v3899 = vunpack.c.l.b16 %v3873
          %v3900 = vunpack.c.h.b16 %v3873
          %v3901 = vunpack.c.l.b16 %v3874
          %v3902 = vunpack.c.h.b16 %v3874
          %v3903 = vunpack.c.l.b16 %v3875
          %v3904 = vunpack.c.h.b16 %v3875
          %v3905 = vunpack.c.l.b16 %v3876
          %v3906 = vunpack.c.h.b16 %v3876
          %v3907 = vunpack.c.l.b16 %v3877
          %v3908 = vunpack.c.h.b16 %v3877
          %v3909 = vunpack.c.l.b16 %v3878
          %v3910 = vunpack.c.h.b16 %v3878
          %v3911 = vunpack.c.l.b16 %v3879
          %v3912 = vunpack.c.h.b16 %v3879
          %v3913 = vunpack.c.l.b16 %v3880
          %v3914 = vunpack.c.h.b16 %v3880
          %v3915 = vunpack.c.l.b16 %v3881
          %v3916 = vunpack.c.h.b16 %v3881
          %v3917 = vunpack.c.l.b16 %v3882
          %v3918 = vunpack.c.h.b16 %v3882
          %v3919 = vpack.c.b16 %v3895, %v3895
          %v3920 = vpack.c.b16 %v3896, %v3896
          %v3921 = vpack.c.b16 %v3897, %v3897
          %v3922 = vpack.c.b16 %v3898, %v3898
          %v3923 = vpack.c.b16 %v3899, %v3899
          %v3924 = vpack.c.b16 %v3900, %v3900
          %v3925 = vpack.c.b16 %v3901, %v3901
          %v3926 = vpack.c.b16 %v3902, %v3902
          %v3927 = vpack.c.b16 %v3903, %v3903
          %v3928 = vpack.c.b16 %v3904, %v3904
          %v3929 = vpack.c.b16 %v3905, %v3905
          %v3930 = vpack.c.b16 %v3906, %v3906
          %v3931 = vpack.c.b16 %v3907, %v3907
          %v3932 = vpack.c.b16 %v3908, %v3908
          %v3933 = vpack.c.b16 %v3909, %v3909
          %v3934 = vpack.c.b16 %v3910, %v3910
          %v3935 = vpack.c.b16 %v3911, %v3911
          %v3936 = vpack.c.b16 %v3912, %v3912
          %v3937 = vpack.c.b16 %v3913, %v3913
          %v3938 = vpack.c.b16 %v3914, %v3914
          %v3939 = vpack.c.b16 %v3915, %v3915
          %v3940 = vpack.c.b16 %v3916, %v3916
          %v3941 = vpack.c.b16 %v3917, %v3917
          %v3942 = vpack.c.b16 %v3918, %v3918
          %3967 = vst.msk [vmem:[#allocation4] sm:$0xf] %vm1924, %v3919
          %3968 = vst.msk [vmem:[#allocation4 + $0x8] sm:$0xf] %vm1924, %v3920
          %3969 = vst.msk [vmem:[#allocation4 + $0x10] sm:$0xf] %vm1924, %v3921
          %3970 = vst.msk [vmem:[#allocation4 + $0x18] sm:$0xf] %vm1924, %v3922
          %3971 = vst.msk [vmem:[#allocation4 + $0x20] sm:$0xf] %vm1924, %v3923
          %3972 = vst.msk [vmem:[#allocation4 + $0x28] sm:$0xf] %vm1924, %v3924
          %3973 = vst.msk [vmem:[#allocation4 + $0x30] sm:$0xf] %vm1924, %v3925
          %3974 = vst.msk [vmem:[#allocation4 + $0x38] sm:$0xf] %vm1924, %v3926
          %3975 = vst.msk [vmem:[#allocation4 + $0x40] sm:$0xf] %vm1924, %v3927
          %3976 = vst.msk [vmem:[#allocation4 + $0x48] sm:$0xf] %vm1924, %v3928
          %3977 = vst.msk [vmem:[#allocation4 + $0x50] sm:$0xf] %vm1924, %v3929
          %3978 = vst.msk [vmem:[#allocation4 + $0x58] sm:$0xf] %vm1924, %v3930
          %3979 = vst.msk [vmem:[#allocation4 + $0x60] sm:$0xf] %vm1924, %v3931
          %3980 = vst.msk [vmem:[#allocation4 + $0x68] sm:$0xf] %vm1924, %v3932
          %3981 = vst.msk [vmem:[#allocation4 + $0x70] sm:$0xf] %vm1924, %v3933
          %3982 = vst.msk [vmem:[#allocation4 + $0x78] sm:$0xf] %vm1924, %v3934
          %3983 = vst.msk [vmem:[#allocation4 + $0x80] sm:$0xf] %vm1924, %v3935
          %3984 = vst.msk [vmem:[#allocation4 + $0x88] sm:$0xf] %vm1924, %v3936
          %3985 = vst.msk [vmem:[#allocation4 + $0x90] sm:$0xf] %vm1924, %v3937
          %3986 = vst.msk [vmem:[#allocation4 + $0x98] sm:$0xf] %vm1924, %v3938
          %3987 = vst.msk [vmem:[#allocation4 + $0xa0] sm:$0xf] %vm1924, %v3939
          %3988 = vst.msk [vmem:[#allocation4 + $0xa8] sm:$0xf] %vm1924, %v3940
          %3989 = vst.msk [vmem:[#allocation4 + $0xb0] sm:$0xf] %vm1924, %v3941
          %vm3990 = vcmask 74752
          %3991 = vst.msk [vmem:[#allocation4 + $0xb8] sm:$0x3] %vm3990, %v3942
          %v3992 = vld [vmem:[#allocation3 + $0x1] sm:$0xff]
          %v3993 = vld [vmem:[#allocation3 + $0x9] sm:$0xff]
          %v3994 = vld [vmem:[#allocation3 + $0x11] sm:$0xff]
          %v3995 = vld [vmem:[#allocation3 + $0x19] sm:$0xff]
          %v3996 = vld [vmem:[#allocation3 + $0x21] sm:$0xff]
          %v3997 = vld [vmem:[#allocation3 + $0x29] sm:$0xff]
          %v3998 = vld [vmem:[#allocation3 + $0x31] sm:$0xff]
          %v3999 = vld [vmem:[#allocation3 + $0x39] sm:$0xff]
          %v4000 = vld [vmem:[#allocation3 + $0x41] sm:$0xff]
          %v4001 = vld [vmem:[#allocation3 + $0x49] sm:$0xff]
          %v4002 = vld [vmem:[#allocation3 + $0x51] sm:$0xff]
          %v4003 = vld [vmem:[#allocation3 + $0x59] sm:$0xff]
          %v4004 = vld [vmem:[#allocation3 + $0x61] sm:$0xff]
          %v4005 = vld [vmem:[#allocation3 + $0x69] sm:$0xff]
          %v4006 = vld [vmem:[#allocation3 + $0x71] sm:$0xff]
          %v4007 = vld [vmem:[#allocation3 + $0x79] sm:$0xff]
          %v4008 = vld [vmem:[#allocation3 + $0x81] sm:$0xff]
          %v4009 = vld [vmem:[#allocation3 + $0x89] sm:$0xff]
          %v4010 = vld [vmem:[#allocation3 + $0x91] sm:$0xff]
          %v4011 = vld [vmem:[#allocation3 + $0x99] sm:$0xff]
          %v4012 = vld [vmem:[#allocation3 + $0xa1] sm:$0xff]
          %v4013 = vld [vmem:[#allocation3 + $0xa9] sm:$0xff]
          %v4014 = vld [vmem:[#allocation3 + $0xb1] sm:$0xff]
          %v4015 = vld [vmem:[#allocation3 + $0xb9] sm:$0xf]
          %v4016 = vpack.c.bf16 %v3993, %v3992
          %v4017 = vpack.c.bf16 %v3995, %v3994
          %v4018 = vpack.c.bf16 %v3997, %v3996
          %v4019 = vpack.c.bf16 %v3999, %v3998
          %v4020 = vpack.c.bf16 %v4001, %v4000
          %v4021 = vpack.c.bf16 %v4003, %v4002
          %v4022 = vpack.c.bf16 %v4005, %v4004
          %v4023 = vpack.c.bf16 %v4007, %v4006
          %v4024 = vpack.c.bf16 %v4009, %v4008
          %v4025 = vpack.c.bf16 %v4011, %v4010
          %v4026 = vpack.c.bf16 %v4013, %v4012
          %v4027 = vpack.c.bf16 %v4015, %v4014
          %v4040 = vunpack.c.l.b16 %v4016
          %v4041 = vunpack.c.h.b16 %v4016
          %v4042 = vunpack.c.l.b16 %v4017
          %v4043 = vunpack.c.h.b16 %v4017
          %v4044 = vunpack.c.l.b16 %v4018
          %v4045 = vunpack.c.h.b16 %v4018
          %v4046 = vunpack.c.l.b16 %v4019
          %v4047 = vunpack.c.h.b16 %v4019
          %v4048 = vunpack.c.l.b16 %v4020
          %v4049 = vunpack.c.h.b16 %v4020
          %v4050 = vunpack.c.l.b16 %v4021
          %v4051 = vunpack.c.h.b16 %v4021
          %v4052 = vunpack.c.l.b16 %v4022
          %v4053 = vunpack.c.h.b16 %v4022
          %v4054 = vunpack.c.l.b16 %v4023
          %v4055 = vunpack.c.h.b16 %v4023
          %v4056 = vunpack.c.l.b16 %v4024
          %v4057 = vunpack.c.h.b16 %v4024
          %v4058 = vunpack.c.l.b16 %v4025
          %v4059 = vunpack.c.h.b16 %v4025
          %v4060 = vunpack.c.l.b16 %v4026
          %v4061 = vunpack.c.h.b16 %v4026
          %v4062 = vunpack.c.l.b16 %v4027
          %v4063 = vunpack.c.h.b16 %v4027
          %v4064 = vpack.c.b16 %v4040, %v4040
          %v4065 = vpack.c.b16 %v4041, %v4041
          %v4066 = vpack.c.b16 %v4042, %v4042
          %v4067 = vpack.c.b16 %v4043, %v4043
          %v4068 = vpack.c.b16 %v4044, %v4044
          %v4069 = vpack.c.b16 %v4045, %v4045
          %v4070 = vpack.c.b16 %v4046, %v4046
          %v4071 = vpack.c.b16 %v4047, %v4047
          %v4072 = vpack.c.b16 %v4048, %v4048
          %v4073 = vpack.c.b16 %v4049, %v4049
          %v4074 = vpack.c.b16 %v4050, %v4050
          %v4075 = vpack.c.b16 %v4051, %v4051
          %v4076 = vpack.c.b16 %v4052, %v4052
          %v4077 = vpack.c.b16 %v4053, %v4053
          %v4078 = vpack.c.b16 %v4054, %v4054
          %v4079 = vpack.c.b16 %v4055, %v4055
          %v4080 = vpack.c.b16 %v4056, %v4056
          %v4081 = vpack.c.b16 %v4057, %v4057
          %v4082 = vpack.c.b16 %v4058, %v4058
          %v4083 = vpack.c.b16 %v4059, %v4059
          %v4084 = vpack.c.b16 %v4060, %v4060
          %v4085 = vpack.c.b16 %v4061, %v4061
          %v4086 = vpack.c.b16 %v4062, %v4062
          %v4087 = vpack.c.b16 %v4063, %v4063
          %4088 = vrot.lane.b32.xlu0 %v4064, 10
          %v4089 = vpop.permute.xlu0 %4088
          %4090 = vrot.lane.b32.xlu0 %v4065, 10
          %v4091 = vpop.permute.xlu0 %4090
          %4092 = vrot.lane.b32.xlu0 %v4066, 10
          %v4093 = vpop.permute.xlu0 %4092
          %4094 = vrot.lane.b32.xlu0 %v4067, 10
          %v4095 = vpop.permute.xlu0 %4094
          %4096 = vrot.lane.b32.xlu0 %v4068, 10
          %v4097 = vpop.permute.xlu0 %4096
          %4098 = vrot.lane.b32.xlu0 %v4069, 10
          %v4099 = vpop.permute.xlu0 %4098
          %4100 = vrot.lane.b32.xlu0 %v4070, 10
          %v4101 = vpop.permute.xlu0 %4100
          %4102 = vrot.lane.b32.xlu0 %v4071, 10
          %v4103 = vpop.permute.xlu0 %4102
          %4104 = vrot.lane.b32.xlu0 %v4072, 10
          %v4105 = vpop.permute.xlu0 %4104
          %4106 = vrot.lane.b32.xlu0 %v4073, 10
          %v4107 = vpop.permute.xlu0 %4106
          %4108 = vrot.lane.b32.xlu0 %v4074, 10
          %v4109 = vpop.permute.xlu0 %4108
          %4110 = vrot.lane.b32.xlu0 %v4075, 10
          %v4111 = vpop.permute.xlu0 %4110
          %4112 = vrot.lane.b32.xlu0 %v4076, 10
          %v4113 = vpop.permute.xlu0 %4112
          %4114 = vrot.lane.b32.xlu0 %v4077, 10
          %v4115 = vpop.permute.xlu0 %4114
          %4116 = vrot.lane.b32.xlu0 %v4078, 10
          %v4117 = vpop.permute.xlu0 %4116
          %4118 = vrot.lane.b32.xlu0 %v4079, 10
          %v4119 = vpop.permute.xlu0 %4118
          %4120 = vrot.lane.b32.xlu0 %v4080, 10
          %v4121 = vpop.permute.xlu0 %4120
          %4122 = vrot.lane.b32.xlu0 %v4081, 10
          %v4123 = vpop.permute.xlu0 %4122
          %4124 = vrot.lane.b32.xlu0 %v4082, 10
          %v4125 = vpop.permute.xlu0 %4124
          %4126 = vrot.lane.b32.xlu0 %v4083, 10
          %v4127 = vpop.permute.xlu0 %4126
          %4128 = vrot.lane.b32.xlu0 %v4084, 10
          %v4129 = vpop.permute.xlu0 %4128
          %4130 = vrot.lane.b32.xlu0 %v4085, 10
          %v4131 = vpop.permute.xlu0 %4130
          %4132 = vrot.lane.b32.xlu0 %v4086, 10
          %v4133 = vpop.permute.xlu0 %4132
          %4134 = vrot.lane.b32.xlu0 %v4087, 10
          %v4135 = vpop.permute.xlu0 %4134
          %vm4160 = vcmask 158800
          %4161 = vst.msk [vmem:[#allocation4] sm:$0xf] %vm4160, %v4089
          %4162 = vst.msk [vmem:[#allocation4 + $0x8] sm:$0xf] %vm4160, %v4091
          %4163 = vst.msk [vmem:[#allocation4 + $0x10] sm:$0xf] %vm4160, %v4093
          %4164 = vst.msk [vmem:[#allocation4 + $0x18] sm:$0xf] %vm4160, %v4095
          %4165 = vst.msk [vmem:[#allocation4 + $0x20] sm:$0xf] %vm4160, %v4097
          %4166 = vst.msk [vmem:[#allocation4 + $0x28] sm:$0xf] %vm4160, %v4099
          %4167 = vst.msk [vmem:[#allocation4 + $0x30] sm:$0xf] %vm4160, %v4101
          %4168 = vst.msk [vmem:[#allocation4 + $0x38] sm:$0xf] %vm4160, %v4103
          %4169 = vst.msk [vmem:[#allocation4 + $0x40] sm:$0xf] %vm4160, %v4105
          %4170 = vst.msk [vmem:[#allocation4 + $0x48] sm:$0xf] %vm4160, %v4107
          %4171 = vst.msk [vmem:[#allocation4 + $0x50] sm:$0xf] %vm4160, %v4109
          %4172 = vst.msk [vmem:[#allocation4 + $0x58] sm:$0xf] %vm4160, %v4111
          %4173 = vst.msk [vmem:[#allocation4 + $0x60] sm:$0xf] %vm4160, %v4113
          %4174 = vst.msk [vmem:[#allocation4 + $0x68] sm:$0xf] %vm4160, %v4115
          %4175 = vst.msk [vmem:[#allocation4 + $0x70] sm:$0xf] %vm4160, %v4117
          %4176 = vst.msk [vmem:[#allocation4 + $0x78] sm:$0xf] %vm4160, %v4119
          %4177 = vst.msk [vmem:[#allocation4 + $0x80] sm:$0xf] %vm4160, %v4121
          %4178 = vst.msk [vmem:[#allocation4 + $0x88] sm:$0xf] %vm4160, %v4123
          %4179 = vst.msk [vmem:[#allocation4 + $0x90] sm:$0xf] %vm4160, %v4125
          %4180 = vst.msk [vmem:[#allocation4 + $0x98] sm:$0xf] %vm4160, %v4127
          %4181 = vst.msk [vmem:[#allocation4 + $0xa0] sm:$0xf] %vm4160, %v4129
          %4182 = vst.msk [vmem:[#allocation4 + $0xa8] sm:$0xf] %vm4160, %v4131
          %4183 = vst.msk [vmem:[#allocation4 + $0xb0] sm:$0xf] %vm4160, %v4133
          %vm4184 = vcmask 156752
          %4185 = vst.msk [vmem:[#allocation4 + $0xb8] sm:$0x3] %vm4184, %v4135
          %v4186 = vld [vmem:[#allocation3 + $0x2] sm:$0xff]
          %v4187 = vld [vmem:[#allocation3 + $0xa] sm:$0xff]
          %v4188 = vld [vmem:[#allocation3 + $0x12] sm:$0xff]
          %v4189 = vld [vmem:[#allocation3 + $0x1a] sm:$0xff]
          %v4190 = vld [vmem:[#allocation3 + $0x22] sm:$0xff]
          %v4191 = vld [vmem:[#allocation3 + $0x2a] sm:$0xff]
          %v4192 = vld [vmem:[#allocation3 + $0x32] sm:$0xff]
          %v4193 = vld [vmem:[#allocation3 + $0x3a] sm:$0xff]
          %v4194 = vld [vmem:[#allocation3 + $0x42] sm:$0xff]
          %v4195 = vld [vmem:[#allocation3 + $0x4a] sm:$0xff]
          %v4196 = vld [vmem:[#allocation3 + $0x52] sm:$0xff]
          %v4197 = vld [vmem:[#allocation3 + $0x5a] sm:$0xff]
          %v4198 = vld [vmem:[#allocation3 + $0x62] sm:$0xff]
          %v4199 = vld [vmem:[#allocation3 + $0x6a] sm:$0xff]
          %v4200 = vld [vmem:[#allocation3 + $0x72] sm:$0xff]
          %v4201 = vld [vmem:[#allocation3 + $0x7a] sm:$0xff]
          %v4202 = vld [vmem:[#allocation3 + $0x82] sm:$0xff]
          %v4203 = vld [vmem:[#allocation3 + $0x8a] sm:$0xff]
          %v4204 = vld [vmem:[#allocation3 + $0x92] sm:$0xff]
          %v4205 = vld [vmem:[#allocation3 + $0x9a] sm:$0xff]
          %v4206 = vld [vmem:[#allocation3 + $0xa2] sm:$0xff]
          %v4207 = vld [vmem:[#allocation3 + $0xaa] sm:$0xff]
          %v4208 = vld [vmem:[#allocation3 + $0xb2] sm:$0xff]
          %v4209 = vld [vmem:[#allocation3 + $0xba] sm:$0xf]
          %v4210 = vpack.c.bf16 %v4187, %v4186
          %v4211 = vpack.c.bf16 %v4189, %v4188
          %v4212 = vpack.c.bf16 %v4191, %v4190
          %v4213 = vpack.c.bf16 %v4193, %v4192
          %v4214 = vpack.c.bf16 %v4195, %v4194
          %v4215 = vpack.c.bf16 %v4197, %v4196
          %v4216 = vpack.c.bf16 %v4199, %v4198
          %v4217 = vpack.c.bf16 %v4201, %v4200
          %v4218 = vpack.c.bf16 %v4203, %v4202
          %v4219 = vpack.c.bf16 %v4205, %v4204
          %v4220 = vpack.c.bf16 %v4207, %v4206
          %v4221 = vpack.c.bf16 %v4209, %v4208
          %v4234 = vunpack.c.l.b16 %v4210
          %v4235 = vunpack.c.h.b16 %v4210
          %v4236 = vunpack.c.l.b16 %v4211
          %v4237 = vunpack.c.h.b16 %v4211
          %v4238 = vunpack.c.l.b16 %v4212
          %v4239 = vunpack.c.h.b16 %v4212
          %v4240 = vunpack.c.l.b16 %v4213
          %v4241 = vunpack.c.h.b16 %v4213
          %v4242 = vunpack.c.l.b16 %v4214
          %v4243 = vunpack.c.h.b16 %v4214
          %v4244 = vunpack.c.l.b16 %v4215
          %v4245 = vunpack.c.h.b16 %v4215
          %v4246 = vunpack.c.l.b16 %v4216
          %v4247 = vunpack.c.h.b16 %v4216
          %v4248 = vunpack.c.l.b16 %v4217
          %v4249 = vunpack.c.h.b16 %v4217
          %v4250 = vunpack.c.l.b16 %v4218
          %v4251 = vunpack.c.h.b16 %v4218
          %v4252 = vunpack.c.l.b16 %v4219
          %v4253 = vunpack.c.h.b16 %v4219
          %v4254 = vunpack.c.l.b16 %v4220
          %v4255 = vunpack.c.h.b16 %v4220
          %v4256 = vunpack.c.l.b16 %v4221
          %v4257 = vunpack.c.h.b16 %v4221
          %v4258 = vpack.c.b16 %v4234, %v4234
          %v4259 = vpack.c.b16 %v4235, %v4235
          %v4260 = vpack.c.b16 %v4236, %v4236
          %v4261 = vpack.c.b16 %v4237, %v4237
          %v4262 = vpack.c.b16 %v4238, %v4238
          %v4263 = vpack.c.b16 %v4239, %v4239
          %v4264 = vpack.c.b16 %v4240, %v4240
          %v4265 = vpack.c.b16 %v4241, %v4241
          %v4266 = vpack.c.b16 %v4242, %v4242
          %v4267 = vpack.c.b16 %v4243, %v4243
          %v4268 = vpack.c.b16 %v4244, %v4244
          %v4269 = vpack.c.b16 %v4245, %v4245
          %v4270 = vpack.c.b16 %v4246, %v4246
          %v4271 = vpack.c.b16 %v4247, %v4247
          %v4272 = vpack.c.b16 %v4248, %v4248
          %v4273 = vpack.c.b16 %v4249, %v4249
          %v4274 = vpack.c.b16 %v4250, %v4250
          %v4275 = vpack.c.b16 %v4251, %v4251
          %v4276 = vpack.c.b16 %v4252, %v4252
          %v4277 = vpack.c.b16 %v4253, %v4253
          %v4278 = vpack.c.b16 %v4254, %v4254
          %v4279 = vpack.c.b16 %v4255, %v4255
          %v4280 = vpack.c.b16 %v4256, %v4256
          %v4281 = vpack.c.b16 %v4257, %v4257
          %4282 = vrot.lane.b32.xlu0 %v4258, 20
          %v4283 = vpop.permute.xlu0 %4282
          %4284 = vrot.lane.b32.xlu0 %v4259, 20
          %v4285 = vpop.permute.xlu0 %4284
          %4286 = vrot.lane.b32.xlu0 %v4260, 20
          %v4287 = vpop.permute.xlu0 %4286
          %4288 = vrot.lane.b32.xlu0 %v4261, 20
          %v4289 = vpop.permute.xlu0 %4288
          %4290 = vrot.lane.b32.xlu0 %v4262, 20
          %v4291 = vpop.permute.xlu0 %4290
          %4292 = vrot.lane.b32.xlu0 %v4263, 20
          %v4293 = vpop.permute.xlu0 %4292
          %4294 = vrot.lane.b32.xlu0 %v4264, 20
          %v4295 = vpop.permute.xlu0 %4294
          %4296 = vrot.lane.b32.xlu0 %v4265, 20
          %v4297 = vpop.permute.xlu0 %4296
          %4298 = vrot.lane.b32.xlu0 %v4266, 20
          %v4299 = vpop.permute.xlu0 %4298
          %4300 = vrot.lane.b32.xlu0 %v4267, 20
          %v4301 = vpop.permute.xlu0 %4300
          %4302 = vrot.lane.b32.xlu0 %v4268, 20
          %v4303 = vpop.permute.xlu0 %4302
          %4304 = vrot.lane.b32.xlu0 %v4269, 20
          %v4305 = vpop.permute.xlu0 %4304
          %4306 = vrot.lane.b32.xlu0 %v4270, 20
          %v4307 = vpop.permute.xlu0 %4306
          %4308 = vrot.lane.b32.xlu0 %v4271, 20
          %v4309 = vpop.permute.xlu0 %4308
          %4310 = vrot.lane.b32.xlu0 %v4272, 20
          %v4311 = vpop.permute.xlu0 %4310
          %4312 = vrot.lane.b32.xlu0 %v4273, 20
          %v4313 = vpop.permute.xlu0 %4312
          %4314 = vrot.lane.b32.xlu0 %v4274, 20
          %v4315 = vpop.permute.xlu0 %4314
          %4316 = vrot.lane.b32.xlu0 %v4275, 20
          %v4317 = vpop.permute.xlu0 %4316
          %4318 = vrot.lane.b32.xlu0 %v4276, 20
          %v4319 = vpop.permute.xlu0 %4318
          %4320 = vrot.lane.b32.xlu0 %v4277, 20
          %v4321 = vpop.permute.xlu0 %4320
          %4322 = vrot.lane.b32.xlu0 %v4278, 20
          %v4323 = vpop.permute.xlu0 %4322
          %4324 = vrot.lane.b32.xlu0 %v4279, 20
          %v4325 = vpop.permute.xlu0 %4324
          %4326 = vrot.lane.b32.xlu0 %v4280, 20
          %v4327 = vpop.permute.xlu0 %4326
          %4328 = vrot.lane.b32.xlu0 %v4281, 20
          %v4329 = vpop.permute.xlu0 %4328
          %vm4354 = vcmask 240800
          %4355 = vst.msk [vmem:[#allocation4] sm:$0xf] %vm4354, %v4283
          %4356 = vst.msk [vmem:[#allocation4 + $0x8] sm:$0xf] %vm4354, %v4285
          %4357 = vst.msk [vmem:[#allocation4 + $0x10] sm:$0xf] %vm4354, %v4287
          %4358 = vst.msk [vmem:[#allocation4 + $0x18] sm:$0xf] %vm4354, %v4289
          %4359 = vst.msk [vmem:[#allocation4 + $0x20] sm:$0xf] %vm4354, %v4291
          %4360 = vst.msk [vmem:[#allocation4 + $0x28] sm:$0xf] %vm4354, %v4293
          %4361 = vst.msk [vmem:[#allocation4 + $0x30] sm:$0xf] %vm4354, %v4295
          %4362 = vst.msk [vmem:[#allocation4 + $0x38] sm:$0xf] %vm4354, %v4297
          %4363 = vst.msk [vmem:[#allocation4 + $0x40] sm:$0xf] %vm4354, %v4299
          %4364 = vst.msk [vmem:[#allocation4 + $0x48] sm:$0xf] %vm4354, %v4301
          %4365 = vst.msk [vmem:[#allocation4 + $0x50] sm:$0xf] %vm4354, %v4303
          %4366 = vst.msk [vmem:[#allocation4 + $0x58] sm:$0xf] %vm4354, %v4305
          %4367 = vst.msk [vmem:[#allocation4 + $0x60] sm:$0xf] %vm4354, %v4307
          %4368 = vst.msk [vmem:[#allocation4 + $0x68] sm:$0xf] %vm4354, %v4309
          %4369 = vst.msk [vmem:[#allocation4 + $0x70] sm:$0xf] %vm4354, %v4311
          %4370 = vst.msk [vmem:[#allocation4 + $0x78] sm:$0xf] %vm4354, %v4313
          %4371 = vst.msk [vmem:[#allocation4 + $0x80] sm:$0xf] %vm4354, %v4315
          %4372 = vst.msk [vmem:[#allocation4 + $0x88] sm:$0xf] %vm4354, %v4317
          %4373 = vst.msk [vmem:[#allocation4 + $0x90] sm:$0xf] %vm4354, %v4319
          %4374 = vst.msk [vmem:[#allocation4 + $0x98] sm:$0xf] %vm4354, %v4321
          %4375 = vst.msk [vmem:[#allocation4 + $0xa0] sm:$0xf] %vm4354, %v4323
          %4376 = vst.msk [vmem:[#allocation4 + $0xa8] sm:$0xf] %vm4354, %v4325
          %4377 = vst.msk [vmem:[#allocation4 + $0xb0] sm:$0xf] %vm4354, %v4327
          %vm4378 = vcmask 238752
          %4379 = vst.msk [vmem:[#allocation4 + $0xb8] sm:$0x3] %vm4378, %v4329
          %v4380 = vld [vmem:[#allocation3 + $0x3] sm:$0xff]
          %v4381 = vld [vmem:[#allocation3 + $0xb] sm:$0xff]
          %v4382 = vld [vmem:[#allocation3 + $0x13] sm:$0xff]
          %v4383 = vld [vmem:[#allocation3 + $0x1b] sm:$0xff]
          %v4384 = vld [vmem:[#allocation3 + $0x23] sm:$0xff]
          %v4385 = vld [vmem:[#allocation3 + $0x2b] sm:$0xff]
          %v4386 = vld [vmem:[#allocation3 + $0x33] sm:$0xff]
          %v4387 = vld [vmem:[#allocation3 + $0x3b] sm:$0xff]
          %v4388 = vld [vmem:[#allocation3 + $0x43] sm:$0xff]
          %v4389 = vld [vmem:[#allocation3 + $0x4b] sm:$0xff]
          %v4390 = vld [vmem:[#allocation3 + $0x53] sm:$0xff]
          %v4391 = vld [vmem:[#allocation3 + $0x5b] sm:$0xff]
          %v4392 = vld [vmem:[#allocation3 + $0x63] sm:$0xff]
          %v4393 = vld [vmem:[#allocation3 + $0x6b] sm:$0xff]
          %v4394 = vld [vmem:[#allocation3 + $0x73] sm:$0xff]
          %v4395 = vld [vmem:[#allocation3 + $0x7b] sm:$0xff]
          %v4396 = vld [vmem:[#allocation3 + $0x83] sm:$0xff]
          %v4397 = vld [vmem:[#allocation3 + $0x8b] sm:$0xff]
          %v4398 = vld [vmem:[#allocation3 + $0x93] sm:$0xff]
          %v4399 = vld [vmem:[#allocation3 + $0x9b] sm:$0xff]
          %v4400 = vld [vmem:[#allocation3 + $0xa3] sm:$0xff]
          %v4401 = vld [vmem:[#allocation3 + $0xab] sm:$0xff]
          %v4402 = vld [vmem:[#allocation3 + $0xb3] sm:$0xff]
          %v4403 = vld [vmem:[#allocation3 + $0xbb] sm:$0xf]
          %v4404 = vpack.c.bf16 %v4381, %v4380
          %v4405 = vpack.c.bf16 %v4383, %v4382
          %v4406 = vpack.c.bf16 %v4385, %v4384
          %v4407 = vpack.c.bf16 %v4387, %v4386
          %v4408 = vpack.c.bf16 %v4389, %v4388
          %v4409 = vpack.c.bf16 %v4391, %v4390
          %v4410 = vpack.c.bf16 %v4393, %v4392
          %v4411 = vpack.c.bf16 %v4395, %v4394
          %v4412 = vpack.c.bf16 %v4397, %v4396
          %v4413 = vpack.c.bf16 %v4399, %v4398
          %v4414 = vpack.c.bf16 %v4401, %v4400
          %v4415 = vpack.c.bf16 %v4403, %v4402
          %v4428 = vunpack.c.l.b16 %v4404
          %v4429 = vunpack.c.h.b16 %v4404
          %v4430 = vunpack.c.l.b16 %v4405
          %v4431 = vunpack.c.h.b16 %v4405
          %v4432 = vunpack.c.l.b16 %v4406
          %v4433 = vunpack.c.h.b16 %v4406
          %v4434 = vunpack.c.l.b16 %v4407
          %v4435 = vunpack.c.h.b16 %v4407
          %v4436 = vunpack.c.l.b16 %v4408
          %v4437 = vunpack.c.h.b16 %v4408
          %v4438 = vunpack.c.l.b16 %v4409
          %v4439 = vunpack.c.h.b16 %v4409
          %v4440 = vunpack.c.l.b16 %v4410
          %v4441 = vunpack.c.h.b16 %v4410
          %v4442 = vunpack.c.l.b16 %v4411
          %v4443 = vunpack.c.h.b16 %v4411
          %v4444 = vunpack.c.l.b16 %v4412
          %v4445 = vunpack.c.h.b16 %v4412
          %v4446 = vunpack.c.l.b16 %v4413
          %v4447 = vunpack.c.h.b16 %v4413
          %v4448 = vunpack.c.l.b16 %v4414
          %v4449 = vunpack.c.h.b16 %v4414
          %v4450 = vunpack.c.l.b16 %v4415
          %v4451 = vunpack.c.h.b16 %v4415
          %v4452 = vpack.c.b16 %v4428, %v4428
          %v4453 = vpack.c.b16 %v4429, %v4429
          %v4454 = vpack.c.b16 %v4430, %v4430
          %v4455 = vpack.c.b16 %v4431, %v4431
          %v4456 = vpack.c.b16 %v4432, %v4432
          %v4457 = vpack.c.b16 %v4433, %v4433
          %v4458 = vpack.c.b16 %v4434, %v4434
          %v4459 = vpack.c.b16 %v4435, %v4435
          %v4460 = vpack.c.b16 %v4436, %v4436
          %v4461 = vpack.c.b16 %v4437, %v4437
          %v4462 = vpack.c.b16 %v4438, %v4438
          %v4463 = vpack.c.b16 %v4439, %v4439
          %v4464 = vpack.c.b16 %v4440, %v4440
          %v4465 = vpack.c.b16 %v4441, %v4441
          %v4466 = vpack.c.b16 %v4442, %v4442
          %v4467 = vpack.c.b16 %v4443, %v4443
          %v4468 = vpack.c.b16 %v4444, %v4444
          %v4469 = vpack.c.b16 %v4445, %v4445
          %v4470 = vpack.c.b16 %v4446, %v4446
          %v4471 = vpack.c.b16 %v4447, %v4447
          %v4472 = vpack.c.b16 %v4448, %v4448
          %v4473 = vpack.c.b16 %v4449, %v4449
          %v4474 = vpack.c.b16 %v4450, %v4450
          %v4475 = vpack.c.b16 %v4451, %v4451
          %4476 = vrot.lane.b32.xlu0 %v4452, 30
          %v4477 = vpop.permute.xlu0 %4476
          %4478 = vrot.lane.b32.xlu0 %v4453, 30
          %v4479 = vpop.permute.xlu0 %4478
          %4480 = vrot.lane.b32.xlu0 %v4454, 30
          %v4481 = vpop.permute.xlu0 %4480
          %4482 = vrot.lane.b32.xlu0 %v4455, 30
          %v4483 = vpop.permute.xlu0 %4482
          %4484 = vrot.lane.b32.xlu0 %v4456, 30
          %v4485 = vpop.permute.xlu0 %4484
          %4486 = vrot.lane.b32.xlu0 %v4457, 30
          %v4487 = vpop.permute.xlu0 %4486
          %4488 = vrot.lane.b32.xlu0 %v4458, 30
          %v4489 = vpop.permute.xlu0 %4488
          %4490 = vrot.lane.b32.xlu0 %v4459, 30
          %v4491 = vpop.permute.xlu0 %4490
          %4492 = vrot.lane.b32.xlu0 %v4460, 30
          %v4493 = vpop.permute.xlu0 %4492
          %4494 = vrot.lane.b32.xlu0 %v4461, 30
          %v4495 = vpop.permute.xlu0 %4494
          %4496 = vrot.lane.b32.xlu0 %v4462, 30
          %v4497 = vpop.permute.xlu0 %4496
          %4498 = vrot.lane.b32.xlu0 %v4463, 30
          %v4499 = vpop.permute.xlu0 %4498
          %4500 = vrot.lane.b32.xlu0 %v4464, 30
          %v4501 = vpop.permute.xlu0 %4500
          %4502 = vrot.lane.b32.xlu0 %v4465, 30
          %v4503 = vpop.permute.xlu0 %4502
          %4504 = vrot.lane.b32.xlu0 %v4466, 30
          %v4505 = vpop.permute.xlu0 %4504
          %4506 = vrot.lane.b32.xlu0 %v4467, 30
          %v4507 = vpop.permute.xlu0 %4506
          %4508 = vrot.lane.b32.xlu0 %v4468, 30
          %v4509 = vpop.permute.xlu0 %4508
          %4510 = vrot.lane.b32.xlu0 %v4469, 30
          %v4511 = vpop.permute.xlu0 %4510
          %4512 = vrot.lane.b32.xlu0 %v4470, 30
          %v4513 = vpop.permute.xlu0 %4512
          %4514 = vrot.lane.b32.xlu0 %v4471, 30
          %v4515 = vpop.permute.xlu0 %4514
          %4516 = vrot.lane.b32.xlu0 %v4472, 30
          %v4517 = vpop.permute.xlu0 %4516
          %4518 = vrot.lane.b32.xlu0 %v4473, 30
          %v4519 = vpop.permute.xlu0 %4518
          %4520 = vrot.lane.b32.xlu0 %v4474, 30
          %v4521 = vpop.permute.xlu0 %4520
          %4522 = vrot.lane.b32.xlu0 %v4475, 30
          %v4523 = vpop.permute.xlu0 %4522
          %vm4548 = vcmask 322800
          %4549 = vst.msk [vmem:[#allocation4] sm:$0xf] %vm4548, %v4477
          %4550 = vst.msk [vmem:[#allocation4 + $0x8] sm:$0xf] %vm4548, %v4479
          %4551 = vst.msk [vmem:[#allocation4 + $0x10] sm:$0xf] %vm4548, %v4481
          %4552 = vst.msk [vmem:[#allocation4 + $0x18] sm:$0xf] %vm4548, %v4483
          %4553 = vst.msk [vmem:[#allocation4 + $0x20] sm:$0xf] %vm4548, %v4485
          %4554 = vst.msk [vmem:[#allocation4 + $0x28] sm:$0xf] %vm4548, %v4487
          %4555 = vst.msk [vmem:[#allocation4 + $0x30] sm:$0xf] %vm4548, %v4489
          %4556 = vst.msk [vmem:[#allocation4 + $0x38] sm:$0xf] %vm4548, %v4491
          %4557 = vst.msk [vmem:[#allocation4 + $0x40] sm:$0xf] %vm4548, %v4493
          %4558 = vst.msk [vmem:[#allocation4 + $0x48] sm:$0xf] %vm4548, %v4495
          %4559 = vst.msk [vmem:[#allocation4 + $0x50] sm:$0xf] %vm4548, %v4497
          %4560 = vst.msk [vmem:[#allocation4 + $0x58] sm:$0xf] %vm4548, %v4499
          %4561 = vst.msk [vmem:[#allocation4 + $0x60] sm:$0xf] %vm4548, %v4501
          %4562 = vst.msk [vmem:[#allocation4 + $0x68] sm:$0xf] %vm4548, %v4503
          %4563 = vst.msk [vmem:[#allocation4 + $0x70] sm:$0xf] %vm4548, %v4505
          %4564 = vst.msk [vmem:[#allocation4 + $0x78] sm:$0xf] %vm4548, %v4507
          %4565 = vst.msk [vmem:[#allocation4 + $0x80] sm:$0xf] %vm4548, %v4509
          %4566 = vst.msk [vmem:[#allocation4 + $0x88] sm:$0xf] %vm4548, %v4511
          %4567 = vst.msk [vmem:[#allocation4 + $0x90] sm:$0xf] %vm4548, %v4513
          %4568 = vst.msk [vmem:[#allocation4 + $0x98] sm:$0xf] %vm4548, %v4515
          %4569 = vst.msk [vmem:[#allocation4 + $0xa0] sm:$0xf] %vm4548, %v4517
          %4570 = vst.msk [vmem:[#allocation4 + $0xa8] sm:$0xf] %vm4548, %v4519
          %4571 = vst.msk [vmem:[#allocation4 + $0xb0] sm:$0xf] %vm4548, %v4521
          %vm4572 = vcmask 320752
          %4573 = vst.msk [vmem:[#allocation4 + $0xb8] sm:$0x3] %vm4572, %v4523
          %v4574 = vld [vmem:[#allocation3 + $0x10] sm:$0xff]
          %v4575 = vld [vmem:[#allocation3 + $0x18] sm:$0xff]
          %v4576 = vld [vmem:[#allocation3 + $0x20] sm:$0xff]
          %v4577 = vld [vmem:[#allocation3 + $0x28] sm:$0xff]
          %v4578 = vld [vmem:[#allocation3 + $0x30] sm:$0xff]
          %v4579 = vld [vmem:[#allocation3 + $0x38] sm:$0xff]
          %v4580 = vld [vmem:[#allocation3 + $0x40] sm:$0xff]
          %v4581 = vld [vmem:[#allocation3 + $0x48] sm:$0xff]
          %v4582 = vld [vmem:[#allocation3 + $0x50] sm:$0xff]
          %v4583 = vld [vmem:[#allocation3 + $0x58] sm:$0xff]
          %v4584 = vld [vmem:[#allocation3 + $0x60] sm:$0xff]
          %v4585 = vld [vmem:[#allocation3 + $0x68] sm:$0xff]
          %v4586 = vld [vmem:[#allocation3 + $0x70] sm:$0xff]
          %v4587 = vld [vmem:[#allocation3 + $0x78] sm:$0xff]
          %v4588 = vld [vmem:[#allocation3 + $0x80] sm:$0xff]
          %v4589 = vld [vmem:[#allocation3 + $0x88] sm:$0xff]
          %v4590 = vld [vmem:[#allocation3 + $0x90] sm:$0xff]
          %v4591 = vld [vmem:[#allocation3 + $0x98] sm:$0xff]
          %v4592 = vld [vmem:[#allocation3 + $0xa0] sm:$0xff]
          %v4593 = vld [vmem:[#allocation3 + $0xa8] sm:$0xff]
          %v4594 = vld [vmem:[#allocation3 + $0xb0] sm:$0xff]
          %v4595 = vld [vmem:[#allocation3 + $0xb8] sm:$0xff]
          %v4596 = vld [vmem:[#allocation3 + $0xc0] sm:$0xff]
          %v4597 = vld [vmem:[#allocation3 + $0xc8] sm:$0xf]
          %v4598 = vpack.c.bf16 %v4575, %v4574
          %v4599 = vpack.c.bf16 %v4577, %v4576
          %v4600 = vpack.c.bf16 %v4579, %v4578
          %v4601 = vpack.c.bf16 %v4581, %v4580
          %v4602 = vpack.c.bf16 %v4583, %v4582
          %v4603 = vpack.c.bf16 %v4585, %v4584
          %v4604 = vpack.c.bf16 %v4587, %v4586
          %v4605 = vpack.c.bf16 %v4589, %v4588
          %v4606 = vpack.c.bf16 %v4591, %v4590
          %v4607 = vpack.c.bf16 %v4593, %v4592
          %v4608 = vpack.c.bf16 %v4595, %v4594
          %v4609 = vpack.c.bf16 %v4597, %v4596
          %v4622 = vunpack.c.l.b16 %v4598
          %v4623 = vunpack.c.h.b16 %v4598
          %v4624 = vunpack.c.l.b16 %v4599
          %v4625 = vunpack.c.h.b16 %v4599
          %v4626 = vunpack.c.l.b16 %v4600
          %v4627 = vunpack.c.h.b16 %v4600
          %v4628 = vunpack.c.l.b16 %v4601
          %v4629 = vunpack.c.h.b16 %v4601
          %v4630 = vunpack.c.l.b16 %v4602
          %v4631 = vunpack.c.h.b16 %v4602
          %v4632 = vunpack.c.l.b16 %v4603
          %v4633 = vunpack.c.h.b16 %v4603
          %v4634 = vunpack.c.l.b16 %v4604
          %v4635 = vunpack.c.h.b16 %v4604
          %v4636 = vunpack.c.l.b16 %v4605
          %v4637 = vunpack.c.h.b16 %v4605
          %v4638 = vunpack.c.l.b16 %v4606
          %v4639 = vunpack.c.h.b16 %v4606
          %v4640 = vunpack.c.l.b16 %v4607
          %v4641 = vunpack.c.h.b16 %v4607
          %v4642 = vunpack.c.l.b16 %v4608
          %v4643 = vunpack.c.h.b16 %v4608
          %v4644 = vunpack.c.l.b16 %v4609
          %v4645 = vunpack.c.h.b16 %v4609
          %v4646 = vpack.c.b16 %v4622, %v4622
          %v4647 = vpack.c.b16 %v4623, %v4623
          %v4648 = vpack.c.b16 %v4624, %v4624
          %v4649 = vpack.c.b16 %v4625, %v4625
          %v4650 = vpack.c.b16 %v4626, %v4626
          %v4651 = vpack.c.b16 %v4627, %v4627
          %v4652 = vpack.c.b16 %v4628, %v4628
          %v4653 = vpack.c.b16 %v4629, %v4629
          %v4654 = vpack.c.b16 %v4630, %v4630
          %v4655 = vpack.c.b16 %v4631, %v4631
          %v4656 = vpack.c.b16 %v4632, %v4632
          %v4657 = vpack.c.b16 %v4633, %v4633
          %v4658 = vpack.c.b16 %v4634, %v4634
          %v4659 = vpack.c.b16 %v4635, %v4635
          %v4660 = vpack.c.b16 %v4636, %v4636
          %v4661 = vpack.c.b16 %v4637, %v4637
          %v4662 = vpack.c.b16 %v4638, %v4638
          %v4663 = vpack.c.b16 %v4639, %v4639
          %v4664 = vpack.c.b16 %v4640, %v4640
          %v4665 = vpack.c.b16 %v4641, %v4641
          %v4666 = vpack.c.b16 %v4642, %v4642
          %v4667 = vpack.c.b16 %v4643, %v4643
          %v4668 = vpack.c.b16 %v4644, %v4644
          %v4669 = vpack.c.b16 %v4645, %v4645
          %4670 = vrot.lane.b32.xlu0 %v4646, 40
          %v4671 = vpop.permute.xlu0 %4670
          %4672 = vrot.lane.b32.xlu0 %v4647, 40
          %v4673 = vpop.permute.xlu0 %4672
          %4674 = vrot.lane.b32.xlu0 %v4648, 40
          %v4675 = vpop.permute.xlu0 %4674
          %4676 = vrot.lane.b32.xlu0 %v4649, 40
          %v4677 = vpop.permute.xlu0 %4676
          %4678 = vrot.lane.b32.xlu0 %v4650, 40
          %v4679 = vpop.permute.xlu0 %4678
          %4680 = vrot.lane.b32.xlu0 %v4651, 40
          %v4681 = vpop.permute.xlu0 %4680
          %4682 = vrot.lane.b32.xlu0 %v4652, 40
          %v4683 = vpop.permute.xlu0 %4682
          %4684 = vrot.lane.b32.xlu0 %v4653, 40
          %v4685 = vpop.permute.xlu0 %4684
          %4686 = vrot.lane.b32.xlu0 %v4654, 40
          %v4687 = vpop.permute.xlu0 %4686
          %4688 = vrot.lane.b32.xlu0 %v4655, 40
          %v4689 = vpop.permute.xlu0 %4688
          %4690 = vrot.lane.b32.xlu0 %v4656, 40
          %v4691 = vpop.permute.xlu0 %4690
          %4692 = vrot.lane.b32.xlu0 %v4657, 40
          %v4693 = vpop.permute.xlu0 %4692
          %4694 = vrot.lane.b32.xlu0 %v4658, 40
          %v4695 = vpop.permute.xlu0 %4694
          %4696 = vrot.lane.b32.xlu0 %v4659, 40
          %v4697 = vpop.permute.xlu0 %4696
          %4698 = vrot.lane.b32.xlu0 %v4660, 40
          %v4699 = vpop.permute.xlu0 %4698
          %4700 = vrot.lane.b32.xlu0 %v4661, 40
          %v4701 = vpop.permute.xlu0 %4700
          %4702 = vrot.lane.b32.xlu0 %v4662, 40
          %v4703 = vpop.permute.xlu0 %4702
          %4704 = vrot.lane.b32.xlu0 %v4663, 40
          %v4705 = vpop.permute.xlu0 %4704
          %4706 = vrot.lane.b32.xlu0 %v4664, 40
          %v4707 = vpop.permute.xlu0 %4706
          %4708 = vrot.lane.b32.xlu0 %v4665, 40
          %v4709 = vpop.permute.xlu0 %4708
          %4710 = vrot.lane.b32.xlu0 %v4666, 40
          %v4711 = vpop.permute.xlu0 %4710
          %4712 = vrot.lane.b32.xlu0 %v4667, 40
          %v4713 = vpop.permute.xlu0 %4712
          %4714 = vrot.lane.b32.xlu0 %v4668, 40
          %v4715 = vpop.permute.xlu0 %4714
          %4716 = vrot.lane.b32.xlu0 %v4669, 40
          %v4717 = vpop.permute.xlu0 %4716
          %vm4742 = vcmask 404800
          %4743 = vst.msk [vmem:[#allocation4] sm:$0xf] %vm4742, %v4671
          %4744 = vst.msk [vmem:[#allocation4 + $0x8] sm:$0xf] %vm4742, %v4673
          %4745 = vst.msk [vmem:[#allocation4 + $0x10] sm:$0xf] %vm4742, %v4675
          %4746 = vst.msk [vmem:[#allocation4 + $0x18] sm:$0xf] %vm4742, %v4677
          %4747 = vst.msk [vmem:[#allocation4 + $0x20] sm:$0xf] %vm4742, %v4679
          %4748 = vst.msk [vmem:[#allocation4 + $0x28] sm:$0xf] %vm4742, %v4681
          %4749 = vst.msk [vmem:[#allocation4 + $0x30] sm:$0xf] %vm4742, %v4683
          %4750 = vst.msk [vmem:[#allocation4 + $0x38] sm:$0xf] %vm4742, %v4685
          %4751 = vst.msk [vmem:[#allocation4 + $0x40] sm:$0xf] %vm4742, %v4687
          %4752 = vst.msk [vmem:[#allocation4 + $0x48] sm:$0xf] %vm4742, %v4689
          %4753 = vst.msk [vmem:[#allocation4 + $0x50] sm:$0xf] %vm4742, %v4691
          %4754 = vst.msk [vmem:[#allocation4 + $0x58] sm:$0xf] %vm4742, %v4693
          %4755 = vst.msk [vmem:[#allocation4 + $0x60] sm:$0xf] %vm4742, %v4695
          %4756 = vst.msk [vmem:[#allocation4 + $0x68] sm:$0xf] %vm4742, %v4697
          %4757 = vst.msk [vmem:[#allocation4 + $0x70] sm:$0xf] %vm4742, %v4699
          %4758 = vst.msk [vmem:[#allocation4 + $0x78] sm:$0xf] %vm4742, %v4701
          %4759 = vst.msk [vmem:[#allocation4 + $0x80] sm:$0xf] %vm4742, %v4703
          %4760 = vst.msk [vmem:[#allocation4 + $0x88] sm:$0xf] %vm4742, %v4705
          %4761 = vst.msk [vmem:[#allocation4 + $0x90] sm:$0xf] %vm4742, %v4707
          %4762 = vst.msk [vmem:[#allocation4 + $0x98] sm:$0xf] %vm4742, %v4709
          %4763 = vst.msk [vmem:[#allocation4 + $0xa0] sm:$0xf] %vm4742, %v4711
          %4764 = vst.msk [vmem:[#allocation4 + $0xa8] sm:$0xf] %vm4742, %v4713
          %4765 = vst.msk [vmem:[#allocation4 + $0xb0] sm:$0xf] %vm4742, %v4715
          %vm4766 = vcmask 402752
          %4767 = vst.msk [vmem:[#allocation4 + $0xb8] sm:$0x3] %vm4766, %v4717
          %v4768 = vld [vmem:[#allocation3 + $0x11] sm:$0xff]
          %v4769 = vld [vmem:[#allocation3 + $0x19] sm:$0xff]
          %v4770 = vld [vmem:[#allocation3 + $0x21] sm:$0xff]
          %v4771 = vld [vmem:[#allocation3 + $0x29] sm:$0xff]
          %v4772 = vld [vmem:[#allocation3 + $0x31] sm:$0xff]
          %v4773 = vld [vmem:[#allocation3 + $0x39] sm:$0xff]
          %v4774 = vld [vmem:[#allocation3 + $0x41] sm:$0xff]
          %v4775 = vld [vmem:[#allocation3 + $0x49] sm:$0xff]
          %v4776 = vld [vmem:[#allocation3 + $0x51] sm:$0xff]
          %v4777 = vld [vmem:[#allocation3 + $0x59] sm:$0xff]
          %v4778 = vld [vmem:[#allocation3 + $0x61] sm:$0xff]
          %v4779 = vld [vmem:[#allocation3 + $0x69] sm:$0xff]
          %v4780 = vld [vmem:[#allocation3 + $0x71] sm:$0xff]
          %v4781 = vld [vmem:[#allocation3 + $0x79] sm:$0xff]
          %v4782 = vld [vmem:[#allocation3 + $0x81] sm:$0xff]
          %v4783 = vld [vmem:[#allocation3 + $0x89] sm:$0xff]
          %v4784 = vld [vmem:[#allocation3 + $0x91] sm:$0xff]
          %v4785 = vld [vmem:[#allocation3 + $0x99] sm:$0xff]
          %v4786 = vld [vmem:[#allocation3 + $0xa1] sm:$0xff]
          %v4787 = vld [vmem:[#allocation3 + $0xa9] sm:$0xff]
          %v4788 = vld [vmem:[#allocation3 + $0xb1] sm:$0xff]
          %v4789 = vld [vmem:[#allocation3 + $0xb9] sm:$0xff]
          %v4790 = vld [vmem:[#allocation3 + $0xc1] sm:$0xff]
          %v4791 = vld [vmem:[#allocation3 + $0xc9] sm:$0xf]
          %v4792 = vpack.c.bf16 %v4769, %v4768
          %v4793 = vpack.c.bf16 %v4771, %v4770
          %v4794 = vpack.c.bf16 %v4773, %v4772
          %v4795 = vpack.c.bf16 %v4775, %v4774
          %v4796 = vpack.c.bf16 %v4777, %v4776
          %v4797 = vpack.c.bf16 %v4779, %v4778
          %v4798 = vpack.c.bf16 %v4781, %v4780
          %v4799 = vpack.c.bf16 %v4783, %v4782
          %v4800 = vpack.c.bf16 %v4785, %v4784
          %v4801 = vpack.c.bf16 %v4787, %v4786
          %v4802 = vpack.c.bf16 %v4789, %v4788
          %v4803 = vpack.c.bf16 %v4791, %v4790
          %v4816 = vunpack.c.l.b16 %v4792
          %v4817 = vunpack.c.h.b16 %v4792
          %v4818 = vunpack.c.l.b16 %v4793
          %v4819 = vunpack.c.h.b16 %v4793
          %v4820 = vunpack.c.l.b16 %v4794
          %v4821 = vunpack.c.h.b16 %v4794
          %v4822 = vunpack.c.l.b16 %v4795
          %v4823 = vunpack.c.h.b16 %v4795
          %v4824 = vunpack.c.l.b16 %v4796
          %v4825 = vunpack.c.h.b16 %v4796
          %v4826 = vunpack.c.l.b16 %v4797
          %v4827 = vunpack.c.h.b16 %v4797
          %v4828 = vunpack.c.l.b16 %v4798
          %v4829 = vunpack.c.h.b16 %v4798
          %v4830 = vunpack.c.l.b16 %v4799
          %v4831 = vunpack.c.h.b16 %v4799
          %v4832 = vunpack.c.l.b16 %v4800
          %v4833 = vunpack.c.h.b16 %v4800
          %v4834 = vunpack.c.l.b16 %v4801
          %v4835 = vunpack.c.h.b16 %v4801
          %v4836 = vunpack.c.l.b16 %v4802
          %v4837 = vunpack.c.h.b16 %v4802
          %v4838 = vunpack.c.l.b16 %v4803
          %v4839 = vunpack.c.h.b16 %v4803
          %v4840 = vpack.c.b16 %v4816, %v4816
          %v4841 = vpack.c.b16 %v4817, %v4817
          %v4842 = vpack.c.b16 %v4818, %v4818
          %v4843 = vpack.c.b16 %v4819, %v4819
          %v4844 = vpack.c.b16 %v4820, %v4820
          %v4845 = vpack.c.b16 %v4821, %v4821
          %v4846 = vpack.c.b16 %v4822, %v4822
          %v4847 = vpack.c.b16 %v4823, %v4823
          %v4848 = vpack.c.b16 %v4824, %v4824
          %v4849 = vpack.c.b16 %v4825, %v4825
          %v4850 = vpack.c.b16 %v4826, %v4826
          %v4851 = vpack.c.b16 %v4827, %v4827
          %v4852 = vpack.c.b16 %v4828, %v4828
          %v4853 = vpack.c.b16 %v4829, %v4829
          %v4854 = vpack.c.b16 %v4830, %v4830
          %v4855 = vpack.c.b16 %v4831, %v4831
          %v4856 = vpack.c.b16 %v4832, %v4832
          %v4857 = vpack.c.b16 %v4833, %v4833
          %v4858 = vpack.c.b16 %v4834, %v4834
          %v4859 = vpack.c.b16 %v4835, %v4835
          %v4860 = vpack.c.b16 %v4836, %v4836
          %v4861 = vpack.c.b16 %v4837, %v4837
          %v4862 = vpack.c.b16 %v4838, %v4838
          %v4863 = vpack.c.b16 %v4839, %v4839
          %4864 = vrot.lane.b32.xlu0 %v4840, 50
          %v4865 = vpop.permute.xlu0 %4864
          %4866 = vrot.lane.b32.xlu0 %v4841, 50
          %v4867 = vpop.permute.xlu0 %4866
          %4868 = vrot.lane.b32.xlu0 %v4842, 50
          %v4869 = vpop.permute.xlu0 %4868
          %4870 = vrot.lane.b32.xlu0 %v4843, 50
          %v4871 = vpop.permute.xlu0 %4870
          %4872 = vrot.lane.b32.xlu0 %v4844, 50
          %v4873 = vpop.permute.xlu0 %4872
          %4874 = vrot.lane.b32.xlu0 %v4845, 50
          %v4875 = vpop.permute.xlu0 %4874
          %4876 = vrot.lane.b32.xlu0 %v4846, 50
          %v4877 = vpop.permute.xlu0 %4876
          %4878 = vrot.lane.b32.xlu0 %v4847, 50
          %v4879 = vpop.permute.xlu0 %4878
          %4880 = vrot.lane.b32.xlu0 %v4848, 50
          %v4881 = vpop.permute.xlu0 %4880
          %4882 = vrot.lane.b32.xlu0 %v4849, 50
          %v4883 = vpop.permute.xlu0 %4882
          %4884 = vrot.lane.b32.xlu0 %v4850, 50
          %v4885 = vpop.permute.xlu0 %4884
          %4886 = vrot.lane.b32.xlu0 %v4851, 50
          %v4887 = vpop.permute.xlu0 %4886
          %4888 = vrot.lane.b32.xlu0 %v4852, 50
          %v4889 = vpop.permute.xlu0 %4888
          %4890 = vrot.lane.b32.xlu0 %v4853, 50
          %v4891 = vpop.permute.xlu0 %4890
          %4892 = vrot.lane.b32.xlu0 %v4854, 50
          %v4893 = vpop.permute.xlu0 %4892
          %4894 = vrot.lane.b32.xlu0 %v4855, 50
          %v4895 = vpop.permute.xlu0 %4894
          %4896 = vrot.lane.b32.xlu0 %v4856, 50
          %v4897 = vpop.permute.xlu0 %4896
          %4898 = vrot.lane.b32.xlu0 %v4857, 50
          %v4899 = vpop.permute.xlu0 %4898
          %4900 = vrot.lane.b32.xlu0 %v4858, 50
          %v4901 = vpop.permute.xlu0 %4900
          %4902 = vrot.lane.b32.xlu0 %v4859, 50
          %v4903 = vpop.permute.xlu0 %4902
          %4904 = vrot.lane.b32.xlu0 %v4860, 50
          %v4905 = vpop.permute.xlu0 %4904
          %4906 = vrot.lane.b32.xlu0 %v4861, 50
          %v4907 = vpop.permute.xlu0 %4906
          %4908 = vrot.lane.b32.xlu0 %v4862, 50
          %v4909 = vpop.permute.xlu0 %4908
          %4910 = vrot.lane.b32.xlu0 %v4863, 50
          %v4911 = vpop.permute.xlu0 %4910
          %vm4936 = vcmask 486800
          %4937 = vst.msk [vmem:[#allocation4] sm:$0xf] %vm4936, %v4865
          %4938 = vst.msk [vmem:[#allocation4 + $0x8] sm:$0xf] %vm4936, %v4867
          %4939 = vst.msk [vmem:[#allocation4 + $0x10] sm:$0xf] %vm4936, %v4869
          %4940 = vst.msk [vmem:[#allocation4 + $0x18] sm:$0xf] %vm4936, %v4871
          %4941 = vst.msk [vmem:[#allocation4 + $0x20] sm:$0xf] %vm4936, %v4873
          %4942 = vst.msk [vmem:[#allocation4 + $0x28] sm:$0xf] %vm4936, %v4875
          %4943 = vst.msk [vmem:[#allocation4 + $0x30] sm:$0xf] %vm4936, %v4877
          %4944 = vst.msk [vmem:[#allocation4 + $0x38] sm:$0xf] %vm4936, %v4879
          %4945 = vst.msk [vmem:[#allocation4 + $0x40] sm:$0xf] %vm4936, %v4881
          %4946 = vst.msk [vmem:[#allocation4 + $0x48] sm:$0xf] %vm4936, %v4883
          %4947 = vst.msk [vmem:[#allocation4 + $0x50] sm:$0xf] %vm4936, %v4885
          %4948 = vst.msk [vmem:[#allocation4 + $0x58] sm:$0xf] %vm4936, %v4887
          %4949 = vst.msk [vmem:[#allocation4 + $0x60] sm:$0xf] %vm4936, %v4889
          %4950 = vst.msk [vmem:[#allocation4 + $0x68] sm:$0xf] %vm4936, %v4891
          %4951 = vst.msk [vmem:[#allocation4 + $0x70] sm:$0xf] %vm4936, %v4893
          %4952 = vst.msk [vmem:[#allocation4 + $0x78] sm:$0xf] %vm4936, %v4895
          %4953 = vst.msk [vmem:[#allocation4 + $0x80] sm:$0xf] %vm4936, %v4897
          %4954 = vst.msk [vmem:[#allocation4 + $0x88] sm:$0xf] %vm4936, %v4899
          %4955 = vst.msk [vmem:[#allocation4 + $0x90] sm:$0xf] %vm4936, %v4901
          %4956 = vst.msk [vmem:[#allocation4 + $0x98] sm:$0xf] %vm4936, %v4903
          %4957 = vst.msk [vmem:[#allocation4 + $0xa0] sm:$0xf] %vm4936, %v4905
          %4958 = vst.msk [vmem:[#allocation4 + $0xa8] sm:$0xf] %vm4936, %v4907
          %4959 = vst.msk [vmem:[#allocation4 + $0xb0] sm:$0xf] %vm4936, %v4909
          %vm4960 = vcmask 484752
          %4961 = vst.msk [vmem:[#allocation4 + $0xb8] sm:$0x3] %vm4960, %v4911
          %v4962 = vld [vmem:[#allocation3 + $0x12] sm:$0xff]
          %v4963 = vld [vmem:[#allocation3 + $0x1a] sm:$0xff]
          %v4964 = vld [vmem:[#allocation3 + $0x22] sm:$0xff]
          %v4965 = vld [vmem:[#allocation3 + $0x2a] sm:$0xff]
          %v4966 = vld [vmem:[#allocation3 + $0x32] sm:$0xff]
          %v4967 = vld [vmem:[#allocation3 + $0x3a] sm:$0xff]
          %v4968 = vld [vmem:[#allocation3 + $0x42] sm:$0xff]
          %v4969 = vld [vmem:[#allocation3 + $0x4a] sm:$0xff]
          %v4970 = vld [vmem:[#allocation3 + $0x52] sm:$0xff]
          %v4971 = vld [vmem:[#allocation3 + $0x5a] sm:$0xff]
          %v4972 = vld [vmem:[#allocation3 + $0x62] sm:$0xff]
          %v4973 = vld [vmem:[#allocation3 + $0x6a] sm:$0xff]
          %v4974 = vld [vmem:[#allocation3 + $0x72] sm:$0xff]
          %v4975 = vld [vmem:[#allocation3 + $0x7a] sm:$0xff]
          %v4976 = vld [vmem:[#allocation3 + $0x82] sm:$0xff]
          %v4977 = vld [vmem:[#allocation3 + $0x8a] sm:$0xff]
          %v4978 = vld [vmem:[#allocation3 + $0x92] sm:$0xff]
          %v4979 = vld [vmem:[#allocation3 + $0x9a] sm:$0xff]
          %v4980 = vld [vmem:[#allocation3 + $0xa2] sm:$0xff]
          %v4981 = vld [vmem:[#allocation3 + $0xaa] sm:$0xff]
          %v4982 = vld [vmem:[#allocation3 + $0xb2] sm:$0xff]
          %v4983 = vld [vmem:[#allocation3 + $0xba] sm:$0xff]
          %v4984 = vld [vmem:[#allocation3 + $0xc2] sm:$0xff]
          %v4985 = vld [vmem:[#allocation3 + $0xca] sm:$0xf]
          %v4986 = vpack.c.bf16 %v4963, %v4962
          %v4987 = vpack.c.bf16 %v4965, %v4964
          %v4988 = vpack.c.bf16 %v4967, %v4966
          %v4989 = vpack.c.bf16 %v4969, %v4968
          %v4990 = vpack.c.bf16 %v4971, %v4970
          %v4991 = vpack.c.bf16 %v4973, %v4972
          %v4992 = vpack.c.bf16 %v4975, %v4974
          %v4993 = vpack.c.bf16 %v4977, %v4976
          %v4994 = vpack.c.bf16 %v4979, %v4978
          %v4995 = vpack.c.bf16 %v4981, %v4980
          %v4996 = vpack.c.bf16 %v4983, %v4982
          %v4997 = vpack.c.bf16 %v4985, %v4984
          %v5010 = vunpack.c.l.b16 %v4986
          %v5011 = vunpack.c.h.b16 %v4986
          %v5012 = vunpack.c.l.b16 %v4987
          %v5013 = vunpack.c.h.b16 %v4987
          %v5014 = vunpack.c.l.b16 %v4988
          %v5015 = vunpack.c.h.b16 %v4988
          %v5016 = vunpack.c.l.b16 %v4989
          %v5017 = vunpack.c.h.b16 %v4989
          %v5018 = vunpack.c.l.b16 %v4990
          %v5019 = vunpack.c.h.b16 %v4990
          %v5020 = vunpack.c.l.b16 %v4991
          %v5021 = vunpack.c.h.b16 %v4991
          %v5022 = vunpack.c.l.b16 %v4992
          %v5023 = vunpack.c.h.b16 %v4992
          %v5024 = vunpack.c.l.b16 %v4993
          %v5025 = vunpack.c.h.b16 %v4993
          %v5026 = vunpack.c.l.b16 %v4994
          %v5027 = vunpack.c.h.b16 %v4994
          %v5028 = vunpack.c.l.b16 %v4995
          %v5029 = vunpack.c.h.b16 %v4995
          %v5030 = vunpack.c.l.b16 %v4996
          %v5031 = vunpack.c.h.b16 %v4996
          %v5032 = vunpack.c.l.b16 %v4997
          %v5033 = vunpack.c.h.b16 %v4997
          %v5034 = vpack.c.b16 %v5010, %v5010
          %v5035 = vpack.c.b16 %v5011, %v5011
          %v5036 = vpack.c.b16 %v5012, %v5012
          %v5037 = vpack.c.b16 %v5013, %v5013
          %v5038 = vpack.c.b16 %v5014, %v5014
          %v5039 = vpack.c.b16 %v5015, %v5015
          %v5040 = vpack.c.b16 %v5016, %v5016
          %v5041 = vpack.c.b16 %v5017, %v5017
          %v5042 = vpack.c.b16 %v5018, %v5018
          %v5043 = vpack.c.b16 %v5019, %v5019
          %v5044 = vpack.c.b16 %v5020, %v5020
          %v5045 = vpack.c.b16 %v5021, %v5021
          %v5046 = vpack.c.b16 %v5022, %v5022
          %v5047 = vpack.c.b16 %v5023, %v5023
          %v5048 = vpack.c.b16 %v5024, %v5024
          %v5049 = vpack.c.b16 %v5025, %v5025
          %v5050 = vpack.c.b16 %v5026, %v5026
          %v5051 = vpack.c.b16 %v5027, %v5027
          %v5052 = vpack.c.b16 %v5028, %v5028
          %v5053 = vpack.c.b16 %v5029, %v5029
          %v5054 = vpack.c.b16 %v5030, %v5030
          %v5055 = vpack.c.b16 %v5031, %v5031
          %v5056 = vpack.c.b16 %v5032, %v5032
          %v5057 = vpack.c.b16 %v5033, %v5033
          %5058 = vrot.lane.b32.xlu0 %v5034, 60
          %v5059 = vpop.permute.xlu0 %5058
          %5060 = vrot.lane.b32.xlu0 %v5035, 60
          %v5061 = vpop.permute.xlu0 %5060
          %5062 = vrot.lane.b32.xlu0 %v5036, 60
          %v5063 = vpop.permute.xlu0 %5062
          %5064 = vrot.lane.b32.xlu0 %v5037, 60
          %v5065 = vpop.permute.xlu0 %5064
          %5066 = vrot.lane.b32.xlu0 %v5038, 60
          %v5067 = vpop.permute.xlu0 %5066
          %5068 = vrot.lane.b32.xlu0 %v5039, 60
          %v5069 = vpop.permute.xlu0 %5068
          %5070 = vrot.lane.b32.xlu0 %v5040, 60
          %v5071 = vpop.permute.xlu0 %5070
          %5072 = vrot.lane.b32.xlu0 %v5041, 60
          %v5073 = vpop.permute.xlu0 %5072
          %5074 = vrot.lane.b32.xlu0 %v5042, 60
          %v5075 = vpop.permute.xlu0 %5074
          %5076 = vrot.lane.b32.xlu0 %v5043, 60
          %v5077 = vpop.permute.xlu0 %5076
          %5078 = vrot.lane.b32.xlu0 %v5044, 60
          %v5079 = vpop.permute.xlu0 %5078
          %5080 = vrot.lane.b32.xlu0 %v5045, 60
          %v5081 = vpop.permute.xlu0 %5080
          %5082 = vrot.lane.b32.xlu0 %v5046, 60
          %v5083 = vpop.permute.xlu0 %5082
          %5084 = vrot.lane.b32.xlu0 %v5047, 60
          %v5085 = vpop.permute.xlu0 %5084
          %5086 = vrot.lane.b32.xlu0 %v5048, 60
          %v5087 = vpop.permute.xlu0 %5086
          %5088 = vrot.lane.b32.xlu0 %v5049, 60
          %v5089 = vpop.permute.xlu0 %5088
          %5090 = vrot.lane.b32.xlu0 %v5050, 60
          %v5091 = vpop.permute.xlu0 %5090
          %5092 = vrot.lane.b32.xlu0 %v5051, 60
          %v5093 = vpop.permute.xlu0 %5092
          %5094 = vrot.lane.b32.xlu0 %v5052, 60
          %v5095 = vpop.permute.xlu0 %5094
          %5096 = vrot.lane.b32.xlu0 %v5053, 60
          %v5097 = vpop.permute.xlu0 %5096
          %5098 = vrot.lane.b32.xlu0 %v5054, 60
          %v5099 = vpop.permute.xlu0 %5098
          %5100 = vrot.lane.b32.xlu0 %v5055, 60
          %v5101 = vpop.permute.xlu0 %5100
          %5102 = vrot.lane.b32.xlu0 %v5056, 60
          %v5103 = vpop.permute.xlu0 %5102
          %5104 = vrot.lane.b32.xlu0 %v5057, 60
          %v5105 = vpop.permute.xlu0 %5104
          %vm5130 = vcmask 568800
          %5131 = vst.msk [vmem:[#allocation4] sm:$0xf] %vm5130, %v5059
          %5132 = vst.msk [vmem:[#allocation4 + $0x8] sm:$0xf] %vm5130, %v5061
          %5133 = vst.msk [vmem:[#allocation4 + $0x10] sm:$0xf] %vm5130, %v5063
          %5134 = vst.msk [vmem:[#allocation4 + $0x18] sm:$0xf] %vm5130, %v5065
          %5135 = vst.msk [vmem:[#allocation4 + $0x20] sm:$0xf] %vm5130, %v5067
          %5136 = vst.msk [vmem:[#allocation4 + $0x28] sm:$0xf] %vm5130, %v5069
          %5137 = vst.msk [vmem:[#allocation4 + $0x30] sm:$0xf] %vm5130, %v5071
          %5138 = vst.msk [vmem:[#allocation4 + $0x38] sm:$0xf] %vm5130, %v5073
          %5139 = vst.msk [vmem:[#allocation4 + $0x40] sm:$0xf] %vm5130, %v5075
          %5140 = vst.msk [vmem:[#allocation4 + $0x48] sm:$0xf] %vm5130, %v5077
          %5141 = vst.msk [vmem:[#allocation4 + $0x50] sm:$0xf] %vm5130, %v5079
          %5142 = vst.msk [vmem:[#allocation4 + $0x58] sm:$0xf] %vm5130, %v5081
          %5143 = vst.msk [vmem:[#allocation4 + $0x60] sm:$0xf] %vm5130, %v5083
          %5144 = vst.msk [vmem:[#allocation4 + $0x68] sm:$0xf] %vm5130, %v5085
          %5145 = vst.msk [vmem:[#allocation4 + $0x70] sm:$0xf] %vm5130, %v5087
          %5146 = vst.msk [vmem:[#allocation4 + $0x78] sm:$0xf] %vm5130, %v5089
          %5147 = vst.msk [vmem:[#allocation4 + $0x80] sm:$0xf] %vm5130, %v5091
          %5148 = vst.msk [vmem:[#allocation4 + $0x88] sm:$0xf] %vm5130, %v5093
          %5149 = vst.msk [vmem:[#allocation4 + $0x90] sm:$0xf] %vm5130, %v5095
          %5150 = vst.msk [vmem:[#allocation4 + $0x98] sm:$0xf] %vm5130, %v5097
          %5151 = vst.msk [vmem:[#allocation4 + $0xa0] sm:$0xf] %vm5130, %v5099
          %5152 = vst.msk [vmem:[#allocation4 + $0xa8] sm:$0xf] %vm5130, %v5101
          %5153 = vst.msk [vmem:[#allocation4 + $0xb0] sm:$0xf] %vm5130, %v5103
          %vm5154 = vcmask 566752
          %5155 = vst.msk [vmem:[#allocation4 + $0xb8] sm:$0x3] %vm5154, %v5105
          %v5156 = vld [vmem:[#allocation3 + $0x13] sm:$0xff]
          %v5157 = vld [vmem:[#allocation3 + $0x1b] sm:$0xff]
          %v5158 = vld [vmem:[#allocation3 + $0x23] sm:$0xff]
          %v5159 = vld [vmem:[#allocation3 + $0x2b] sm:$0xff]
          %v5160 = vld [vmem:[#allocation3 + $0x33] sm:$0xff]
          %v5161 = vld [vmem:[#allocation3 + $0x3b] sm:$0xff]
          %v5162 = vld [vmem:[#allocation3 + $0x43] sm:$0xff]
          %v5163 = vld [vmem:[#allocation3 + $0x4b] sm:$0xff]
          %v5164 = vld [vmem:[#allocation3 + $0x53] sm:$0xff]
          %v5165 = vld [vmem:[#allocation3 + $0x5b] sm:$0xff]
          %v5166 = vld [vmem:[#allocation3 + $0x63] sm:$0xff]
          %v5167 = vld [vmem:[#allocation3 + $0x6b] sm:$0xff]
          %v5168 = vld [vmem:[#allocation3 + $0x73] sm:$0xff]
          %v5169 = vld [vmem:[#allocation3 + $0x7b] sm:$0xff]
          %v5170 = vld [vmem:[#allocation3 + $0x83] sm:$0xff]
          %v5171 = vld [vmem:[#allocation3 + $0x8b] sm:$0xff]
          %v5172 = vld [vmem:[#allocation3 + $0x93] sm:$0xff]
          %v5173 = vld [vmem:[#allocation3 + $0x9b] sm:$0xff]
          %v5174 = vld [vmem:[#allocation3 + $0xa3] sm:$0xff]
          %v5175 = vld [vmem:[#allocation3 + $0xab] sm:$0xff]
          %v5176 = vld [vmem:[#allocation3 + $0xb3] sm:$0xff]
          %v5177 = vld [vmem:[#allocation3 + $0xbb] sm:$0xff]
          %v5178 = vld [vmem:[#allocation3 + $0xc3] sm:$0xff]
          %v5179 = vld [vmem:[#allocation3 + $0xcb] sm:$0xf]
          %v5180 = vpack.c.bf16 %v5157, %v5156
          %v5181 = vpack.c.bf16 %v5159, %v5158
          %v5182 = vpack.c.bf16 %v5161, %v5160
          %v5183 = vpack.c.bf16 %v5163, %v5162
          %v5184 = vpack.c.bf16 %v5165, %v5164
          %v5185 = vpack.c.bf16 %v5167, %v5166
          %v5186 = vpack.c.bf16 %v5169, %v5168
          %v5187 = vpack.c.bf16 %v5171, %v5170
          %v5188 = vpack.c.bf16 %v5173, %v5172
          %v5189 = vpack.c.bf16 %v5175, %v5174
          %v5190 = vpack.c.bf16 %v5177, %v5176
          %v5191 = vpack.c.bf16 %v5179, %v5178
          %v5204 = vunpack.c.l.b16 %v5180
          %v5205 = vunpack.c.h.b16 %v5180
          %v5206 = vunpack.c.l.b16 %v5181
          %v5207 = vunpack.c.h.b16 %v5181
          %v5208 = vunpack.c.l.b16 %v5182
          %v5209 = vunpack.c.h.b16 %v5182
          %v5210 = vunpack.c.l.b16 %v5183
          %v5211 = vunpack.c.h.b16 %v5183
          %v5212 = vunpack.c.l.b16 %v5184
          %v5213 = vunpack.c.h.b16 %v5184
          %v5214 = vunpack.c.l.b16 %v5185
          %v5215 = vunpack.c.h.b16 %v5185
          %v5216 = vunpack.c.l.b16 %v5186
          %v5217 = vunpack.c.h.b16 %v5186
          %v5218 = vunpack.c.l.b16 %v5187
          %v5219 = vunpack.c.h.b16 %v5187
          %v5220 = vunpack.c.l.b16 %v5188
          %v5221 = vunpack.c.h.b16 %v5188
          %v5222 = vunpack.c.l.b16 %v5189
          %v5223 = vunpack.c.h.b16 %v5189
          %v5224 = vunpack.c.l.b16 %v5190
          %v5225 = vunpack.c.h.b16 %v5190
          %v5226 = vunpack.c.l.b16 %v5191
          %v5227 = vunpack.c.h.b16 %v5191
          %v5228 = vpack.c.b16 %v5204, %v5204
          %v5229 = vpack.c.b16 %v5205, %v5205
          %v5230 = vpack.c.b16 %v5206, %v5206
          %v5231 = vpack.c.b16 %v5207, %v5207
          %v5232 = vpack.c.b16 %v5208, %v5208
          %v5233 = vpack.c.b16 %v5209, %v5209
          %v5234 = vpack.c.b16 %v5210, %v5210
          %v5235 = vpack.c.b16 %v5211, %v5211
          %v5236 = vpack.c.b16 %v5212, %v5212
          %v5237 = vpack.c.b16 %v5213, %v5213
          %v5238 = vpack.c.b16 %v5214, %v5214
          %v5239 = vpack.c.b16 %v5215, %v5215
          %v5240 = vpack.c.b16 %v5216, %v5216
          %v5241 = vpack.c.b16 %v5217, %v5217
          %v5242 = vpack.c.b16 %v5218, %v5218
          %v5243 = vpack.c.b16 %v5219, %v5219
          %v5244 = vpack.c.b16 %v5220, %v5220
          %v5245 = vpack.c.b16 %v5221, %v5221
          %v5246 = vpack.c.b16 %v5222, %v5222
          %v5247 = vpack.c.b16 %v5223, %v5223
          %v5248 = vpack.c.b16 %v5224, %v5224
          %v5249 = vpack.c.b16 %v5225, %v5225
          %v5250 = vpack.c.b16 %v5226, %v5226
          %v5251 = vpack.c.b16 %v5227, %v5227
          %5252 = vrot.lane.b32.xlu0 %v5228, 70
          %v5253 = vpop.permute.xlu0 %5252
          %5254 = vrot.lane.b32.xlu0 %v5229, 70
          %v5255 = vpop.permute.xlu0 %5254
          %5256 = vrot.lane.b32.xlu0 %v5230, 70
          %v5257 = vpop.permute.xlu0 %5256
          %5258 = vrot.lane.b32.xlu0 %v5231, 70
          %v5259 = vpop.permute.xlu0 %5258
          %5260 = vrot.lane.b32.xlu0 %v5232, 70
          %v5261 = vpop.permute.xlu0 %5260
          %5262 = vrot.lane.b32.xlu0 %v5233, 70
          %v5263 = vpop.permute.xlu0 %5262
          %5264 = vrot.lane.b32.xlu0 %v5234, 70
          %v5265 = vpop.permute.xlu0 %5264
          %5266 = vrot.lane.b32.xlu0 %v5235, 70
          %v5267 = vpop.permute.xlu0 %5266
          %5268 = vrot.lane.b32.xlu0 %v5236, 70
          %v5269 = vpop.permute.xlu0 %5268
          %5270 = vrot.lane.b32.xlu0 %v5237, 70
          %v5271 = vpop.permute.xlu0 %5270
          %5272 = vrot.lane.b32.xlu0 %v5238, 70
          %v5273 = vpop.permute.xlu0 %5272
          %5274 = vrot.lane.b32.xlu0 %v5239, 70
          %v5275 = vpop.permute.xlu0 %5274
          %5276 = vrot.lane.b32.xlu0 %v5240, 70
          %v5277 = vpop.permute.xlu0 %5276
          %5278 = vrot.lane.b32.xlu0 %v5241, 70
          %v5279 = vpop.permute.xlu0 %5278
          %5280 = vrot.lane.b32.xlu0 %v5242, 70
          %v5281 = vpop.permute.xlu0 %5280
          %5282 = vrot.lane.b32.xlu0 %v5243, 70
          %v5283 = vpop.permute.xlu0 %5282
          %5284 = vrot.lane.b32.xlu0 %v5244, 70
          %v5285 = vpop.permute.xlu0 %5284
          %5286 = vrot.lane.b32.xlu0 %v5245, 70
          %v5287 = vpop.permute.xlu0 %5286
          %5288 = vrot.lane.b32.xlu0 %v5246, 70
          %v5289 = vpop.permute.xlu0 %5288
          %5290 = vrot.lane.b32.xlu0 %v5247, 70
          %v5291 = vpop.permute.xlu0 %5290
          %5292 = vrot.lane.b32.xlu0 %v5248, 70
          %v5293 = vpop.permute.xlu0 %5292
          %5294 = vrot.lane.b32.xlu0 %v5249, 70
          %v5295 = vpop.permute.xlu0 %5294
          %5296 = vrot.lane.b32.xlu0 %v5250, 70
          %v5297 = vpop.permute.xlu0 %5296
          %5298 = vrot.lane.b32.xlu0 %v5251, 70
          %v5299 = vpop.permute.xlu0 %5298
          %vm5324 = vcmask 650800
          %5325 = vst.msk [vmem:[#allocation4] sm:$0xf] %vm5324, %v5253
          %5326 = vst.msk [vmem:[#allocation4 + $0x8] sm:$0xf] %vm5324, %v5255
          %5327 = vst.msk [vmem:[#allocation4 + $0x10] sm:$0xf] %vm5324, %v5257
          %5328 = vst.msk [vmem:[#allocation4 + $0x18] sm:$0xf] %vm5324, %v5259
          %5329 = vst.msk [vmem:[#allocation4 + $0x20] sm:$0xf] %vm5324, %v5261
          %5330 = vst.msk [vmem:[#allocation4 + $0x28] sm:$0xf] %vm5324, %v5263
          %5331 = vst.msk [vmem:[#allocation4 + $0x30] sm:$0xf] %vm5324, %v5265
          %5332 = vst.msk [vmem:[#allocation4 + $0x38] sm:$0xf] %vm5324, %v5267
          %5333 = vst.msk [vmem:[#allocation4 + $0x40] sm:$0xf] %vm5324, %v5269
          %5334 = vst.msk [vmem:[#allocation4 + $0x48] sm:$0xf] %vm5324, %v5271
          %5335 = vst.msk [vmem:[#allocation4 + $0x50] sm:$0xf] %vm5324, %v5273
          %5336 = vst.msk [vmem:[#allocation4 + $0x58] sm:$0xf] %vm5324, %v5275
          %5337 = vst.msk [vmem:[#allocation4 + $0x60] sm:$0xf] %vm5324, %v5277
          %5338 = vst.msk [vmem:[#allocation4 + $0x68] sm:$0xf] %vm5324, %v5279
          %5339 = vst.msk [vmem:[#allocation4 + $0x70] sm:$0xf] %vm5324, %v5281
          %5340 = vst.msk [vmem:[#allocation4 + $0x78] sm:$0xf] %vm5324, %v5283
          %5341 = vst.msk [vmem:[#allocation4 + $0x80] sm:$0xf] %vm5324, %v5285
          %5342 = vst.msk [vmem:[#allocation4 + $0x88] sm:$0xf] %vm5324, %v5287
          %5343 = vst.msk [vmem:[#allocation4 + $0x90] sm:$0xf] %vm5324, %v5289
          %5344 = vst.msk [vmem:[#allocation4 + $0x98] sm:$0xf] %vm5324, %v5291
          %5345 = vst.msk [vmem:[#allocation4 + $0xa0] sm:$0xf] %vm5324, %v5293
          %5346 = vst.msk [vmem:[#allocation4 + $0xa8] sm:$0xf] %vm5324, %v5295
          %5347 = vst.msk [vmem:[#allocation4 + $0xb0] sm:$0xf] %vm5324, %v5297
          %vm5348 = vcmask 648752
          %5349 = vst.msk [vmem:[#allocation4 + $0xb8] sm:$0x3] %vm5348, %v5299
          %v5350 = vld [vmem:[#allocation3 + $0x20] sm:$0xff]
          %v5351 = vld [vmem:[#allocation3 + $0x28] sm:$0xff]
          %v5352 = vld [vmem:[#allocation3 + $0x30] sm:$0xff]
          %v5353 = vld [vmem:[#allocation3 + $0x38] sm:$0xff]
          %v5354 = vld [vmem:[#allocation3 + $0x40] sm:$0xff]
          %v5355 = vld [vmem:[#allocation3 + $0x48] sm:$0xff]
          %v5356 = vld [vmem:[#allocation3 + $0x50] sm:$0xff]
          %v5357 = vld [vmem:[#allocation3 + $0x58] sm:$0xff]
          %v5358 = vld [vmem:[#allocation3 + $0x60] sm:$0xff]
          %v5359 = vld [vmem:[#allocation3 + $0x68] sm:$0xff]
          %v5360 = vld [vmem:[#allocation3 + $0x70] sm:$0xff]
          %v5361 = vld [vmem:[#allocation3 + $0x78] sm:$0xff]
          %v5362 = vld [vmem:[#allocation3 + $0x80] sm:$0xff]
          %v5363 = vld [vmem:[#allocation3 + $0x88] sm:$0xff]
          %v5364 = vld [vmem:[#allocation3 + $0x90] sm:$0xff]
          %v5365 = vld [vmem:[#allocation3 + $0x98] sm:$0xff]
          %v5366 = vld [vmem:[#allocation3 + $0xa0] sm:$0xff]
          %v5367 = vld [vmem:[#allocation3 + $0xa8] sm:$0xff]
          %v5368 = vld [vmem:[#allocation3 + $0xb0] sm:$0xff]
          %v5369 = vld [vmem:[#allocation3 + $0xb8] sm:$0xff]
          %v5370 = vld [vmem:[#allocation3 + $0xc0] sm:$0xff]
          %v5371 = vld [vmem:[#allocation3 + $0xc8] sm:$0xff]
          %v5372 = vld [vmem:[#allocation3 + $0xd0] sm:$0xff]
          %v5373 = vld [vmem:[#allocation3 + $0xd8] sm:$0xf]
          %v5374 = vpack.c.bf16 %v5351, %v5350
          %v5375 = vpack.c.bf16 %v5353, %v5352
          %v5376 = vpack.c.bf16 %v5355, %v5354
          %v5377 = vpack.c.bf16 %v5357, %v5356
          %v5378 = vpack.c.bf16 %v5359, %v5358
          %v5379 = vpack.c.bf16 %v5361, %v5360
          %v5380 = vpack.c.bf16 %v5363, %v5362
          %v5381 = vpack.c.bf16 %v5365, %v5364
          %v5382 = vpack.c.bf16 %v5367, %v5366
          %v5383 = vpack.c.bf16 %v5369, %v5368
          %v5384 = vpack.c.bf16 %v5371, %v5370
          %v5385 = vpack.c.bf16 %v5373, %v5372
          %v5398 = vunpack.c.l.b16 %v5374
          %v5399 = vunpack.c.h.b16 %v5374
          %v5400 = vunpack.c.l.b16 %v5375
          %v5401 = vunpack.c.h.b16 %v5375
          %v5402 = vunpack.c.l.b16 %v5376
          %v5403 = vunpack.c.h.b16 %v5376
          %v5404 = vunpack.c.l.b16 %v5377
          %v5405 = vunpack.c.h.b16 %v5377
          %v5406 = vunpack.c.l.b16 %v5378
          %v5407 = vunpack.c.h.b16 %v5378
          %v5408 = vunpack.c.l.b16 %v5379
          %v5409 = vunpack.c.h.b16 %v5379
          %v5410 = vunpack.c.l.b16 %v5380
          %v5411 = vunpack.c.h.b16 %v5380
          %v5412 = vunpack.c.l.b16 %v5381
          %v5413 = vunpack.c.h.b16 %v5381
          %v5414 = vunpack.c.l.b16 %v5382
          %v5415 = vunpack.c.h.b16 %v5382
          %v5416 = vunpack.c.l.b16 %v5383
          %v5417 = vunpack.c.h.b16 %v5383
          %v5418 = vunpack.c.l.b16 %v5384
          %v5419 = vunpack.c.h.b16 %v5384
          %v5420 = vunpack.c.l.b16 %v5385
          %v5421 = vunpack.c.h.b16 %v5385
          %v5422 = vpack.c.b16 %v5398, %v5398
          %v5423 = vpack.c.b16 %v5399, %v5399
          %v5424 = vpack.c.b16 %v5400, %v5400
          %v5425 = vpack.c.b16 %v5401, %v5401
          %v5426 = vpack.c.b16 %v5402, %v5402
          %v5427 = vpack.c.b16 %v5403, %v5403
          %v5428 = vpack.c.b16 %v5404, %v5404
          %v5429 = vpack.c.b16 %v5405, %v5405
          %v5430 = vpack.c.b16 %v5406, %v5406
          %v5431 = vpack.c.b16 %v5407, %v5407
          %v5432 = vpack.c.b16 %v5408, %v5408
          %v5433 = vpack.c.b16 %v5409, %v5409
          %v5434 = vpack.c.b16 %v5410, %v5410
          %v5435 = vpack.c.b16 %v5411, %v5411
          %v5436 = vpack.c.b16 %v5412, %v5412
          %v5437 = vpack.c.b16 %v5413, %v5413
          %v5438 = vpack.c.b16 %v5414, %v5414
          %v5439 = vpack.c.b16 %v5415, %v5415
          %v5440 = vpack.c.b16 %v5416, %v5416
          %v5441 = vpack.c.b16 %v5417, %v5417
          %v5442 = vpack.c.b16 %v5418, %v5418
          %v5443 = vpack.c.b16 %v5419, %v5419
          %v5444 = vpack.c.b16 %v5420, %v5420
          %v5445 = vpack.c.b16 %v5421, %v5421
          %5446 = vrot.lane.b32.xlu0 %v5422, 80
          %v5447 = vpop.permute.xlu0 %5446
          %5448 = vrot.lane.b32.xlu0 %v5423, 80
          %v5449 = vpop.permute.xlu0 %5448
          %5450 = vrot.lane.b32.xlu0 %v5424, 80
          %v5451 = vpop.permute.xlu0 %5450
          %5452 = vrot.lane.b32.xlu0 %v5425, 80
          %v5453 = vpop.permute.xlu0 %5452
          %5454 = vrot.lane.b32.xlu0 %v5426, 80
          %v5455 = vpop.permute.xlu0 %5454
          %5456 = vrot.lane.b32.xlu0 %v5427, 80
          %v5457 = vpop.permute.xlu0 %5456
          %5458 = vrot.lane.b32.xlu0 %v5428, 80
          %v5459 = vpop.permute.xlu0 %5458
          %5460 = vrot.lane.b32.xlu0 %v5429, 80
          %v5461 = vpop.permute.xlu0 %5460
          %5462 = vrot.lane.b32.xlu0 %v5430, 80
          %v5463 = vpop.permute.xlu0 %5462
          %5464 = vrot.lane.b32.xlu0 %v5431, 80
          %v5465 = vpop.permute.xlu0 %5464
          %5466 = vrot.lane.b32.xlu0 %v5432, 80
          %v5467 = vpop.permute.xlu0 %5466
          %5468 = vrot.lane.b32.xlu0 %v5433, 80
          %v5469 = vpop.permute.xlu0 %5468
          %5470 = vrot.lane.b32.xlu0 %v5434, 80
          %v5471 = vpop.permute.xlu0 %5470
          %5472 = vrot.lane.b32.xlu0 %v5435, 80
          %v5473 = vpop.permute.xlu0 %5472
          %5474 = vrot.lane.b32.xlu0 %v5436, 80
          %v5475 = vpop.permute.xlu0 %5474
          %5476 = vrot.lane.b32.xlu0 %v5437, 80
          %v5477 = vpop.permute.xlu0 %5476
          %5478 = vrot.lane.b32.xlu0 %v5438, 80
          %v5479 = vpop.permute.xlu0 %5478
          %5480 = vrot.lane.b32.xlu0 %v5439, 80
          %v5481 = vpop.permute.xlu0 %5480
          %5482 = vrot.lane.b32.xlu0 %v5440, 80
          %v5483 = vpop.permute.xlu0 %5482
          %5484 = vrot.lane.b32.xlu0 %v5441, 80
          %v5485 = vpop.permute.xlu0 %5484
          %5486 = vrot.lane.b32.xlu0 %v5442, 80
          %v5487 = vpop.permute.xlu0 %5486
          %5488 = vrot.lane.b32.xlu0 %v5443, 80
          %v5489 = vpop.permute.xlu0 %5488
          %5490 = vrot.lane.b32.xlu0 %v5444, 80
          %v5491 = vpop.permute.xlu0 %5490
          %5492 = vrot.lane.b32.xlu0 %v5445, 80
          %v5493 = vpop.permute.xlu0 %5492
          %vm5518 = vcmask 732800
          %5519 = vst.msk [vmem:[#allocation4] sm:$0xf] %vm5518, %v5447
          %5520 = vst.msk [vmem:[#allocation4 + $0x8] sm:$0xf] %vm5518, %v5449
          %5521 = vst.msk [vmem:[#allocation4 + $0x10] sm:$0xf] %vm5518, %v5451
          %5522 = vst.msk [vmem:[#allocation4 + $0x18] sm:$0xf] %vm5518, %v5453
          %5523 = vst.msk [vmem:[#allocation4 + $0x20] sm:$0xf] %vm5518, %v5455
          %5524 = vst.msk [vmem:[#allocation4 + $0x28] sm:$0xf] %vm5518, %v5457
          %5525 = vst.msk [vmem:[#allocation4 + $0x30] sm:$0xf] %vm5518, %v5459
          %5526 = vst.msk [vmem:[#allocation4 + $0x38] sm:$0xf] %vm5518, %v5461
          %5527 = vst.msk [vmem:[#allocation4 + $0x40] sm:$0xf] %vm5518, %v5463
          %5528 = vst.msk [vmem:[#allocation4 + $0x48] sm:$0xf] %vm5518, %v5465
          %5529 = vst.msk [vmem:[#allocation4 + $0x50] sm:$0xf] %vm5518, %v5467
          %5530 = vst.msk [vmem:[#allocation4 + $0x58] sm:$0xf] %vm5518, %v5469
          %5531 = vst.msk [vmem:[#allocation4 + $0x60] sm:$0xf] %vm5518, %v5471
          %5532 = vst.msk [vmem:[#allocation4 + $0x68] sm:$0xf] %vm5518, %v5473
          %5533 = vst.msk [vmem:[#allocation4 + $0x70] sm:$0xf] %vm5518, %v5475
          %5534 = vst.msk [vmem:[#allocation4 + $0x78] sm:$0xf] %vm5518, %v5477
          %5535 = vst.msk [vmem:[#allocation4 + $0x80] sm:$0xf] %vm5518, %v5479
          %5536 = vst.msk [vmem:[#allocation4 + $0x88] sm:$0xf] %vm5518, %v5481
          %5537 = vst.msk [vmem:[#allocation4 + $0x90] sm:$0xf] %vm5518, %v5483
          %5538 = vst.msk [vmem:[#allocation4 + $0x98] sm:$0xf] %vm5518, %v5485
          %5539 = vst.msk [vmem:[#allocation4 + $0xa0] sm:$0xf] %vm5518, %v5487
          %5540 = vst.msk [vmem:[#allocation4 + $0xa8] sm:$0xf] %vm5518, %v5489
          %5541 = vst.msk [vmem:[#allocation4 + $0xb0] sm:$0xf] %vm5518, %v5491
          %vm5542 = vcmask 730752
          %5543 = vst.msk [vmem:[#allocation4 + $0xb8] sm:$0x3] %vm5542, %v5493
          %v5544 = vld [vmem:[#allocation3 + $0x21] sm:$0xff]
          %v5545 = vld [vmem:[#allocation3 + $0x29] sm:$0xff]
          %v5546 = vld [vmem:[#allocation3 + $0x31] sm:$0xff]
          %v5547 = vld [vmem:[#allocation3 + $0x39] sm:$0xff]
          %v5548 = vld [vmem:[#allocation3 + $0x41] sm:$0xff]
          %v5549 = vld [vmem:[#allocation3 + $0x49] sm:$0xff]
          %v5550 = vld [vmem:[#allocation3 + $0x51] sm:$0xff]
          %v5551 = vld [vmem:[#allocation3 + $0x59] sm:$0xff]
          %v5552 = vld [vmem:[#allocation3 + $0x61] sm:$0xff]
          %v5553 = vld [vmem:[#allocation3 + $0x69] sm:$0xff]
          %v5554 = vld [vmem:[#allocation3 + $0x71] sm:$0xff]
          %v5555 = vld [vmem:[#allocation3 + $0x79] sm:$0xff]
          %v5556 = vld [vmem:[#allocation3 + $0x81] sm:$0xff]
          %v5557 = vld [vmem:[#allocation3 + $0x89] sm:$0xff]
          %v5558 = vld [vmem:[#allocation3 + $0x91] sm:$0xff]
          %v5559 = vld [vmem:[#allocation3 + $0x99] sm:$0xff]
          %v5560 = vld [vmem:[#allocation3 + $0xa1] sm:$0xff]
          %v5561 = vld [vmem:[#allocation3 + $0xa9] sm:$0xff]
          %v5562 = vld [vmem:[#allocation3 + $0xb1] sm:$0xff]
          %v5563 = vld [vmem:[#allocation3 + $0xb9] sm:$0xff]
          %v5564 = vld [vmem:[#allocation3 + $0xc1] sm:$0xff]
          %v5565 = vld [vmem:[#allocation3 + $0xc9] sm:$0xff]
          %v5566 = vld [vmem:[#allocation3 + $0xd1] sm:$0xff]
          %v5567 = vld [vmem:[#allocation3 + $0xd9] sm:$0xf]
          %v5568 = vpack.c.bf16 %v5545, %v5544
          %v5569 = vpack.c.bf16 %v5547, %v5546
          %v5570 = vpack.c.bf16 %v5549, %v5548
          %v5571 = vpack.c.bf16 %v5551, %v5550
          %v5572 = vpack.c.bf16 %v5553, %v5552
          %v5573 = vpack.c.bf16 %v5555, %v5554
          %v5574 = vpack.c.bf16 %v5557, %v5556
          %v5575 = vpack.c.bf16 %v5559, %v5558
          %v5576 = vpack.c.bf16 %v5561, %v5560
          %v5577 = vpack.c.bf16 %v5563, %v5562
          %v5578 = vpack.c.bf16 %v5565, %v5564
          %v5579 = vpack.c.bf16 %v5567, %v5566
          %v5592 = vunpack.c.l.b16 %v5568
          %v5593 = vunpack.c.h.b16 %v5568
          %v5594 = vunpack.c.l.b16 %v5569
          %v5595 = vunpack.c.h.b16 %v5569
          %v5596 = vunpack.c.l.b16 %v5570
          %v5597 = vunpack.c.h.b16 %v5570
          %v5598 = vunpack.c.l.b16 %v5571
          %v5599 = vunpack.c.h.b16 %v5571
          %v5600 = vunpack.c.l.b16 %v5572
          %v5601 = vunpack.c.h.b16 %v5572
          %v5602 = vunpack.c.l.b16 %v5573
          %v5603 = vunpack.c.h.b16 %v5573
          %v5604 = vunpack.c.l.b16 %v5574
          %v5605 = vunpack.c.h.b16 %v5574
          %v5606 = vunpack.c.l.b16 %v5575
          %v5607 = vunpack.c.h.b16 %v5575
          %v5608 = vunpack.c.l.b16 %v5576
          %v5609 = vunpack.c.h.b16 %v5576
          %v5610 = vunpack.c.l.b16 %v5577
          %v5611 = vunpack.c.h.b16 %v5577
          %v5612 = vunpack.c.l.b16 %v5578
          %v5613 = vunpack.c.h.b16 %v5578
          %v5614 = vunpack.c.l.b16 %v5579
          %v5615 = vunpack.c.h.b16 %v5579
          %v5616 = vpack.c.b16 %v5592, %v5592
          %v5617 = vpack.c.b16 %v5593, %v5593
          %v5618 = vpack.c.b16 %v5594, %v5594
          %v5619 = vpack.c.b16 %v5595, %v5595
          %v5620 = vpack.c.b16 %v5596, %v5596
          %v5621 = vpack.c.b16 %v5597, %v5597
          %v5622 = vpack.c.b16 %v5598, %v5598
          %v5623 = vpack.c.b16 %v5599, %v5599
          %v5624 = vpack.c.b16 %v5600, %v5600
          %v5625 = vpack.c.b16 %v5601, %v5601
          %v5626 = vpack.c.b16 %v5602, %v5602
          %v5627 = vpack.c.b16 %v5603, %v5603
          %v5628 = vpack.c.b16 %v5604, %v5604
          %v5629 = vpack.c.b16 %v5605, %v5605
          %v5630 = vpack.c.b16 %v5606, %v5606
          %v5631 = vpack.c.b16 %v5607, %v5607
          %v5632 = vpack.c.b16 %v5608, %v5608
          %v5633 = vpack.c.b16 %v5609, %v5609
          %v5634 = vpack.c.b16 %v5610, %v5610
          %v5635 = vpack.c.b16 %v5611, %v5611
          %v5636 = vpack.c.b16 %v5612, %v5612
          %v5637 = vpack.c.b16 %v5613, %v5613
          %v5638 = vpack.c.b16 %v5614, %v5614
          %v5639 = vpack.c.b16 %v5615, %v5615
          %5640 = vrot.lane.b32.xlu0 %v5616, 90
          %v5641 = vpop.permute.xlu0 %5640
          %5642 = vrot.lane.b32.xlu0 %v5617, 90
          %v5643 = vpop.permute.xlu0 %5642
          %5644 = vrot.lane.b32.xlu0 %v5618, 90
          %v5645 = vpop.permute.xlu0 %5644
          %5646 = vrot.lane.b32.xlu0 %v5619, 90
          %v5647 = vpop.permute.xlu0 %5646
          %5648 = vrot.lane.b32.xlu0 %v5620, 90
          %v5649 = vpop.permute.xlu0 %5648
          %5650 = vrot.lane.b32.xlu0 %v5621, 90
          %v5651 = vpop.permute.xlu0 %5650
          %5652 = vrot.lane.b32.xlu0 %v5622, 90
          %v5653 = vpop.permute.xlu0 %5652
          %5654 = vrot.lane.b32.xlu0 %v5623, 90
          %v5655 = vpop.permute.xlu0 %5654
          %5656 = vrot.lane.b32.xlu0 %v5624, 90
          %v5657 = vpop.permute.xlu0 %5656
          %5658 = vrot.lane.b32.xlu0 %v5625, 90
          %v5659 = vpop.permute.xlu0 %5658
          %5660 = vrot.lane.b32.xlu0 %v5626, 90
          %v5661 = vpop.permute.xlu0 %5660
          %5662 = vrot.lane.b32.xlu0 %v5627, 90
          %v5663 = vpop.permute.xlu0 %5662
          %5664 = vrot.lane.b32.xlu0 %v5628, 90
          %v5665 = vpop.permute.xlu0 %5664
          %5666 = vrot.lane.b32.xlu0 %v5629, 90
          %v5667 = vpop.permute.xlu0 %5666
          %5668 = vrot.lane.b32.xlu0 %v5630, 90
          %v5669 = vpop.permute.xlu0 %5668
          %5670 = vrot.lane.b32.xlu0 %v5631, 90
          %v5671 = vpop.permute.xlu0 %5670
          %5672 = vrot.lane.b32.xlu0 %v5632, 90
          %v5673 = vpop.permute.xlu0 %5672
          %5674 = vrot.lane.b32.xlu0 %v5633, 90
          %v5675 = vpop.permute.xlu0 %5674
          %5676 = vrot.lane.b32.xlu0 %v5634, 90
          %v5677 = vpop.permute.xlu0 %5676
          %5678 = vrot.lane.b32.xlu0 %v5635, 90
          %v5679 = vpop.permute.xlu0 %5678
          %5680 = vrot.lane.b32.xlu0 %v5636, 90
          %v5681 = vpop.permute.xlu0 %5680
          %5682 = vrot.lane.b32.xlu0 %v5637, 90
          %v5683 = vpop.permute.xlu0 %5682
          %5684 = vrot.lane.b32.xlu0 %v5638, 90
          %v5685 = vpop.permute.xlu0 %5684
          %5686 = vrot.lane.b32.xlu0 %v5639, 90
          %v5687 = vpop.permute.xlu0 %5686
          %vm5712 = vcmask 814800
          %5713 = vst.msk [vmem:[#allocation4] sm:$0xf] %vm5712, %v5641
          %5714 = vst.msk [vmem:[#allocation4 + $0x8] sm:$0xf] %vm5712, %v5643
          %5715 = vst.msk [vmem:[#allocation4 + $0x10] sm:$0xf] %vm5712, %v5645
          %5716 = vst.msk [vmem:[#allocation4 + $0x18] sm:$0xf] %vm5712, %v5647
          %5717 = vst.msk [vmem:[#allocation4 + $0x20] sm:$0xf] %vm5712, %v5649
          %5718 = vst.msk [vmem:[#allocation4 + $0x28] sm:$0xf] %vm5712, %v5651
          %5719 = vst.msk [vmem:[#allocation4 + $0x30] sm:$0xf] %vm5712, %v5653
          %5720 = vst.msk [vmem:[#allocation4 + $0x38] sm:$0xf] %vm5712, %v5655
          %5721 = vst.msk [vmem:[#allocation4 + $0x40] sm:$0xf] %vm5712, %v5657
          %5722 = vst.msk [vmem:[#allocation4 + $0x48] sm:$0xf] %vm5712, %v5659
          %5723 = vst.msk [vmem:[#allocation4 + $0x50] sm:$0xf] %vm5712, %v5661
          %5724 = vst.msk [vmem:[#allocation4 + $0x58] sm:$0xf] %vm5712, %v5663
          %5725 = vst.msk [vmem:[#allocation4 + $0x60] sm:$0xf] %vm5712, %v5665
          %5726 = vst.msk [vmem:[#allocation4 + $0x68] sm:$0xf] %vm5712, %v5667
          %5727 = vst.msk [vmem:[#allocation4 + $0x70] sm:$0xf] %vm5712, %v5669
          %5728 = vst.msk [vmem:[#allocation4 + $0x78] sm:$0xf] %vm5712, %v5671
          %5729 = vst.msk [vmem:[#allocation4 + $0x80] sm:$0xf] %vm5712, %v5673
          %5730 = vst.msk [vmem:[#allocation4 + $0x88] sm:$0xf] %vm5712, %v5675
          %5731 = vst.msk [vmem:[#allocation4 + $0x90] sm:$0xf] %vm5712, %v5677
          %5732 = vst.msk [vmem:[#allocation4 + $0x98] sm:$0xf] %vm5712, %v5679
          %5733 = vst.msk [vmem:[#allocation4 + $0xa0] sm:$0xf] %vm5712, %v5681
          %5734 = vst.msk [vmem:[#allocation4 + $0xa8] sm:$0xf] %vm5712, %v5683
          %5735 = vst.msk [vmem:[#allocation4 + $0xb0] sm:$0xf] %vm5712, %v5685
          %vm5736 = vcmask 812752
          %5737 = vst.msk [vmem:[#allocation4 + $0xb8] sm:$0x3] %vm5736, %v5687
          %v5738 = vld [vmem:[#allocation3 + $0x22] sm:$0xff]
          %v5739 = vld [vmem:[#allocation3 + $0x2a] sm:$0xff]
          %v5740 = vld [vmem:[#allocation3 + $0x32] sm:$0xff]
          %v5741 = vld [vmem:[#allocation3 + $0x3a] sm:$0xff]
          %v5742 = vld [vmem:[#allocation3 + $0x42] sm:$0xff]
          %v5743 = vld [vmem:[#allocation3 + $0x4a] sm:$0xff]
          %v5744 = vld [vmem:[#allocation3 + $0x52] sm:$0xff]
          %v5745 = vld [vmem:[#allocation3 + $0x5a] sm:$0xff]
          %v5746 = vld [vmem:[#allocation3 + $0x62] sm:$0xff]
          %v5747 = vld [vmem:[#allocation3 + $0x6a] sm:$0xff]
          %v5748 = vld [vmem:[#allocation3 + $0x72] sm:$0xff]
          %v5749 = vld [vmem:[#allocation3 + $0x7a] sm:$0xff]
          %v5750 = vld [vmem:[#allocation3 + $0x82] sm:$0xff]
          %v5751 = vld [vmem:[#allocation3 + $0x8a] sm:$0xff]
          %v5752 = vld [vmem:[#allocation3 + $0x92] sm:$0xff]
          %v5753 = vld [vmem:[#allocation3 + $0x9a] sm:$0xff]
          %v5754 = vld [vmem:[#allocation3 + $0xa2] sm:$0xff]
          %v5755 = vld [vmem:[#allocation3 + $0xaa] sm:$0xff]
          %v5756 = vld [vmem:[#allocation3 + $0xb2] sm:$0xff]
          %v5757 = vld [vmem:[#allocation3 + $0xba] sm:$0xff]
          %v5758 = vld [vmem:[#allocation3 + $0xc2] sm:$0xff]
          %v5759 = vld [vmem:[#allocation3 + $0xca] sm:$0xff]
          %v5760 = vld [vmem:[#allocation3 + $0xd2] sm:$0xff]
          %v5761 = vld [vmem:[#allocation3 + $0xda] sm:$0xf]
          %v5762 = vpack.c.bf16 %v5739, %v5738
          %v5763 = vpack.c.bf16 %v5741, %v5740
          %v5764 = vpack.c.bf16 %v5743, %v5742
          %v5765 = vpack.c.bf16 %v5745, %v5744
          %v5766 = vpack.c.bf16 %v5747, %v5746
          %v5767 = vpack.c.bf16 %v5749, %v5748
          %v5768 = vpack.c.bf16 %v5751, %v5750
          %v5769 = vpack.c.bf16 %v5753, %v5752
          %v5770 = vpack.c.bf16 %v5755, %v5754
          %v5771 = vpack.c.bf16 %v5757, %v5756
          %v5772 = vpack.c.bf16 %v5759, %v5758
          %v5773 = vpack.c.bf16 %v5761, %v5760
          %v5786 = vunpack.c.l.b16 %v5762
          %v5787 = vunpack.c.h.b16 %v5762
          %v5788 = vunpack.c.l.b16 %v5763
          %v5789 = vunpack.c.h.b16 %v5763
          %v5790 = vunpack.c.l.b16 %v5764
          %v5791 = vunpack.c.h.b16 %v5764
          %v5792 = vunpack.c.l.b16 %v5765
          %v5793 = vunpack.c.h.b16 %v5765
          %v5794 = vunpack.c.l.b16 %v5766
          %v5795 = vunpack.c.h.b16 %v5766
          %v5796 = vunpack.c.l.b16 %v5767
          %v5797 = vunpack.c.h.b16 %v5767
          %v5798 = vunpack.c.l.b16 %v5768
          %v5799 = vunpack.c.h.b16 %v5768
          %v5800 = vunpack.c.l.b16 %v5769
          %v5801 = vunpack.c.h.b16 %v5769
          %v5802 = vunpack.c.l.b16 %v5770
          %v5803 = vunpack.c.h.b16 %v5770
          %v5804 = vunpack.c.l.b16 %v5771
          %v5805 = vunpack.c.h.b16 %v5771
          %v5806 = vunpack.c.l.b16 %v5772
          %v5807 = vunpack.c.h.b16 %v5772
          %v5808 = vunpack.c.l.b16 %v5773
          %v5809 = vunpack.c.h.b16 %v5773
          %v5810 = vpack.c.b16 %v5786, %v5786
          %v5811 = vpack.c.b16 %v5787, %v5787
          %v5812 = vpack.c.b16 %v5788, %v5788
          %v5813 = vpack.c.b16 %v5789, %v5789
          %v5814 = vpack.c.b16 %v5790, %v5790
          %v5815 = vpack.c.b16 %v5791, %v5791
          %v5816 = vpack.c.b16 %v5792, %v5792
          %v5817 = vpack.c.b16 %v5793, %v5793
          %v5818 = vpack.c.b16 %v5794, %v5794
          %v5819 = vpack.c.b16 %v5795, %v5795
          %v5820 = vpack.c.b16 %v5796, %v5796
          %v5821 = vpack.c.b16 %v5797, %v5797
          %v5822 = vpack.c.b16 %v5798, %v5798
          %v5823 = vpack.c.b16 %v5799, %v5799
          %v5824 = vpack.c.b16 %v5800, %v5800
          %v5825 = vpack.c.b16 %v5801, %v5801
          %v5826 = vpack.c.b16 %v5802, %v5802
          %v5827 = vpack.c.b16 %v5803, %v5803
          %v5828 = vpack.c.b16 %v5804, %v5804
          %v5829 = vpack.c.b16 %v5805, %v5805
          %v5830 = vpack.c.b16 %v5806, %v5806
          %v5831 = vpack.c.b16 %v5807, %v5807
          %v5832 = vpack.c.b16 %v5808, %v5808
          %v5833 = vpack.c.b16 %v5809, %v5809
          %5834 = vrot.lane.b32.xlu0 %v5810, 100
          %v5835 = vpop.permute.xlu0 %5834
          %5836 = vrot.lane.b32.xlu0 %v5811, 100
          %v5837 = vpop.permute.xlu0 %5836
          %5838 = vrot.lane.b32.xlu0 %v5812, 100
          %v5839 = vpop.permute.xlu0 %5838
          %5840 = vrot.lane.b32.xlu0 %v5813, 100
          %v5841 = vpop.permute.xlu0 %5840
          %5842 = vrot.lane.b32.xlu0 %v5814, 100
          %v5843 = vpop.permute.xlu0 %5842
          %5844 = vrot.lane.b32.xlu0 %v5815, 100
          %v5845 = vpop.permute.xlu0 %5844
          %5846 = vrot.lane.b32.xlu0 %v5816, 100
          %v5847 = vpop.permute.xlu0 %5846
          %5848 = vrot.lane.b32.xlu0 %v5817, 100
          %v5849 = vpop.permute.xlu0 %5848
          %5850 = vrot.lane.b32.xlu0 %v5818, 100
          %v5851 = vpop.permute.xlu0 %5850
          %5852 = vrot.lane.b32.xlu0 %v5819, 100
          %v5853 = vpop.permute.xlu0 %5852
          %5854 = vrot.lane.b32.xlu0 %v5820, 100
          %v5855 = vpop.permute.xlu0 %5854
          %5856 = vrot.lane.b32.xlu0 %v5821, 100
          %v5857 = vpop.permute.xlu0 %5856
          %5858 = vrot.lane.b32.xlu0 %v5822, 100
          %v5859 = vpop.permute.xlu0 %5858
          %5860 = vrot.lane.b32.xlu0 %v5823, 100
          %v5861 = vpop.permute.xlu0 %5860
          %5862 = vrot.lane.b32.xlu0 %v5824, 100
          %v5863 = vpop.permute.xlu0 %5862
          %5864 = vrot.lane.b32.xlu0 %v5825, 100
          %v5865 = vpop.permute.xlu0 %5864
          %5866 = vrot.lane.b32.xlu0 %v5826, 100
          %v5867 = vpop.permute.xlu0 %5866
          %5868 = vrot.lane.b32.xlu0 %v5827, 100
          %v5869 = vpop.permute.xlu0 %5868
          %5870 = vrot.lane.b32.xlu0 %v5828, 100
          %v5871 = vpop.permute.xlu0 %5870
          %5872 = vrot.lane.b32.xlu0 %v5829, 100
          %v5873 = vpop.permute.xlu0 %5872
          %5874 = vrot.lane.b32.xlu0 %v5830, 100
          %v5875 = vpop.permute.xlu0 %5874
          %5876 = vrot.lane.b32.xlu0 %v5831, 100
          %v5877 = vpop.permute.xlu0 %5876
          %5878 = vrot.lane.b32.xlu0 %v5832, 100
          %v5879 = vpop.permute.xlu0 %5878
          %5880 = vrot.lane.b32.xlu0 %v5833, 100
          %v5881 = vpop.permute.xlu0 %5880
          %vm5906 = vcmask 896800
          %5907 = vst.msk [vmem:[#allocation4] sm:$0xf] %vm5906, %v5835
          %5908 = vst.msk [vmem:[#allocation4 + $0x8] sm:$0xf] %vm5906, %v5837
          %5909 = vst.msk [vmem:[#allocation4 + $0x10] sm:$0xf] %vm5906, %v5839
          %5910 = vst.msk [vmem:[#allocation4 + $0x18] sm:$0xf] %vm5906, %v5841
          %5911 = vst.msk [vmem:[#allocation4 + $0x20] sm:$0xf] %vm5906, %v5843
          %5912 = vst.msk [vmem:[#allocation4 + $0x28] sm:$0xf] %vm5906, %v5845
          %5913 = vst.msk [vmem:[#allocation4 + $0x30] sm:$0xf] %vm5906, %v5847
          %5914 = vst.msk [vmem:[#allocation4 + $0x38] sm:$0xf] %vm5906, %v5849
          %5915 = vst.msk [vmem:[#allocation4 + $0x40] sm:$0xf] %vm5906, %v5851
          %5916 = vst.msk [vmem:[#allocation4 + $0x48] sm:$0xf] %vm5906, %v5853
          %5917 = vst.msk [vmem:[#allocation4 + $0x50] sm:$0xf] %vm5906, %v5855
          %5918 = vst.msk [vmem:[#allocation4 + $0x58] sm:$0xf] %vm5906, %v5857
          %5919 = vst.msk [vmem:[#allocation4 + $0x60] sm:$0xf] %vm5906, %v5859
          %5920 = vst.msk [vmem:[#allocation4 + $0x68] sm:$0xf] %vm5906, %v5861
          %5921 = vst.msk [vmem:[#allocation4 + $0x70] sm:$0xf] %vm5906, %v5863
          %5922 = vst.msk [vmem:[#allocation4 + $0x78] sm:$0xf] %vm5906, %v5865
          %5923 = vst.msk [vmem:[#allocation4 + $0x80] sm:$0xf] %vm5906, %v5867
          %5924 = vst.msk [vmem:[#allocation4 + $0x88] sm:$0xf] %vm5906, %v5869
          %5925 = vst.msk [vmem:[#allocation4 + $0x90] sm:$0xf] %vm5906, %v5871
          %5926 = vst.msk [vmem:[#allocation4 + $0x98] sm:$0xf] %vm5906, %v5873
          %5927 = vst.msk [vmem:[#allocation4 + $0xa0] sm:$0xf] %vm5906, %v5875
          %5928 = vst.msk [vmem:[#allocation4 + $0xa8] sm:$0xf] %vm5906, %v5877
          %5929 = vst.msk [vmem:[#allocation4 + $0xb0] sm:$0xf] %vm5906, %v5879
          %vm5930 = vcmask 894752
          %5931 = vst.msk [vmem:[#allocation4 + $0xb8] sm:$0x3] %vm5930, %v5881
          %v5932 = vld [vmem:[#allocation3 + $0x23] sm:$0xff]
          %v5933 = vld [vmem:[#allocation3 + $0x2b] sm:$0xff]
          %v5934 = vld [vmem:[#allocation3 + $0x33] sm:$0xff]
          %v5935 = vld [vmem:[#allocation3 + $0x3b] sm:$0xff]
          %v5936 = vld [vmem:[#allocation3 + $0x43] sm:$0xff]
          %v5937 = vld [vmem:[#allocation3 + $0x4b] sm:$0xff]
          %v5938 = vld [vmem:[#allocation3 + $0x53] sm:$0xff]
          %v5939 = vld [vmem:[#allocation3 + $0x5b] sm:$0xff]
          %v5940 = vld [vmem:[#allocation3 + $0x63] sm:$0xff]
          %v5941 = vld [vmem:[#allocation3 + $0x6b] sm:$0xff]
          %v5942 = vld [vmem:[#allocation3 + $0x73] sm:$0xff]
          %v5943 = vld [vmem:[#allocation3 + $0x7b] sm:$0xff]
          %v5944 = vld [vmem:[#allocation3 + $0x83] sm:$0xff]
          %v5945 = vld [vmem:[#allocation3 + $0x8b] sm:$0xff]
          %v5946 = vld [vmem:[#allocation3 + $0x93] sm:$0xff]
          %v5947 = vld [vmem:[#allocation3 + $0x9b] sm:$0xff]
          %v5948 = vld [vmem:[#allocation3 + $0xa3] sm:$0xff]
          %v5949 = vld [vmem:[#allocation3 + $0xab] sm:$0xff]
          %v5950 = vld [vmem:[#allocation3 + $0xb3] sm:$0xff]
          %v5951 = vld [vmem:[#allocation3 + $0xbb] sm:$0xff]
          %v5952 = vld [vmem:[#allocation3 + $0xc3] sm:$0xff]
          %v5953 = vld [vmem:[#allocation3 + $0xcb] sm:$0xff]
          %v5954 = vld [vmem:[#allocation3 + $0xd3] sm:$0xff]
          %v5955 = vld [vmem:[#allocation3 + $0xdb] sm:$0xf]
          %v5956 = vpack.c.bf16 %v5933, %v5932
          %v5957 = vpack.c.bf16 %v5935, %v5934
          %v5958 = vpack.c.bf16 %v5937, %v5936
          %v5959 = vpack.c.bf16 %v5939, %v5938
          %v5960 = vpack.c.bf16 %v5941, %v5940
          %v5961 = vpack.c.bf16 %v5943, %v5942
          %v5962 = vpack.c.bf16 %v5945, %v5944
          %v5963 = vpack.c.bf16 %v5947, %v5946
          %v5964 = vpack.c.bf16 %v5949, %v5948
          %v5965 = vpack.c.bf16 %v5951, %v5950
          %v5966 = vpack.c.bf16 %v5953, %v5952
          %v5967 = vpack.c.bf16 %v5955, %v5954
          %v5980 = vunpack.c.l.b16 %v5956
          %v5981 = vunpack.c.h.b16 %v5956
          %v5982 = vunpack.c.l.b16 %v5957
          %v5983 = vunpack.c.h.b16 %v5957
          %v5984 = vunpack.c.l.b16 %v5958
          %v5985 = vunpack.c.h.b16 %v5958
          %v5986 = vunpack.c.l.b16 %v5959
          %v5987 = vunpack.c.h.b16 %v5959
          %v5988 = vunpack.c.l.b16 %v5960
          %v5989 = vunpack.c.h.b16 %v5960
          %v5990 = vunpack.c.l.b16 %v5961
          %v5991 = vunpack.c.h.b16 %v5961
          %v5992 = vunpack.c.l.b16 %v5962
          %v5993 = vunpack.c.h.b16 %v5962
          %v5994 = vunpack.c.l.b16 %v5963
          %v5995 = vunpack.c.h.b16 %v5963
          %v5996 = vunpack.c.l.b16 %v5964
          %v5997 = vunpack.c.h.b16 %v5964
          %v5998 = vunpack.c.l.b16 %v5965
          %v5999 = vunpack.c.h.b16 %v5965
          %v6000 = vunpack.c.l.b16 %v5966
          %v6001 = vunpack.c.h.b16 %v5966
          %v6002 = vunpack.c.l.b16 %v5967
          %v6003 = vunpack.c.h.b16 %v5967
          %v6004 = vpack.c.b16 %v5980, %v5980
          %v6005 = vpack.c.b16 %v5981, %v5981
          %v6006 = vpack.c.b16 %v5982, %v5982
          %v6007 = vpack.c.b16 %v5983, %v5983
          %v6008 = vpack.c.b16 %v5984, %v5984
          %v6009 = vpack.c.b16 %v5985, %v5985
          %v6010 = vpack.c.b16 %v5986, %v5986
          %v6011 = vpack.c.b16 %v5987, %v5987
          %v6012 = vpack.c.b16 %v5988, %v5988
          %v6013 = vpack.c.b16 %v5989, %v5989
          %v6014 = vpack.c.b16 %v5990, %v5990
          %v6015 = vpack.c.b16 %v5991, %v5991
          %v6016 = vpack.c.b16 %v5992, %v5992
          %v6017 = vpack.c.b16 %v5993, %v5993
          %v6018 = vpack.c.b16 %v5994, %v5994
          %v6019 = vpack.c.b16 %v5995, %v5995
          %v6020 = vpack.c.b16 %v5996, %v5996
          %v6021 = vpack.c.b16 %v5997, %v5997
          %v6022 = vpack.c.b16 %v5998, %v5998
          %v6023 = vpack.c.b16 %v5999, %v5999
          %v6024 = vpack.c.b16 %v6000, %v6000
          %v6025 = vpack.c.b16 %v6001, %v6001
          %v6026 = vpack.c.b16 %v6002, %v6002
          %v6027 = vpack.c.b16 %v6003, %v6003
          %6028 = vrot.lane.b32.xlu0 %v6004, 110
          %v6029 = vpop.permute.xlu0 %6028
          %6030 = vrot.lane.b32.xlu0 %v6005, 110
          %v6031 = vpop.permute.xlu0 %6030
          %6032 = vrot.lane.b32.xlu0 %v6006, 110
          %v6033 = vpop.permute.xlu0 %6032
          %6034 = vrot.lane.b32.xlu0 %v6007, 110
          %v6035 = vpop.permute.xlu0 %6034
          %6036 = vrot.lane.b32.xlu0 %v6008, 110
          %v6037 = vpop.permute.xlu0 %6036
          %6038 = vrot.lane.b32.xlu0 %v6009, 110
          %v6039 = vpop.permute.xlu0 %6038
          %6040 = vrot.lane.b32.xlu0 %v6010, 110
          %v6041 = vpop.permute.xlu0 %6040
          %6042 = vrot.lane.b32.xlu0 %v6011, 110
          %v6043 = vpop.permute.xlu0 %6042
          %6044 = vrot.lane.b32.xlu0 %v6012, 110
          %v6045 = vpop.permute.xlu0 %6044
          %6046 = vrot.lane.b32.xlu0 %v6013, 110
          %v6047 = vpop.permute.xlu0 %6046
          %6048 = vrot.lane.b32.xlu0 %v6014, 110
          %v6049 = vpop.permute.xlu0 %6048
          %6050 = vrot.lane.b32.xlu0 %v6015, 110
          %v6051 = vpop.permute.xlu0 %6050
          %6052 = vrot.lane.b32.xlu0 %v6016, 110
          %v6053 = vpop.permute.xlu0 %6052
          %6054 = vrot.lane.b32.xlu0 %v6017, 110
          %v6055 = vpop.permute.xlu0 %6054
          %6056 = vrot.lane.b32.xlu0 %v6018, 110
          %v6057 = vpop.permute.xlu0 %6056
          %6058 = vrot.lane.b32.xlu0 %v6019, 110
          %v6059 = vpop.permute.xlu0 %6058
          %6060 = vrot.lane.b32.xlu0 %v6020, 110
          %v6061 = vpop.permute.xlu0 %6060
          %6062 = vrot.lane.b32.xlu0 %v6021, 110
          %v6063 = vpop.permute.xlu0 %6062
          %6064 = vrot.lane.b32.xlu0 %v6022, 110
          %v6065 = vpop.permute.xlu0 %6064
          %6066 = vrot.lane.b32.xlu0 %v6023, 110
          %v6067 = vpop.permute.xlu0 %6066
          %6068 = vrot.lane.b32.xlu0 %v6024, 110
          %v6069 = vpop.permute.xlu0 %6068
          %6070 = vrot.lane.b32.xlu0 %v6025, 110
          %v6071 = vpop.permute.xlu0 %6070
          %6072 = vrot.lane.b32.xlu0 %v6026, 110
          %v6073 = vpop.permute.xlu0 %6072
          %6074 = vrot.lane.b32.xlu0 %v6027, 110
          %v6075 = vpop.permute.xlu0 %6074
          %vm6100 = vcmask 978800
          %6101 = vst.msk [vmem:[#allocation4] sm:$0xf] %vm6100, %v6029
          %6102 = vst.msk [vmem:[#allocation4 + $0x8] sm:$0xf] %vm6100, %v6031
          %6103 = vst.msk [vmem:[#allocation4 + $0x10] sm:$0xf] %vm6100, %v6033
          %6104 = vst.msk [vmem:[#allocation4 + $0x18] sm:$0xf] %vm6100, %v6035
          %6105 = vst.msk [vmem:[#allocation4 + $0x20] sm:$0xf] %vm6100, %v6037
          %6106 = vst.msk [vmem:[#allocation4 + $0x28] sm:$0xf] %vm6100, %v6039
          %6107 = vst.msk [vmem:[#allocation4 + $0x30] sm:$0xf] %vm6100, %v6041
          %6108 = vst.msk [vmem:[#allocation4 + $0x38] sm:$0xf] %vm6100, %v6043
          %6109 = vst.msk [vmem:[#allocation4 + $0x40] sm:$0xf] %vm6100, %v6045
          %6110 = vst.msk [vmem:[#allocation4 + $0x48] sm:$0xf] %vm6100, %v6047
          %6111 = vst.msk [vmem:[#allocation4 + $0x50] sm:$0xf] %vm6100, %v6049
          %6112 = vst.msk [vmem:[#allocation4 + $0x58] sm:$0xf] %vm6100, %v6051
          %6113 = vst.msk [vmem:[#allocation4 + $0x60] sm:$0xf] %vm6100, %v6053
          %6114 = vst.msk [vmem:[#allocation4 + $0x68] sm:$0xf] %vm6100, %v6055
          %6115 = vst.msk [vmem:[#allocation4 + $0x70] sm:$0xf] %vm6100, %v6057
          %6116 = vst.msk [vmem:[#allocation4 + $0x78] sm:$0xf] %vm6100, %v6059
          %6117 = vst.msk [vmem:[#allocation4 + $0x80] sm:$0xf] %vm6100, %v6061
          %6118 = vst.msk [vmem:[#allocation4 + $0x88] sm:$0xf] %vm6100, %v6063
          %6119 = vst.msk [vmem:[#allocation4 + $0x90] sm:$0xf] %vm6100, %v6065
          %6120 = vst.msk [vmem:[#allocation4 + $0x98] sm:$0xf] %vm6100, %v6067
          %6121 = vst.msk [vmem:[#allocation4 + $0xa0] sm:$0xf] %vm6100, %v6069
          %6122 = vst.msk [vmem:[#allocation4 + $0xa8] sm:$0xf] %vm6100, %v6071
          %6123 = vst.msk [vmem:[#allocation4 + $0xb0] sm:$0xf] %vm6100, %v6073
          %vm6124 = vcmask 976752
          %6125 = vst.msk [vmem:[#allocation4 + $0xb8] sm:$0x3] %vm6124, %v6075
          %v6126 = vld [vmem:[#allocation3 + $0x30] sm:$0xff]
          %v6127 = vld [vmem:[#allocation3 + $0x38] sm:$0xff]
          %v6128 = vld [vmem:[#allocation3 + $0x40] sm:$0xff]
          %v6129 = vld [vmem:[#allocation3 + $0x48] sm:$0xff]
          %v6130 = vld [vmem:[#allocation3 + $0x50] sm:$0xff]
          %v6131 = vld [vmem:[#allocation3 + $0x58] sm:$0xff]
          %v6132 = vld [vmem:[#allocation3 + $0x60] sm:$0xff]
          %v6133 = vld [vmem:[#allocation3 + $0x68] sm:$0xff]
          %v6134 = vld [vmem:[#allocation3 + $0x70] sm:$0xff]
          %v6135 = vld [vmem:[#allocation3 + $0x78] sm:$0xff]
          %v6136 = vld [vmem:[#allocation3 + $0x80] sm:$0xff]
          %v6137 = vld [vmem:[#allocation3 + $0x88] sm:$0xff]
          %v6138 = vld [vmem:[#allocation3 + $0x90] sm:$0xff]
          %v6139 = vld [vmem:[#allocation3 + $0x98] sm:$0xff]
          %v6140 = vld [vmem:[#allocation3 + $0xa0] sm:$0xff]
          %v6141 = vld [vmem:[#allocation3 + $0xa8] sm:$0xff]
          %v6142 = vld [vmem:[#allocation3 + $0xb0] sm:$0xff]
          %v6143 = vld [vmem:[#allocation3 + $0xb8] sm:$0xff]
          %v6144 = vld [vmem:[#allocation3 + $0xc0] sm:$0xff]
          %v6145 = vld [vmem:[#allocation3 + $0xc8] sm:$0xff]
          %v6146 = vld [vmem:[#allocation3 + $0xd0] sm:$0xff]
          %v6147 = vld [vmem:[#allocation3 + $0xd8] sm:$0xff]
          %v6148 = vld [vmem:[#allocation3 + $0xe0] sm:$0xff]
          %v6149 = vld [vmem:[#allocation3 + $0xe8] sm:$0xf]
          %v6150 = vpack.c.bf16 %v6127, %v6126
          %v6151 = vpack.c.bf16 %v6129, %v6128
          %v6152 = vpack.c.bf16 %v6131, %v6130
          %v6153 = vpack.c.bf16 %v6133, %v6132
          %v6154 = vpack.c.bf16 %v6135, %v6134
          %v6155 = vpack.c.bf16 %v6137, %v6136
          %v6156 = vpack.c.bf16 %v6139, %v6138
          %v6157 = vpack.c.bf16 %v6141, %v6140
          %v6158 = vpack.c.bf16 %v6143, %v6142
          %v6159 = vpack.c.bf16 %v6145, %v6144
          %v6160 = vpack.c.bf16 %v6147, %v6146
          %v6161 = vpack.c.bf16 %v6149, %v6148
          %v6174 = vunpack.c.l.b16 %v6150
          %v6175 = vunpack.c.h.b16 %v6150
          %v6176 = vunpack.c.l.b16 %v6151
          %v6177 = vunpack.c.h.b16 %v6151
          %v6178 = vunpack.c.l.b16 %v6152
          %v6179 = vunpack.c.h.b16 %v6152
          %v6180 = vunpack.c.l.b16 %v6153
          %v6181 = vunpack.c.h.b16 %v6153
          %v6182 = vunpack.c.l.b16 %v6154
          %v6183 = vunpack.c.h.b16 %v6154
          %v6184 = vunpack.c.l.b16 %v6155
          %v6185 = vunpack.c.h.b16 %v6155
          %v6186 = vunpack.c.l.b16 %v6156
          %v6187 = vunpack.c.h.b16 %v6156
          %v6188 = vunpack.c.l.b16 %v6157
          %v6189 = vunpack.c.h.b16 %v6157
          %v6190 = vunpack.c.l.b16 %v6158
          %v6191 = vunpack.c.h.b16 %v6158
          %v6192 = vunpack.c.l.b16 %v6159
          %v6193 = vunpack.c.h.b16 %v6159
          %v6194 = vunpack.c.l.b16 %v6160
          %v6195 = vunpack.c.h.b16 %v6160
          %v6196 = vunpack.c.l.b16 %v6161
          %v6197 = vunpack.c.h.b16 %v6161
          %v6198 = vpack.c.b16 %v6174, %v6174
          %v6199 = vpack.c.b16 %v6175, %v6175
          %v6200 = vpack.c.b16 %v6176, %v6176
          %v6201 = vpack.c.b16 %v6177, %v6177
          %v6202 = vpack.c.b16 %v6178, %v6178
          %v6203 = vpack.c.b16 %v6179, %v6179
          %v6204 = vpack.c.b16 %v6180, %v6180
          %v6205 = vpack.c.b16 %v6181, %v6181
          %v6206 = vpack.c.b16 %v6182, %v6182
          %v6207 = vpack.c.b16 %v6183, %v6183
          %v6208 = vpack.c.b16 %v6184, %v6184
          %v6209 = vpack.c.b16 %v6185, %v6185
          %v6210 = vpack.c.b16 %v6186, %v6186
          %v6211 = vpack.c.b16 %v6187, %v6187
          %v6212 = vpack.c.b16 %v6188, %v6188
          %v6213 = vpack.c.b16 %v6189, %v6189
          %v6214 = vpack.c.b16 %v6190, %v6190
          %v6215 = vpack.c.b16 %v6191, %v6191
          %v6216 = vpack.c.b16 %v6192, %v6192
          %v6217 = vpack.c.b16 %v6193, %v6193
          %v6218 = vpack.c.b16 %v6194, %v6194
          %v6219 = vpack.c.b16 %v6195, %v6195
          %v6220 = vpack.c.b16 %v6196, %v6196
          %v6221 = vpack.c.b16 %v6197, %v6197
          %6222 = vrot.lane.b32.xlu0 %v6198, 120
          %v6223 = vpop.permute.xlu0 %6222
          %6224 = vrot.lane.b32.xlu0 %v6199, 120
          %v6225 = vpop.permute.xlu0 %6224
          %6226 = vrot.lane.b32.xlu0 %v6200, 120
          %v6227 = vpop.permute.xlu0 %6226
          %6228 = vrot.lane.b32.xlu0 %v6201, 120
          %v6229 = vpop.permute.xlu0 %6228
          %6230 = vrot.lane.b32.xlu0 %v6202, 120
          %v6231 = vpop.permute.xlu0 %6230
          %6232 = vrot.lane.b32.xlu0 %v6203, 120
          %v6233 = vpop.permute.xlu0 %6232
          %6234 = vrot.lane.b32.xlu0 %v6204, 120
          %v6235 = vpop.permute.xlu0 %6234
          %6236 = vrot.lane.b32.xlu0 %v6205, 120
          %v6237 = vpop.permute.xlu0 %6236
          %6238 = vrot.lane.b32.xlu0 %v6206, 120
          %v6239 = vpop.permute.xlu0 %6238
          %6240 = vrot.lane.b32.xlu0 %v6207, 120
          %v6241 = vpop.permute.xlu0 %6240
          %6242 = vrot.lane.b32.xlu0 %v6208, 120
          %v6243 = vpop.permute.xlu0 %6242
          %6244 = vrot.lane.b32.xlu0 %v6209, 120
          %v6245 = vpop.permute.xlu0 %6244
          %6246 = vrot.lane.b32.xlu0 %v6210, 120
          %v6247 = vpop.permute.xlu0 %6246
          %6248 = vrot.lane.b32.xlu0 %v6211, 120
          %v6249 = vpop.permute.xlu0 %6248
          %6250 = vrot.lane.b32.xlu0 %v6212, 120
          %v6251 = vpop.permute.xlu0 %6250
          %6252 = vrot.lane.b32.xlu0 %v6213, 120
          %v6253 = vpop.permute.xlu0 %6252
          %6254 = vrot.lane.b32.xlu0 %v6214, 120
          %v6255 = vpop.permute.xlu0 %6254
          %6256 = vrot.lane.b32.xlu0 %v6215, 120
          %v6257 = vpop.permute.xlu0 %6256
          %6258 = vrot.lane.b32.xlu0 %v6216, 120
          %v6259 = vpop.permute.xlu0 %6258
          %6260 = vrot.lane.b32.xlu0 %v6217, 120
          %v6261 = vpop.permute.xlu0 %6260
          %6262 = vrot.lane.b32.xlu0 %v6218, 120
          %v6263 = vpop.permute.xlu0 %6262
          %6264 = vrot.lane.b32.xlu0 %v6219, 120
          %v6265 = vpop.permute.xlu0 %6264
          %6266 = vrot.lane.b32.xlu0 %v6220, 120
          %v6267 = vpop.permute.xlu0 %6266
          %6268 = vrot.lane.b32.xlu0 %v6221, 120
          %v6269 = vpop.permute.xlu0 %6268
          %v6270 = vrot.slane %v6223, 4
          %v6271 = vrot.slane %v6225, 4
          %v6272 = vrot.slane %v6227, 4
          %v6273 = vrot.slane %v6229, 4
          %v6274 = vrot.slane %v6231, 4
          %v6275 = vrot.slane %v6233, 4
          %v6276 = vrot.slane %v6235, 4
          %v6277 = vrot.slane %v6237, 4
          %v6278 = vrot.slane %v6239, 4
          %v6279 = vrot.slane %v6241, 4
          %v6280 = vrot.slane %v6243, 4
          %v6281 = vrot.slane %v6245, 4
          %v6282 = vrot.slane %v6247, 4
          %v6283 = vrot.slane %v6249, 4
          %v6284 = vrot.slane %v6251, 4
          %v6285 = vrot.slane %v6253, 4
          %v6286 = vrot.slane %v6255, 4
          %v6287 = vrot.slane %v6257, 4
          %v6288 = vrot.slane %v6259, 4
          %v6289 = vrot.slane %v6261, 4
          %v6290 = vrot.slane %v6263, 4
          %v6291 = vrot.slane %v6265, 4
          %v6292 = vrot.slane %v6267, 4
          %v6293 = vrot.slane %v6269, 4
          %vm6294 = vcmask 982016
          %v6295 = vsel %vm6294, %v6270, %v6223
          %v6296 = vsel %vm6294, %v6271, %v6225
          %v6297 = vsel %vm6294, %v6272, %v6227
          %v6298 = vsel %vm6294, %v6273, %v6229
          %v6299 = vsel %vm6294, %v6274, %v6231
          %v6300 = vsel %vm6294, %v6275, %v6233
          %v6301 = vsel %vm6294, %v6276, %v6235
          %v6302 = vsel %vm6294, %v6277, %v6237
          %v6303 = vsel %vm6294, %v6278, %v6239
          %v6304 = vsel %vm6294, %v6279, %v6241
          %v6305 = vsel %vm6294, %v6280, %v6243
          %v6306 = vsel %vm6294, %v6281, %v6245
          %v6307 = vsel %vm6294, %v6282, %v6247
          %v6308 = vsel %vm6294, %v6283, %v6249
          %v6309 = vsel %vm6294, %v6284, %v6251
          %v6310 = vsel %vm6294, %v6285, %v6253
          %v6311 = vsel %vm6294, %v6286, %v6255
          %v6312 = vsel %vm6294, %v6287, %v6257
          %v6313 = vsel %vm6294, %v6288, %v6259
          %v6314 = vsel %vm6294, %v6289, %v6261
          %v6315 = vsel %vm6294, %v6290, %v6263
          %v6316 = vsel %vm6294, %v6291, %v6265
          %v6317 = vsel %vm6294, %v6292, %v6267
          %v6318 = vsel %vm6294, %v6293, %v6269
          %vm6343 = vcmask 1044416
          %vm6344 = vcmask 15364
          %vm6345 = vmor %vm6344, %vm6343
          %6346 = vst.msk [vmem:[#allocation4] sm:$0xff] %vm6345, %v6295
          %6347 = vst.msk [vmem:[#allocation4 + $0x8] sm:$0xff] %vm6345, %v6296
          %6348 = vst.msk [vmem:[#allocation4 + $0x10] sm:$0xff] %vm6345, %v6297
          %6349 = vst.msk [vmem:[#allocation4 + $0x18] sm:$0xff] %vm6345, %v6298
          %6350 = vst.msk [vmem:[#allocation4 + $0x20] sm:$0xff] %vm6345, %v6299
          %6351 = vst.msk [vmem:[#allocation4 + $0x28] sm:$0xff] %vm6345, %v6300
          %6352 = vst.msk [vmem:[#allocation4 + $0x30] sm:$0xff] %vm6345, %v6301
          %6353 = vst.msk [vmem:[#allocation4 + $0x38] sm:$0xff] %vm6345, %v6302
          %6354 = vst.msk [vmem:[#allocation4 + $0x40] sm:$0xff] %vm6345, %v6303
          %6355 = vst.msk [vmem:[#allocation4 + $0x48] sm:$0xff] %vm6345, %v6304
          %6356 = vst.msk [vmem:[#allocation4 + $0x50] sm:$0xff] %vm6345, %v6305
          %6357 = vst.msk [vmem:[#allocation4 + $0x58] sm:$0xff] %vm6345, %v6306
          %6358 = vst.msk [vmem:[#allocation4 + $0x60] sm:$0xff] %vm6345, %v6307
          %6359 = vst.msk [vmem:[#allocation4 + $0x68] sm:$0xff] %vm6345, %v6308
          %6360 = vst.msk [vmem:[#allocation4 + $0x70] sm:$0xff] %vm6345, %v6309
          %6361 = vst.msk [vmem:[#allocation4 + $0x78] sm:$0xff] %vm6345, %v6310
          %6362 = vst.msk [vmem:[#allocation4 + $0x80] sm:$0xff] %vm6345, %v6311
          %6363 = vst.msk [vmem:[#allocation4 + $0x88] sm:$0xff] %vm6345, %v6312
          %6364 = vst.msk [vmem:[#allocation4 + $0x90] sm:$0xff] %vm6345, %v6313
          %6365 = vst.msk [vmem:[#allocation4 + $0x98] sm:$0xff] %vm6345, %v6314
          %6366 = vst.msk [vmem:[#allocation4 + $0xa0] sm:$0xff] %vm6345, %v6315
          %6367 = vst.msk [vmem:[#allocation4 + $0xa8] sm:$0xff] %vm6345, %v6316
          %6368 = vst.msk [vmem:[#allocation4 + $0xb0] sm:$0xff] %vm6345, %v6317
          %vm6369 = vcmask 1042368
          %vm6370 = vcmask 13316
          %vm6371 = vmor %vm6370, %vm6369
          %6372 = vst.msk [vmem:[#allocation4 + $0xb8] sm:$0x33] %vm6371, %v6318
          %v6373 = vld [vmem:[#allocation3 + $0x31] sm:$0xff]
          %v6374 = vld [vmem:[#allocation3 + $0x39] sm:$0xff]
          %v6375 = vld [vmem:[#allocation3 + $0x41] sm:$0xff]
          %v6376 = vld [vmem:[#allocation3 + $0x49] sm:$0xff]
          %v6377 = vld [vmem:[#allocation3 + $0x51] sm:$0xff]
          %v6378 = vld [vmem:[#allocation3 + $0x59] sm:$0xff]
          %v6379 = vld [vmem:[#allocation3 + $0x61] sm:$0xff]
          %v6380 = vld [vmem:[#allocation3 + $0x69] sm:$0xff]
          %v6381 = vld [vmem:[#allocation3 + $0x71] sm:$0xff]
          %v6382 = vld [vmem:[#allocation3 + $0x79] sm:$0xff]
          %v6383 = vld [vmem:[#allocation3 + $0x81] sm:$0xff]
          %v6384 = vld [vmem:[#allocation3 + $0x89] sm:$0xff]
          %v6385 = vld [vmem:[#allocation3 + $0x91] sm:$0xff]
          %v6386 = vld [vmem:[#allocation3 + $0x99] sm:$0xff]
          %v6387 = vld [vmem:[#allocation3 + $0xa1] sm:$0xff]
          %v6388 = vld [vmem:[#allocation3 + $0xa9] sm:$0xff]
          %v6389 = vld [vmem:[#allocation3 + $0xb1] sm:$0xff]
          %v6390 = vld [vmem:[#allocation3 + $0xb9] sm:$0xff]
          %v6391 = vld [vmem:[#allocation3 + $0xc1] sm:$0xff]
          %v6392 = vld [vmem:[#allocation3 + $0xc9] sm:$0xff]
          %v6393 = vld [vmem:[#allocation3 + $0xd1] sm:$0xff]
          %v6394 = vld [vmem:[#allocation3 + $0xd9] sm:$0xff]
          %v6395 = vld [vmem:[#allocation3 + $0xe1] sm:$0xff]
          %v6396 = vld [vmem:[#allocation3 + $0xe9] sm:$0xf]
          %v6397 = vpack.c.bf16 %v6374, %v6373
          %v6398 = vpack.c.bf16 %v6376, %v6375
          %v6399 = vpack.c.bf16 %v6378, %v6377
          %v6400 = vpack.c.bf16 %v6380, %v6379
          %v6401 = vpack.c.bf16 %v6382, %v6381
          %v6402 = vpack.c.bf16 %v6384, %v6383
          %v6403 = vpack.c.bf16 %v6386, %v6385
          %v6404 = vpack.c.bf16 %v6388, %v6387
          %v6405 = vpack.c.bf16 %v6390, %v6389
          %v6406 = vpack.c.bf16 %v6392, %v6391
          %v6407 = vpack.c.bf16 %v6394, %v6393
          %v6408 = vpack.c.bf16 %v6396, %v6395
          %v6421 = vunpack.c.l.b16 %v6397
          %v6422 = vunpack.c.h.b16 %v6397
          %v6423 = vunpack.c.l.b16 %v6398
          %v6424 = vunpack.c.h.b16 %v6398
          %v6425 = vunpack.c.l.b16 %v6399
          %v6426 = vunpack.c.h.b16 %v6399
          %v6427 = vunpack.c.l.b16 %v6400
          %v6428 = vunpack.c.h.b16 %v6400
          %v6429 = vunpack.c.l.b16 %v6401
          %v6430 = vunpack.c.h.b16 %v6401
          %v6431 = vunpack.c.l.b16 %v6402
          %v6432 = vunpack.c.h.b16 %v6402
          %v6433 = vunpack.c.l.b16 %v6403
          %v6434 = vunpack.c.h.b16 %v6403
          %v6435 = vunpack.c.l.b16 %v6404
          %v6436 = vunpack.c.h.b16 %v6404
          %v6437 = vunpack.c.l.b16 %v6405
          %v6438 = vunpack.c.h.b16 %v6405
          %v6439 = vunpack.c.l.b16 %v6406
          %v6440 = vunpack.c.h.b16 %v6406
          %v6441 = vunpack.c.l.b16 %v6407
          %v6442 = vunpack.c.h.b16 %v6407
          %v6443 = vunpack.c.l.b16 %v6408
          %v6444 = vunpack.c.h.b16 %v6408
          %v6445 = vpack.c.b16 %v6421, %v6421
          %v6446 = vpack.c.b16 %v6422, %v6422
          %v6447 = vpack.c.b16 %v6423, %v6423
          %v6448 = vpack.c.b16 %v6424, %v6424
          %v6449 = vpack.c.b16 %v6425, %v6425
          %v6450 = vpack.c.b16 %v6426, %v6426
          %v6451 = vpack.c.b16 %v6427, %v6427
          %v6452 = vpack.c.b16 %v6428, %v6428
          %v6453 = vpack.c.b16 %v6429, %v6429
          %v6454 = vpack.c.b16 %v6430, %v6430
          %v6455 = vpack.c.b16 %v6431, %v6431
          %v6456 = vpack.c.b16 %v6432, %v6432
          %v6457 = vpack.c.b16 %v6433, %v6433
          %v6458 = vpack.c.b16 %v6434, %v6434
          %v6459 = vpack.c.b16 %v6435, %v6435
          %v6460 = vpack.c.b16 %v6436, %v6436
          %v6461 = vpack.c.b16 %v6437, %v6437
          %v6462 = vpack.c.b16 %v6438, %v6438
          %v6463 = vpack.c.b16 %v6439, %v6439
          %v6464 = vpack.c.b16 %v6440, %v6440
          %v6465 = vpack.c.b16 %v6441, %v6441
          %v6466 = vpack.c.b16 %v6442, %v6442
          %v6467 = vpack.c.b16 %v6443, %v6443
          %v6468 = vpack.c.b16 %v6444, %v6444
          %6469 = vrot.lane.b32.xlu0 %v6445, 2
          %v6470 = vpop.permute.xlu0 %6469
          %6471 = vrot.lane.b32.xlu0 %v6446, 2
          %v6472 = vpop.permute.xlu0 %6471
          %6473 = vrot.lane.b32.xlu0 %v6447, 2
          %v6474 = vpop.permute.xlu0 %6473
          %6475 = vrot.lane.b32.xlu0 %v6448, 2
          %v6476 = vpop.permute.xlu0 %6475
          %6477 = vrot.lane.b32.xlu0 %v6449, 2
          %v6478 = vpop.permute.xlu0 %6477
          %6479 = vrot.lane.b32.xlu0 %v6450, 2
          %v6480 = vpop.permute.xlu0 %6479
          %6481 = vrot.lane.b32.xlu0 %v6451, 2
          %v6482 = vpop.permute.xlu0 %6481
          %6483 = vrot.lane.b32.xlu0 %v6452, 2
          %v6484 = vpop.permute.xlu0 %6483
          %6485 = vrot.lane.b32.xlu0 %v6453, 2
          %v6486 = vpop.permute.xlu0 %6485
          %6487 = vrot.lane.b32.xlu0 %v6454, 2
          %v6488 = vpop.permute.xlu0 %6487
          %6489 = vrot.lane.b32.xlu0 %v6455, 2
          %v6490 = vpop.permute.xlu0 %6489
          %6491 = vrot.lane.b32.xlu0 %v6456, 2
          %v6492 = vpop.permute.xlu0 %6491
          %6493 = vrot.lane.b32.xlu0 %v6457, 2
          %v6494 = vpop.permute.xlu0 %6493
          %6495 = vrot.lane.b32.xlu0 %v6458, 2
          %v6496 = vpop.permute.xlu0 %6495
          %6497 = vrot.lane.b32.xlu0 %v6459, 2
          %v6498 = vpop.permute.xlu0 %6497
          %6499 = vrot.lane.b32.xlu0 %v6460, 2
          %v6500 = vpop.permute.xlu0 %6499
          %6501 = vrot.lane.b32.xlu0 %v6461, 2
          %v6502 = vpop.permute.xlu0 %6501
          %6503 = vrot.lane.b32.xlu0 %v6462, 2
          %v6504 = vpop.permute.xlu0 %6503
          %6505 = vrot.lane.b32.xlu0 %v6463, 2
          %v6506 = vpop.permute.xlu0 %6505
          %6507 = vrot.lane.b32.xlu0 %v6464, 2
          %v6508 = vpop.permute.xlu0 %6507
          %6509 = vrot.lane.b32.xlu0 %v6465, 2
          %v6510 = vpop.permute.xlu0 %6509
          %6511 = vrot.lane.b32.xlu0 %v6466, 2
          %v6512 = vpop.permute.xlu0 %6511
          %6513 = vrot.lane.b32.xlu0 %v6467, 2
          %v6514 = vpop.permute.xlu0 %6513
          %6515 = vrot.lane.b32.xlu0 %v6468, 2
          %v6516 = vpop.permute.xlu0 %6515
          %vm6541 = vcmask 93200
          %6542 = vst.msk [vmem:[#allocation4 + $0x4] sm:$0xf] %vm6541, %v6470
          %6543 = vst.msk [vmem:[#allocation4 + $0xc] sm:$0xf] %vm6541, %v6472
          %6544 = vst.msk [vmem:[#allocation4 + $0x14] sm:$0xf] %vm6541, %v6474
          %6545 = vst.msk [vmem:[#allocation4 + $0x1c] sm:$0xf] %vm6541, %v6476
          %6546 = vst.msk [vmem:[#allocation4 + $0x24] sm:$0xf] %vm6541, %v6478
          %6547 = vst.msk [vmem:[#allocation4 + $0x2c] sm:$0xf] %vm6541, %v6480
          %6548 = vst.msk [vmem:[#allocation4 + $0x34] sm:$0xf] %vm6541, %v6482
          %6549 = vst.msk [vmem:[#allocation4 + $0x3c] sm:$0xf] %vm6541, %v6484
          %6550 = vst.msk [vmem:[#allocation4 + $0x44] sm:$0xf] %vm6541, %v6486
          %6551 = vst.msk [vmem:[#allocation4 + $0x4c] sm:$0xf] %vm6541, %v6488
          %6552 = vst.msk [vmem:[#allocation4 + $0x54] sm:$0xf] %vm6541, %v6490
          %6553 = vst.msk [vmem:[#allocation4 + $0x5c] sm:$0xf] %vm6541, %v6492
          %6554 = vst.msk [vmem:[#allocation4 + $0x64] sm:$0xf] %vm6541, %v6494
          %6555 = vst.msk [vmem:[#allocation4 + $0x6c] sm:$0xf] %vm6541, %v6496
          %6556 = vst.msk [vmem:[#allocation4 + $0x74] sm:$0xf] %vm6541, %v6498
          %6557 = vst.msk [vmem:[#allocation4 + $0x7c] sm:$0xf] %vm6541, %v6500
          %6558 = vst.msk [vmem:[#allocation4 + $0x84] sm:$0xf] %vm6541, %v6502
          %6559 = vst.msk [vmem:[#allocation4 + $0x8c] sm:$0xf] %vm6541, %v6504
          %6560 = vst.msk [vmem:[#allocation4 + $0x94] sm:$0xf] %vm6541, %v6506
          %6561 = vst.msk [vmem:[#allocation4 + $0x9c] sm:$0xf] %vm6541, %v6508
          %6562 = vst.msk [vmem:[#allocation4 + $0xa4] sm:$0xf] %vm6541, %v6510
          %6563 = vst.msk [vmem:[#allocation4 + $0xac] sm:$0xf] %vm6541, %v6512
          %6564 = vst.msk [vmem:[#allocation4 + $0xb4] sm:$0xf] %vm6541, %v6514
          %vm6565 = vcmask 91152
          %6566 = vst.msk [vmem:[#allocation4 + $0xbc] sm:$0x3] %vm6565, %v6516
          %v6567 = vld [vmem:[#allocation3 + $0x32] sm:$0xff]
          %v6568 = vld [vmem:[#allocation3 + $0x3a] sm:$0xff]
          %v6569 = vld [vmem:[#allocation3 + $0x42] sm:$0xff]
          %v6570 = vld [vmem:[#allocation3 + $0x4a] sm:$0xff]
          %v6571 = vld [vmem:[#allocation3 + $0x52] sm:$0xff]
          %v6572 = vld [vmem:[#allocation3 + $0x5a] sm:$0xff]
          %v6573 = vld [vmem:[#allocation3 + $0x62] sm:$0xff]
          %v6574 = vld [vmem:[#allocation3 + $0x6a] sm:$0xff]
          %v6575 = vld [vmem:[#allocation3 + $0x72] sm:$0xff]
          %v6576 = vld [vmem:[#allocation3 + $0x7a] sm:$0xff]
          %v6577 = vld [vmem:[#allocation3 + $0x82] sm:$0xff]
          %v6578 = vld [vmem:[#allocation3 + $0x8a] sm:$0xff]
          %v6579 = vld [vmem:[#allocation3 + $0x92] sm:$0xff]
          %v6580 = vld [vmem:[#allocation3 + $0x9a] sm:$0xff]
          %v6581 = vld [vmem:[#allocation3 + $0xa2] sm:$0xff]
          %v6582 = vld [vmem:[#allocation3 + $0xaa] sm:$0xff]
          %v6583 = vld [vmem:[#allocation3 + $0xb2] sm:$0xff]
          %v6584 = vld [vmem:[#allocation3 + $0xba] sm:$0xff]
          %v6585 = vld [vmem:[#allocation3 + $0xc2] sm:$0xff]
          %v6586 = vld [vmem:[#allocation3 + $0xca] sm:$0xff]
          %v6587 = vld [vmem:[#allocation3 + $0xd2] sm:$0xff]
          %v6588 = vld [vmem:[#allocation3 + $0xda] sm:$0xff]
          %v6589 = vld [vmem:[#allocation3 + $0xe2] sm:$0xff]
          %v6590 = vld [vmem:[#allocation3 + $0xea] sm:$0xf]
          %v6591 = vpack.c.bf16 %v6568, %v6567
          %v6592 = vpack.c.bf16 %v6570, %v6569
          %v6593 = vpack.c.bf16 %v6572, %v6571
          %v6594 = vpack.c.bf16 %v6574, %v6573
          %v6595 = vpack.c.bf16 %v6576, %v6575
          %v6596 = vpack.c.bf16 %v6578, %v6577
          %v6597 = vpack.c.bf16 %v6580, %v6579
          %v6598 = vpack.c.bf16 %v6582, %v6581
          %v6599 = vpack.c.bf16 %v6584, %v6583
          %v6600 = vpack.c.bf16 %v6586, %v6585
          %v6601 = vpack.c.bf16 %v6588, %v6587
          %v6602 = vpack.c.bf16 %v6590, %v6589
          %v6615 = vunpack.c.l.b16 %v6591
          %v6616 = vunpack.c.h.b16 %v6591
          %v6617 = vunpack.c.l.b16 %v6592
          %v6618 = vunpack.c.h.b16 %v6592
          %v6619 = vunpack.c.l.b16 %v6593
          %v6620 = vunpack.c.h.b16 %v6593
          %v6621 = vunpack.c.l.b16 %v6594
          %v6622 = vunpack.c.h.b16 %v6594
          %v6623 = vunpack.c.l.b16 %v6595
          %v6624 = vunpack.c.h.b16 %v6595
          %v6625 = vunpack.c.l.b16 %v6596
          %v6626 = vunpack.c.h.b16 %v6596
          %v6627 = vunpack.c.l.b16 %v6597
          %v6628 = vunpack.c.h.b16 %v6597
          %v6629 = vunpack.c.l.b16 %v6598
          %v6630 = vunpack.c.h.b16 %v6598
          %v6631 = vunpack.c.l.b16 %v6599
          %v6632 = vunpack.c.h.b16 %v6599
          %v6633 = vunpack.c.l.b16 %v6600
          %v6634 = vunpack.c.h.b16 %v6600
          %v6635 = vunpack.c.l.b16 %v6601
          %v6636 = vunpack.c.h.b16 %v6601
          %v6637 = vunpack.c.l.b16 %v6602
          %v6638 = vunpack.c.h.b16 %v6602
          %v6639 = vpack.c.b16 %v6615, %v6615
          %v6640 = vpack.c.b16 %v6616, %v6616
          %v6641 = vpack.c.b16 %v6617, %v6617
          %v6642 = vpack.c.b16 %v6618, %v6618
          %v6643 = vpack.c.b16 %v6619, %v6619
          %v6644 = vpack.c.b16 %v6620, %v6620
          %v6645 = vpack.c.b16 %v6621, %v6621
          %v6646 = vpack.c.b16 %v6622, %v6622
          %v6647 = vpack.c.b16 %v6623, %v6623
          %v6648 = vpack.c.b16 %v6624, %v6624
          %v6649 = vpack.c.b16 %v6625, %v6625
          %v6650 = vpack.c.b16 %v6626, %v6626
          %v6651 = vpack.c.b16 %v6627, %v6627
          %v6652 = vpack.c.b16 %v6628, %v6628
          %v6653 = vpack.c.b16 %v6629, %v6629
          %v6654 = vpack.c.b16 %v6630, %v6630
          %v6655 = vpack.c.b16 %v6631, %v6631
          %v6656 = vpack.c.b16 %v6632, %v6632
          %v6657 = vpack.c.b16 %v6633, %v6633
          %v6658 = vpack.c.b16 %v6634, %v6634
          %v6659 = vpack.c.b16 %v6635, %v6635
          %v6660 = vpack.c.b16 %v6636, %v6636
          %v6661 = vpack.c.b16 %v6637, %v6637
          %v6662 = vpack.c.b16 %v6638, %v6638
          %6663 = vrot.lane.b32.xlu0 %v6639, 12
          %v6664 = vpop.permute.xlu0 %6663
          %6665 = vrot.lane.b32.xlu0 %v6640, 12
          %v6666 = vpop.permute.xlu0 %6665
          %6667 = vrot.lane.b32.xlu0 %v6641, 12
          %v6668 = vpop.permute.xlu0 %6667
          %6669 = vrot.lane.b32.xlu0 %v6642, 12
          %v6670 = vpop.permute.xlu0 %6669
          %6671 = vrot.lane.b32.xlu0 %v6643, 12
          %v6672 = vpop.permute.xlu0 %6671
          %6673 = vrot.lane.b32.xlu0 %v6644, 12
          %v6674 = vpop.permute.xlu0 %6673
          %6675 = vrot.lane.b32.xlu0 %v6645, 12
          %v6676 = vpop.permute.xlu0 %6675
          %6677 = vrot.lane.b32.xlu0 %v6646, 12
          %v6678 = vpop.permute.xlu0 %6677
          %6679 = vrot.lane.b32.xlu0 %v6647, 12
          %v6680 = vpop.permute.xlu0 %6679
          %6681 = vrot.lane.b32.xlu0 %v6648, 12
          %v6682 = vpop.permute.xlu0 %6681
          %6683 = vrot.lane.b32.xlu0 %v6649, 12
          %v6684 = vpop.permute.xlu0 %6683
          %6685 = vrot.lane.b32.xlu0 %v6650, 12
          %v6686 = vpop.permute.xlu0 %6685
          %6687 = vrot.lane.b32.xlu0 %v6651, 12
          %v6688 = vpop.permute.xlu0 %6687
          %6689 = vrot.lane.b32.xlu0 %v6652, 12
          %v6690 = vpop.permute.xlu0 %6689
          %6691 = vrot.lane.b32.xlu0 %v6653, 12
          %v6692 = vpop.permute.xlu0 %6691
          %6693 = vrot.lane.b32.xlu0 %v6654, 12
          %v6694 = vpop.permute.xlu0 %6693
          %6695 = vrot.lane.b32.xlu0 %v6655, 12
          %v6696 = vpop.permute.xlu0 %6695
          %6697 = vrot.lane.b32.xlu0 %v6656, 12
          %v6698 = vpop.permute.xlu0 %6697
          %6699 = vrot.lane.b32.xlu0 %v6657, 12
          %v6700 = vpop.permute.xlu0 %6699
          %6701 = vrot.lane.b32.xlu0 %v6658, 12
          %v6702 = vpop.permute.xlu0 %6701
          %6703 = vrot.lane.b32.xlu0 %v6659, 12
          %v6704 = vpop.permute.xlu0 %6703
          %6705 = vrot.lane.b32.xlu0 %v6660, 12
          %v6706 = vpop.permute.xlu0 %6705
          %6707 = vrot.lane.b32.xlu0 %v6661, 12
          %v6708 = vpop.permute.xlu0 %6707
          %6709 = vrot.lane.b32.xlu0 %v6662, 12
          %v6710 = vpop.permute.xlu0 %6709
          %vm6735 = vcmask 175200
          %6736 = vst.msk [vmem:[#allocation4 + $0x4] sm:$0xf] %vm6735, %v6664
          %6737 = vst.msk [vmem:[#allocation4 + $0xc] sm:$0xf] %vm6735, %v6666
          %6738 = vst.msk [vmem:[#allocation4 + $0x14] sm:$0xf] %vm6735, %v6668
          %6739 = vst.msk [vmem:[#allocation4 + $0x1c] sm:$0xf] %vm6735, %v6670
          %6740 = vst.msk [vmem:[#allocation4 + $0x24] sm:$0xf] %vm6735, %v6672
          %6741 = vst.msk [vmem:[#allocation4 + $0x2c] sm:$0xf] %vm6735, %v6674
          %6742 = vst.msk [vmem:[#allocation4 + $0x34] sm:$0xf] %vm6735, %v6676
          %6743 = vst.msk [vmem:[#allocation4 + $0x3c] sm:$0xf] %vm6735, %v6678
          %6744 = vst.msk [vmem:[#allocation4 + $0x44] sm:$0xf] %vm6735, %v6680
          %6745 = vst.msk [vmem:[#allocation4 + $0x4c] sm:$0xf] %vm6735, %v6682
          %6746 = vst.msk [vmem:[#allocation4 + $0x54] sm:$0xf] %vm6735, %v6684
          %6747 = vst.msk [vmem:[#allocation4 + $0x5c] sm:$0xf] %vm6735, %v6686
          %6748 = vst.msk [vmem:[#allocation4 + $0x64] sm:$0xf] %vm6735, %v6688
          %6749 = vst.msk [vmem:[#allocation4 + $0x6c] sm:$0xf] %vm6735, %v6690
          %6750 = vst.msk [vmem:[#allocation4 + $0x74] sm:$0xf] %vm6735, %v6692
          %6751 = vst.msk [vmem:[#allocation4 + $0x7c] sm:$0xf] %vm6735, %v6694
          %6752 = vst.msk [vmem:[#allocation4 + $0x84] sm:$0xf] %vm6735, %v6696
          %6753 = vst.msk [vmem:[#allocation4 + $0x8c] sm:$0xf] %vm6735, %v6698
          %6754 = vst.msk [vmem:[#allocation4 + $0x94] sm:$0xf] %vm6735, %v6700
          %6755 = vst.msk [vmem:[#allocation4 + $0x9c] sm:$0xf] %vm6735, %v6702
          %6756 = vst.msk [vmem:[#allocation4 + $0xa4] sm:$0xf] %vm6735, %v6704
          %6757 = vst.msk [vmem:[#allocation4 + $0xac] sm:$0xf] %vm6735, %v6706
          %6758 = vst.msk [vmem:[#allocation4 + $0xb4] sm:$0xf] %vm6735, %v6708
          %vm6759 = vcmask 173152
          %6760 = vst.msk [vmem:[#allocation4 + $0xbc] sm:$0x3] %vm6759, %v6710
          %v6761 = vld [vmem:[#allocation3 + $0x33] sm:$0xff]
          %v6762 = vld [vmem:[#allocation3 + $0x3b] sm:$0xff]
          %v6763 = vld [vmem:[#allocation3 + $0x43] sm:$0xff]
          %v6764 = vld [vmem:[#allocation3 + $0x4b] sm:$0xff]
          %v6765 = vld [vmem:[#allocation3 + $0x53] sm:$0xff]
          %v6766 = vld [vmem:[#allocation3 + $0x5b] sm:$0xff]
          %v6767 = vld [vmem:[#allocation3 + $0x63] sm:$0xff]
          %v6768 = vld [vmem:[#allocation3 + $0x6b] sm:$0xff]
          %v6769 = vld [vmem:[#allocation3 + $0x73] sm:$0xff]
          %v6770 = vld [vmem:[#allocation3 + $0x7b] sm:$0xff]
          %v6771 = vld [vmem:[#allocation3 + $0x83] sm:$0xff]
          %v6772 = vld [vmem:[#allocation3 + $0x8b] sm:$0xff]
          %v6773 = vld [vmem:[#allocation3 + $0x93] sm:$0xff]
          %v6774 = vld [vmem:[#allocation3 + $0x9b] sm:$0xff]
          %v6775 = vld [vmem:[#allocation3 + $0xa3] sm:$0xff]
          %v6776 = vld [vmem:[#allocation3 + $0xab] sm:$0xff]
          %v6777 = vld [vmem:[#allocation3 + $0xb3] sm:$0xff]
          %v6778 = vld [vmem:[#allocation3 + $0xbb] sm:$0xff]
          %v6779 = vld [vmem:[#allocation3 + $0xc3] sm:$0xff]
          %v6780 = vld [vmem:[#allocation3 + $0xcb] sm:$0xff]
          %v6781 = vld [vmem:[#allocation3 + $0xd3] sm:$0xff]
          %v6782 = vld [vmem:[#allocation3 + $0xdb] sm:$0xff]
          %v6783 = vld [vmem:[#allocation3 + $0xe3] sm:$0xff]
          %v6784 = vld [vmem:[#allocation3 + $0xeb] sm:$0xf]
          %v6785 = vpack.c.bf16 %v6762, %v6761
          %v6786 = vpack.c.bf16 %v6764, %v6763
          %v6787 = vpack.c.bf16 %v6766, %v6765
          %v6788 = vpack.c.bf16 %v6768, %v6767
          %v6789 = vpack.c.bf16 %v6770, %v6769
          %v6790 = vpack.c.bf16 %v6772, %v6771
          %v6791 = vpack.c.bf16 %v6774, %v6773
          %v6792 = vpack.c.bf16 %v6776, %v6775
          %v6793 = vpack.c.bf16 %v6778, %v6777
          %v6794 = vpack.c.bf16 %v6780, %v6779
          %v6795 = vpack.c.bf16 %v6782, %v6781
          %v6796 = vpack.c.bf16 %v6784, %v6783
          %v6809 = vunpack.c.l.b16 %v6785
          %v6810 = vunpack.c.h.b16 %v6785
          %v6811 = vunpack.c.l.b16 %v6786
          %v6812 = vunpack.c.h.b16 %v6786
          %v6813 = vunpack.c.l.b16 %v6787
          %v6814 = vunpack.c.h.b16 %v6787
          %v6815 = vunpack.c.l.b16 %v6788
          %v6816 = vunpack.c.h.b16 %v6788
          %v6817 = vunpack.c.l.b16 %v6789
          %v6818 = vunpack.c.h.b16 %v6789
          %v6819 = vunpack.c.l.b16 %v6790
          %v6820 = vunpack.c.h.b16 %v6790
          %v6821 = vunpack.c.l.b16 %v6791
          %v6822 = vunpack.c.h.b16 %v6791
          %v6823 = vunpack.c.l.b16 %v6792
          %v6824 = vunpack.c.h.b16 %v6792
          %v6825 = vunpack.c.l.b16 %v6793
          %v6826 = vunpack.c.h.b16 %v6793
          %v6827 = vunpack.c.l.b16 %v6794
          %v6828 = vunpack.c.h.b16 %v6794
          %v6829 = vunpack.c.l.b16 %v6795
          %v6830 = vunpack.c.h.b16 %v6795
          %v6831 = vunpack.c.l.b16 %v6796
          %v6832 = vunpack.c.h.b16 %v6796
          %v6833 = vpack.c.b16 %v6809, %v6809
          %v6834 = vpack.c.b16 %v6810, %v6810
          %v6835 = vpack.c.b16 %v6811, %v6811
          %v6836 = vpack.c.b16 %v6812, %v6812
          %v6837 = vpack.c.b16 %v6813, %v6813
          %v6838 = vpack.c.b16 %v6814, %v6814
          %v6839 = vpack.c.b16 %v6815, %v6815
          %v6840 = vpack.c.b16 %v6816, %v6816
          %v6841 = vpack.c.b16 %v6817, %v6817
          %v6842 = vpack.c.b16 %v6818, %v6818
          %v6843 = vpack.c.b16 %v6819, %v6819
          %v6844 = vpack.c.b16 %v6820, %v6820
          %v6845 = vpack.c.b16 %v6821, %v6821
          %v6846 = vpack.c.b16 %v6822, %v6822
          %v6847 = vpack.c.b16 %v6823, %v6823
          %v6848 = vpack.c.b16 %v6824, %v6824
          %v6849 = vpack.c.b16 %v6825, %v6825
          %v6850 = vpack.c.b16 %v6826, %v6826
          %v6851 = vpack.c.b16 %v6827, %v6827
          %v6852 = vpack.c.b16 %v6828, %v6828
          %v6853 = vpack.c.b16 %v6829, %v6829
          %v6854 = vpack.c.b16 %v6830, %v6830
          %v6855 = vpack.c.b16 %v6831, %v6831
          %v6856 = vpack.c.b16 %v6832, %v6832
          %6857 = vrot.lane.b32.xlu0 %v6833, 22
          %v6858 = vpop.permute.xlu0 %6857
          %6859 = vrot.lane.b32.xlu0 %v6834, 22
          %v6860 = vpop.permute.xlu0 %6859
          %6861 = vrot.lane.b32.xlu0 %v6835, 22
          %v6862 = vpop.permute.xlu0 %6861
          %6863 = vrot.lane.b32.xlu0 %v6836, 22
          %v6864 = vpop.permute.xlu0 %6863
          %6865 = vrot.lane.b32.xlu0 %v6837, 22
          %v6866 = vpop.permute.xlu0 %6865
          %6867 = vrot.lane.b32.xlu0 %v6838, 22
          %v6868 = vpop.permute.xlu0 %6867
          %6869 = vrot.lane.b32.xlu0 %v6839, 22
          %v6870 = vpop.permute.xlu0 %6869
          %6871 = vrot.lane.b32.xlu0 %v6840, 22
          %v6872 = vpop.permute.xlu0 %6871
          %6873 = vrot.lane.b32.xlu0 %v6841, 22
          %v6874 = vpop.permute.xlu0 %6873
          %6875 = vrot.lane.b32.xlu0 %v6842, 22
          %v6876 = vpop.permute.xlu0 %6875
          %6877 = vrot.lane.b32.xlu0 %v6843, 22
          %v6878 = vpop.permute.xlu0 %6877
          %6879 = vrot.lane.b32.xlu0 %v6844, 22
          %v6880 = vpop.permute.xlu0 %6879
          %6881 = vrot.lane.b32.xlu0 %v6845, 22
          %v6882 = vpop.permute.xlu0 %6881
          %6883 = vrot.lane.b32.xlu0 %v6846, 22
          %v6884 = vpop.permute.xlu0 %6883
          %6885 = vrot.lane.b32.xlu0 %v6847, 22
          %v6886 = vpop.permute.xlu0 %6885
          %6887 = vrot.lane.b32.xlu0 %v6848, 22
          %v6888 = vpop.permute.xlu0 %6887
          %6889 = vrot.lane.b32.xlu0 %v6849, 22
          %v6890 = vpop.permute.xlu0 %6889
          %6891 = vrot.lane.b32.xlu0 %v6850, 22
          %v6892 = vpop.permute.xlu0 %6891
          %6893 = vrot.lane.b32.xlu0 %v6851, 22
          %v6894 = vpop.permute.xlu0 %6893
          %6895 = vrot.lane.b32.xlu0 %v6852, 22
          %v6896 = vpop.permute.xlu0 %6895
          %6897 = vrot.lane.b32.xlu0 %v6853, 22
          %v6898 = vpop.permute.xlu0 %6897
          %6899 = vrot.lane.b32.xlu0 %v6854, 22
          %v6900 = vpop.permute.xlu0 %6899
          %6901 = vrot.lane.b32.xlu0 %v6855, 22
          %v6902 = vpop.permute.xlu0 %6901
          %6903 = vrot.lane.b32.xlu0 %v6856, 22
          %v6904 = vpop.permute.xlu0 %6903
          %vm6929 = vcmask 257200
          %6930 = vst.msk [vmem:[#allocation4 + $0x4] sm:$0xf] %vm6929, %v6858
          %6931 = vst.msk [vmem:[#allocation4 + $0xc] sm:$0xf] %vm6929, %v6860
          %6932 = vst.msk [vmem:[#allocation4 + $0x14] sm:$0xf] %vm6929, %v6862
          %6933 = vst.msk [vmem:[#allocation4 + $0x1c] sm:$0xf] %vm6929, %v6864
          %6934 = vst.msk [vmem:[#allocation4 + $0x24] sm:$0xf] %vm6929, %v6866
          %6935 = vst.msk [vmem:[#allocation4 + $0x2c] sm:$0xf] %vm6929, %v6868
          %6936 = vst.msk [vmem:[#allocation4 + $0x34] sm:$0xf] %vm6929, %v6870
          %6937 = vst.msk [vmem:[#allocation4 + $0x3c] sm:$0xf] %vm6929, %v6872
          %6938 = vst.msk [vmem:[#allocation4 + $0x44] sm:$0xf] %vm6929, %v6874
          %6939 = vst.msk [vmem:[#allocation4 + $0x4c] sm:$0xf] %vm6929, %v6876
          %6940 = vst.msk [vmem:[#allocation4 + $0x54] sm:$0xf] %vm6929, %v6878
          %6941 = vst.msk [vmem:[#allocation4 + $0x5c] sm:$0xf] %vm6929, %v6880
          %6942 = vst.msk [vmem:[#allocation4 + $0x64] sm:$0xf] %vm6929, %v6882
          %6943 = vst.msk [vmem:[#allocation4 + $0x6c] sm:$0xf] %vm6929, %v6884
          %6944 = vst.msk [vmem:[#allocation4 + $0x74] sm:$0xf] %vm6929, %v6886
          %6945 = vst.msk [vmem:[#allocation4 + $0x7c] sm:$0xf] %vm6929, %v6888
          %6946 = vst.msk [vmem:[#allocation4 + $0x84] sm:$0xf] %vm6929, %v6890
          %6947 = vst.msk [vmem:[#allocation4 + $0x8c] sm:$0xf] %vm6929, %v6892
          %6948 = vst.msk [vmem:[#allocation4 + $0x94] sm:$0xf] %vm6929, %v6894
          %6949 = vst.msk [vmem:[#allocation4 + $0x9c] sm:$0xf] %vm6929, %v6896
          %6950 = vst.msk [vmem:[#allocation4 + $0xa4] sm:$0xf] %vm6929, %v6898
          %6951 = vst.msk [vmem:[#allocation4 + $0xac] sm:$0xf] %vm6929, %v6900
          %6952 = vst.msk [vmem:[#allocation4 + $0xb4] sm:$0xf] %vm6929, %v6902
          %vm6953 = vcmask 255152
          %6954 = vst.msk [vmem:[#allocation4 + $0xbc] sm:$0x3] %vm6953, %v6904
          %v6955 = vld [vmem:[#allocation4] sm:$0xff]
          %v6956 = vld [vmem:[#allocation4 + $0x8] sm:$0xff]
          %v6957 = vld [vmem:[#allocation4 + $0x10] sm:$0xff]
          %v6958 = vld [vmem:[#allocation4 + $0x18] sm:$0xff]
          %v6959 = vld [vmem:[#allocation4 + $0x20] sm:$0xff]
          %v6960 = vld [vmem:[#allocation4 + $0x28] sm:$0xff]
          %v6961 = vld [vmem:[#allocation4 + $0x30] sm:$0xff]
          %v6962 = vld [vmem:[#allocation4 + $0x38] sm:$0xff]
          %v6963 = vld [vmem:[#allocation4 + $0x40] sm:$0xff]
          %v6964 = vld [vmem:[#allocation4 + $0x48] sm:$0xff]
          %v6965 = vld [vmem:[#allocation4 + $0x50] sm:$0xff]
          %v6966 = vld [vmem:[#allocation4 + $0x58] sm:$0xff]
          %v6967 = vld [vmem:[#allocation4 + $0x60] sm:$0xff]
          %v6968 = vld [vmem:[#allocation4 + $0x68] sm:$0xff]
          %v6969 = vld [vmem:[#allocation4 + $0x70] sm:$0xff]
          %v6970 = vld [vmem:[#allocation4 + $0x78] sm:$0xff]
          %v6971 = vld [vmem:[#allocation4 + $0x80] sm:$0xff]
          %v6972 = vld [vmem:[#allocation4 + $0x88] sm:$0xff]
          %v6973 = vld [vmem:[#allocation4 + $0x90] sm:$0xff]
          %v6974 = vld [vmem:[#allocation4 + $0x98] sm:$0xff]
          %v6975 = vld [vmem:[#allocation4 + $0xa0] sm:$0xff]
          %v6976 = vld [vmem:[#allocation4 + $0xa8] sm:$0xff]
          %v6977 = vld [vmem:[#allocation4 + $0xb0] sm:$0xff]
          %v6978 = vld [vmem:[#allocation4 + $0xb8] sm:$0x33]
          %v6979 = vld [vmem:[%s4] sm:$0xf]
          %v6980 = vld [vmem:[%s4 + $0x4] sm:$0xf]
          %v6981 = vld [vmem:[%s4 + $0x8] sm:$0xf]
          %v6982 = vld [vmem:[%s4 + $0xc] sm:$0xf]
          %v6983 = vld [vmem:[%s4 + $0x10] sm:$0xf]
          %v6984 = vld [vmem:[%s4 + $0x14] sm:$0xf]
          %v6985 = vld [vmem:[%s4 + $0x18] sm:$0xf]
          %v6986 = vld [vmem:[%s4 + $0x1c] sm:$0xf]
          %v6987 = vld [vmem:[%s4 + $0x20] sm:$0xf]
          %v6988 = vld [vmem:[%s4 + $0x24] sm:$0xf]
          %v6989 = vld [vmem:[%s4 + $0x28] sm:$0xf]
          %v6990 = vld [vmem:[%s4 + $0x2c] sm:$0xf]
          %v6991 = vld [vmem:[%s4 + $0x30] sm:$0xf]
          %v6992 = vld [vmem:[%s4 + $0x34] sm:$0xf]
          %v6993 = vld [vmem:[%s4 + $0x38] sm:$0xf]
          %v6994 = vld [vmem:[%s4 + $0x3c] sm:$0xf]
          %v6995 = vld [vmem:[%s4 + $0x40] sm:$0xf]
          %v6996 = vld [vmem:[%s4 + $0x44] sm:$0xf]
          %v6997 = vld [vmem:[%s4 + $0x48] sm:$0xf]
          %v6998 = vld [vmem:[%s4 + $0x4c] sm:$0xf]
          %v6999 = vld [vmem:[%s5] sm:$0x1]
          %v7001 = vlaneseq
          %v7002 = vshrl.u32 %v7001, 7
          %v7003 = vsub.s32 0, %v7002
          %v7004 = vrot.slane %v6999, %v7003
          %v7030 = vunpack.c.l.b16 %v6955
          %v7031 = vunpack.c.h.b16 %v6955
          %v7032 = vunpack.c.l.b16 %v6956
          %v7033 = vunpack.c.h.b16 %v6956
          %v7034 = vunpack.c.l.b16 %v6957
          %v7035 = vunpack.c.h.b16 %v6957
          %v7036 = vunpack.c.l.b16 %v6958
          %v7037 = vunpack.c.h.b16 %v6958
          %v7038 = vunpack.c.l.b16 %v6959
          %v7039 = vunpack.c.h.b16 %v6959
          %v7040 = vunpack.c.l.b16 %v6960
          %v7041 = vunpack.c.h.b16 %v6960
          %v7042 = vunpack.c.l.b16 %v6961
          %v7043 = vunpack.c.h.b16 %v6961
          %v7044 = vunpack.c.l.b16 %v6962
          %v7045 = vunpack.c.h.b16 %v6962
          %v7046 = vunpack.c.l.b16 %v6963
          %v7047 = vunpack.c.h.b16 %v6963
          %v7048 = vunpack.c.l.b16 %v6964
          %v7049 = vunpack.c.h.b16 %v6964
          %v7050 = vunpack.c.l.b16 %v6965
          %v7051 = vunpack.c.h.b16 %v6965
          %v7052 = vunpack.c.l.b16 %v6966
          %v7053 = vunpack.c.h.b16 %v6966
          %v7054 = vunpack.c.l.b16 %v6967
          %v7055 = vunpack.c.h.b16 %v6967
          %v7056 = vunpack.c.l.b16 %v6968
          %v7057 = vunpack.c.h.b16 %v6968
          %v7058 = vunpack.c.l.b16 %v6969
          %v7059 = vunpack.c.h.b16 %v6969
          %v7060 = vunpack.c.l.b16 %v6970
          %v7061 = vunpack.c.h.b16 %v6970
          %v7062 = vunpack.c.l.b16 %v6971
          %v7063 = vunpack.c.h.b16 %v6971
          %v7064 = vunpack.c.l.b16 %v6972
          %v7065 = vunpack.c.h.b16 %v6972
          %v7066 = vunpack.c.l.b16 %v6973
          %v7067 = vunpack.c.h.b16 %v6973
          %v7068 = vunpack.c.l.b16 %v6974
          %v7069 = vunpack.c.h.b16 %v6974
          %v7070 = vunpack.c.l.b16 %v6975
          %v7071 = vunpack.c.h.b16 %v6975
          %v7072 = vunpack.c.l.b16 %v6976
          %v7073 = vunpack.c.h.b16 %v6976
          %v7074 = vunpack.c.l.b16 %v6977
          %v7075 = vunpack.c.h.b16 %v6977
          %v7076 = vunpack.c.l.b16 %v6978
          %v7077 = vunpack.c.h.b16 %v6978
          %v7078 = vpack.c.b16 %v7032, %v7030
          %v7079 = vpack.c.b16 %v7033, %v7031
          %v7080 = vpack.c.b16 %v7036, %v7034
          %v7081 = vpack.c.b16 %v7037, %v7035
          %v7082 = vpack.c.b16 %v7040, %v7038
          %v7083 = vpack.c.b16 %v7041, %v7039
          %v7084 = vpack.c.b16 %v7044, %v7042
          %v7085 = vpack.c.b16 %v7045, %v7043
          %v7086 = vpack.c.b16 %v7048, %v7046
          %v7087 = vpack.c.b16 %v7049, %v7047
          %v7088 = vpack.c.b16 %v7052, %v7050
          %v7089 = vpack.c.b16 %v7053, %v7051
          %v7090 = vpack.c.b16 %v7056, %v7054
          %v7091 = vpack.c.b16 %v7057, %v7055
          %v7092 = vpack.c.b16 %v7060, %v7058
          %v7093 = vpack.c.b16 %v7061, %v7059
          %v7094 = vpack.c.b16 %v7064, %v7062
          %v7095 = vpack.c.b16 %v7065, %v7063
          %v7096 = vpack.c.b16 %v7068, %v7066
          %v7097 = vpack.c.b16 %v7069, %v7067
          %v7098 = vpack.c.b16 %v7072, %v7070
          %v7099 = vpack.c.b16 %v7073, %v7071
          %v7100 = vpack.c.b16 %v7076, %v7074
          %v7101 = vpack.c.b16 %v7077, %v7075
          %v7134 = vunpack.c.l.b16 %v6979
          %v7135 = vunpack.c.l.b16 %v6980
          %v7136 = vunpack.c.l.b16 %v6981
          %v7137 = vunpack.c.l.b16 %v6982
          %v7138 = vunpack.c.l.b16 %v6983
          %v7139 = vunpack.c.l.b16 %v6984
          %v7140 = vunpack.c.l.b16 %v6985
          %v7141 = vunpack.c.l.b16 %v6986
          %v7142 = vunpack.c.l.b16 %v6987
          %v7143 = vunpack.c.l.b16 %v6988
          %v7144 = vunpack.c.l.b16 %v6989
          %v7145 = vunpack.c.l.b16 %v6990
          %v7146 = vunpack.c.l.b16 %v6991
          %v7147 = vunpack.c.l.b16 %v6992
          %v7148 = vunpack.c.l.b16 %v6993
          %v7149 = vunpack.c.l.b16 %v6994
          %v7150 = vunpack.c.l.b16 %v6995
          %v7151 = vunpack.c.l.b16 %v6996
          %v7152 = vunpack.c.l.b16 %v6997
          %v7153 = vunpack.c.l.b16 %v6998
          %v7154 = vpack.c.b16 %v7135, %v7134
          %v7155 = vpack.c.b16 %v7137, %v7136
          %v7156 = vpack.c.b16 %v7139, %v7138
          %v7157 = vpack.c.b16 %v7141, %v7140
          %v7158 = vpack.c.b16 %v7143, %v7142
          %v7159 = vpack.c.b16 %v7145, %v7144
          %v7160 = vpack.c.b16 %v7147, %v7146
          %v7161 = vpack.c.b16 %v7149, %v7148
          %v7162 = vpack.c.b16 %v7151, %v7150
          %v7163 = vpack.c.b16 %v7153, %v7152
          %vm7174 = vcmask 261120
          %v7176 = vsel %vm7174, %v7079, 0
          %v7179 = vsel %vm7174, %v7081, 0
          %v7182 = vsel %vm7174, %v7083, 0
          %v7185 = vsel %vm7174, %v7085, 0
          %v7188 = vsel %vm7174, %v7087, 0
          %v7191 = vsel %vm7174, %v7089, 0
          %v7194 = vsel %vm7174, %v7091, 0
          %v7197 = vsel %vm7174, %v7093, 0
          %v7200 = vsel %vm7174, %v7095, 0
          %v7203 = vsel %vm7174, %v7097, 0
          %v7206 = vsel %vm7174, %v7099, 0
          %v7209 = vsel %vm7174, %v7101, 0
          %7211 = vmatprep.subr.bf16.mxu0 0
          %7212 = vmatpush1.bf16.msra.mxu0 %v7161
          %7213 = vmatprep.subr.bf16.mxu0 0
          %7214 = vmatpush1.bf16.msra.mxu0 %v7160
          %7215 = vmatprep.subr.bf16.mxu0 0
          %7216 = vmatpush1.bf16.msra.mxu0 %v7159
          %7217 = vmatprep.subr.bf16.mxu0 0
          %7218 = vmatpush1.bf16.msra.mxu0 %v7158
          %7219 = vmatprep.subr.bf16.mxu0 0
          %7220 = vmatpush1.bf16.msra.mxu0 %v7157
          %7221 = vmatprep.subr.bf16.mxu0 0
          %7222 = vmatpush1.bf16.msra.mxu0 %v7156
          %7223 = vmatprep.subr.bf16.mxu0 0
          %7224 = vmatpush1.bf16.msra.mxu0 %v7155
          %7225 = vmatprep.subr.bf16.mxu0 0
          %7226 = vmatpush1.bf16.msra.mxu0 %v7154
          %7227 = vmatprep.subr.bf16.mxu0 0
          %7228 = vmatpush2.bf16.msra.mxu0 0
          %7229 = vmatprep.subr.bf16.mxu0 0
          %7230 = vmatpush2.bf16.msra.mxu0 0
          %7231 = vmatprep.subr.bf16.mxu0 0
          %7232 = vmatpush2.bf16.msra.mxu0 0
          %7233 = vmatprep.subr.bf16.mxu0 0
          %7234 = vmatpush2.bf16.msra.mxu0 0
          %7235 = vmatprep.subr.bf16.mxu0 0
          %7236 = vmatpush2.bf16.msra.mxu0 0
          %7237 = vmatprep.subr.bf16.mxu0 0
          %7238 = vmatpush2.bf16.msra.mxu0 0
          %7239 = vmatprep.subr.bf16.mxu0 0
          %7240 = vmatpush2.bf16.msra.mxu0 %v7163
          %7241 = vmatprep.subr.bf16.mxu0 0
          %7242 = vmatpush2.bf16.msra.mxu0 %v7162
          %7243 = vmatprep.mubr.bf16.mxu0 %v7176
          %7244 = vmatmul.mubr.bf16.gmra.mxu0 %v7078
          %v7245 = vpop.f32.mrf.mxu0
          %v7246 = vadd.f32 %v7004, %v7245
          %v7247 = vpop.f32.mrf.mxu0
          %v7248 = vpop.f32.mrf.mxu0
          %v7249 = vadd.f32 %v7004, %v7248
          %v7250 = vpop.f32.mrf.mxu0
          %7251 = vmatprep.mubr.bf16.mxu0 %v7179
          %7252 = vmatmul.mubr.bf16.gmra.mxu0 %v7080
          %v7253 = vpop.f32.mrf.mxu0
          %v7254 = vadd.f32 %v7004, %v7253
          %v7255 = vpop.f32.mrf.mxu0
          %v7256 = vpop.f32.mrf.mxu0
          %v7257 = vadd.f32 %v7004, %v7256
          %v7258 = vpop.f32.mrf.mxu0
          %7259 = vmatprep.mubr.bf16.mxu0 %v7182
          %7260 = vmatmul.mubr.bf16.gmra.mxu0 %v7082
          %v7261 = vpop.f32.mrf.mxu0
          %v7262 = vadd.f32 %v7004, %v7261
          %v7263 = vpop.f32.mrf.mxu0
          %v7264 = vpop.f32.mrf.mxu0
          %v7265 = vadd.f32 %v7004, %v7264
          %v7266 = vpop.f32.mrf.mxu0
          %7267 = vmatprep.mubr.bf16.mxu0 %v7185
          %7268 = vmatmul.mubr.bf16.gmra.mxu0 %v7084
          %v7269 = vpop.f32.mrf.mxu0
          %v7270 = vadd.f32 %v7004, %v7269
          %v7271 = vpop.f32.mrf.mxu0
          %v7272 = vpop.f32.mrf.mxu0
          %v7273 = vadd.f32 %v7004, %v7272
          %v7274 = vpop.f32.mrf.mxu0
          %7275 = vmatprep.mubr.bf16.mxu0 %v7188
          %7276 = vmatmul.mubr.bf16.gmra.mxu0 %v7086
          %v7277 = vpop.f32.mrf.mxu0
          %v7278 = vadd.f32 %v7004, %v7277
          %v7279 = vpop.f32.mrf.mxu0
          %v7280 = vpop.f32.mrf.mxu0
          %v7281 = vadd.f32 %v7004, %v7280
          %v7282 = vpop.f32.mrf.mxu0
          %7283 = vmatprep.mubr.bf16.mxu0 %v7191
          %7284 = vmatmul.mubr.bf16.gmra.mxu0 %v7088
          %v7285 = vpop.f32.mrf.mxu0
          %v7286 = vadd.f32 %v7004, %v7285
          %v7287 = vpop.f32.mrf.mxu0
          %v7288 = vpop.f32.mrf.mxu0
          %v7289 = vadd.f32 %v7004, %v7288
          %v7290 = vpop.f32.mrf.mxu0
          %7291 = vmatprep.mubr.bf16.mxu0 %v7194
          %7292 = vmatmul.mubr.bf16.gmra.mxu0 %v7090
          %v7293 = vpop.f32.mrf.mxu0
          %v7294 = vadd.f32 %v7004, %v7293
          %v7295 = vpop.f32.mrf.mxu0
          %v7296 = vpop.f32.mrf.mxu0
          %v7297 = vadd.f32 %v7004, %v7296
          %v7298 = vpop.f32.mrf.mxu0
          %7299 = vmatprep.mubr.bf16.mxu0 %v7197
          %7300 = vmatmul.mubr.bf16.gmra.mxu0 %v7092
          %v7301 = vpop.f32.mrf.mxu0
          %v7302 = vadd.f32 %v7004, %v7301
          %v7303 = vpop.f32.mrf.mxu0
          %v7304 = vpop.f32.mrf.mxu0
          %v7305 = vadd.f32 %v7004, %v7304
          %v7306 = vpop.f32.mrf.mxu0
          %7307 = vmatprep.mubr.bf16.mxu0 %v7200
          %7308 = vmatmul.mubr.bf16.gmra.mxu0 %v7094
          %v7309 = vpop.f32.mrf.mxu0
          %v7310 = vadd.f32 %v7004, %v7309
          %v7311 = vpop.f32.mrf.mxu0
          %v7312 = vpop.f32.mrf.mxu0
          %v7313 = vadd.f32 %v7004, %v7312
          %v7314 = vpop.f32.mrf.mxu0
          %7315 = vmatprep.mubr.bf16.mxu0 %v7203
          %7316 = vmatmul.mubr.bf16.gmra.mxu0 %v7096
          %v7317 = vpop.f32.mrf.mxu0
          %v7318 = vadd.f32 %v7004, %v7317
          %v7319 = vpop.f32.mrf.mxu0
          %v7320 = vpop.f32.mrf.mxu0
          %v7321 = vadd.f32 %v7004, %v7320
          %v7322 = vpop.f32.mrf.mxu0
          %7323 = vmatprep.mubr.bf16.mxu0 %v7206
          %7324 = vmatmul.mubr.bf16.gmra.mxu0 %v7098
          %v7325 = vpop.f32.mrf.mxu0
          %v7326 = vadd.f32 %v7004, %v7325
          %v7327 = vpop.f32.mrf.mxu0
          %v7328 = vpop.f32.mrf.mxu0
          %v7329 = vadd.f32 %v7004, %v7328
          %v7330 = vpop.f32.mrf.mxu0
          %7331 = vmatprep.mubr.bf16.mxu0 %v7209
          %7332 = vmatmul.mubr.bf16.gmra.mxu0 %v7100
          %v7333 = vpop.f32.mrf.mxu0
          %v7334 = vadd.f32 %v7004, %v7333
          %v7335 = vpop.f32.mrf.mxu0
          %v7336 = vpop.f32.mrf.mxu0
          %v7337 = vadd.f32 %v7004, %v7336
          %v7338 = vpop.f32.mrf.mxu0
          %7339 = vdwg.mxu0
          %v7340 = vmax.f32 %v7246, 0.0
          %v7341 = vmax.f32 %v7249, 0.0
          %v7342 = vmax.f32 %v7254, 0.0
          %v7343 = vmax.f32 %v7257, 0.0
          %v7344 = vmax.f32 %v7262, 0.0
          %v7345 = vmax.f32 %v7265, 0.0
          %v7346 = vmax.f32 %v7270, 0.0
          %v7347 = vmax.f32 %v7273, 0.0
          %v7348 = vmax.f32 %v7278, 0.0
          %v7349 = vmax.f32 %v7281, 0.0
          %v7350 = vmax.f32 %v7286, 0.0
          %v7351 = vmax.f32 %v7289, 0.0
          %v7352 = vmax.f32 %v7294, 0.0
          %v7353 = vmax.f32 %v7297, 0.0
          %v7354 = vmax.f32 %v7302, 0.0
          %v7355 = vmax.f32 %v7305, 0.0
          %v7356 = vmax.f32 %v7310, 0.0
          %v7357 = vmax.f32 %v7313, 0.0
          %v7358 = vmax.f32 %v7318, 0.0
          %v7359 = vmax.f32 %v7321, 0.0
          %v7360 = vmax.f32 %v7326, 0.0
          %v7361 = vmax.f32 %v7329, 0.0
          %v7362 = vmax.f32 %v7334, 0.0
          %v7363 = vmax.f32 %v7337, 0.0
          %vm7364 = vcmask 162816
          %7365 = vst.msk [vmem:[#allocation5] sm:$0xff] %vm7364, %v7340
          %7366 = vst.msk [vmem:[#allocation5 + $0x8] sm:$0xff] %vm7364, %v7341
          %7367 = vst.msk [vmem:[#allocation5 + $0x10] sm:$0xff] %vm7364, %v7342
          %7368 = vst.msk [vmem:[#allocation5 + $0x18] sm:$0xff] %vm7364, %v7343
          %7369 = vst.msk [vmem:[#allocation5 + $0x20] sm:$0xff] %vm7364, %v7344
          %7370 = vst.msk [vmem:[#allocation5 + $0x28] sm:$0xff] %vm7364, %v7345
          %7371 = vst.msk [vmem:[#allocation5 + $0x30] sm:$0xff] %vm7364, %v7346
          %7372 = vst.msk [vmem:[#allocation5 + $0x38] sm:$0xff] %vm7364, %v7347
          %7373 = vst.msk [vmem:[#allocation5 + $0x40] sm:$0xff] %vm7364, %v7348
          %7374 = vst.msk [vmem:[#allocation5 + $0x48] sm:$0xff] %vm7364, %v7349
          %7375 = vst.msk [vmem:[#allocation5 + $0x50] sm:$0xff] %vm7364, %v7350
          %7376 = vst.msk [vmem:[#allocation5 + $0x58] sm:$0xff] %vm7364, %v7351
          %7377 = vst.msk [vmem:[#allocation5 + $0x60] sm:$0xff] %vm7364, %v7352
          %7378 = vst.msk [vmem:[#allocation5 + $0x68] sm:$0xff] %vm7364, %v7353
          %7379 = vst.msk [vmem:[#allocation5 + $0x70] sm:$0xff] %vm7364, %v7354
          %7380 = vst.msk [vmem:[#allocation5 + $0x78] sm:$0xff] %vm7364, %v7355
          %7381 = vst.msk [vmem:[#allocation5 + $0x80] sm:$0xff] %vm7364, %v7356
          %7382 = vst.msk [vmem:[#allocation5 + $0x88] sm:$0xff] %vm7364, %v7357
          %7383 = vst.msk [vmem:[#allocation5 + $0x90] sm:$0xff] %vm7364, %v7358
          %7384 = vst.msk [vmem:[#allocation5 + $0x98] sm:$0xff] %vm7364, %v7359
          %7385 = vst.msk [vmem:[#allocation5 + $0xa0] sm:$0xff] %vm7364, %v7360
          %7386 = vst.msk [vmem:[#allocation5 + $0xa8] sm:$0xff] %vm7364, %v7361
          %7387 = vst.msk [vmem:[#allocation5 + $0xb0] sm:$0xff] %vm7364, %v7362
          %vm7388 = vcmask 158720
          %7389 = vst.msk [vmem:[#allocation5 + $0xb8] sm:$0xf] %vm7388, %v7363
          %v7390 = vld [vmem:[%s6] sm:$0xff]
          %v7391 = vld [vmem:[%s6 + $0x8] sm:$0xff]
          %v7392 = vld [vmem:[%s6 + $0x10] sm:$0xff]
          %v7393 = vld [vmem:[%s6 + $0x18] sm:$0xff]
          %v7394 = vld [vmem:[%s6 + $0x20] sm:$0xff]
          %v7395 = vld [vmem:[%s6 + $0x28] sm:$0xff]
          %v7396 = vld [vmem:[%s6 + $0x30] sm:$0xff]
          %v7397 = vld [vmem:[%s6 + $0x38] sm:$0xff]
          %v7398 = vld [vmem:[#allocation5] sm:$0xff]
          %v7399 = vld [vmem:[#allocation5 + $0x8] sm:$0xff]
          %v7400 = vld [vmem:[#allocation5 + $0x10] sm:$0xff]
          %v7401 = vld [vmem:[#allocation5 + $0x18] sm:$0xff]
          %v7402 = vld [vmem:[#allocation5 + $0x20] sm:$0xff]
          %v7403 = vld [vmem:[#allocation5 + $0x28] sm:$0xff]
          %v7404 = vld [vmem:[#allocation5 + $0x30] sm:$0xff]
          %v7405 = vld [vmem:[#allocation5 + $0x38] sm:$0xff]
          %v7406 = vld [vmem:[#allocation5 + $0x40] sm:$0xff]
          %v7407 = vld [vmem:[#allocation5 + $0x48] sm:$0xff]
          %v7408 = vld [vmem:[#allocation5 + $0x50] sm:$0xff]
          %v7409 = vld [vmem:[#allocation5 + $0x58] sm:$0xff]
          %v7410 = vld [vmem:[#allocation5 + $0x60] sm:$0xff]
          %v7411 = vld [vmem:[#allocation5 + $0x68] sm:$0xff]
          %v7412 = vld [vmem:[#allocation5 + $0x70] sm:$0xff]
          %v7413 = vld [vmem:[#allocation5 + $0x78] sm:$0xff]
          %v7414 = vld [vmem:[#allocation5 + $0x80] sm:$0xff]
          %v7415 = vld [vmem:[#allocation5 + $0x88] sm:$0xff]
          %v7416 = vld [vmem:[#allocation5 + $0x90] sm:$0xff]
          %v7417 = vld [vmem:[#allocation5 + $0x98] sm:$0xff]
          %v7418 = vld [vmem:[#allocation5 + $0xa0] sm:$0xff]
          %v7419 = vld [vmem:[#allocation5 + $0xa8] sm:$0x7]
          %v7420 = vld [vmem:[#allocation5 + $0x1] sm:$0xff]
          %v7421 = vld [vmem:[#allocation5 + $0x9] sm:$0xff]
          %v7422 = vld [vmem:[#allocation5 + $0x11] sm:$0xff]
          %v7423 = vld [vmem:[#allocation5 + $0x19] sm:$0xff]
          %v7424 = vld [vmem:[#allocation5 + $0x21] sm:$0xff]
          %v7425 = vld [vmem:[#allocation5 + $0x29] sm:$0xff]
          %v7426 = vld [vmem:[#allocation5 + $0x31] sm:$0xff]
          %v7427 = vld [vmem:[#allocation5 + $0x39] sm:$0xff]
          %v7428 = vld [vmem:[#allocation5 + $0x41] sm:$0xff]
          %v7429 = vld [vmem:[#allocation5 + $0x49] sm:$0xff]
          %v7430 = vld [vmem:[#allocation5 + $0x51] sm:$0xff]
          %v7431 = vld [vmem:[#allocation5 + $0x59] sm:$0xff]
          %v7432 = vld [vmem:[#allocation5 + $0x61] sm:$0xff]
          %v7433 = vld [vmem:[#allocation5 + $0x69] sm:$0xff]
          %v7434 = vld [vmem:[#allocation5 + $0x71] sm:$0xff]
          %v7435 = vld [vmem:[#allocation5 + $0x79] sm:$0xff]
          %v7436 = vld [vmem:[#allocation5 + $0x81] sm:$0xff]
          %v7437 = vld [vmem:[#allocation5 + $0x89] sm:$0xff]
          %v7438 = vld [vmem:[#allocation5 + $0x91] sm:$0xff]
          %v7439 = vld [vmem:[#allocation5 + $0x99] sm:$0xff]
          %v7440 = vld [vmem:[#allocation5 + $0xa1] sm:$0xff]
          %v7441 = vld [vmem:[#allocation5 + $0xa9] sm:$0x7]
          %v7442 = vld [vmem:[#allocation5 + $0xa8] sm:$0xff]
          %v7443 = vld [vmem:[#allocation5 + $0xb0] sm:$0xff]
          %v7444 = vld [vmem:[#allocation5 + $0xb8] sm:$0x7]
          %v7445 = vld [vmem:[#allocation5 + $0xa9] sm:$0xff]
          %v7446 = vld [vmem:[#allocation5 + $0xb1] sm:$0xff]
          %v7447 = vld [vmem:[#allocation5 + $0xb9] sm:$0x7]
          %v7448 = vmax.f32 %v7398, %v7420
          %v7449 = vmax.f32 %v7399, %v7421
          %v7450 = vmax.f32 %v7400, %v7422
          %v7451 = vmax.f32 %v7401, %v7423
          %v7452 = vmax.f32 %v7402, %v7424
          %v7453 = vmax.f32 %v7403, %v7425
          %v7454 = vmax.f32 %v7404, %v7426
          %v7455 = vmax.f32 %v7405, %v7427
          %v7456 = vmax.f32 %v7406, %v7428
          %v7457 = vmax.f32 %v7407, %v7429
          %v7458 = vmax.f32 %v7408, %v7430
          %v7459 = vmax.f32 %v7409, %v7431
          %v7460 = vmax.f32 %v7410, %v7432
          %v7461 = vmax.f32 %v7411, %v7433
          %v7462 = vmax.f32 %v7412, %v7434
          %v7463 = vmax.f32 %v7413, %v7435
          %v7464 = vmax.f32 %v7414, %v7436
          %v7465 = vmax.f32 %v7415, %v7437
          %v7466 = vmax.f32 %v7416, %v7438
          %v7467 = vmax.f32 %v7417, %v7439
          %v7468 = vmax.f32 %v7418, %v7440
          %v7469 = vmax.f32 %v7419, %v7441
          %v7470 = vmax.f32 %v7442, %v7445
          %v7471 = vmax.f32 %v7443, %v7446
          %v7472 = vmax.f32 %v7444, %v7447
          %v7473 = vmax.f32 %v7448, %v7450
          %v7474 = vmax.f32 %v7449, %v7451
          %v7475 = vmax.f32 %v7450, %v7452
          %v7476 = vmax.f32 %v7451, %v7453
          %v7477 = vmax.f32 %v7452, %v7454
          %v7478 = vmax.f32 %v7453, %v7455
          %v7479 = vmax.f32 %v7454, %v7456
          %v7480 = vmax.f32 %v7455, %v7457
          %v7481 = vmax.f32 %v7456, %v7458
          %v7482 = vmax.f32 %v7457, %v7459
          %v7483 = vmax.f32 %v7458, %v7460
          %v7484 = vmax.f32 %v7459, %v7461
          %v7485 = vmax.f32 %v7460, %v7462
          %v7486 = vmax.f32 %v7461, %v7463
          %v7487 = vmax.f32 %v7462, %v7464
          %v7488 = vmax.f32 %v7463, %v7465
          %v7489 = vmax.f32 %v7464, %v7466
          %v7490 = vmax.f32 %v7465, %v7467
          %v7491 = vmax.f32 %v7466, %v7468
          %v7492 = vmax.f32 %v7467, %v7470
          %v7493 = vmax.f32 %v7468, %v7471
          %v7494 = vmax.f32 %v7469, %v7472
          %v7495 = vpack.c.bf16 %v7474, %v7473
          %v7496 = vpack.c.bf16 %v7476, %v7475
          %v7497 = vpack.c.bf16 %v7478, %v7477
          %v7498 = vpack.c.bf16 %v7480, %v7479
          %v7499 = vpack.c.bf16 %v7482, %v7481
          %v7500 = vpack.c.bf16 %v7484, %v7483
          %v7501 = vpack.c.bf16 %v7486, %v7485
          %v7502 = vpack.c.bf16 %v7488, %v7487
          %v7503 = vpack.c.bf16 %v7490, %v7489
          %v7504 = vpack.c.bf16 %v7492, %v7491
          %v7505 = vpack.c.bf16 %v7494, %v7493
          %v7514 = vunpack.c.l.b16 %v7390
          %v7515 = vunpack.c.h.b16 %v7390
          %v7516 = vunpack.c.l.b16 %v7391
          %v7517 = vunpack.c.h.b16 %v7391
          %v7518 = vunpack.c.l.b16 %v7392
          %v7519 = vunpack.c.h.b16 %v7392
          %v7520 = vunpack.c.l.b16 %v7393
          %v7521 = vunpack.c.h.b16 %v7393
          %v7522 = vunpack.c.l.b16 %v7394
          %v7523 = vunpack.c.h.b16 %v7394
          %v7524 = vunpack.c.l.b16 %v7395
          %v7525 = vunpack.c.h.b16 %v7395
          %v7526 = vunpack.c.l.b16 %v7396
          %v7527 = vunpack.c.h.b16 %v7396
          %v7528 = vunpack.c.l.b16 %v7397
          %v7529 = vunpack.c.h.b16 %v7397
          %v7530 = vpack.c.b16 %v7516, %v7514
          %v7531 = vpack.c.b16 %v7517, %v7515
          %v7532 = vpack.c.b16 %v7520, %v7518
          %v7533 = vpack.c.b16 %v7521, %v7519
          %v7534 = vpack.c.b16 %v7524, %v7522
          %v7535 = vpack.c.b16 %v7525, %v7523
          %v7536 = vpack.c.b16 %v7528, %v7526
          %v7537 = vpack.c.b16 %v7529, %v7527
          %vm7542 = vcmask 351232
          %v7544 = vsel %vm7542, %v7531, 0
          %v7547 = vsel %vm7542, %v7533, 0
          %v7550 = vsel %vm7542, %v7535, 0
          %v7553 = vsel %vm7542, %v7537, 0
          %v7556 = vand.u32 %v7505, %v3167
          %7558 = vmatprep.subr.bf16.mxu0 0
          %7559 = vmatpush1.bf16.msra.mxu0 %v7502
          %7560 = vmatprep.subr.bf16.mxu0 0
          %7561 = vmatpush1.bf16.msra.mxu0 %v7501
          %7562 = vmatprep.subr.bf16.mxu0 0
          %7563 = vmatpush1.bf16.msra.mxu0 %v7500
          %7564 = vmatprep.subr.bf16.mxu0 0
          %7565 = vmatpush1.bf16.msra.mxu0 %v7499
          %7566 = vmatprep.subr.bf16.mxu0 0
          %7567 = vmatpush1.bf16.msra.mxu0 %v7498
          %7568 = vmatprep.subr.bf16.mxu0 0
          %7569 = vmatpush1.bf16.msra.mxu0 %v7497
          %7570 = vmatprep.subr.bf16.mxu0 0
          %7571 = vmatpush1.bf16.msra.mxu0 %v7496
          %7572 = vmatprep.subr.bf16.mxu0 0
          %7573 = vmatpush1.bf16.msra.mxu0 %v7495
          %7574 = vmatprep.subr.bf16.mxu0 0
          %7575 = vmatpush2.bf16.msra.mxu0 0
          %7576 = vmatprep.subr.bf16.mxu0 0
          %7577 = vmatpush2.bf16.msra.mxu0 0
          %7578 = vmatprep.subr.bf16.mxu0 0
          %7579 = vmatpush2.bf16.msra.mxu0 0
          %7580 = vmatprep.subr.bf16.mxu0 0
          %7581 = vmatpush2.bf16.msra.mxu0 0
          %7582 = vmatprep.subr.bf16.mxu0 0
          %7583 = vmatpush2.bf16.msra.mxu0 0
          %7584 = vmatprep.subr.bf16.mxu0 0
          %7585 = vmatpush2.bf16.msra.mxu0 %v7556
          %7586 = vmatprep.subr.bf16.mxu0 0
          %7587 = vmatpush2.bf16.msra.mxu0 %v7504
          %7588 = vmatprep.subr.bf16.mxu0 0
          %7589 = vmatpush2.bf16.msra.mxu0 %v7503
          %7590 = vmatprep.mubr.bf16.mxu0 %v7544
          %7591 = vmatmul.mubr.bf16.gmra.mxu0 %v7530
          %v7592 = vpop.f32.mrf.mxu0
          %v7593 = vadd.f32 0.0, %v7592
          %v7594 = vpop.f32.mrf.mxu0
          %v7595 = vpop.f32.mrf.mxu0
          %v7596 = vadd.f32 0.0, %v7595
          %v7597 = vpop.f32.mrf.mxu0
          %7598 = vmatprep.mubr.bf16.mxu0 %v7547
          %7599 = vmatmul.mubr.bf16.gmra.mxu0 %v7532
          %v7600 = vpop.f32.mrf.mxu0
          %v7601 = vadd.f32 0.0, %v7600
          %v7602 = vpop.f32.mrf.mxu0
          %v7603 = vpop.f32.mrf.mxu0
          %v7604 = vadd.f32 0.0, %v7603
          %v7605 = vpop.f32.mrf.mxu0
          %7606 = vmatprep.mubr.bf16.mxu0 %v7550
          %7607 = vmatmul.mubr.bf16.gmra.mxu0 %v7534
          %v7608 = vpop.f32.mrf.mxu0
          %v7609 = vadd.f32 0.0, %v7608
          %v7610 = vpop.f32.mrf.mxu0
          %v7611 = vpop.f32.mrf.mxu0
          %v7612 = vadd.f32 0.0, %v7611
          %v7613 = vpop.f32.mrf.mxu0
          %7614 = vmatprep.mubr.bf16.mxu0 %v7553
          %7615 = vmatmul.mubr.bf16.gmra.mxu0 %v7536
          %v7616 = vpop.f32.mrf.mxu0
          %v7617 = vadd.f32 0.0, %v7616
          %v7618 = vpop.f32.mrf.mxu0
          %v7619 = vpop.f32.mrf.mxu0
          %v7620 = vadd.f32 0.0, %v7619
          %v7621 = vpop.f32.mrf.mxu0
          %7622 = vdwg.mxu0
          %7623 = vst.msk [vmem:[#allocation6] sm:$0xff] %vm7364, %v7593
          %7624 = vst.msk [vmem:[#allocation6 + $0x8] sm:$0xff] %vm7364, %v7596
          %7625 = vst.msk [vmem:[#allocation6 + $0x10] sm:$0xff] %vm7364, %v7601
          %7626 = vst.msk [vmem:[#allocation6 + $0x18] sm:$0xff] %vm7364, %v7604
          %7627 = vst.msk [vmem:[#allocation6 + $0x20] sm:$0xff] %vm7364, %v7609
          %7628 = vst.msk [vmem:[#allocation6 + $0x28] sm:$0xff] %vm7364, %v7612
          %7629 = vst.msk [vmem:[#allocation6 + $0x30] sm:$0xff] %vm7364, %v7617
          %7630 = vst.msk [vmem:[#allocation6 + $0x38] sm:$0xff] %vm7364, %v7620
          %v7631 = vld [vmem:[#allocation6] sm:$0xff]
          %v7632 = vld [vmem:[#allocation6 + $0x8] sm:$0xff]
          %v7633 = vld [vmem:[#allocation6 + $0x10] sm:$0xff]
          %v7634 = vld [vmem:[#allocation6 + $0x18] sm:$0xf]
          %v7635 = vpack.c.bf16 %v7632, %v7631
          %v7636 = vpack.c.bf16 %v7634, %v7633
          %v7639 = vunpack.c.l.b16 %v7635
          %v7640 = vunpack.c.h.b16 %v7635
          %v7641 = vunpack.c.l.b16 %v7636
          %v7642 = vunpack.c.h.b16 %v7636
          %v7643 = vpack.c.b16 %v7639, %v7639
          %v7644 = vpack.c.b16 %v7640, %v7640
          %v7645 = vpack.c.b16 %v7641, %v7641
          %v7646 = vpack.c.b16 %v7642, %v7642
          %7651 = vst.msk [vmem:[#allocation7] sm:$0xf] %vm7388, %v7643
          %7652 = vst.msk [vmem:[#allocation7 + $0xc] sm:$0xf] %vm7388, %v7644
          %7653 = vst.msk [vmem:[#allocation7 + $0x18] sm:$0xf] %vm7388, %v7645
          %vm7654 = vcmask 156672
          %7655 = vst.msk [vmem:[#allocation7 + $0x24] sm:$0x3] %vm7654, %v7646
          %v7656 = vld [vmem:[#allocation6 + $0x1] sm:$0xff]
          %v7657 = vld [vmem:[#allocation6 + $0x9] sm:$0xff]
          %v7658 = vld [vmem:[#allocation6 + $0x11] sm:$0xff]
          %v7659 = vld [vmem:[#allocation6 + $0x19] sm:$0xf]
          %v7660 = vpack.c.bf16 %v7657, %v7656
          %v7661 = vpack.c.bf16 %v7659, %v7658
          %v7664 = vunpack.c.l.b16 %v7660
          %v7665 = vunpack.c.h.b16 %v7660
          %v7666 = vunpack.c.l.b16 %v7661
          %v7667 = vunpack.c.h.b16 %v7661
          %v7668 = vpack.c.b16 %v7664, %v7664
          %v7669 = vpack.c.b16 %v7665, %v7665
          %v7670 = vpack.c.b16 %v7666, %v7666
          %v7671 = vpack.c.b16 %v7667, %v7667
          %7672 = vrot.lane.b32.xlu0 %v7668, 20
          %v7673 = vpop.permute.xlu0 %7672
          %7674 = vrot.lane.b32.xlu0 %v7669, 20
          %v7675 = vpop.permute.xlu0 %7674
          %7676 = vrot.lane.b32.xlu0 %v7670, 20
          %v7677 = vpop.permute.xlu0 %7676
          %7678 = vrot.lane.b32.xlu0 %v7671, 20
          %v7679 = vpop.permute.xlu0 %7678
          %vm7684 = vcmask 322720
          %7685 = vst.msk [vmem:[#allocation7] sm:$0xf] %vm7684, %v7673
          %7686 = vst.msk [vmem:[#allocation7 + $0xc] sm:$0xf] %vm7684, %v7675
          %7687 = vst.msk [vmem:[#allocation7 + $0x18] sm:$0xf] %vm7684, %v7677
          %vm7688 = vcmask 320672
          %7689 = vst.msk [vmem:[#allocation7 + $0x24] sm:$0x3] %vm7688, %v7679
          %v7690 = vld [vmem:[#allocation6 + $0x2] sm:$0xff]
          %v7691 = vld [vmem:[#allocation6 + $0xa] sm:$0xff]
          %v7692 = vld [vmem:[#allocation6 + $0x12] sm:$0xff]
          %v7693 = vld [vmem:[#allocation6 + $0x1a] sm:$0xf]
          %v7694 = vpack.c.bf16 %v7691, %v7690
          %v7695 = vpack.c.bf16 %v7693, %v7692
          %v7698 = vunpack.c.l.b16 %v7694
          %v7699 = vunpack.c.h.b16 %v7694
          %v7700 = vunpack.c.l.b16 %v7695
          %v7701 = vunpack.c.h.b16 %v7695
          %v7702 = vpack.c.b16 %v7698, %v7698
          %v7703 = vpack.c.b16 %v7699, %v7699
          %v7704 = vpack.c.b16 %v7700, %v7700
          %v7705 = vpack.c.b16 %v7701, %v7701
          %7706 = vrot.lane.b32.xlu0 %v7702, 40
          %v7707 = vpop.permute.xlu0 %7706
          %7708 = vrot.lane.b32.xlu0 %v7703, 40
          %v7709 = vpop.permute.xlu0 %7708
          %7710 = vrot.lane.b32.xlu0 %v7704, 40
          %v7711 = vpop.permute.xlu0 %7710
          %7712 = vrot.lane.b32.xlu0 %v7705, 40
          %v7713 = vpop.permute.xlu0 %7712
          %vm7718 = vcmask 486720
          %7719 = vst.msk [vmem:[#allocation7] sm:$0xf] %vm7718, %v7707
          %7720 = vst.msk [vmem:[#allocation7 + $0xc] sm:$0xf] %vm7718, %v7709
          %7721 = vst.msk [vmem:[#allocation7 + $0x18] sm:$0xf] %vm7718, %v7711
          %vm7722 = vcmask 484672
          %7723 = vst.msk [vmem:[#allocation7 + $0x24] sm:$0x3] %vm7722, %v7713
          %v7724 = vld [vmem:[#allocation6 + $0x3] sm:$0xff]
          %v7725 = vld [vmem:[#allocation6 + $0xb] sm:$0xff]
          %v7726 = vld [vmem:[#allocation6 + $0x13] sm:$0xff]
          %v7727 = vld [vmem:[#allocation6 + $0x1b] sm:$0xf]
          %v7728 = vpack.c.bf16 %v7725, %v7724
          %v7729 = vpack.c.bf16 %v7727, %v7726
          %v7732 = vunpack.c.l.b16 %v7728
          %v7733 = vunpack.c.h.b16 %v7728
          %v7734 = vunpack.c.l.b16 %v7729
          %v7735 = vunpack.c.h.b16 %v7729
          %v7736 = vpack.c.b16 %v7732, %v7732
          %v7737 = vpack.c.b16 %v7733, %v7733
          %v7738 = vpack.c.b16 %v7734, %v7734
          %v7739 = vpack.c.b16 %v7735, %v7735
          %7740 = vrot.lane.b32.xlu0 %v7736, 60
          %v7741 = vpop.permute.xlu0 %7740
          %7742 = vrot.lane.b32.xlu0 %v7737, 60
          %v7743 = vpop.permute.xlu0 %7742
          %7744 = vrot.lane.b32.xlu0 %v7738, 60
          %v7745 = vpop.permute.xlu0 %7744
          %7746 = vrot.lane.b32.xlu0 %v7739, 60
          %v7747 = vpop.permute.xlu0 %7746
          %vm7752 = vcmask 650720
          %7753 = vst.msk [vmem:[#allocation7] sm:$0xf] %vm7752, %v7741
          %7754 = vst.msk [vmem:[#allocation7 + $0xc] sm:$0xf] %vm7752, %v7743
          %7755 = vst.msk [vmem:[#allocation7 + $0x18] sm:$0xf] %vm7752, %v7745
          %vm7756 = vcmask 648672
          %7757 = vst.msk [vmem:[#allocation7 + $0x24] sm:$0x3] %vm7756, %v7747
          %v7758 = vld [vmem:[#allocation6 + $0x8] sm:$0xff]
          %v7759 = vld [vmem:[#allocation6 + $0x10] sm:$0xff]
          %v7760 = vld [vmem:[#allocation6 + $0x18] sm:$0xff]
          %v7761 = vld [vmem:[#allocation6 + $0x20] sm:$0xf]
          %v7762 = vpack.c.bf16 %v7759, %v7758
          %v7763 = vpack.c.bf16 %v7761, %v7760
          %v7766 = vunpack.c.l.b16 %v7762
          %v7767 = vunpack.c.h.b16 %v7762
          %v7768 = vunpack.c.l.b16 %v7763
          %v7769 = vunpack.c.h.b16 %v7763
          %v7770 = vpack.c.b16 %v7766, %v7766
          %v7771 = vpack.c.b16 %v7767, %v7767
          %v7772 = vpack.c.b16 %v7768, %v7768
          %v7773 = vpack.c.b16 %v7769, %v7769
          %7774 = vrot.lane.b32.xlu0 %v7770, 80
          %v7775 = vpop.permute.xlu0 %7774
          %7776 = vrot.lane.b32.xlu0 %v7771, 80
          %v7777 = vpop.permute.xlu0 %7776
          %7778 = vrot.lane.b32.xlu0 %v7772, 80
          %v7779 = vpop.permute.xlu0 %7778
          %7780 = vrot.lane.b32.xlu0 %v7773, 80
          %v7781 = vpop.permute.xlu0 %7780
          %vm7786 = vcmask 814720
          %7787 = vst.msk [vmem:[#allocation7] sm:$0xf] %vm7786, %v7775
          %7788 = vst.msk [vmem:[#allocation7 + $0xc] sm:$0xf] %vm7786, %v7777
          %7789 = vst.msk [vmem:[#allocation7 + $0x18] sm:$0xf] %vm7786, %v7779
          %vm7790 = vcmask 812672
          %7791 = vst.msk [vmem:[#allocation7 + $0x24] sm:$0x3] %vm7790, %v7781
          %v7792 = vld [vmem:[#allocation6 + $0x9] sm:$0xff]
          %v7793 = vld [vmem:[#allocation6 + $0x11] sm:$0xff]
          %v7794 = vld [vmem:[#allocation6 + $0x19] sm:$0xff]
          %v7795 = vld [vmem:[#allocation6 + $0x21] sm:$0xf]
          %v7796 = vpack.c.bf16 %v7793, %v7792
          %v7797 = vpack.c.bf16 %v7795, %v7794
          %v7800 = vunpack.c.l.b16 %v7796
          %v7801 = vunpack.c.h.b16 %v7796
          %v7802 = vunpack.c.l.b16 %v7797
          %v7803 = vunpack.c.h.b16 %v7797
          %v7804 = vpack.c.b16 %v7800, %v7800
          %v7805 = vpack.c.b16 %v7801, %v7801
          %v7806 = vpack.c.b16 %v7802, %v7802
          %v7807 = vpack.c.b16 %v7803, %v7803
          %7808 = vrot.lane.b32.xlu0 %v7804, 100
          %v7809 = vpop.permute.xlu0 %7808
          %7810 = vrot.lane.b32.xlu0 %v7805, 100
          %v7811 = vpop.permute.xlu0 %7810
          %7812 = vrot.lane.b32.xlu0 %v7806, 100
          %v7813 = vpop.permute.xlu0 %7812
          %7814 = vrot.lane.b32.xlu0 %v7807, 100
          %v7815 = vpop.permute.xlu0 %7814
          %vm7820 = vcmask 978720
          %7821 = vst.msk [vmem:[#allocation7] sm:$0xf] %vm7820, %v7809
          %7822 = vst.msk [vmem:[#allocation7 + $0xc] sm:$0xf] %vm7820, %v7811
          %7823 = vst.msk [vmem:[#allocation7 + $0x18] sm:$0xf] %vm7820, %v7813
          %vm7824 = vcmask 976672
          %7825 = vst.msk [vmem:[#allocation7 + $0x24] sm:$0x3] %vm7824, %v7815
          %v7826 = vld [vmem:[#allocation6 + $0xa] sm:$0xff]
          %v7827 = vld [vmem:[#allocation6 + $0x12] sm:$0xff]
          %v7828 = vld [vmem:[#allocation6 + $0x1a] sm:$0xff]
          %v7829 = vld [vmem:[#allocation6 + $0x22] sm:$0xf]
          %v7830 = vpack.c.bf16 %v7827, %v7826
          %v7831 = vpack.c.bf16 %v7829, %v7828
          %v7834 = vunpack.c.l.b16 %v7830
          %v7835 = vunpack.c.h.b16 %v7830
          %v7836 = vunpack.c.l.b16 %v7831
          %v7837 = vunpack.c.h.b16 %v7831
          %v7838 = vpack.c.b16 %v7834, %v7834
          %v7839 = vpack.c.b16 %v7835, %v7835
          %v7840 = vpack.c.b16 %v7836, %v7836
          %v7841 = vpack.c.b16 %v7837, %v7837
          %7842 = vrot.lane.b32.xlu0 %v7838, 120
          %v7843 = vpop.permute.xlu0 %7842
          %7844 = vrot.lane.b32.xlu0 %v7839, 120
          %v7845 = vpop.permute.xlu0 %7844
          %7846 = vrot.lane.b32.xlu0 %v7840, 120
          %v7847 = vpop.permute.xlu0 %7846
          %7848 = vrot.lane.b32.xlu0 %v7841, 120
          %v7849 = vpop.permute.xlu0 %7848
          %v7850 = vrot.slane %v7843, 4
          %v7851 = vrot.slane %v7845, 4
          %v7852 = vrot.slane %v7847, 4
          %v7853 = vrot.slane %v7849, 4
          %v7854 = vsel %vm6294, %v7850, %v7843
          %v7855 = vsel %vm6294, %v7851, %v7845
          %v7856 = vsel %vm6294, %v7852, %v7847
          %v7857 = vsel %vm6294, %v7853, %v7849
          %vm7862 = vcmask 97284
          %vm7863 = vmor %vm7862, %vm6343
          %7864 = vst.msk [vmem:[#allocation7] sm:$0xff] %vm7863, %v7854
          %7865 = vst.msk [vmem:[#allocation7 + $0xc] sm:$0xff] %vm7863, %v7855
          %7866 = vst.msk [vmem:[#allocation7 + $0x18] sm:$0xff] %vm7863, %v7856
          %vm7867 = vcmask 95236
          %vm7868 = vmor %vm7867, %vm6369
          %7869 = vst.msk [vmem:[#allocation7 + $0x24] sm:$0x33] %vm7868, %v7857
          %v7870 = vld [vmem:[#allocation6 + $0xb] sm:$0xff]
          %v7871 = vld [vmem:[#allocation6 + $0x13] sm:$0xff]
          %v7872 = vld [vmem:[#allocation6 + $0x1b] sm:$0xff]
          %v7873 = vld [vmem:[#allocation6 + $0x23] sm:$0xf]
          %v7874 = vpack.c.bf16 %v7871, %v7870
          %v7875 = vpack.c.bf16 %v7873, %v7872
          %v7878 = vunpack.c.l.b16 %v7874
          %v7879 = vunpack.c.h.b16 %v7874
          %v7880 = vunpack.c.l.b16 %v7875
          %v7881 = vunpack.c.h.b16 %v7875
          %v7882 = vpack.c.b16 %v7878, %v7878
          %v7883 = vpack.c.b16 %v7879, %v7879
          %v7884 = vpack.c.b16 %v7880, %v7880
          %v7885 = vpack.c.b16 %v7881, %v7881
          %7886 = vrot.lane.b32.xlu0 %v7882, 12
          %v7887 = vpop.permute.xlu0 %7886
          %7888 = vrot.lane.b32.xlu0 %v7883, 12
          %v7889 = vpop.permute.xlu0 %7888
          %7890 = vrot.lane.b32.xlu0 %v7884, 12
          %v7891 = vpop.permute.xlu0 %7890
          %7892 = vrot.lane.b32.xlu0 %v7885, 12
          %v7893 = vpop.permute.xlu0 %7892
          %vm7898 = vcmask 257120
          %7899 = vst.msk [vmem:[#allocation7 + $0x4] sm:$0xf] %vm7898, %v7887
          %7900 = vst.msk [vmem:[#allocation7 + $0x10] sm:$0xf] %vm7898, %v7889
          %7901 = vst.msk [vmem:[#allocation7 + $0x1c] sm:$0xf] %vm7898, %v7891
          %vm7902 = vcmask 255072
          %7903 = vst.msk [vmem:[#allocation7 + $0x28] sm:$0x3] %vm7902, %v7893
          %v7904 = vld [vmem:[#allocation6 + $0x10] sm:$0xff]
          %v7905 = vld [vmem:[#allocation6 + $0x18] sm:$0xff]
          %v7906 = vld [vmem:[#allocation6 + $0x20] sm:$0xff]
          %v7907 = vld [vmem:[#allocation6 + $0x28] sm:$0xf]
          %v7908 = vpack.c.bf16 %v7905, %v7904
          %v7909 = vpack.c.bf16 %v7907, %v7906
          %v7912 = vunpack.c.l.b16 %v7908
          %v7913 = vunpack.c.h.b16 %v7908
          %v7914 = vunpack.c.l.b16 %v7909
          %v7915 = vunpack.c.h.b16 %v7909
          %v7916 = vpack.c.b16 %v7912, %v7912
          %v7917 = vpack.c.b16 %v7913, %v7913
          %v7918 = vpack.c.b16 %v7914, %v7914
          %v7919 = vpack.c.b16 %v7915, %v7915
          %7920 = vrot.lane.b32.xlu0 %v7916, 32
          %v7921 = vpop.permute.xlu0 %7920
          %7922 = vrot.lane.b32.xlu0 %v7917, 32
          %v7923 = vpop.permute.xlu0 %7922
          %7924 = vrot.lane.b32.xlu0 %v7918, 32
          %v7925 = vpop.permute.xlu0 %7924
          %7926 = vrot.lane.b32.xlu0 %v7919, 32
          %v7927 = vpop.permute.xlu0 %7926
          %vm7932 = vcmask 421120
          %7933 = vst.msk [vmem:[#allocation7 + $0x4] sm:$0xf] %vm7932, %v7921
          %7934 = vst.msk [vmem:[#allocation7 + $0x10] sm:$0xf] %vm7932, %v7923
          %7935 = vst.msk [vmem:[#allocation7 + $0x1c] sm:$0xf] %vm7932, %v7925
          %vm7936 = vcmask 419072
          %7937 = vst.msk [vmem:[#allocation7 + $0x28] sm:$0x3] %vm7936, %v7927
          %v7938 = vld [vmem:[#allocation6 + $0x11] sm:$0xff]
          %v7939 = vld [vmem:[#allocation6 + $0x19] sm:$0xff]
          %v7940 = vld [vmem:[#allocation6 + $0x21] sm:$0xff]
          %v7941 = vld [vmem:[#allocation6 + $0x29] sm:$0xf]
          %v7942 = vpack.c.bf16 %v7939, %v7938
          %v7943 = vpack.c.bf16 %v7941, %v7940
          %v7946 = vunpack.c.l.b16 %v7942
          %v7947 = vunpack.c.h.b16 %v7942
          %v7948 = vunpack.c.l.b16 %v7943
          %v7949 = vunpack.c.h.b16 %v7943
          %v7950 = vpack.c.b16 %v7946, %v7946
          %v7951 = vpack.c.b16 %v7947, %v7947
          %v7952 = vpack.c.b16 %v7948, %v7948
          %v7953 = vpack.c.b16 %v7949, %v7949
          %7954 = vrot.lane.b32.xlu0 %v7950, 52
          %v7955 = vpop.permute.xlu0 %7954
          %7956 = vrot.lane.b32.xlu0 %v7951, 52
          %v7957 = vpop.permute.xlu0 %7956
          %7958 = vrot.lane.b32.xlu0 %v7952, 52
          %v7959 = vpop.permute.xlu0 %7958
          %7960 = vrot.lane.b32.xlu0 %v7953, 52
          %v7961 = vpop.permute.xlu0 %7960
          %vm7966 = vcmask 585120
          %7967 = vst.msk [vmem:[#allocation7 + $0x4] sm:$0xf] %vm7966, %v7955
          %7968 = vst.msk [vmem:[#allocation7 + $0x10] sm:$0xf] %vm7966, %v7957
          %7969 = vst.msk [vmem:[#allocation7 + $0x1c] sm:$0xf] %vm7966, %v7959
          %vm7970 = vcmask 583072
          %7971 = vst.msk [vmem:[#allocation7 + $0x28] sm:$0x3] %vm7970, %v7961
          %v7972 = vld [vmem:[#allocation6 + $0x12] sm:$0xff]
          %v7973 = vld [vmem:[#allocation6 + $0x1a] sm:$0xff]
          %v7974 = vld [vmem:[#allocation6 + $0x22] sm:$0xff]
          %v7975 = vld [vmem:[#allocation6 + $0x2a] sm:$0xf]
          %v7976 = vpack.c.bf16 %v7973, %v7972
          %v7977 = vpack.c.bf16 %v7975, %v7974
          %v7980 = vunpack.c.l.b16 %v7976
          %v7981 = vunpack.c.h.b16 %v7976
          %v7982 = vunpack.c.l.b16 %v7977
          %v7983 = vunpack.c.h.b16 %v7977
          %v7984 = vpack.c.b16 %v7980, %v7980
          %v7985 = vpack.c.b16 %v7981, %v7981
          %v7986 = vpack.c.b16 %v7982, %v7982
          %v7987 = vpack.c.b16 %v7983, %v7983
          %7988 = vrot.lane.b32.xlu0 %v7984, 72
          %v7989 = vpop.permute.xlu0 %7988
          %7990 = vrot.lane.b32.xlu0 %v7985, 72
          %v7991 = vpop.permute.xlu0 %7990
          %7992 = vrot.lane.b32.xlu0 %v7986, 72
          %v7993 = vpop.permute.xlu0 %7992
          %7994 = vrot.lane.b32.xlu0 %v7987, 72
          %v7995 = vpop.permute.xlu0 %7994
          %vm8000 = vcmask 749120
          %8001 = vst.msk [vmem:[#allocation7 + $0x4] sm:$0xf] %vm8000, %v7989
          %8002 = vst.msk [vmem:[#allocation7 + $0x10] sm:$0xf] %vm8000, %v7991
          %8003 = vst.msk [vmem:[#allocation7 + $0x1c] sm:$0xf] %vm8000, %v7993
          %vm8004 = vcmask 747072
          %8005 = vst.msk [vmem:[#allocation7 + $0x28] sm:$0x3] %vm8004, %v7995
          %v8006 = vld [vmem:[#allocation6 + $0x13] sm:$0xff]
          %v8007 = vld [vmem:[#allocation6 + $0x1b] sm:$0xff]
          %v8008 = vld [vmem:[#allocation6 + $0x23] sm:$0xff]
          %v8009 = vld [vmem:[#allocation6 + $0x2b] sm:$0xf]
          %v8010 = vpack.c.bf16 %v8007, %v8006
          %v8011 = vpack.c.bf16 %v8009, %v8008
          %v8014 = vunpack.c.l.b16 %v8010
          %v8015 = vunpack.c.h.b16 %v8010
          %v8016 = vunpack.c.l.b16 %v8011
          %v8017 = vunpack.c.h.b16 %v8011
          %v8018 = vpack.c.b16 %v8014, %v8014
          %v8019 = vpack.c.b16 %v8015, %v8015
          %v8020 = vpack.c.b16 %v8016, %v8016
          %v8021 = vpack.c.b16 %v8017, %v8017
          %8022 = vrot.lane.b32.xlu0 %v8018, 92
          %v8023 = vpop.permute.xlu0 %8022
          %8024 = vrot.lane.b32.xlu0 %v8019, 92
          %v8025 = vpop.permute.xlu0 %8024
          %8026 = vrot.lane.b32.xlu0 %v8020, 92
          %v8027 = vpop.permute.xlu0 %8026
          %8028 = vrot.lane.b32.xlu0 %v8021, 92
          %v8029 = vpop.permute.xlu0 %8028
          %vm8034 = vcmask 913120
          %8035 = vst.msk [vmem:[#allocation7 + $0x4] sm:$0xf] %vm8034, %v8023
          %8036 = vst.msk [vmem:[#allocation7 + $0x10] sm:$0xf] %vm8034, %v8025
          %8037 = vst.msk [vmem:[#allocation7 + $0x1c] sm:$0xf] %vm8034, %v8027
          %vm8038 = vcmask 911072
          %8039 = vst.msk [vmem:[#allocation7 + $0x28] sm:$0x3] %vm8038, %v8029
          %v8040 = vld [vmem:[#allocation6 + $0x18] sm:$0xff]
          %v8041 = vld [vmem:[#allocation6 + $0x20] sm:$0xff]
          %v8042 = vld [vmem:[#allocation6 + $0x28] sm:$0xff]
          %v8043 = vld [vmem:[#allocation6 + $0x30] sm:$0xf]
          %v8044 = vpack.c.bf16 %v8041, %v8040
          %v8045 = vpack.c.bf16 %v8043, %v8042
          %v8048 = vunpack.c.l.b16 %v8044
          %v8049 = vunpack.c.h.b16 %v8044
          %v8050 = vunpack.c.l.b16 %v8045
          %v8051 = vunpack.c.h.b16 %v8045
          %v8052 = vpack.c.b16 %v8048, %v8048
          %v8053 = vpack.c.b16 %v8049, %v8049
          %v8054 = vpack.c.b16 %v8050, %v8050
          %v8055 = vpack.c.b16 %v8051, %v8051
          %8056 = vrot.lane.b32.xlu0 %v8052, 112
          %v8057 = vpop.permute.xlu0 %8056
          %8058 = vrot.lane.b32.xlu0 %v8053, 112
          %v8059 = vpop.permute.xlu0 %8058
          %8060 = vrot.lane.b32.xlu0 %v8054, 112
          %v8061 = vpop.permute.xlu0 %8060
          %8062 = vrot.lane.b32.xlu0 %v8055, 112
          %v8063 = vpop.permute.xlu0 %8062
          %v8064 = vrot.slane %v8057, 4
          %v8065 = vrot.slane %v8059, 4
          %v8066 = vrot.slane %v8061, 4
          %v8067 = vrot.slane %v8063, 4
          %vm8068 = vcmask 916480
          %v8069 = vsel %vm8068, %v8064, %v8057
          %v8070 = vsel %vm8068, %v8065, %v8059
          %v8071 = vsel %vm8068, %v8066, %v8061
          %v8072 = vsel %vm8068, %v8067, %v8063
          %vm8077 = vcmask 1044352
          %vm8078 = vcmask 31748
          %vm8079 = vmor %vm8078, %vm8077
          %8080 = vst.msk [vmem:[#allocation7 + $0x4] sm:$0xff] %vm8079, %v8069
          %8081 = vst.msk [vmem:[#allocation7 + $0x10] sm:$0xff] %vm8079, %v8070
          %8082 = vst.msk [vmem:[#allocation7 + $0x1c] sm:$0xff] %vm8079, %v8071
          %vm8083 = vcmask 1042304
          %vm8084 = vcmask 29700
          %vm8085 = vmor %vm8084, %vm8083
          %8086 = vst.msk [vmem:[#allocation7 + $0x28] sm:$0x33] %vm8085, %v8072
          %v8087 = vld [vmem:[#allocation6 + $0x19] sm:$0xff]
          %v8088 = vld [vmem:[#allocation6 + $0x21] sm:$0xff]
          %v8089 = vld [vmem:[#allocation6 + $0x29] sm:$0xff]
          %v8090 = vld [vmem:[#allocation6 + $0x31] sm:$0xf]
          %v8091 = vpack.c.bf16 %v8088, %v8087
          %v8092 = vpack.c.bf16 %v8090, %v8089
          %v8095 = vunpack.c.l.b16 %v8091
          %v8096 = vunpack.c.h.b16 %v8091
          %v8097 = vunpack.c.l.b16 %v8092
          %v8098 = vunpack.c.h.b16 %v8092
          %v8099 = vpack.c.b16 %v8095, %v8095
          %v8100 = vpack.c.b16 %v8096, %v8096
          %v8101 = vpack.c.b16 %v8097, %v8097
          %v8102 = vpack.c.b16 %v8098, %v8098
          %8103 = vrot.lane.b32.xlu0 %v8099, 4
          %v8104 = vpop.permute.xlu0 %8103
          %8105 = vrot.lane.b32.xlu0 %v8100, 4
          %v8106 = vpop.permute.xlu0 %8105
          %8107 = vrot.lane.b32.xlu0 %v8101, 4
          %v8108 = vpop.permute.xlu0 %8107
          %8109 = vrot.lane.b32.xlu0 %v8102, 4
          %v8110 = vpop.permute.xlu0 %8109
          %vm8115 = vcmask 191520
          %8116 = vst.msk [vmem:[#allocation7 + $0x8] sm:$0xf] %vm8115, %v8104
          %8117 = vst.msk [vmem:[#allocation7 + $0x14] sm:$0xf] %vm8115, %v8106
          %8118 = vst.msk [vmem:[#allocation7 + $0x20] sm:$0xf] %vm8115, %v8108
          %vm8119 = vcmask 189472
          %8120 = vst.msk [vmem:[#allocation7 + $0x2c] sm:$0x3] %vm8119, %v8110
          %v8121 = vld [vmem:[#allocation6 + $0x1a] sm:$0xff]
          %v8122 = vld [vmem:[#allocation6 + $0x22] sm:$0xff]
          %v8123 = vld [vmem:[#allocation6 + $0x2a] sm:$0xff]
          %v8124 = vld [vmem:[#allocation6 + $0x32] sm:$0xf]
          %v8125 = vpack.c.bf16 %v8122, %v8121
          %v8126 = vpack.c.bf16 %v8124, %v8123
          %v8129 = vunpack.c.l.b16 %v8125
          %v8130 = vunpack.c.h.b16 %v8125
          %v8131 = vunpack.c.l.b16 %v8126
          %v8132 = vunpack.c.h.b16 %v8126
          %v8133 = vpack.c.b16 %v8129, %v8129
          %v8134 = vpack.c.b16 %v8130, %v8130
          %v8135 = vpack.c.b16 %v8131, %v8131
          %v8136 = vpack.c.b16 %v8132, %v8132
          %8137 = vrot.lane.b32.xlu0 %v8133, 24
          %v8138 = vpop.permute.xlu0 %8137
          %8139 = vrot.lane.b32.xlu0 %v8134, 24
          %v8140 = vpop.permute.xlu0 %8139
          %8141 = vrot.lane.b32.xlu0 %v8135, 24
          %v8142 = vpop.permute.xlu0 %8141
          %8143 = vrot.lane.b32.xlu0 %v8136, 24
          %v8144 = vpop.permute.xlu0 %8143
          %vm8149 = vcmask 355520
          %8150 = vst.msk [vmem:[#allocation7 + $0x8] sm:$0xf] %vm8149, %v8138
          %8151 = vst.msk [vmem:[#allocation7 + $0x14] sm:$0xf] %vm8149, %v8140
          %8152 = vst.msk [vmem:[#allocation7 + $0x20] sm:$0xf] %vm8149, %v8142
          %vm8153 = vcmask 353472
          %8154 = vst.msk [vmem:[#allocation7 + $0x2c] sm:$0x3] %vm8153, %v8144
          %v8155 = vld [vmem:[#allocation6 + $0x1b] sm:$0xff]
          %v8156 = vld [vmem:[#allocation6 + $0x23] sm:$0xff]
          %v8157 = vld [vmem:[#allocation6 + $0x2b] sm:$0xff]
          %v8158 = vld [vmem:[#allocation6 + $0x33] sm:$0xf]
          %v8159 = vpack.c.bf16 %v8156, %v8155
          %v8160 = vpack.c.bf16 %v8158, %v8157
          %v8163 = vunpack.c.l.b16 %v8159
          %v8164 = vunpack.c.h.b16 %v8159
          %v8165 = vunpack.c.l.b16 %v8160
          %v8166 = vunpack.c.h.b16 %v8160
          %v8167 = vpack.c.b16 %v8163, %v8163
          %v8168 = vpack.c.b16 %v8164, %v8164
          %v8169 = vpack.c.b16 %v8165, %v8165
          %v8170 = vpack.c.b16 %v8166, %v8166
          %8171 = vrot.lane.b32.xlu0 %v8167, 44
          %v8172 = vpop.permute.xlu0 %8171
          %8173 = vrot.lane.b32.xlu0 %v8168, 44
          %v8174 = vpop.permute.xlu0 %8173
          %8175 = vrot.lane.b32.xlu0 %v8169, 44
          %v8176 = vpop.permute.xlu0 %8175
          %8177 = vrot.lane.b32.xlu0 %v8170, 44
          %v8178 = vpop.permute.xlu0 %8177
          %vm8183 = vcmask 519520
          %8184 = vst.msk [vmem:[#allocation7 + $0x8] sm:$0xf] %vm8183, %v8172
          %8185 = vst.msk [vmem:[#allocation7 + $0x14] sm:$0xf] %vm8183, %v8174
          %8186 = vst.msk [vmem:[#allocation7 + $0x20] sm:$0xf] %vm8183, %v8176
          %vm8187 = vcmask 517472
          %8188 = vst.msk [vmem:[#allocation7 + $0x2c] sm:$0x3] %vm8187, %v8178
          %v8189 = vld [vmem:[#allocation7] sm:$0xff]
          %v8190 = vld [vmem:[#allocation7 + $0x8] sm:$0xf]
          %v8191 = vld [vmem:[#allocation7 + $0xc] sm:$0xff]
          %v8192 = vld [vmem:[#allocation7 + $0x14] sm:$0xf]
          %v8193 = vld [vmem:[#allocation7 + $0x18] sm:$0xff]
          %v8194 = vld [vmem:[#allocation7 + $0x20] sm:$0xf]
          %v8195 = vld [vmem:[#allocation7 + $0x24] sm:$0x33]
          %v8196 = vld [vmem:[#allocation7 + $0x2c] sm:$0x3]
          %v8197 = vld [vmem:[%s7] sm:$0xf]
          %v8198 = vld [vmem:[%s7 + $0x4] sm:$0xf]
          %v8199 = vld [vmem:[%s7 + $0x8] sm:$0xf]
          %v8200 = vld [vmem:[%s7 + $0xc] sm:$0xf]
          %v8201 = vld [vmem:[%s7 + $0x10] sm:$0xf]
          %v8202 = vld [vmem:[%s7 + $0x14] sm:$0xf]
          %v8203 = vld [vmem:[%s7 + $0x18] sm:$0xf]
          %v8204 = vld [vmem:[%s7 + $0x1c] sm:$0xf]
          %v8205 = vld [vmem:[%s7 + $0x20] sm:$0xf]
          %v8206 = vld [vmem:[%s7 + $0x24] sm:$0xf]
          %v8207 = vld [vmem:[%s7 + $0x28] sm:$0xf]
          %v8208 = vld [vmem:[%s7 + $0x2c] sm:$0xf]
          %v8209 = vld [vmem:[%s7 + $0x30] sm:$0xf]
          %v8210 = vld [vmem:[%s7 + $0x34] sm:$0xf]
          %v8211 = vld [vmem:[%s7 + $0x38] sm:$0xf]
          %v8212 = vld [vmem:[%s7 + $0x3c] sm:$0xf]
          %v8213 = vld [vmem:[%s7 + $0x40] sm:$0xf]
          %v8214 = vld [vmem:[%s7 + $0x44] sm:$0xf]
          %v8215 = vld [vmem:[%s7 + $0x48] sm:$0xf]
          %v8216 = vld [vmem:[%s7 + $0x4c] sm:$0xf]
          %v8217 = vld [vmem:[%s7 + $0x50] sm:$0xf]
          %v8218 = vld [vmem:[%s7 + $0x54] sm:$0xf]
          %v8219 = vld [vmem:[%s7 + $0x58] sm:$0xf]
          %v8220 = vld [vmem:[%s7 + $0x5c] sm:$0xf]
          %v8221 = vld [vmem:[%s7 + $0x60] sm:$0xf]
          %v8222 = vld [vmem:[%s7 + $0x64] sm:$0xf]
          %v8223 = vld [vmem:[%s7 + $0x68] sm:$0xf]
          %v8224 = vld [vmem:[%s7 + $0x6c] sm:$0xf]
          %v8225 = vld [vmem:[%s7 + $0x70] sm:$0xf]
          %v8226 = vld [vmem:[%s7 + $0x74] sm:$0xf]
          %v8227 = vld [vmem:[%s7 + $0x78] sm:$0xf]
          %v8228 = vld [vmem:[%s7 + $0x7c] sm:$0xf]
          %v8229 = vld [vmem:[%s7 + $0x80] sm:$0xf]
          %v8230 = vld [vmem:[%s7 + $0x84] sm:$0xf]
          %v8231 = vld [vmem:[%s7 + $0x88] sm:$0xf]
          %v8232 = vld [vmem:[%s7 + $0x8c] sm:$0xf]
          %v8233 = vld [vmem:[%s7 + $0x90] sm:$0xf]
          %v8234 = vld [vmem:[%s7 + $0x94] sm:$0xf]
          %v8235 = vld [vmem:[%s7 + $0x98] sm:$0xf]
          %v8236 = vld [vmem:[%s7 + $0x9c] sm:$0xf]
          %v8237 = vld [vmem:[%s8] sm:$0x1]
          %v8239 = vlaneseq
          %v8240 = vshrl.u32 %v8239, 7
          %v8241 = vsub.s32 0, %v8240
          %v8242 = vrot.slane %v8237, %v8241
          %v8252 = vunpack.c.l.b16 %v8189
          %v8253 = vunpack.c.h.b16 %v8189
          %v8254 = vunpack.c.l.b16 %v8190
          %v8255 = vunpack.c.l.b16 %v8191
          %v8256 = vunpack.c.h.b16 %v8191
          %v8257 = vunpack.c.l.b16 %v8192
          %v8258 = vunpack.c.l.b16 %v8193
          %v8259 = vunpack.c.h.b16 %v8193
          %v8260 = vunpack.c.l.b16 %v8194
          %v8261 = vunpack.c.l.b16 %v8195
          %v8262 = vunpack.c.h.b16 %v8195
          %v8263 = vunpack.c.l.b16 %v8196
          %v8264 = vpack.c.b16 %v8255, %v8252
          %v8265 = vpack.c.b16 %v8256, %v8253
          %v8266 = vpack.c.b16 %v8257, %v8254
          %v8267 = vpack.c.b16 %v8261, %v8258
          %v8268 = vpack.c.b16 %v8262, %v8259
          %v8269 = vpack.c.b16 %v8263, %v8260
          %v8314 = vunpack.c.l.b16 %v8197
          %v8315 = vunpack.c.l.b16 %v8198
          %v8316 = vunpack.c.l.b16 %v8199
          %v8317 = vunpack.c.l.b16 %v8200
          %v8318 = vunpack.c.l.b16 %v8201
          %v8319 = vunpack.c.l.b16 %v8202
          %v8320 = vunpack.c.l.b16 %v8203
          %v8321 = vunpack.c.l.b16 %v8204
          %v8322 = vunpack.c.l.b16 %v8205
          %v8323 = vunpack.c.l.b16 %v8206
          %v8324 = vunpack.c.l.b16 %v8207
          %v8325 = vunpack.c.l.b16 %v8208
          %v8326 = vunpack.c.l.b16 %v8209
          %v8327 = vunpack.c.l.b16 %v8210
          %v8328 = vunpack.c.l.b16 %v8211
          %v8329 = vunpack.c.l.b16 %v8212
          %v8330 = vunpack.c.l.b16 %v8213
          %v8331 = vunpack.c.l.b16 %v8214
          %v8332 = vunpack.c.l.b16 %v8215
          %v8333 = vunpack.c.l.b16 %v8216
          %v8334 = vunpack.c.l.b16 %v8217
          %v8335 = vunpack.c.l.b16 %v8218
          %v8336 = vunpack.c.l.b16 %v8219
          %v8337 = vunpack.c.l.b16 %v8220
          %v8338 = vunpack.c.l.b16 %v8221
          %v8339 = vunpack.c.l.b16 %v8222
          %v8340 = vunpack.c.l.b16 %v8223
          %v8341 = vunpack.c.l.b16 %v8224
          %v8342 = vunpack.c.l.b16 %v8225
          %v8343 = vunpack.c.l.b16 %v8226
          %v8344 = vunpack.c.l.b16 %v8227
          %v8345 = vunpack.c.l.b16 %v8228
          %v8346 = vunpack.c.l.b16 %v8229
          %v8347 = vunpack.c.l.b16 %v8230
          %v8348 = vunpack.c.l.b16 %v8231
          %v8349 = vunpack.c.l.b16 %v8232
          %v8350 = vunpack.c.l.b16 %v8233
          %v8351 = vunpack.c.l.b16 %v8234
          %v8352 = vunpack.c.l.b16 %v8235
          %v8353 = vunpack.c.l.b16 %v8236
          %v8354 = vpack.c.b16 %v8315, %v8314
          %v8355 = vpack.c.b16 %v8317, %v8316
          %v8356 = vpack.c.b16 %v8319, %v8318
          %v8357 = vpack.c.b16 %v8321, %v8320
          %v8358 = vpack.c.b16 %v8323, %v8322
          %v8359 = vpack.c.b16 %v8325, %v8324
          %v8360 = vpack.c.b16 %v8327, %v8326
          %v8361 = vpack.c.b16 %v8329, %v8328
          %v8362 = vpack.c.b16 %v8331, %v8330
          %v8363 = vpack.c.b16 %v8333, %v8332
          %v8364 = vpack.c.b16 %v8335, %v8334
          %v8365 = vpack.c.b16 %v8337, %v8336
          %v8366 = vpack.c.b16 %v8339, %v8338
          %v8367 = vpack.c.b16 %v8341, %v8340
          %v8368 = vpack.c.b16 %v8343, %v8342
          %v8369 = vpack.c.b16 %v8345, %v8344
          %v8370 = vpack.c.b16 %v8347, %v8346
          %v8371 = vpack.c.b16 %v8349, %v8348
          %v8372 = vpack.c.b16 %v8351, %v8350
          %v8373 = vpack.c.b16 %v8353, %v8352
          %vm8394 = vcmask 523264
          %v8396 = vsel %vm8394, %v8266, 0
          %v8399 = vsel %vm8394, %v8269, 0
          %8401 = vmatprep.subr.bf16.mxu0 0
          %8402 = vmatpush1.bf16.msra.mxu0 %v8361
          %8403 = vmatprep.subr.bf16.mxu0 0
          %8404 = vmatpush1.bf16.msra.mxu0 %v8360
          %8405 = vmatprep.subr.bf16.mxu0 0
          %8406 = vmatpush1.bf16.msra.mxu0 %v8359
          %8407 = vmatprep.subr.bf16.mxu0 0
          %8408 = vmatpush1.bf16.msra.mxu0 %v8358
          %8409 = vmatprep.subr.bf16.mxu0 0
          %8410 = vmatpush1.bf16.msra.mxu0 %v8357
          %8411 = vmatprep.subr.bf16.mxu0 0
          %8412 = vmatpush1.bf16.msra.mxu0 %v8356
          %8413 = vmatprep.subr.bf16.mxu0 0
          %8414 = vmatpush1.bf16.msra.mxu0 %v8355
          %8415 = vmatprep.subr.bf16.mxu0 0
          %8416 = vmatpush1.bf16.msra.mxu0 %v8354
          %8417 = vmatprep.subr.bf16.mxu0 0
          %8418 = vmatpush2.bf16.msra.mxu0 %v8369
          %8419 = vmatprep.subr.bf16.mxu0 0
          %8420 = vmatpush2.bf16.msra.mxu0 %v8368
          %8421 = vmatprep.subr.bf16.mxu0 0
          %8422 = vmatpush2.bf16.msra.mxu0 %v8367
          %8423 = vmatprep.subr.bf16.mxu0 0
          %8424 = vmatpush2.bf16.msra.mxu0 %v8366
          %8425 = vmatprep.subr.bf16.mxu0 0
          %8426 = vmatpush2.bf16.msra.mxu0 %v8365
          %8427 = vmatprep.subr.bf16.mxu0 0
          %8428 = vmatpush2.bf16.msra.mxu0 %v8364
          %8429 = vmatprep.subr.bf16.mxu0 0
          %8430 = vmatpush2.bf16.msra.mxu0 %v8363
          %8431 = vmatprep.subr.bf16.mxu0 0
          %8432 = vmatpush2.bf16.msra.mxu0 %v8362
          %8433 = vmatprep.mubr.bf16.mxu0 %v8265
          %8434 = vmatmul.mubr.bf16.gmra.mxu0 %v8264
          %v8435 = vpop.f32.mrf.mxu0
          %v8436 = vadd.f32 %v8242, %v8435
          %v8437 = vpop.f32.mrf.mxu0
          %v8438 = vpop.f32.mrf.mxu0
          %v8439 = vadd.f32 %v8242, %v8438
          %v8440 = vpop.f32.mrf.mxu0
          %8441 = vmatprep.mubr.bf16.mxu0 %v8268
          %8442 = vmatmul.mubr.bf16.gmra.mxu0 %v8267
          %v8443 = vpop.f32.mrf.mxu0
          %v8444 = vadd.f32 %v8242, %v8443
          %v8445 = vpop.f32.mrf.mxu0
          %v8446 = vpop.f32.mrf.mxu0
          %v8447 = vadd.f32 %v8242, %v8446
          %v8448 = vpop.f32.mrf.mxu0
          %8449 = vdwg.mxu0
          %8450 = vmatprep.subr.bf16.mxu0 0
          %8451 = vmatpush1.bf16.msra.mxu0 0
          %8452 = vmatprep.subr.bf16.mxu0 0
          %8453 = vmatpush1.bf16.msra.mxu0 0
          %8454 = vmatprep.subr.bf16.mxu0 0
          %8455 = vmatpush1.bf16.msra.mxu0 0
          %8456 = vmatprep.subr.bf16.mxu0 0
          %8457 = vmatpush1.bf16.msra.mxu0 0
          %8458 = vmatprep.subr.bf16.mxu0 0
          %8459 = vmatpush1.bf16.msra.mxu0 %v8373
          %8460 = vmatprep.subr.bf16.mxu0 0
          %8461 = vmatpush1.bf16.msra.mxu0 %v8372
          %8462 = vmatprep.subr.bf16.mxu0 0
          %8463 = vmatpush1.bf16.msra.mxu0 %v8371
          %8464 = vmatprep.subr.bf16.mxu0 0
          %8465 = vmatpush1.bf16.msra.mxu0 %v8370
          %8466 = vmatprep.subr.bf16.mxu0 0
          %8467 = vmatpush2.bf16.msra.mxu0 0
          %8468 = vmatprep.subr.bf16.mxu0 0
          %8469 = vmatpush2.bf16.msra.mxu0 0
          %8470 = vmatprep.subr.bf16.mxu0 0
          %8471 = vmatpush2.bf16.msra.mxu0 0
          %8472 = vmatprep.subr.bf16.mxu0 0
          %8473 = vmatpush2.bf16.msra.mxu0 0
          %8474 = vmatprep.subr.bf16.mxu0 0
          %8475 = vmatpush2.bf16.msra.mxu0 0
          %8476 = vmatprep.subr.bf16.mxu0 0
          %8477 = vmatpush2.bf16.msra.mxu0 0
          %8478 = vmatprep.subr.bf16.mxu0 0
          %8479 = vmatpush2.bf16.msra.mxu0 0
          %8480 = vmatprep.subr.bf16.mxu0 0
          %8481 = vmatpush2.bf16.msra.mxu0 0
          %8482 = vmatprep.mubr.bf16.mxu0 0
          %8483 = vmatmul.mubr.bf16.gmra.mxu0 %v8396
          %v8484 = vpop.f32.mrf.mxu0
          %v8485 = vadd.f32 %v8436, %v8484
          %v8486 = vpop.f32.mrf.mxu0
          %v8487 = vpop.f32.mrf.mxu0
          %v8488 = vadd.f32 %v8439, %v8487
          %v8489 = vpop.f32.mrf.mxu0
          %8490 = vmatprep.mubr.bf16.mxu0 0
          %8491 = vmatmul.mubr.bf16.gmra.mxu0 %v8399
          %v8492 = vpop.f32.mrf.mxu0
          %v8493 = vadd.f32 %v8444, %v8492
          %v8494 = vpop.f32.mrf.mxu0
          %v8495 = vpop.f32.mrf.mxu0
          %v8496 = vadd.f32 %v8447, %v8495
          %v8497 = vpop.f32.mrf.mxu0
          %8498 = vdwg.mxu0
          %v8499 = vmax.f32 %v8485, 0.0
          %v8500 = vmax.f32 %v8488, 0.0
          %v8501 = vmax.f32 %v8493, 0.0
          %v8502 = vmax.f32 %v8496, 0.0
          %vm8503 = vcmask 326656
          %8504 = vst.msk [vmem:[#allocation8] sm:$0xff] %vm8503, %v8499
          %8505 = vst.msk [vmem:[#allocation8 + $0x8] sm:$0xff] %vm8503, %v8500
          %8506 = vst.msk [vmem:[#allocation8 + $0x10] sm:$0xff] %vm8503, %v8501
          %vm8507 = vcmask 322560
          %8508 = vst.msk [vmem:[#allocation8 + $0x18] sm:$0xf] %vm8507, %v8502
          %v8509 = vld [vmem:[%s9] sm:$0xf]
          %v8510 = vld [vmem:[%s9 + $0x4] sm:$0xf]
          %v8511 = vld [vmem:[%s9 + $0x8] sm:$0xf]
          %v8512 = vld [vmem:[%s9 + $0xc] sm:$0xf]
          %v8513 = vld [vmem:[%s9 + $0x10] sm:$0x3]
          %v8514 = vld [vmem:[#allocation8] sm:$0xff]
          %v8515 = vld [vmem:[#allocation8 + $0x8] sm:$0xff]
          %v8516 = vld [vmem:[#allocation8 + $0x10] sm:$0x7]
          %v8517 = vld [vmem:[#allocation8 + $0x1] sm:$0xff]
          %v8518 = vld [vmem:[#allocation8 + $0x9] sm:$0xff]
          %v8519 = vld [vmem:[#allocation8 + $0x11] sm:$0x7]
          %v8520 = vld [vmem:[#allocation8 + $0x10] sm:$0xff]
          %v8521 = vld [vmem:[#allocation8 + $0x18] sm:$0x7]
          %v8522 = vld [vmem:[#allocation8 + $0x11] sm:$0xff]
          %v8523 = vld [vmem:[#allocation8 + $0x19] sm:$0x7]
          %v8524 = vmax.f32 %v8514, %v8517
          %v8525 = vmax.f32 %v8515, %v8518
          %v8526 = vmax.f32 %v8516, %v8519
          %v8527 = vmax.f32 %v8520, %v8522
          %v8528 = vmax.f32 %v8521, %v8523
          %v8529 = vmax.f32 %v8524, %v8525
          %v8530 = vmax.f32 %v8525, %v8527
          %v8531 = vmax.f32 %v8526, %v8528
          %v8532 = vpack.c.bf16 %v8530, %v8529
          %v8533 = vpack.c.bf16 %v8531, %v8531
          %v8539 = vunpack.c.l.b16 %v8509
          %v8540 = vunpack.c.l.b16 %v8510
          %v8541 = vunpack.c.l.b16 %v8511
          %v8542 = vunpack.c.l.b16 %v8512
          %v8543 = vunpack.c.l.b16 %v8513
          %v8544 = vpack.c.b16 %v8540, %v8539
          %v8545 = vpack.c.b16 %v8542, %v8541
          %v8546 = vpack.c.b16 %v8543, %v8543
          %vm8547 = vcmask 154624
          %v8549 = vsel %vm8547, %v8544, 0
          %v8552 = vsel %vm8547, %v8545, 0
          %v8555 = vsel %vm8547, %v8546, 0
          %vm8557 = vcmask 1040384
          %vm8558 = vcmask 1041408
          %v8559 = vsel %vm8557, 4294967295, 65535
          %v8560 = vsel %vm8558, %v8559, 0
          %v8562 = vand.u32 %v8533, %v8560
          %8564 = vmatprep.subr.bf16.mxu0 0
          %8565 = vmatpush1.bf16.msra.mxu0 0
          %8566 = vmatprep.subr.bf16.mxu0 0
          %8567 = vmatpush1.bf16.msra.mxu0 0
          %8568 = vmatprep.subr.bf16.mxu0 0
          %8569 = vmatpush1.bf16.msra.mxu0 0
          %8570 = vmatprep.subr.bf16.mxu0 0
          %8571 = vmatpush1.bf16.msra.mxu0 0
          %8572 = vmatprep.subr.bf16.mxu0 0
          %8573 = vmatpush1.bf16.msra.mxu0 0
          %8574 = vmatprep.subr.bf16.mxu0 0
          %8575 = vmatpush1.bf16.msra.mxu0 0
          %8576 = vmatprep.subr.bf16.mxu0 0
          %8577 = vmatpush1.bf16.msra.mxu0 %v8562
          %8578 = vmatprep.subr.bf16.mxu0 0
          %8579 = vmatpush1.bf16.msra.mxu0 %v8532
          %8580 = vmatprep.subr.bf16.mxu0 0
          %8581 = vmatpush2.bf16.msra.mxu0 0
          %8582 = vmatprep.subr.bf16.mxu0 0
          %8583 = vmatpush2.bf16.msra.mxu0 0
          %8584 = vmatprep.subr.bf16.mxu0 0
          %8585 = vmatpush2.bf16.msra.mxu0 0
          %8586 = vmatprep.subr.bf16.mxu0 0
          %8587 = vmatpush2.bf16.msra.mxu0 0
          %8588 = vmatprep.subr.bf16.mxu0 0
          %8589 = vmatpush2.bf16.msra.mxu0 0
          %8590 = vmatprep.subr.bf16.mxu0 0
          %8591 = vmatpush2.bf16.msra.mxu0 0
          %8592 = vmatprep.subr.bf16.mxu0 0
          %8593 = vmatpush2.bf16.msra.mxu0 0
          %8594 = vmatprep.subr.bf16.mxu0 0
          %8595 = vmatpush2.bf16.msra.mxu0 0
          %8596 = vmatprep.mubr.bf16.mxu0 0
          %8597 = vmatmul.mubr.bf16.gmra.mxu0 %v8549
          %v8598 = vpop.f32.mrf.mxu0
          %v8599 = vadd.f32 0.0, %v8598
          %v8600 = vpop.f32.mrf.mxu0
          %v8601 = vpop.f32.mrf.mxu0
          %v8602 = vadd.f32 0.0, %v8601
          %v8603 = vpop.f32.mrf.mxu0
          %8604 = vmatprep.mubr.bf16.mxu0 0
          %8605 = vmatmul.mubr.bf16.gmra.mxu0 %v8552
          %v8606 = vpop.f32.mrf.mxu0
          %v8607 = vadd.f32 0.0, %v8606
          %v8608 = vpop.f32.mrf.mxu0
          %v8609 = vpop.f32.mrf.mxu0
          %v8610 = vadd.f32 0.0, %v8609
          %v8611 = vpop.f32.mrf.mxu0
          %8612 = vmatprep.mubr.bf16.mxu0 0
          %8613 = vmatmul.mubr.bf16.gmra.mxu0 %v8555
          %v8614 = vpop.f32.mrf.mxu0
          %v8615 = vadd.f32 0.0, %v8614
          %v8616 = vpop.f32.mrf.mxu0
          %v8617 = vpop.f32.mrf.mxu0
          %v8618 = vpop.f32.mrf.mxu0
          %8619 = vdwg.mxu0
          %8620 = vst.msk [vmem:[#allocation9] sm:$0xff] %vm8503, %v8599
          %8621 = vst.msk [vmem:[#allocation9 + $0x8] sm:$0xff] %vm8503, %v8602
          %8622 = vst.msk [vmem:[#allocation9 + $0x10] sm:$0xff] %vm8503, %v8607
          %8623 = vst.msk [vmem:[#allocation9 + $0x18] sm:$0xff] %vm8503, %v8610
          %8624 = vst.msk [vmem:[#allocation9 + $0x20] sm:$0xf] %vm8507, %v8615
          %v8625 = vld [vmem:[#allocation9] sm:$0xff]
          %v8626 = vpack.c.bf16 %v8625, %v8625
          %8627 = vst.msk [vmem:[#allocation10] sm:$0xf] %vm8507, %v8626
          %v8628 = vld [vmem:[#allocation9 + $0x1] sm:$0xff]
          %v8629 = vpack.c.bf16 %v8628, %v8628
          %v8631 = vunpack.c.l.b16 %v8629
          %v8632 = vpack.c.b16 %v8631, %v8631
          %8633 = vrot.lane.b32.xlu0 %v8632, 40
          %v8634 = vpop.permute.xlu0 %8633
          %vm8636 = vcmask 650560
          %8637 = vst.msk [vmem:[#allocation10] sm:$0xf] %vm8636, %v8634
          %v8638 = vld [vmem:[#allocation9 + $0x2] sm:$0xff]
          %v8639 = vpack.c.bf16 %v8638, %v8638
          %v8641 = vunpack.c.l.b16 %v8639
          %v8642 = vpack.c.b16 %v8641, %v8641
          %8643 = vrot.lane.b32.xlu0 %v8642, 80
          %v8644 = vpop.permute.xlu0 %8643
          %vm8646 = vcmask 978560
          %8647 = vst.msk [vmem:[#allocation10] sm:$0xf] %vm8646, %v8644
          %v8648 = vld [vmem:[#allocation9 + $0x3] sm:$0xff]
          %v8649 = vpack.c.bf16 %v8648, %v8648
          %v8651 = vunpack.c.l.b16 %v8649
          %v8652 = vpack.c.b16 %v8651, %v8651
          %8653 = vrot.lane.b32.xlu0 %v8652, 120
          %v8654 = vpop.permute.xlu0 %8653
          %v8655 = vrot.slane %v8654, 4
          %v8656 = vsel %vm6294, %v8655, %v8654
          %vm8658 = vcmask 261124
          %vm8659 = vmor %vm8658, %vm6343
          %8660 = vst.msk [vmem:[#allocation10] sm:$0xff] %vm8659, %v8656
          %v8661 = vld [vmem:[#allocation9 + $0x6] sm:$0xff]
          %v8662 = vpack.c.bf16 %v8661, %v8661
          %v8664 = vunpack.c.l.b16 %v8662
          %v8665 = vpack.c.b16 %v8664, %v8664
          %8666 = vrot.lane.b32.xlu0 %v8665, 32
          %v8667 = vpop.permute.xlu0 %8666
          %vm8669 = vcmask 584960
          %8670 = vst.msk [vmem:[#allocation10 + $0x4] sm:$0xf] %vm8669, %v8667
          %v8671 = vld [vmem:[#allocation9 + $0x7] sm:$0xff]
          %v8672 = vpack.c.bf16 %v8671, %v8671
          %v8674 = vunpack.c.l.b16 %v8672
          %v8675 = vpack.c.b16 %v8674, %v8674
          %8676 = vrot.lane.b32.xlu0 %v8675, 72
          %v8677 = vpop.permute.xlu0 %8676
          %vm8679 = vcmask 912960
          %8680 = vst.msk [vmem:[#allocation10 + $0x4] sm:$0xf] %vm8679, %v8677
          %v8681 = vld [vmem:[#allocation9 + $0x8] sm:$0xff]
          %v8682 = vpack.c.bf16 %v8681, %v8681
          %v8684 = vunpack.c.l.b16 %v8682
          %v8685 = vpack.c.b16 %v8684, %v8684
          %8686 = vrot.lane.b32.xlu0 %v8685, 112
          %v8687 = vpop.permute.xlu0 %8686
          %v8688 = vrot.slane %v8687, 4
          %v8689 = vsel %vm8068, %v8688, %v8687
          %vm8691 = vcmask 195588
          %vm8692 = vmor %vm8691, %vm8077
          %8693 = vst.msk [vmem:[#allocation10 + $0x4] sm:$0xff] %vm8692, %v8689
          %v8694 = vld [vmem:[#allocation9 + $0x9] sm:$0xff]
          %v8695 = vpack.c.bf16 %v8694, %v8694
          %v8697 = vunpack.c.l.b16 %v8695
          %v8698 = vpack.c.b16 %v8697, %v8697
          %8699 = vrot.lane.b32.xlu0 %v8698, 24
          %v8700 = vpop.permute.xlu0 %8699
          %vm8702 = vcmask 519360
          %8703 = vst.msk [vmem:[#allocation10 + $0x8] sm:$0xf] %vm8702, %v8700
          %v8704 = vld [vmem:[#allocation9 + $0xc] sm:$0xff]
          %v8705 = vpack.c.bf16 %v8704, %v8704
          %v8707 = vunpack.c.l.b16 %v8705
          %v8708 = vpack.c.b16 %v8707, %v8707
          %8709 = vrot.lane.b32.xlu0 %v8708, 64
          %v8710 = vpop.permute.xlu0 %8709
          %vm8712 = vcmask 847360
          %8713 = vst.msk [vmem:[#allocation10 + $0x8] sm:$0xf] %vm8712, %v8710
          %v8714 = vld [vmem:[#allocation9 + $0xd] sm:$0xff]
          %v8715 = vpack.c.bf16 %v8714, %v8714
          %v8717 = vunpack.c.l.b16 %v8715
          %v8718 = vpack.c.b16 %v8717, %v8717
          %8719 = vrot.lane.b32.xlu0 %v8718, 104
          %v8720 = vpop.permute.xlu0 %8719
          %v8721 = vrot.slane %v8720, 4
          %vm8722 = vcmask 850944
          %v8723 = vsel %vm8722, %v8721, %v8720
          %vm8725 = vcmask 1044288
          %vm8726 = vcmask 130052
          %vm8727 = vmor %vm8726, %vm8725
          %8728 = vst.msk [vmem:[#allocation10 + $0x8] sm:$0xff] %vm8727, %v8723
          %v8729 = vld [vmem:[#allocation9 + $0xe] sm:$0xff]
          %v8730 = vpack.c.bf16 %v8729, %v8729
          %v8732 = vunpack.c.l.b16 %v8730
          %v8733 = vpack.c.b16 %v8732, %v8732
          %8734 = vrot.lane.b32.xlu0 %v8733, 16
          %v8735 = vpop.permute.xlu0 %8734
          %vm8737 = vcmask 453760
          %8738 = vst.msk [vmem:[#allocation10 + $0xc] sm:$0xf] %vm8737, %v8735
          %v8739 = vld [vmem:[#allocation9 + $0xf] sm:$0xff]
          %v8740 = vpack.c.bf16 %v8739, %v8739
          %v8742 = vunpack.c.l.b16 %v8740
          %v8743 = vpack.c.b16 %v8742, %v8742
          %8744 = vrot.lane.b32.xlu0 %v8743, 56
          %v8745 = vpop.permute.xlu0 %8744
          %vm8747 = vcmask 781760
          %8748 = vst.msk [vmem:[#allocation10 + $0xc] sm:$0xf] %vm8747, %v8745
          %v8749 = vld [vmem:[#allocation9 + $0x12] sm:$0xff]
          %v8750 = vpack.c.bf16 %v8749, %v8749
          %v8752 = vunpack.c.l.b16 %v8750
          %v8753 = vpack.c.b16 %v8752, %v8752
          %8754 = vrot.lane.b32.xlu0 %v8753, 96
          %v8755 = vpop.permute.xlu0 %8754
          %v8756 = vrot.slane %v8755, 4
          %vm8757 = vcmask 785408
          %v8758 = vsel %vm8757, %v8756, %v8755
          %vm8760 = vcmask 1044224
          %vm8761 = vcmask 64516
          %vm8762 = vmor %vm8761, %vm8760
          %8763 = vst.msk [vmem:[#allocation10 + $0xc] sm:$0xff] %vm8762, %v8758
          %v8764 = vld [vmem:[#allocation9 + $0x13] sm:$0xff]
          %v8765 = vpack.c.bf16 %v8764, %v8764
          %v8767 = vunpack.c.l.b16 %v8765
          %v8768 = vpack.c.b16 %v8767, %v8767
          %8769 = vrot.lane.b32.xlu0 %v8768, 8
          %v8770 = vpop.permute.xlu0 %8769
          %vm8772 = vcmask 388160
          %8773 = vst.msk [vmem:[#allocation10 + $0x10] sm:$0xf] %vm8772, %v8770
          %v8774 = vld [vmem:[#allocation9 + $0x14] sm:$0xff]
          %v8775 = vpack.c.bf16 %v8774, %v8774
          %v8777 = vunpack.c.l.b16 %v8775
          %v8778 = vpack.c.b16 %v8777, %v8777
          %8779 = vrot.lane.b32.xlu0 %v8778, 48
          %v8780 = vpop.permute.xlu0 %8779
          %vm8782 = vcmask 716160
          %8783 = vst.msk [vmem:[#allocation10 + $0x10] sm:$0xf] %vm8782, %v8780
          %v8784 = vld [vmem:[#allocation9 + $0x15] sm:$0xff]
          %v8785 = vpack.c.bf16 %v8784, %v8784
          %v8787 = vunpack.c.l.b16 %v8785
          %v8788 = vpack.c.b16 %v8787, %v8787
          %8789 = vrot.lane.b32.xlu0 %v8788, 88
          %v8790 = vpop.permute.xlu0 %8789
          %vm8792 = vcmask 1044160
          %8793 = vst.msk [vmem:[#allocation10 + $0x10] sm:$0xf] %vm8792, %v8790
          %v8794 = vld [vmem:[#allocation10] sm:$0xff]
          %v8795 = vld [vmem:[#allocation10 + $0x8] sm:$0xff]
          %v8796 = vld [vmem:[#allocation10 + $0x10] sm:$0xf]
          %v8797 = vld [vmem:[%s10] sm:$0xff]
          %v8798 = vld [vmem:[%s10 + $0x8] sm:$0xff]
          %v8799 = vld [vmem:[%s10 + $0x10] sm:$0xff]
          %v8800 = vld [vmem:[%s10 + $0x18] sm:$0xff]
          %v8801 = vld [vmem:[%s10 + $0x20] sm:$0xff]
          %v8802 = vld [vmem:[%s10 + $0x28] sm:$0xff]
          %v8803 = vld [vmem:[%s10 + $0x30] sm:$0xff]
          %v8804 = vld [vmem:[%s10 + $0x38] sm:$0xff]
          %v8805 = vld [vmem:[%s10 + $0x40] sm:$0xff]
          %v8806 = vld [vmem:[%s10 + $0x48] sm:$0xff]
          %v8807 = vld [vmem:[%s10 + $0x50] sm:$0xff]
          %v8808 = vld [vmem:[%s10 + $0x58] sm:$0xff]
          %v8809 = vld [vmem:[%s10 + $0x60] sm:$0xff]
          %v8810 = vld [vmem:[%s10 + $0x68] sm:$0xff]
          %v8811 = vld [vmem:[%s10 + $0x70] sm:$0xff]
          %v8812 = vld [vmem:[%s10 + $0x78] sm:$0xff]
          %v8813 = vld [vmem:[%s10 + $0x80] sm:$0xff]
          %v8814 = vld [vmem:[%s10 + $0x88] sm:$0xff]
          %v8815 = vld [vmem:[%s10 + $0x90] sm:$0xff]
          %v8816 = vld [vmem:[%s10 + $0x98] sm:$0xff]
          %v8817 = vld [vmem:[%s10 + $0xa0] sm:$0xff]
          %v8818 = vld [vmem:[%s10 + $0xa8] sm:$0xff]
          %v8819 = vld [vmem:[%s10 + $0xb0] sm:$0xff]
          %v8820 = vld [vmem:[%s10 + $0xb8] sm:$0xff]
          %v8821 = vld [vmem:[%s10 + $0xc0] sm:$0xff]
          %v8822 = vld [vmem:[%s10 + $0xc8] sm:$0xff]
          %v8823 = vld [vmem:[%s10 + $0xd0] sm:$0xff]
          %v8824 = vld [vmem:[%s10 + $0xd8] sm:$0xff]
          %v8825 = vld [vmem:[%s10 + $0xe0] sm:$0xff]
          %v8826 = vld [vmem:[%s10 + $0xe8] sm:$0xff]
          %v8827 = vld [vmem:[%s10 + $0xf0] sm:$0xff]
          %v8828 = vld [vmem:[%s10 + $0xf8] sm:$0xff]
          %v8829 = vld [vmem:[%s10 + $0x100] sm:$0xff]
          %v8830 = vld [vmem:[%s10 + $0x108] sm:$0xff]
          %v8831 = vld [vmem:[%s10 + $0x110] sm:$0xff]
          %v8832 = vld [vmem:[%s10 + $0x118] sm:$0xff]
          %v8833 = vld [vmem:[%s10 + $0x120] sm:$0xff]
          %v8834 = vld [vmem:[%s10 + $0x128] sm:$0xff]
          %v8835 = vld [vmem:[%s10 + $0x130] sm:$0xff]
          %v8836 = vld [vmem:[%s10 + $0x138] sm:$0xff]
          %v8837 = vld [vmem:[%s10 + $0x140] sm:$0xff]
          %v8838 = vld [vmem:[%s10 + $0x148] sm:$0xff]
          %v8839 = vld [vmem:[%s10 + $0x150] sm:$0xff]
          %v8840 = vld [vmem:[%s10 + $0x158] sm:$0xff]
          %v8841 = vld [vmem:[%s10 + $0x160] sm:$0xff]
          %v8842 = vld [vmem:[%s10 + $0x168] sm:$0xff]
          %v8843 = vld [vmem:[%s10 + $0x170] sm:$0xff]
          %v8844 = vld [vmem:[%s10 + $0x178] sm:$0xff]
          %v8845 = vld [vmem:[%s10 + $0x180] sm:$0xff]
          %v8846 = vld [vmem:[%s10 + $0x188] sm:$0xff]
          %v8847 = vld [vmem:[%s10 + $0x190] sm:$0xff]
          %v8848 = vld [vmem:[%s10 + $0x198] sm:$0xff]
          %v8849 = vld [vmem:[%s10 + $0x1a0] sm:$0xff]
          %v8850 = vld [vmem:[%s10 + $0x1a8] sm:$0xff]
          %v8851 = vld [vmem:[%s10 + $0x1b0] sm:$0xff]
          %v8852 = vld [vmem:[%s10 + $0x1b8] sm:$0xff]
          %v8853 = vld [vmem:[%s10 + $0x1c0] sm:$0xff]
          %v8854 = vld [vmem:[%s10 + $0x1c8] sm:$0xff]
          %v8855 = vld [vmem:[%s10 + $0x1d0] sm:$0xff]
          %v8856 = vld [vmem:[%s10 + $0x1d8] sm:$0xff]
          %v8857 = vld [vmem:[%s10 + $0x1e0] sm:$0xff]
          %v8858 = vld [vmem:[%s10 + $0x1e8] sm:$0xff]
          %v8859 = vld [vmem:[%s10 + $0x1f0] sm:$0xff]
          %v8860 = vld [vmem:[%s10 + $0x1f8] sm:$0xff]
          %v8861 = vld [vmem:[%s10 + $0x200] sm:$0xff]
          %v8862 = vld [vmem:[%s10 + $0x208] sm:$0xff]
          %v8863 = vld [vmem:[%s10 + $0x210] sm:$0xff]
          %v8864 = vld [vmem:[%s10 + $0x218] sm:$0xff]
          %v8865 = vld [vmem:[%s10 + $0x220] sm:$0xff]
          %v8866 = vld [vmem:[%s10 + $0x228] sm:$0xff]
          %v8867 = vld [vmem:[%s10 + $0x230] sm:$0xff]
          %v8868 = vld [vmem:[%s10 + $0x238] sm:$0xff]
          %v8869 = vld [vmem:[%s10 + $0x240] sm:$0xff]
          %v8870 = vld [vmem:[%s10 + $0x248] sm:$0xff]
          %v8871 = vld [vmem:[%s10 + $0x250] sm:$0xff]
          %v8872 = vld [vmem:[%s10 + $0x258] sm:$0xff]
          %v8873 = vld [vmem:[%s10 + $0x260] sm:$0xff]
          %v8874 = vld [vmem:[%s10 + $0x268] sm:$0xff]
          %v8875 = vld [vmem:[%s10 + $0x270] sm:$0xff]
          %v8876 = vld [vmem:[%s10 + $0x278] sm:$0xff]
          %v8877 = vld [vmem:[%s11] sm:$0x3]
          %v8879 = vlaneseq
          %v8880 = vshrl.u32 %v8879, 7
          %v8881 = vsub.s32 0, %v8880
          %v8882 = vrot.slane %v8877, %v8881
          %v8883 = vlaneseq
          %v8884 = vshrl.u32 %v8883, 7
          %v8885 = vsub.s32 1, %v8884
          %v8886 = vrot.slane %v8877, %v8885
          %v8892 = vunpack.c.l.b16 %v8794
          %v8893 = vunpack.c.h.b16 %v8794
          %v8894 = vunpack.c.l.b16 %v8795
          %v8895 = vunpack.c.h.b16 %v8795
          %v8896 = vunpack.c.l.b16 %v8796
          %v8897 = vpack.c.b16 %v8892, %v8892
          %v8898 = vpack.c.b16 %v8893, %v8893
          %v8899 = vpack.c.b16 %v8894, %v8894
          %v8900 = vpack.c.b16 %v8895, %v8895
          %v8901 = vpack.c.b16 %v8896, %v8896
          %v8987 = vunpack.c.l.b16 %v8797
          %v8988 = vunpack.c.h.b16 %v8797
          %v8989 = vunpack.c.l.b16 %v8798
          %v8990 = vunpack.c.h.b16 %v8798
          %v8991 = vunpack.c.l.b16 %v8799
          %v8992 = vunpack.c.h.b16 %v8799
          %v8993 = vunpack.c.l.b16 %v8800
          %v8994 = vunpack.c.h.b16 %v8800
          %v8995 = vunpack.c.l.b16 %v8801
          %v8996 = vunpack.c.h.b16 %v8801
          %v8997 = vunpack.c.l.b16 %v8802
          %v8998 = vunpack.c.h.b16 %v8802
          %v8999 = vunpack.c.l.b16 %v8803
          %v9000 = vunpack.c.h.b16 %v8803
          %v9001 = vunpack.c.l.b16 %v8804
          %v9002 = vunpack.c.h.b16 %v8804
          %v9003 = vunpack.c.l.b16 %v8805
          %v9004 = vunpack.c.h.b16 %v8805
          %v9005 = vunpack.c.l.b16 %v8806
          %v9006 = vunpack.c.h.b16 %v8806
          %v9007 = vunpack.c.l.b16 %v8807
          %v9008 = vunpack.c.h.b16 %v8807
          %v9009 = vunpack.c.l.b16 %v8808
          %v9010 = vunpack.c.h.b16 %v8808
          %v9011 = vunpack.c.l.b16 %v8809
          %v9012 = vunpack.c.h.b16 %v8809
          %v9013 = vunpack.c.l.b16 %v8810
          %v9014 = vunpack.c.h.b16 %v8810
          %v9015 = vunpack.c.l.b16 %v8811
          %v9016 = vunpack.c.h.b16 %v8811
          %v9017 = vunpack.c.l.b16 %v8812
          %v9018 = vunpack.c.h.b16 %v8812
          %v9019 = vunpack.c.l.b16 %v8813
          %v9020 = vunpack.c.h.b16 %v8813
          %v9021 = vunpack.c.l.b16 %v8814
          %v9022 = vunpack.c.h.b16 %v8814
          %v9023 = vunpack.c.l.b16 %v8815
          %v9024 = vunpack.c.h.b16 %v8815
          %v9025 = vunpack.c.l.b16 %v8816
          %v9026 = vunpack.c.h.b16 %v8816
          %v9027 = vunpack.c.l.b16 %v8817
          %v9028 = vunpack.c.h.b16 %v8817
          %v9029 = vunpack.c.l.b16 %v8818
          %v9030 = vunpack.c.h.b16 %v8818
          %v9031 = vunpack.c.l.b16 %v8819
          %v9032 = vunpack.c.h.b16 %v8819
          %v9033 = vunpack.c.l.b16 %v8820
          %v9034 = vunpack.c.h.b16 %v8820
          %v9035 = vunpack.c.l.b16 %v8821
          %v9036 = vunpack.c.h.b16 %v8821
          %v9037 = vunpack.c.l.b16 %v8822
          %v9038 = vunpack.c.h.b16 %v8822
          %v9039 = vunpack.c.l.b16 %v8823
          %v9040 = vunpack.c.h.b16 %v8823
          %v9041 = vunpack.c.l.b16 %v8824
          %v9042 = vunpack.c.h.b16 %v8824
          %v9043 = vunpack.c.l.b16 %v8825
          %v9044 = vunpack.c.h.b16 %v8825
          %v9045 = vunpack.c.l.b16 %v8826
          %v9046 = vunpack.c.h.b16 %v8826
          %v9047 = vunpack.c.l.b16 %v8827
          %v9048 = vunpack.c.h.b16 %v8827
          %v9049 = vunpack.c.l.b16 %v8828
          %v9050 = vunpack.c.h.b16 %v8828
          %v9051 = vunpack.c.l.b16 %v8829
          %v9052 = vunpack.c.h.b16 %v8829
          %v9053 = vunpack.c.l.b16 %v8830
          %v9054 = vunpack.c.h.b16 %v8830
          %v9055 = vunpack.c.l.b16 %v8831
          %v9056 = vunpack.c.h.b16 %v8831
          %v9057 = vunpack.c.l.b16 %v8832
          %v9058 = vunpack.c.h.b16 %v8832
          %v9059 = vunpack.c.l.b16 %v8833
          %v9060 = vunpack.c.h.b16 %v8833
          %v9061 = vunpack.c.l.b16 %v8834
          %v9062 = vunpack.c.h.b16 %v8834
          %v9063 = vunpack.c.l.b16 %v8835
          %v9064 = vunpack.c.h.b16 %v8835
          %v9065 = vunpack.c.l.b16 %v8836
          %v9066 = vunpack.c.h.b16 %v8836
          %v9067 = vunpack.c.l.b16 %v8837
          %v9068 = vunpack.c.h.b16 %v8837
          %v9069 = vunpack.c.l.b16 %v8838
          %v9070 = vunpack.c.h.b16 %v8838
          %v9071 = vunpack.c.l.b16 %v8839
          %v9072 = vunpack.c.h.b16 %v8839
          %v9073 = vunpack.c.l.b16 %v8840
          %v9074 = vunpack.c.h.b16 %v8840
          %v9075 = vunpack.c.l.b16 %v8841
          %v9076 = vunpack.c.h.b16 %v8841
          %v9077 = vunpack.c.l.b16 %v8842
          %v9078 = vunpack.c.h.b16 %v8842
          %v9079 = vunpack.c.l.b16 %v8843
          %v9080 = vunpack.c.h.b16 %v8843
          %v9081 = vunpack.c.l.b16 %v8844
          %v9082 = vunpack.c.h.b16 %v8844
          %v9083 = vunpack.c.l.b16 %v8845
          %v9084 = vunpack.c.h.b16 %v8845
          %v9085 = vunpack.c.l.b16 %v8846
          %v9086 = vunpack.c.h.b16 %v8846
          %v9087 = vunpack.c.l.b16 %v8847
          %v9088 = vunpack.c.h.b16 %v8847
          %v9089 = vunpack.c.l.b16 %v8848
          %v9090 = vunpack.c.h.b16 %v8848
          %v9091 = vunpack.c.l.b16 %v8849
          %v9092 = vunpack.c.h.b16 %v8849
          %v9093 = vunpack.c.l.b16 %v8850
          %v9094 = vunpack.c.h.b16 %v8850
          %v9095 = vunpack.c.l.b16 %v8851
          %v9096 = vunpack.c.h.b16 %v8851
          %v9097 = vunpack.c.l.b16 %v8852
          %v9098 = vunpack.c.h.b16 %v8852
          %v9099 = vunpack.c.l.b16 %v8853
          %v9100 = vunpack.c.h.b16 %v8853
          %v9101 = vunpack.c.l.b16 %v8854
          %v9102 = vunpack.c.h.b16 %v8854
          %v9103 = vunpack.c.l.b16 %v8855
          %v9104 = vunpack.c.h.b16 %v8855
          %v9105 = vunpack.c.l.b16 %v8856
          %v9106 = vunpack.c.h.b16 %v8856
          %v9107 = vunpack.c.l.b16 %v8857
          %v9108 = vunpack.c.h.b16 %v8857
          %v9109 = vunpack.c.l.b16 %v8858
          %v9110 = vunpack.c.h.b16 %v8858
          %v9111 = vunpack.c.l.b16 %v8859
          %v9112 = vunpack.c.h.b16 %v8859
          %v9113 = vunpack.c.l.b16 %v8860
          %v9114 = vunpack.c.h.b16 %v8860
          %v9115 = vunpack.c.l.b16 %v8861
          %v9116 = vunpack.c.h.b16 %v8861
          %v9117 = vunpack.c.l.b16 %v8862
          %v9118 = vunpack.c.h.b16 %v8862
          %v9119 = vunpack.c.l.b16 %v8863
          %v9120 = vunpack.c.h.b16 %v8863
          %v9121 = vunpack.c.l.b16 %v8864
          %v9122 = vunpack.c.h.b16 %v8864
          %v9123 = vunpack.c.l.b16 %v8865
          %v9124 = vunpack.c.h.b16 %v8865
          %v9125 = vunpack.c.l.b16 %v8866
          %v9126 = vunpack.c.h.b16 %v8866
          %v9127 = vunpack.c.l.b16 %v8867
          %v9128 = vunpack.c.h.b16 %v8867
          %v9129 = vunpack.c.l.b16 %v8868
          %v9130 = vunpack.c.h.b16 %v8868
          %v9131 = vunpack.c.l.b16 %v8869
          %v9132 = vunpack.c.h.b16 %v8869
          %v9133 = vunpack.c.l.b16 %v8870
          %v9134 = vunpack.c.h.b16 %v8870
          %v9135 = vunpack.c.l.b16 %v8871
          %v9136 = vunpack.c.h.b16 %v8871
          %v9137 = vunpack.c.l.b16 %v8872
          %v9138 = vunpack.c.h.b16 %v8872
          %v9139 = vunpack.c.l.b16 %v8873
          %v9140 = vunpack.c.h.b16 %v8873
          %v9141 = vunpack.c.l.b16 %v8874
          %v9142 = vunpack.c.h.b16 %v8874
          %v9143 = vunpack.c.l.b16 %v8875
          %v9144 = vunpack.c.h.b16 %v8875
          %v9145 = vunpack.c.l.b16 %v8876
          %v9146 = vunpack.c.h.b16 %v8876
          %v9147 = vpack.c.b16 %v8989, %v8987
          %v9148 = vpack.c.b16 %v8990, %v8988
          %v9149 = vpack.c.b16 %v8993, %v8991
          %v9150 = vpack.c.b16 %v8994, %v8992
          %v9151 = vpack.c.b16 %v8997, %v8995
          %v9152 = vpack.c.b16 %v8998, %v8996
          %v9153 = vpack.c.b16 %v9001, %v8999
          %v9154 = vpack.c.b16 %v9002, %v9000
          %v9155 = vpack.c.b16 %v9005, %v9003
          %v9156 = vpack.c.b16 %v9006, %v9004
          %v9157 = vpack.c.b16 %v9009, %v9007
          %v9158 = vpack.c.b16 %v9010, %v9008
          %v9159 = vpack.c.b16 %v9013, %v9011
          %v9160 = vpack.c.b16 %v9014, %v9012
          %v9161 = vpack.c.b16 %v9017, %v9015
          %v9162 = vpack.c.b16 %v9018, %v9016
          %v9163 = vpack.c.b16 %v9021, %v9019
          %v9164 = vpack.c.b16 %v9022, %v9020
          %v9165 = vpack.c.b16 %v9025, %v9023
          %v9166 = vpack.c.b16 %v9026, %v9024
          %v9167 = vpack.c.b16 %v9029, %v9027
          %v9168 = vpack.c.b16 %v9030, %v9028
          %v9169 = vpack.c.b16 %v9033, %v9031
          %v9170 = vpack.c.b16 %v9034, %v9032
          %v9171 = vpack.c.b16 %v9037, %v9035
          %v9172 = vpack.c.b16 %v9038, %v9036
          %v9173 = vpack.c.b16 %v9041, %v9039
          %v9174 = vpack.c.b16 %v9042, %v9040
          %v9175 = vpack.c.b16 %v9045, %v9043
          %v9176 = vpack.c.b16 %v9046, %v9044
          %v9177 = vpack.c.b16 %v9049, %v9047
          %v9178 = vpack.c.b16 %v9050, %v9048
          %v9179 = vpack.c.b16 %v9053, %v9051
          %v9180 = vpack.c.b16 %v9054, %v9052
          %v9181 = vpack.c.b16 %v9057, %v9055
          %v9182 = vpack.c.b16 %v9058, %v9056
          %v9183 = vpack.c.b16 %v9061, %v9059
          %v9184 = vpack.c.b16 %v9062, %v9060
          %v9185 = vpack.c.b16 %v9065, %v9063
          %v9186 = vpack.c.b16 %v9066, %v9064
          %v9187 = vpack.c.b16 %v9069, %v9067
          %v9188 = vpack.c.b16 %v9070, %v9068
          %v9189 = vpack.c.b16 %v9073, %v9071
          %v9190 = vpack.c.b16 %v9074, %v9072
          %v9191 = vpack.c.b16 %v9077, %v9075
          %v9192 = vpack.c.b16 %v9078, %v9076
          %v9193 = vpack.c.b16 %v9081, %v9079
          %v9194 = vpack.c.b16 %v9082, %v9080
          %v9195 = vpack.c.b16 %v9085, %v9083
          %v9196 = vpack.c.b16 %v9086, %v9084
          %v9197 = vpack.c.b16 %v9089, %v9087
          %v9198 = vpack.c.b16 %v9090, %v9088
          %v9199 = vpack.c.b16 %v9093, %v9091
          %v9200 = vpack.c.b16 %v9094, %v9092
          %v9201 = vpack.c.b16 %v9097, %v9095
          %v9202 = vpack.c.b16 %v9098, %v9096
          %v9203 = vpack.c.b16 %v9101, %v9099
          %v9204 = vpack.c.b16 %v9102, %v9100
          %v9205 = vpack.c.b16 %v9105, %v9103
          %v9206 = vpack.c.b16 %v9106, %v9104
          %v9207 = vpack.c.b16 %v9109, %v9107
          %v9208 = vpack.c.b16 %v9110, %v9108
          %v9209 = vpack.c.b16 %v9113, %v9111
          %v9210 = vpack.c.b16 %v9114, %v9112
          %v9211 = vpack.c.b16 %v9117, %v9115
          %v9212 = vpack.c.b16 %v9118, %v9116
          %v9213 = vpack.c.b16 %v9121, %v9119
          %v9214 = vpack.c.b16 %v9122, %v9120
          %v9215 = vpack.c.b16 %v9125, %v9123
          %v9216 = vpack.c.b16 %v9126, %v9124
          %v9217 = vpack.c.b16 %v9129, %v9127
          %v9218 = vpack.c.b16 %v9130, %v9128
          %v9219 = vpack.c.b16 %v9133, %v9131
          %v9220 = vpack.c.b16 %v9134, %v9132
          %v9221 = vpack.c.b16 %v9137, %v9135
          %v9222 = vpack.c.b16 %v9138, %v9136
          %v9223 = vpack.c.b16 %v9141, %v9139
          %v9224 = vpack.c.b16 %v9142, %v9140
          %v9225 = vpack.c.b16 %v9145, %v9143
          %v9226 = vpack.c.b16 %v9146, %v9144
          %9307 = vmatprep.subr.bf16.mxu0 %v9162
          %9308 = vmatpush1.bf16.msra.mxu0 %v9161
          %9309 = vmatprep.subr.bf16.mxu0 %v9160
          %9310 = vmatpush1.bf16.msra.mxu0 %v9159
          %9311 = vmatprep.subr.bf16.mxu0 %v9158
          %9312 = vmatpush1.bf16.msra.mxu0 %v9157
          %9313 = vmatprep.subr.bf16.mxu0 %v9156
          %9314 = vmatpush1.bf16.msra.mxu0 %v9155
          %9315 = vmatprep.subr.bf16.mxu0 %v9154
          %9316 = vmatpush1.bf16.msra.mxu0 %v9153
          %9317 = vmatprep.subr.bf16.mxu0 %v9152
          %9318 = vmatpush1.bf16.msra.mxu0 %v9151
          %9319 = vmatprep.subr.bf16.mxu0 %v9150
          %9320 = vmatpush1.bf16.msra.mxu0 %v9149
          %9321 = vmatprep.subr.bf16.mxu0 %v9148
          %9322 = vmatpush1.bf16.msra.mxu0 %v9147
          %9323 = vmatprep.subr.bf16.mxu0 %v9178
          %9324 = vmatpush2.bf16.msra.mxu0 %v9177
          %9325 = vmatprep.subr.bf16.mxu0 %v9176
          %9326 = vmatpush2.bf16.msra.mxu0 %v9175
          %9327 = vmatprep.subr.bf16.mxu0 %v9174
          %9328 = vmatpush2.bf16.msra.mxu0 %v9173
          %9329 = vmatprep.subr.bf16.mxu0 %v9172
          %9330 = vmatpush2.bf16.msra.mxu0 %v9171
          %9331 = vmatprep.subr.bf16.mxu0 %v9170
          %9332 = vmatpush2.bf16.msra.mxu0 %v9169
          %9333 = vmatprep.subr.bf16.mxu0 %v9168
          %9334 = vmatpush2.bf16.msra.mxu0 %v9167
          %9335 = vmatprep.subr.bf16.mxu0 %v9166
          %9336 = vmatpush2.bf16.msra.mxu0 %v9165
          %9337 = vmatprep.subr.bf16.mxu0 %v9164
          %9338 = vmatpush2.bf16.msra.mxu0 %v9163
          %9339 = vmatprep.mubr.bf16.mxu0 %v8898
          %9340 = vmatmul.mubr.bf16.gmra.mxu0 %v8897
          %v9341 = vpop.f32.mrf.mxu0
          %v9342 = vadd.f32 %v8882, %v9341
          %v9343 = vpop.f32.mrf.mxu0
          %v9344 = vadd.f32 %v8886, %v9343
          %v9345 = vpop.f32.mrf.mxu0
          %v9346 = vpop.f32.mrf.mxu0
          %9347 = vdwg.mxu0
          %9348 = vmatprep.subr.bf16.mxu0 %v9194
          %9349 = vmatpush1.bf16.msra.mxu0 %v9193
          %9350 = vmatprep.subr.bf16.mxu0 %v9192
          %9351 = vmatpush1.bf16.msra.mxu0 %v9191
          %9352 = vmatprep.subr.bf16.mxu0 %v9190
          %9353 = vmatpush1.bf16.msra.mxu0 %v9189
          %9354 = vmatprep.subr.bf16.mxu0 %v9188
          %9355 = vmatpush1.bf16.msra.mxu0 %v9187
          %9356 = vmatprep.subr.bf16.mxu0 %v9186
          %9357 = vmatpush1.bf16.msra.mxu0 %v9185
          %9358 = vmatprep.subr.bf16.mxu0 %v9184
          %9359 = vmatpush1.bf16.msra.mxu0 %v9183
          %9360 = vmatprep.subr.bf16.mxu0 %v9182
          %9361 = vmatpush1.bf16.msra.mxu0 %v9181
          %9362 = vmatprep.subr.bf16.mxu0 %v9180
          %9363 = vmatpush1.bf16.msra.mxu0 %v9179
          %9364 = vmatprep.subr.bf16.mxu0 %v9210
          %9365 = vmatpush2.bf16.msra.mxu0 %v9209
          %9366 = vmatprep.subr.bf16.mxu0 %v9208
          %9367 = vmatpush2.bf16.msra.mxu0 %v9207
          %9368 = vmatprep.subr.bf16.mxu0 %v9206
          %9369 = vmatpush2.bf16.msra.mxu0 %v9205
          %9370 = vmatprep.subr.bf16.mxu0 %v9204
          %9371 = vmatpush2.bf16.msra.mxu0 %v9203
          %9372 = vmatprep.subr.bf16.mxu0 %v9202
          %9373 = vmatpush2.bf16.msra.mxu0 %v9201
          %9374 = vmatprep.subr.bf16.mxu0 %v9200
          %9375 = vmatpush2.bf16.msra.mxu0 %v9199
          %9376 = vmatprep.subr.bf16.mxu0 %v9198
          %9377 = vmatpush2.bf16.msra.mxu0 %v9197
          %9378 = vmatprep.subr.bf16.mxu0 %v9196
          %9379 = vmatpush2.bf16.msra.mxu0 %v9195
          %9380 = vmatprep.mubr.bf16.mxu0 %v8900
          %9381 = vmatmul.mubr.bf16.gmra.mxu0 %v8899
          %v9382 = vpop.f32.mrf.mxu0
          %v9383 = vadd.f32 %v9342, %v9382
          %v9384 = vpop.f32.mrf.mxu0
          %v9385 = vadd.f32 %v9344, %v9384
          %v9386 = vpop.f32.mrf.mxu0
          %v9387 = vpop.f32.mrf.mxu0
          %9388 = vdwg.mxu0
          %9389 = vmatprep.subr.bf16.mxu0 %v9226
          %9390 = vmatpush1.bf16.msra.mxu0 %v9225
          %9391 = vmatprep.subr.bf16.mxu0 %v9224
          %9392 = vmatpush1.bf16.msra.mxu0 %v9223
          %9393 = vmatprep.subr.bf16.mxu0 %v9222
          %9394 = vmatpush1.bf16.msra.mxu0 %v9221
          %9395 = vmatprep.subr.bf16.mxu0 %v9220
          %9396 = vmatpush1.bf16.msra.mxu0 %v9219
          %9397 = vmatprep.subr.bf16.mxu0 %v9218
          %9398 = vmatpush1.bf16.msra.mxu0 %v9217
          %9399 = vmatprep.subr.bf16.mxu0 %v9216
          %9400 = vmatpush1.bf16.msra.mxu0 %v9215
          %9401 = vmatprep.subr.bf16.mxu0 %v9214
          %9402 = vmatpush1.bf16.msra.mxu0 %v9213
          %9403 = vmatprep.subr.bf16.mxu0 %v9212
          %9404 = vmatpush1.bf16.msra.mxu0 %v9211
          %9405 = vmatprep.subr.bf16.mxu0 0
          %9406 = vmatpush2.bf16.msra.mxu0 0
          %9407 = vmatprep.subr.bf16.mxu0 0
          %9408 = vmatpush2.bf16.msra.mxu0 0
          %9409 = vmatprep.subr.bf16.mxu0 0
          %9410 = vmatpush2.bf16.msra.mxu0 0
          %9411 = vmatprep.subr.bf16.mxu0 0
          %9412 = vmatpush2.bf16.msra.mxu0 0
          %9413 = vmatprep.subr.bf16.mxu0 0
          %9414 = vmatpush2.bf16.msra.mxu0 0
          %9415 = vmatprep.subr.bf16.mxu0 0
          %9416 = vmatpush2.bf16.msra.mxu0 0
          %9417 = vmatprep.subr.bf16.mxu0 0
          %9418 = vmatpush2.bf16.msra.mxu0 0
          %9419 = vmatprep.subr.bf16.mxu0 0
          %9420 = vmatpush2.bf16.msra.mxu0 0
          %9421 = vmatprep.mubr.bf16.mxu0 0
          %9422 = vmatmul.mubr.bf16.gmra.mxu0 %v8901
          %v9423 = vpop.f32.mrf.mxu0
          %v9424 = vadd.f32 %v9383, %v9423
          %v9425 = vpop.f32.mrf.mxu0
          %v9426 = vadd.f32 %v9385, %v9425
          %v9427 = vpop.f32.mrf.mxu0
          %v9428 = vpop.f32.mrf.mxu0
          %9429 = vdwg.mxu0
          %v9430 = vmax.f32 %v9424, 0.0
          %v9431 = vmax.f32 %v9426, 0.0
          %9432 = vst [vmem:[#allocation11] sm:$0xff] %v9430
          %vm9433 = vcmask 588800
          %9434 = vst.msk [vmem:[#allocation11 + $0x8] sm:$0xff] %vm9433, %v9431
          %v9435 = vld [vmem:[#allocation11] ss:$8 sm:$0x3]
          %s9436 = scalar_lea.vmem [#allocation11], 1
          %v9437 = vld [vmem:[%s9436] ss:$8 sm:$0x3]
          %s9438 = scalar_lea.vmem [#allocation11], 6
          %v9439 = vld [vmem:[%s9438] ss:$8 sm:$0x3]
          %s9440 = scalar_lea.vmem [#allocation11], 7
          %v9441 = vld [vmem:[%s9440] ss:$8 sm:$0x3]
          %v9442 = vmax.f32 %v9435, %v9437
          %v9443 = vmax.f32 %v9439, %v9441
          %v9444 = vmax.f32 %v9442, %v9443
          %v9445 = vlaneseq
          %vm9446 = vcmp.ge.s32.totalorder %v9445, 0
          %vm9447 = vcmp.lt.s32.totalorder %v9445, 200
          %vm9448 = vmand %vm9446, %vm9447
          %s9449 = sshra.s32 %s635, 3
          %s9450 = sand.u32 %s635, 7
          %s9451 = sshra.s32 %s635, 3
          %s9452 = sand.u32 %s635, 7
          %s9453 = smul.u32 %s9449, 2
          %s9454 = smul.u32 %s9453, 8
          %s9455 = sadd.s32 %s9454, %s9452
          %s9456 = scalar_lea.vmem [#allocation12], %s9455
          %9457 = vst.msk [vmem:[%s9456] ss:$8 sm:$0x3] %vm9448, %v9444
          %9458 = vst.msk [vmem:[%s9456] ss:$8 sm:$0x0] %vm9448, %v9444
        $region105: #{seq_net_2_forward.1} parent=99 // loop_footer
          %s639 = sadd.s32 1, %s635
        $region106: #{seq_net_2_forward.1} parent=99 // loop_footer_branch
          %634 = sbr.rel target = $region102
        $region107: #{seq_net_2_forward.1} parent=99 // loop_exit
          _
        %v9459 = vld [vmem:[#allocation12] sm:$0xff]
        %v9460 = vld [vmem:[#allocation12 + $0x8] sm:$0xff]
        %v9461 = vpack.c.bf16 %v9459, %v9459
        %v9462 = vpack.c.bf16 %v9460, %v9460
        %v9463 = vld [vmem:[%s12] sm:$0xf]
        %v9464 = vld [vmem:[%s12 + $0x4] sm:$0xf]
        %v9465 = vld [vmem:[%s12 + $0x8] sm:$0xf]
        %v9466 = vld [vmem:[%s12 + $0xc] sm:$0xf]
        %v9467 = vld [vmem:[%s12 + $0x10] sm:$0xf]
        %v9468 = vld [vmem:[%s12 + $0x14] sm:$0xf]
        %v9469 = vld [vmem:[%s12 + $0x18] sm:$0xf]
        %v9470 = vld [vmem:[%s12 + $0x1c] sm:$0xf]
        %v9471 = vld [vmem:[%s12 + $0x20] sm:$0xf]
        %v9472 = vld [vmem:[%s12 + $0x24] sm:$0xf]
        %v9473 = vld [vmem:[%s12 + $0x28] sm:$0xf]
        %v9474 = vld [vmem:[%s12 + $0x2c] sm:$0xf]
        %v9475 = vld [vmem:[%s12 + $0x30] sm:$0xf]
        %v9476 = vld [vmem:[%s12 + $0x34] sm:$0xf]
        %v9477 = vld [vmem:[%s12 + $0x38] sm:$0xf]
        %v9478 = vld [vmem:[%s12 + $0x3c] sm:$0xf]
        %v9479 = vld [vmem:[%s12 + $0x40] sm:$0xf]
        %v9480 = vld [vmem:[%s12 + $0x44] sm:$0xf]
        %v9481 = vld [vmem:[%s12 + $0x48] sm:$0xf]
        %v9482 = vld [vmem:[%s12 + $0x4c] sm:$0xf]
        %v9483 = vld [vmem:[%s12 + $0x50] sm:$0xf]
        %v9484 = vld [vmem:[%s12 + $0x54] sm:$0xf]
        %v9485 = vld [vmem:[%s12 + $0x58] sm:$0xf]
        %v9486 = vld [vmem:[%s12 + $0x5c] sm:$0xf]
        %v9487 = vld [vmem:[%s12 + $0x60] sm:$0xf]
        %v9488 = vld [vmem:[%s13] sm:$0x1]
        %v9490 = vlaneseq
        %v9491 = vshrl.u32 %v9490, 7
        %v9492 = vsub.s32 0, %v9491
        %v9493 = vrot.slane %v9488, %v9492
        %v9520 = vunpack.c.l.b16 %v9463
        %v9521 = vunpack.c.l.b16 %v9464
        %v9522 = vunpack.c.l.b16 %v9465
        %v9523 = vunpack.c.l.b16 %v9466
        %v9524 = vunpack.c.l.b16 %v9467
        %v9525 = vunpack.c.l.b16 %v9468
        %v9526 = vunpack.c.l.b16 %v9469
        %v9527 = vunpack.c.l.b16 %v9470
        %v9528 = vunpack.c.l.b16 %v9471
        %v9529 = vunpack.c.l.b16 %v9472
        %v9530 = vunpack.c.l.b16 %v9473
        %v9531 = vunpack.c.l.b16 %v9474
        %v9532 = vunpack.c.l.b16 %v9475
        %v9533 = vunpack.c.l.b16 %v9476
        %v9534 = vunpack.c.l.b16 %v9477
        %v9535 = vunpack.c.l.b16 %v9478
        %v9536 = vunpack.c.l.b16 %v9479
        %v9537 = vunpack.c.l.b16 %v9480
        %v9538 = vunpack.c.l.b16 %v9481
        %v9539 = vunpack.c.l.b16 %v9482
        %v9540 = vunpack.c.l.b16 %v9483
        %v9541 = vunpack.c.l.b16 %v9484
        %v9542 = vunpack.c.l.b16 %v9485
        %v9543 = vunpack.c.l.b16 %v9486
        %v9544 = vunpack.c.l.b16 %v9487
        %v9545 = vpack.c.b16 %v9521, %v9520
        %v9546 = vpack.c.b16 %v9523, %v9522
        %v9547 = vpack.c.b16 %v9525, %v9524
        %v9548 = vpack.c.b16 %v9527, %v9526
        %v9549 = vpack.c.b16 %v9529, %v9528
        %v9550 = vpack.c.b16 %v9531, %v9530
        %v9551 = vpack.c.b16 %v9533, %v9532
        %v9552 = vpack.c.b16 %v9535, %v9534
        %v9553 = vpack.c.b16 %v9537, %v9536
        %v9554 = vpack.c.b16 %v9539, %v9538
        %v9555 = vpack.c.b16 %v9541, %v9540
        %v9556 = vpack.c.b16 %v9543, %v9542
        %v9557 = vpack.c.b16 %v9544, %v9544
        %vm9570 = vcmask 588800
        %v9572 = vsel %vm9570, %v9462, 0
        %vm9574 = vcmask 1043456
        %v9576 = vsel %vm9574, %v9557, 0
        %9578 = vmatprep.subr.bf16.mxu0 0
        %9579 = vmatpush1.bf16.msra.mxu0 %v9552
        %9580 = vmatprep.subr.bf16.mxu0 0
        %9581 = vmatpush1.bf16.msra.mxu0 %v9551
        %9582 = vmatprep.subr.bf16.mxu0 0
        %9583 = vmatpush1.bf16.msra.mxu0 %v9550
        %9584 = vmatprep.subr.bf16.mxu0 0
        %9585 = vmatpush1.bf16.msra.mxu0 %v9549
        %9586 = vmatprep.subr.bf16.mxu0 0
        %9587 = vmatpush1.bf16.msra.mxu0 %v9548
        %9588 = vmatprep.subr.bf16.mxu0 0
        %9589 = vmatpush1.bf16.msra.mxu0 %v9547
        %9590 = vmatprep.subr.bf16.mxu0 0
        %9591 = vmatpush1.bf16.msra.mxu0 %v9546
        %9592 = vmatprep.subr.bf16.mxu0 0
        %9593 = vmatpush1.bf16.msra.mxu0 %v9545
        %9594 = vmatprep.subr.bf16.mxu0 0
        %9595 = vmatpush2.bf16.msra.mxu0 0
        %9596 = vmatprep.subr.bf16.mxu0 0
        %9597 = vmatpush2.bf16.msra.mxu0 0
        %9598 = vmatprep.subr.bf16.mxu0 0
        %9599 = vmatpush2.bf16.msra.mxu0 0
        %9600 = vmatprep.subr.bf16.mxu0 0
        %9601 = vmatpush2.bf16.msra.mxu0 %v9576
        %9602 = vmatprep.subr.bf16.mxu0 0
        %9603 = vmatpush2.bf16.msra.mxu0 %v9556
        %9604 = vmatprep.subr.bf16.mxu0 0
        %9605 = vmatpush2.bf16.msra.mxu0 %v9555
        %9606 = vmatprep.subr.bf16.mxu0 0
        %9607 = vmatpush2.bf16.msra.mxu0 %v9554
        %9608 = vmatprep.subr.bf16.mxu0 0
        %9609 = vmatpush2.bf16.msra.mxu0 %v9553
        %9610 = vmatprep.mubr.bf16.mxu0 %v9572
        %9611 = vmatmul.mubr.bf16.gmra.mxu0 %v9461
        %v9612 = vpop.f32.mrf.mxu0
        %v9613 = vadd.f32 %v9493, %v9612
        %v9614 = vpop.f32.mrf.mxu0
        %v9615 = vpop.f32.mrf.mxu0
        %v9616 = vpop.f32.mrf.mxu0
        %9617 = vdwg.mxu0
        %v9618 = vpack.c.bf16 %v9613, %v9613
        %v9619 = vld [vmem:[%s14] sm:$0xf]
        %v9620 = vld [vmem:[%s14 + $0x4] sm:$0xf]
        %v9621 = vld [vmem:[%s14 + $0x8] sm:$0xf]
        %v9622 = vld [vmem:[%s14 + $0xc] sm:$0xf]
        %v9623 = vld [vmem:[%s14 + $0x10] sm:$0xf]
        %v9624 = vld [vmem:[%s14 + $0x14] sm:$0xf]
        %v9625 = vld [vmem:[%s14 + $0x18] sm:$0xf]
        %v9626 = vld [vmem:[%s14 + $0x1c] sm:$0xf]
        %v9627 = vld [vmem:[%s14 + $0x20] sm:$0xf]
        %v9628 = vld [vmem:[%s14 + $0x24] sm:$0xf]
        %v9629 = vld [vmem:[%s14 + $0x28] sm:$0xf]
        %v9630 = vld [vmem:[%s14 + $0x2c] sm:$0xf]
        %v9631 = vld [vmem:[%s14 + $0x30] sm:$0xf]
        %v9632 = vld [vmem:[%s14 + $0x34] sm:$0xf]
        %v9633 = vld [vmem:[%s14 + $0x38] sm:$0xf]
        %v9634 = vld [vmem:[%s15] sm:$0x1]
        %v9636 = vlaneseq
        %v9637 = vshrl.u32 %v9636, 7
        %v9638 = vsub.s32 0, %v9637
        %v9639 = vrot.slane %v9634, %v9638
        %v9656 = vunpack.c.l.b16 %v9619
        %v9657 = vunpack.c.l.b16 %v9620
        %v9658 = vunpack.c.l.b16 %v9621
        %v9659 = vunpack.c.l.b16 %v9622
        %v9660 = vunpack.c.l.b16 %v9623
        %v9661 = vunpack.c.l.b16 %v9624
        %v9662 = vunpack.c.l.b16 %v9625
        %v9663 = vunpack.c.l.b16 %v9626
        %v9664 = vunpack.c.l.b16 %v9627
        %v9665 = vunpack.c.l.b16 %v9628
        %v9666 = vunpack.c.l.b16 %v9629
        %v9667 = vunpack.c.l.b16 %v9630
        %v9668 = vunpack.c.l.b16 %v9631
        %v9669 = vunpack.c.l.b16 %v9632
        %v9670 = vunpack.c.l.b16 %v9633
        %v9671 = vpack.c.b16 %v9657, %v9656
        %v9672 = vpack.c.b16 %v9659, %v9658
        %v9673 = vpack.c.b16 %v9661, %v9660
        %v9674 = vpack.c.b16 %v9663, %v9662
        %v9675 = vpack.c.b16 %v9665, %v9664
        %v9676 = vpack.c.b16 %v9667, %v9666
        %v9677 = vpack.c.b16 %v9669, %v9668
        %v9678 = vpack.c.b16 %v9670, %v9670
        %vm9686 = vcmask 982016
        %v9688 = vsel %vm9686, %v9618, 0
        %v9691 = vsel %vm9574, %v9678, 0
        %9693 = vmatprep.subr.bf16.mxu0 0
        %9694 = vmatpush1.bf16.msra.mxu0 %v9691
        %9695 = vmatprep.subr.bf16.mxu0 0
        %9696 = vmatpush1.bf16.msra.mxu0 %v9677
        %9697 = vmatprep.subr.bf16.mxu0 0
        %9698 = vmatpush1.bf16.msra.mxu0 %v9676
        %9699 = vmatprep.subr.bf16.mxu0 0
        %9700 = vmatpush1.bf16.msra.mxu0 %v9675
        %9701 = vmatprep.subr.bf16.mxu0 0
        %9702 = vmatpush1.bf16.msra.mxu0 %v9674
        %9703 = vmatprep.subr.bf16.mxu0 0
        %9704 = vmatpush1.bf16.msra.mxu0 %v9673
        %9705 = vmatprep.subr.bf16.mxu0 0
        %9706 = vmatpush1.bf16.msra.mxu0 %v9672
        %9707 = vmatprep.subr.bf16.mxu0 0
        %9708 = vmatpush1.bf16.msra.mxu0 %v9671
        %9709 = vmatprep.subr.bf16.mxu0 0
        %9710 = vmatpush2.bf16.msra.mxu0 0
        %9711 = vmatprep.subr.bf16.mxu0 0
        %9712 = vmatpush2.bf16.msra.mxu0 0
        %9713 = vmatprep.subr.bf16.mxu0 0
        %9714 = vmatpush2.bf16.msra.mxu0 0
        %9715 = vmatprep.subr.bf16.mxu0 0
        %9716 = vmatpush2.bf16.msra.mxu0 0
        %9717 = vmatprep.subr.bf16.mxu0 0
        %9718 = vmatpush2.bf16.msra.mxu0 0
        %9719 = vmatprep.subr.bf16.mxu0 0
        %9720 = vmatpush2.bf16.msra.mxu0 0
        %9721 = vmatprep.subr.bf16.mxu0 0
        %9722 = vmatpush2.bf16.msra.mxu0 0
        %9723 = vmatprep.subr.bf16.mxu0 0
        %9724 = vmatpush2.bf16.msra.mxu0 0
        %9725 = vmatprep.mubr.bf16.mxu0 0
        %9726 = vmatmul.mubr.bf16.gmra.mxu0 %v9688
        %v9727 = vpop.f32.mrf.mxu0
        %v9728 = vadd.f32 %v9639, %v9727
        %v9729 = vpop.f32.mrf.mxu0
        %v9730 = vpop.f32.mrf.mxu0
        %v9731 = vpop.f32.mrf.mxu0
        %9732 = vdwg.mxu0
        %v9733 = vpack.c.bf16 %v9728, %v9728
        %v9734 = vld [vmem:[%s16] sm:$0xf]
        %v9735 = vld [vmem:[%s16 + $0x4] sm:$0xf]
        %v9736 = vld [vmem:[%s16 + $0x8] sm:$0xf]
        %v9737 = vld [vmem:[%s16 + $0xc] sm:$0xf]
        %v9738 = vld [vmem:[%s16 + $0x10] sm:$0xf]
        %v9739 = vld [vmem:[%s16 + $0x14] sm:$0xf]
        %v9740 = vld [vmem:[%s16 + $0x18] sm:$0xf]
        %v9741 = vld [vmem:[%s16 + $0x1c] sm:$0x3]
        %v9742 = vld [vmem:[%s17] sm:$0x1]
        %v9744 = vlaneseq
        %v9745 = vshrl.u32 %v9744, 7
        %v9746 = vsub.s32 0, %v9745
        %v9747 = vrot.slane %v9742, %v9746
        %v9757 = vunpack.c.l.b16 %v9734
        %v9758 = vunpack.c.l.b16 %v9735
        %v9759 = vunpack.c.l.b16 %v9736
        %v9760 = vunpack.c.l.b16 %v9737
        %v9761 = vunpack.c.l.b16 %v9738
        %v9762 = vunpack.c.l.b16 %v9739
        %v9763 = vunpack.c.l.b16 %v9740
        %v9764 = vunpack.c.l.b16 %v9741
        %v9765 = vpack.c.b16 %v9758, %v9757
        %v9766 = vpack.c.b16 %v9760, %v9759
        %v9767 = vpack.c.b16 %v9762, %v9761
        %v9768 = vpack.c.b16 %v9764, %v9763
        %vm9772 = vcmask 490496
        %v9774 = vsel %vm9772, %v9733, 0
        %vm9776 = vcmask 1045504
        %v9778 = vsel %vm9776, %v9768, 0
        %9780 = vmatprep.subr.bf16.mxu0 0
        %9781 = vmatpush1.bf16.msra.mxu0 0
        %9782 = vmatprep.subr.bf16.mxu0 0
        %9783 = vmatpush1.bf16.msra.mxu0 0
        %9784 = vmatprep.subr.bf16.mxu0 0
        %9785 = vmatpush1.bf16.msra.mxu0 0
        %9786 = vmatprep.subr.bf16.mxu0 0
        %9787 = vmatpush1.bf16.msra.mxu0 0
        %9788 = vmatprep.subr.bf16.mxu0 0
        %9789 = vmatpush1.bf16.msra.mxu0 %v9778
        %9790 = vmatprep.subr.bf16.mxu0 0
        %9791 = vmatpush1.bf16.msra.mxu0 %v9767
        %9792 = vmatprep.subr.bf16.mxu0 0
        %9793 = vmatpush1.bf16.msra.mxu0 %v9766
        %9794 = vmatprep.subr.bf16.mxu0 0
        %9795 = vmatpush1.bf16.msra.mxu0 %v9765
        %9796 = vmatprep.subr.bf16.mxu0 0
        %9797 = vmatpush2.bf16.msra.mxu0 0
        %9798 = vmatprep.subr.bf16.mxu0 0
        %9799 = vmatpush2.bf16.msra.mxu0 0
        %9800 = vmatprep.subr.bf16.mxu0 0
        %9801 = vmatpush2.bf16.msra.mxu0 0
        %9802 = vmatprep.subr.bf16.mxu0 0
        %9803 = vmatpush2.bf16.msra.mxu0 0
        %9804 = vmatprep.subr.bf16.mxu0 0
        %9805 = vmatpush2.bf16.msra.mxu0 0
        %9806 = vmatprep.subr.bf16.mxu0 0
        %9807 = vmatpush2.bf16.msra.mxu0 0
        %9808 = vmatprep.subr.bf16.mxu0 0
        %9809 = vmatpush2.bf16.msra.mxu0 0
        %9810 = vmatprep.subr.bf16.mxu0 0
        %9811 = vmatpush2.bf16.msra.mxu0 0
        %9812 = vmatprep.mubr.bf16.mxu0 0
        %9813 = vmatmul.mubr.bf16.gmra.mxu0 %v9774
        %v9814 = vpop.f32.mrf.mxu0
        %v9815 = vadd.f32 %v9747, %v9814
        %v9816 = vpop.f32.mrf.mxu0
        %v9817 = vpop.f32.mrf.mxu0
        %v9818 = vpop.f32.mrf.mxu0
        %9819 = vdwg.mxu0
        %v9820 = vpack.c.bf16 %v9815, %v9815
        %v9821 = vld [vmem:[%s18] sm:$0xf]
        %v9822 = vld [vmem:[%s18 + $0x4] sm:$0xf]
        %v9823 = vld [vmem:[%s18 + $0x8] sm:$0xf]
        %v9824 = vld [vmem:[%s18 + $0xc] sm:$0x7]
        %v9825 = vld [vmem:[%s19] sm:$0x1]
        %v9827 = vlaneseq
        %v9828 = vshrl.u32 %v9827, 7
        %v9829 = vsub.s32 0, %v9828
        %v9830 = vrot.slane %v9825, %v9829
        %v9836 = vunpack.c.l.b16 %v9821
        %v9837 = vunpack.c.l.b16 %v9822
        %v9838 = vunpack.c.l.b16 %v9823
        %v9839 = vunpack.c.l.b16 %v9824
        %v9840 = vpack.c.b16 %v9837, %v9836
        %v9841 = vpack.c.b16 %v9839, %v9838
        %vm9843 = vcmask 244736
        %v9845 = vsel %vm9843, %v9820, 0
        %vm9847 = vcmask 1046528
        %v9849 = vsel %vm9847, %v9841, 0
        %9851 = vmatprep.subr.bf16.mxu0 0
        %9852 = vmatpush1.bf16.msra.mxu0 0
        %9853 = vmatprep.subr.bf16.mxu0 0
        %9854 = vmatpush1.bf16.msra.mxu0 0
        %9855 = vmatprep.subr.bf16.mxu0 0
        %9856 = vmatpush1.bf16.msra.mxu0 0
        %9857 = vmatprep.subr.bf16.mxu0 0
        %9858 = vmatpush1.bf16.msra.mxu0 0
        %9859 = vmatprep.subr.bf16.mxu0 0
        %9860 = vmatpush1.bf16.msra.mxu0 0
        %9861 = vmatprep.subr.bf16.mxu0 0
        %9862 = vmatpush1.bf16.msra.mxu0 0
        %9863 = vmatprep.subr.bf16.mxu0 0
        %9864 = vmatpush1.bf16.msra.mxu0 %v9849
        %9865 = vmatprep.subr.bf16.mxu0 0
        %9866 = vmatpush1.bf16.msra.mxu0 %v9840
        %9867 = vmatprep.subr.bf16.mxu0 0
        %9868 = vmatpush2.bf16.msra.mxu0 0
        %9869 = vmatprep.subr.bf16.mxu0 0
        %9870 = vmatpush2.bf16.msra.mxu0 0
        %9871 = vmatprep.subr.bf16.mxu0 0
        %9872 = vmatpush2.bf16.msra.mxu0 0
        %9873 = vmatprep.subr.bf16.mxu0 0
        %9874 = vmatpush2.bf16.msra.mxu0 0
        %9875 = vmatprep.subr.bf16.mxu0 0
        %9876 = vmatpush2.bf16.msra.mxu0 0
        %9877 = vmatprep.subr.bf16.mxu0 0
        %9878 = vmatpush2.bf16.msra.mxu0 0
        %9879 = vmatprep.subr.bf16.mxu0 0
        %9880 = vmatpush2.bf16.msra.mxu0 0
        %9881 = vmatprep.subr.bf16.mxu0 0
        %9882 = vmatpush2.bf16.msra.mxu0 0
        %9883 = vmatprep.mubr.bf16.mxu0 0
        %9884 = vmatmul.mubr.bf16.gmra.mxu0 %v9845
        %v9885 = vpop.f32.mrf.mxu0
        %v9886 = vadd.f32 %v9830, %v9885
        %v9887 = vpop.f32.mrf.mxu0
        %v9888 = vpop.f32.mrf.mxu0
        %v9889 = vpop.f32.mrf.mxu0
        %9890 = vdwg.mxu0
        %vm9891 = vcmask 80896
        %9892 = vst.msk [vmem:[%s625] sm:$0xff] %vm9891, %v9886
        %s9893 = sand.u32 %s467, 1
        %s9894 = scalar_lea.sflag [#allocation14], %s9893
        %s9895 = sand.u32 %s467, 1
        %s9896 = smul.addr %s9895, 8
        %s9897 = scalar_lea.vmem [#allocation13], %s9896
        // Predicated region
        $region108: #{seq_net_2_forward.1} parent=99 // pred_check
          %p9898 = pneg %p477
        $region109: #{seq_net_2_forward.1} parent=99 // pred_check_branch
          %9900 = sbr.rel (%p9898) target = $region111
        $region110: #{seq_net_2_forward.1} parent=99 // pred_region
          %s9902 = ssub.s32 128, 128
          %9903 = vsyncadd %s9894, %s9902
          %s9904 = smul.addr %s34, 128
          %s9905 = scalar_lea.hbm %s20, %s9904
          %s9907 = sshll.u32 %s9897, 4
          %s9908 = int_to_ptr.vmem [resolvable:$true] %s9907
          %9910 = dma.vmem_to_hbm [thread:$0]  %s9908, 128, %s9905, %s9894
        $region111: #{seq_net_2_forward.1} parent=99 // pred_fallthru
          _
      $region100: #{seq_net_2_forward.1} parent=5 // pred_fallthru
        _
      %p9911 = scmp.le.s32.totalorder 2, %s29
      // Predicated region
      $region112: #{seq_net_2_forward.1} parent=5 // pred_check
        %p9912 = pneg %p9911
      $region113: #{seq_net_2_forward.1} parent=5 // pred_check_branch
        %9914 = sbr.rel (%p9912) target = $region115
      $region114: #{seq_net_2_forward.1} parent=5 // pred_region
        %s9915 = ssub.s32 %s29, 2
        // Predicated region
        $region116: #{seq_net_2_forward.1} parent=114 // pred_check
          %p9916 = pneg %p483
        $region117: #{seq_net_2_forward.1} parent=114 // pred_check_branch
          %9918 = sbr.rel (%p9916) target = $region119
        $region118: #{seq_net_2_forward.1} parent=114 // pred_region
          %s9919 = sand.u32 %s468, 1
          %s9920 = scalar_lea.sflag [#allocation14], %s9919
          %s9921 = sand.u32 %s468, 1
          %s9922 = smul.addr %s9921, 8
          %s9923 = scalar_lea.vmem [#allocation13], %s9922
          %9924 = dma.done %s9920, 128
        $region119: #{seq_net_2_forward.1} parent=114 // pred_fallthru
          _
      $region115: #{seq_net_2_forward.1} parent=5 // pred_fallthru
        _
    $region6: #{seq_net_2_forward.1} parent=1 // loop_footer
      %s33 = sadd.s32 1, %s29
    $region7: #{seq_net_2_forward.1} parent=1 // loop_footer_branch
      %28 = sbr.rel target = $region3
    $region8: #{seq_net_2_forward.1} parent=1 // loop_exit
      _
    %9925 = vsyncpa [#allocation14], 1
    %s9926 = scalar_lea.sflag [#allocation14], 1
    %9927 = vsyncpa %s9926, 1

</llo_original>
